<compile_context>
chip_gen: v7x
topology: tpu7x:2x2x1
jax: 0.10.0
libtpu: 0.0.40
codegen_flags: <defaults>
</compile_context>

<pallas_src>
import jax
import jax.numpy as jnp
from jax.experimental import pallas as pl
from jax.experimental.pallas import tpu as pltpu


def _round_up(x, m):
    return ((x + m - 1) // m) * m


# ---------------------------------------------------------------------------
# Chip-adaptive VMEM plan (v5e/v6e: 128 MiB VMEM -> raise; v7x: 64 MiB -> tighten)
# ---------------------------------------------------------------------------
def _vmem_plan():
    cap = 64 * 1024 * 1024                       # conservative default (v7x)
    try:
        cap = int(getattr(pltpu.get_tpu_info(), "vmem_capacity_bytes", cap))
    except Exception:
        pass
    limit = max(min(cap - 24 * 1024 * 1024, 96 * 1024 * 1024), 32 * 1024 * 1024)
    budget = max(limit // 2, 16 * 1024 * 1024)   # per-kernel working-set budget
    return limit, budget


def _pick_tm(M, per_row_bytes, fixed_bytes=0, max_tm=1024,
             budget=24 * 1024 * 1024):
    tm = max_tm
    while tm > 16 and fixed_bytes + tm * per_row_bytes > budget:
        tm //= 2
    if M > 16:
        # Keep >= 2 M-blocks whenever possible so both v7x TensorCores get work.
        tm = min(tm, _round_up(pl.cdiv(M, 2), 16))
    if M < tm:
        tm = M
    return tm


# ---------------------------------------------------------------------------
# Pallas kernel 1: direct convolution on a VMEM-resident (flattened) image.
#   x_ref  : (1, Rt, Ct)  bf16   flattened padded image rows (+ KW-1 pad rows)
#   w_ref  : (T, Ct, tn)  bf16   per-tap weight matrices
#   sc_ref : (1, tn)      f32    per-channel scale  (BN, applied on f32 acc)
#   sh_ref : (1, tn)      f32    per-channel shift  (bias/BN)
#   o_ref  : (1, L, tn)          L = Ho*Wt flat output rows (cols >= Wo garbage)
# ---------------------------------------------------------------------------
def _make_direct_conv_kernel(T, KW, Wt, L, negative_slope):
    def kernel(x_ref, w_ref, sc_ref, sh_ref, o_ref):
        acc = None
        for t in range(T):                       # static, unrolled tap loop
            ty, tx = divmod(t, KW)
            xs = x_ref[0, pl.ds(ty * Wt + tx, L), :]
            p = jnp.dot(xs, w_ref[t], preferred_element_type=jnp.float32)
            acc = p if acc is None else acc + p
        y = acc * sc_ref[...] + sh_ref[...]
        if negative_slope is not None:
            y = jnp.maximum(y, negative_slope * y)
        o_ref[0] = y.astype(o_ref.dtype)
    return kernel


def _direct_conv_call(flat, wt, scale, shift, Wt, KW, Ho,
                      negative_slope, out_dtype):
    B, Rt, Ct = flat.shape
    T, _, Npad = wt.shape
    L = Ho * Wt
    out_bytes = jnp.dtype(out_dtype).itemsize
    vmem_limit, budget = _vmem_plan()

    def est(tn):                                 # per-step VMEM working set
        return (2 * Rt * Ct * 2 + 2 * T * Ct * tn * 2 + 2 * L * tn * out_bytes
                + 2 * L * tn * 4 + L * Ct * 2 + 4 * tn * 8)

    # Collapse the N axis (grid-invariant weights, widest stores) when it fits.
    cands = sorted({c for c in (Npad, 512, 256, 128) if Npad % c == 0},
                   reverse=True)
    tn = cands[-1]
    for c in cands:
        if est(c) <= budget:
            tn = c
            break

    n_j = Npad // tn
    grid = (B, n_j)

    return pl.pallas_call(
        _make_direct_conv_kernel(T, KW, Wt, L, negative_slope),
        out_shape=jax.ShapeDtypeStruct((B, L, Npad), out_dtype),
        grid_spec=pltpu.PrefetchScalarGridSpec(
            num_scalar_prefetch=0,
            grid=grid,
            in_specs=[
                pl.BlockSpec((1, Rt, Ct), lambda b, j: (b, 0, 0)),   # image
                pl.BlockSpec((T, Ct, tn), lambda b, j: (0, 0, j)),   # weights
                pl.BlockSpec((1, tn), lambda b, j: (0, j)),          # scale
                pl.BlockSpec((1, tn), lambda b, j: (0, j)),          # shift
            ],
            out_specs=pl.BlockSpec((1, L, tn), lambda b, j: (b, 0, j)),
        ),
        compiler_params=pltpu.CompilerParams(
            dimension_semantics=("parallel", "parallel"),
            vmem_limit_bytes=vmem_limit,
        ),
        cost_estimate=pl.CostEstimate(
            flops=2 * B * T * L * Ct * Npad,
            transcendentals=0,
            bytes_accessed=(B * n_j * Rt * Ct * 2
                            + (B * n_j if n_j > 1 else 1) * T * Ct * Npad * 2
                            + 2 * Npad * 4
                            + B * L * Npad * out_bytes),
        ),
    )(flat, wt, scale, shift)


# ---------------------------------------------------------------------------
# Wrapper-side layout transforms (pure XLA, ~1x input read + 1x write)
# ---------------------------------------------------------------------------
def _space_to_depth_pad(x_bf16, pad, stride, k):
    """Pad spatially, space-to-depth for stride-2 (k=4 -> effective k=2, s=1),
    flatten spatial to rows, append KW_eff-1 zero rows for tap-slice bounds."""
    B, H, W, C = x_bf16.shape
    xp = jnp.pad(x_bf16, ((0, 0), (pad, pad), (pad, pad), (0, 0)))
    Hp, Wp = H + 2 * pad, W + 2 * pad
    if stride == 2:
        assert k == 4 and Hp % 2 == 0 and Wp % 2 == 0
        Ht, Wt, Ct = Hp // 2, Wp // 2, 4 * C
        xt = xp.reshape(B, Ht, 2, Wt, 2, C)
        xt = jnp.transpose(xt, (0, 1, 3, 2, 4, 5)).reshape(B, Ht, Wt, Ct)
        kh_eff = kw_eff = k // 2
    else:
        assert stride == 1
        Ht, Wt, Ct = Hp, Wp, C
        xt = xp
        kh_eff = kw_eff = k
    Ho, Wo = Ht - kh_eff + 1, Wt - kw_eff + 1
    flat = xt.reshape(B, Ht * Wt, Ct)
    flat = jnp.pad(flat, ((0, 0), (0, kw_eff - 1), (0, 0)))
    return flat, (Wt, Ct, kh_eff, kw_eff, Ho, Wo)


def _transform_weights(w_oihw, stride):
    Cout, Cin, kh, kw = w_oihw.shape
    w_ = jnp.transpose(w_oihw, (2, 3, 1, 0))             # (kh, kw, Cin, Cout)
    if stride == 2:
        w_ = w_.reshape(kh // 2, 2, kw // 2, 2, Cin, Cout)
        w_ = jnp.transpose(w_, (0, 2, 1, 3, 4, 5))       # (ty,tx,dy,dx,Cin,Cout)
        return w_.reshape((kh // 2) * (kw // 2), 4 * Cin, Cout)
    return w_.reshape(kh * kw, Cin, Cout)


def conv2d_fused(x_nhwc, w_oihw, bias, bn=None, eps=1e-5, stride=2, pad=1,
                 negative_slope=None, out_dtype=jnp.bfloat16):
    """Conv2d (PyTorch OIHW weights) [+ eval BN] [+ LeakyReLU] on NHWC input."""
    Cout, Cin, k, _ = w_oihw.shape
    flat, (Wt, Ct, KH, KW, Ho, Wo) = _space_to_depth_pad(
        x_nhwc.astype(jnp.bfloat16), pad, stride, k)
    B = flat.shape[0]

    wt = _transform_weights(w_oihw, stride).astype(jnp.bfloat16)
    if bn is not None:
        gamma, beta, mean, var = bn
        scale = gamma / jnp.sqrt(var + eps)               # eval-mode BN fold
        shift = beta + scale * (bias - mean)
    else:
        scale = jnp.ones_like(bias)
        shift = bias

    Npad = _round_up(Cout, 128)                           # lane-dense output
    if Npad != Cout:
        wt = jnp.pad(wt, ((0, 0), (0, 0), (0, Npad - Cout)))
        scale = jnp.pad(scale, (0, Npad - Cout))
        shift = jnp.pad(shift, (0, Npad - Cout))

    out_flat = _direct_conv_call(
        flat, wt,
        scale.astype(jnp.float32).reshape(1, Npad),
        shift.astype(jnp.float32).reshape(1, Npad),
        Wt, KW, Ho, negative_slope, out_dtype)
    return out_flat.reshape(B, Ho, Wt, Npad)[:, :, :Wo, :Cout]


# ---------------------------------------------------------------------------
# Pallas kernel 2: three back-to-back 1x1 convs on a VMEM-resident tile
# ---------------------------------------------------------------------------
def _fusion_chain_kernel(x_ref, w1_ref, b1_ref, w2_ref, b2_ref,
                         w3_ref, b3_ref, o_ref):
    h = jnp.dot(x_ref[...], w1_ref[...],
                preferred_element_type=jnp.float32) + b1_ref[...]
    h = jnp.dot(h.astype(jnp.bfloat16), w2_ref[...],
                preferred_element_type=jnp.float32) + b2_ref[...]
    h = jnp.dot(h.astype(jnp.bfloat16), w3_ref[...],
                preferred_element_type=jnp.float32) + b3_ref[...]
    o_ref[...] = h.astype(o_ref.dtype)


def fused_fusion_chain(x_flat, ws, bs, out_dtype=jnp.bfloat16):
    """x_flat: (M, C0); ws/bs: three 1x1-conv weight/bias pairs, fused in VMEM."""
    M, C0 = x_flat.shape
    dims = [C0] + [w.shape[1] for w in ws]
    dims_p = [_round_up(d, 128) for d in dims]

    x_p = x_flat
    if dims_p[0] != C0:
        x_p = jnp.pad(x_p, ((0, 0), (0, dims_p[0] - C0)))
    x_bf = x_p.astype(jnp.bfloat16)

    ws_p, bs_p = [], []
    for idx, (w, b) in enumerate(zip(ws, bs)):
        din, dout = dims[idx], dims[idx + 1]
        dinp, doutp = dims_p[idx], dims_p[idx + 1]
        ws_p.append(jnp.pad(w, ((0, dinp - din),
                                (0, doutp - dout))).astype(jnp.bfloat16))
        bs_p.append(jnp.pad(b, (0, doutp - dout))
                    .astype(jnp.float32).reshape(1, doutp))

    Cout_p = dims_p[-1]
    out_bytes = jnp.dtype(out_dtype).itemsize
    vmem_limit, budget = _vmem_plan()
    w_bytes = sum(dims_p[i] * dims_p[i + 1] for i in range(3)) * 2
    per_row = 2 * dims_p[0] * 2 + 2 * Cout_p * out_bytes + 3 * max(dims_p) * 4
    tm = _pick_tm(M, per_row, fixed_bytes=2 * w_bytes, budget=budget)

    grid = (pl.cdiv(M, tm),)
    flops = 2 * M * sum(dims_p[i] * dims_p[i + 1] for i in range(3))

    out = pl.pallas_call(
        _fusion_chain_kernel,
        out_shape=jax.ShapeDtypeStruct((M, Cout_p), out_dtype),
        grid_spec=pltpu.PrefetchScalarGridSpec(
            num_scalar_prefetch=0,
            grid=grid,
            in_specs=[
                pl.BlockSpec((tm, dims_p[0]), lambda i: (i, 0)),
                pl.BlockSpec((dims_p[0], dims_p[1]), lambda i: (0, 0)),
                pl.BlockSpec((1, dims_p[1]), lambda i: (0, 0)),
                pl.BlockSpec((dims_p[1], dims_p[2]), lambda i: (0, 0)),
                pl.BlockSpec((1, dims_p[2]), lambda i: (0, 0)),
                pl.BlockSpec((dims_p[2], dims_p[3]), lambda i: (0, 0)),
                pl.BlockSpec((1, dims_p[3]), lambda i: (0, 0)),
            ],
            out_specs=pl.BlockSpec((tm, Cout_p), lambda i: (i, 0)),
        ),
        compiler_params=pltpu.CompilerParams(
            dimension_semantics=("parallel",),
            vmem_limit_bytes=vmem_limit,
        ),
        cost_estimate=pl.CostEstimate(
            flops=flops, transcendentals=0,
            bytes_accessed=M * dims_p[0] * 2 + w_bytes + M * Cout_p * out_bytes),
    )(x_bf, ws_p[0], bs_p[0], ws_p[1], bs_p[1], ws_p[2], bs_p[2])
    return out[:, :dims[-1]]


# ---------------------------------------------------------------------------
# Deterministic parameter init
# ---------------------------------------------------------------------------
def _conv_params(key, cout, cin, k, with_bn=True):
    kw_, kb_, kg_, kbeta_ = jax.random.split(key, 4)
    p = {
        "w": 0.05 * jax.random.normal(kw_, (cout, cin, k, k), jnp.float32),
        "b": 0.05 * jax.random.normal(kb_, (cout,), jnp.float32),
    }
    if with_bn:
        p["gamma"] = 1.0 + 0.05 * jax.random.normal(kg_, (cout,), jnp.float32)
        p["beta"] = 0.05 * jax.random.normal(kbeta_, (cout,), jnp.float32)
        p["mean"] = jnp.zeros((cout,), jnp.float32)      # eval-mode running stats
        p["var"] = jnp.ones((cout,), jnp.float32)
    return p


def _fusion_params(key, cin, cout):
    kw_, kb_ = jax.random.split(key)
    return {
        "w": 0.05 * jax.random.normal(kw_, (cin, cout), jnp.float32),
        "b": 0.05 * jax.random.normal(kb_, (cout,), jnp.float32),
    }


def init_params(key, input_channels, nf):
    ks = jax.random.split(key, 8)
    return {
        "conv1": _conv_params(ks[0], nf, input_channels, 4),
        "conv2": _conv_params(ks[1], nf * 2, nf, 4),
        "conv3": _conv_params(ks[2], nf * 4, nf * 2, 4),
        "conv4": _conv_params(ks[3], nf * 8, nf * 4, 4),
        "fusion1": _fusion_params(ks[4], nf * 8, nf * 16),
        "fusion2": _fusion_params(ks[5], nf * 16, nf * 16),
        "fusion3": _fusion_params(ks[6], nf * 16, nf * 16),
        "final_conv": _conv_params(ks[7], 1, nf * 16, 4, with_bn=False),
    }


# ---------------------------------------------------------------------------
# Forward pass
# ---------------------------------------------------------------------------
def patch_discriminator_with_sed(params, semantic_feature_maps, fs_nchw):
    x = jnp.transpose(fs_nchw, (0, 2, 3, 1))             # NCHW -> NHWC

    # ---- DownSampler: conv -> BN -> LeakyReLU(0.2) (x3), then conv -> BN ----
    for i in range(4):
        p = params[f"conv{i + 1}"]
        neg = 0.2 if i < 3 else None                      # layer 4: BN only
        x = conv2d_fused(x, p["w"], p["b"],
                         bn=(p["gamma"], p["beta"], p["mean"], p["var"]),
                         stride=2, pad=1, negative_slope=neg,
                         out_dtype=jnp.bfloat16)

    # ---- Semantic-aware fusion blocks (single fused Pallas call) ----
    # TODO(synk): SemanticAwareFusionBlock definition is not provided in the
    # reference; stand-in is a deterministic 1x1-conv channel-changer chain and
    # semantic_feature_maps is not consumed.
    B, H, W, C = x.shape
    ws = [params[n]["w"] for n in ("fusion1", "fusion2", "fusion3")]
    bs = [params[n]["b"] for n in ("fusion1", "fusion2", "fusion3")]
    out = fused_fusion_chain(x.reshape(B * H * W, C), ws, bs,
                             out_dtype=jnp.bfloat16)
    x = out.reshape(B, H, W, ws[-1].shape[1])

    # ---- final_conv: Conv2d(nf*16 -> 1, k=4, s=1, p=1), no BN/activation ----
    p = params["final_conv"]
    x = conv2d_fused(x, p["w"], p["b"], bn=None, stride=1, pad=1,
                     negative_slope=None, out_dtype=jnp.float32)

    return jnp.transpose(x, (0, 3, 1, 2))                 # NHWC -> NCHW


# ---------------------------------------------------------------------------
if __name__ == "__main__":
    key = jax.random.PRNGKey(0)
    k_param, k_sem, k_fs = jax.random.split(key, 3)

    # Small, module-consistent shapes: num_filters=16, 32x32 RGB-like input.
    batch, in_ch, nf, hw = 2, 3, 16, 32
    params = init_params(k_param, in_ch, nf)

    fs = jax.random.normal(k_fs, (batch, in_ch, hw, hw), jnp.float32)    # NCHW
    semantic_feature_maps = jax.random.normal(k_sem, (batch, 512, 8, 8),
                                              jnp.float32)               # NCHW

    fwd = jax.jit(patch_discriminator_with_sed)
    out = jax.block_until_ready(fwd(params, semantic_feature_maps, fs))

    # Sanity: 32 -> 16 -> 8 -> 4 -> 2 spatial, final conv (k=4,s=1,p=1) -> 1x1.
    assert out.shape == (batch, 1, 1, 1), out.shape
    assert out.dtype == jnp.float32
    print("KERNEL_OK")
</pallas_src>

<mosaic_0001>
module attributes {stable_mosaic.version = 11 : i64} {
  func.func @kernel(%arg0: i32, %arg1: i32, %arg2: memref<1x290x12xbf16, #tpu.memory_space<vmem>>, %arg3: memref<4x12x128xbf16, #tpu.memory_space<vmem>>, %arg4: memref<1x128xf32, #tpu.memory_space<vmem>>, %arg5: memref<1x128xf32, #tpu.memory_space<vmem>>, %arg6: memref<1x272x128xbf16, #tpu.memory_space<vmem>>) attributes {dimension_semantics = [#tpu.dimension_semantics<parallel>, #tpu.dimension_semantics<parallel>], iteration_bounds = array<i64: 2, 1>, scalar_prefetch = 0 : i64, scratch_operands = 0 : i64, tpu.core_type = #tpu.core_type<tc>, window_params = [{transform_indices = @transform_0, window_bounds = array<i64: 1, 290, 12>}, {transform_indices = @transform_1, window_bounds = array<i64: 4, 12, 128>}, {transform_indices = @transform_2, window_bounds = array<i64: 1, 128>}, {transform_indices = @transform_3, window_bounds = array<i64: 1, 128>}, {transform_indices = @transform_4, window_bounds = array<i64: 1, 272, 128>}]} {
    %c0 = arith.constant 0 : index
    %c0_0 = arith.constant 0 : index
    %c0_1 = arith.constant 0 : index
    %0 = vector.load %arg2[%c0, %c0_0, %c0_1] : memref<1x290x12xbf16, #tpu.memory_space<vmem>>, vector<1x272x12xbf16>
    %1 = vector.shape_cast %0 : vector<1x272x12xbf16> to vector<272x12xbf16>
    %c0_2 = arith.constant 0 : index
    %c0_3 = arith.constant 0 : index
    %c0_4 = arith.constant 0 : index
    %2 = vector.load %arg3[%c0_2, %c0_3, %c0_4] : memref<4x12x128xbf16, #tpu.memory_space<vmem>>, vector<1x12x128xbf16>
    %3 = vector.shape_cast %2 : vector<1x12x128xbf16> to vector<12x128xbf16>
    %cst = arith.constant dense<0.000000e+00> : vector<272x128xf32>
    %4 = tpu.matmul %1, %3, %cst {dimension_numbers = #tpu.dot_dimension_numbers<[1], [0], [0], [1], [0, 0, 1, 1], [], []>} : vector<272x12xbf16>, vector<12x128xbf16>, vector<272x128xf32> -> vector<272x128xf32>
    %c0_5 = arith.constant 0 : index
    %c1 = arith.constant 1 : index
    %c0_6 = arith.constant 0 : index
    %5 = vector.load %arg2[%c0_5, %c1, %c0_6] : memref<1x290x12xbf16, #tpu.memory_space<vmem>>, vector<1x272x12xbf16>
    %6 = vector.shape_cast %5 : vector<1x272x12xbf16> to vector<272x12xbf16>
    %c1_7 = arith.constant 1 : index
    %c0_8 = arith.constant 0 : index
    %c0_9 = arith.constant 0 : index
    %7 = vector.load %arg3[%c1_7, %c0_8, %c0_9] : memref<4x12x128xbf16, #tpu.memory_space<vmem>>, vector<1x12x128xbf16>
    %8 = vector.shape_cast %7 : vector<1x12x128xbf16> to vector<12x128xbf16>
    %cst_10 = arith.constant dense<0.000000e+00> : vector<272x128xf32>
    %9 = tpu.matmul %6, %8, %cst_10 {dimension_numbers = #tpu.dot_dimension_numbers<[1], [0], [0], [1], [0, 0, 1, 1], [], []>} : vector<272x12xbf16>, vector<12x128xbf16>, vector<272x128xf32> -> vector<272x128xf32>
    %10 = arith.addf %4, %9 : vector<272x128xf32>
    %c0_11 = arith.constant 0 : index
    %c17 = arith.constant 17 : index
    %c0_12 = arith.constant 0 : index
    %11 = vector.load %arg2[%c0_11, %c17, %c0_12] : memref<1x290x12xbf16, #tpu.memory_space<vmem>>, vector<1x272x12xbf16>
    %12 = vector.shape_cast %11 : vector<1x272x12xbf16> to vector<272x12xbf16>
    %c2 = arith.constant 2 : index
    %c0_13 = arith.constant 0 : index
    %c0_14 = arith.constant 0 : index
    %13 = vector.load %arg3[%c2, %c0_13, %c0_14] : memref<4x12x128xbf16, #tpu.memory_space<vmem>>, vector<1x12x128xbf16>
    %14 = vector.shape_cast %13 : vector<1x12x128xbf16> to vector<12x128xbf16>
    %cst_15 = arith.constant dense<0.000000e+00> : vector<272x128xf32>
    %15 = tpu.matmul %12, %14, %cst_15 {dimension_numbers = #tpu.dot_dimension_numbers<[1], [0], [0], [1], [0, 0, 1, 1], [], []>} : vector<272x12xbf16>, vector<12x128xbf16>, vector<272x128xf32> -> vector<272x128xf32>
    %16 = arith.addf %10, %15 : vector<272x128xf32>
    %c0_16 = arith.constant 0 : index
    %c18 = arith.constant 18 : index
    %c0_17 = arith.constant 0 : index
    %17 = vector.load %arg2[%c0_16, %c18, %c0_17] : memref<1x290x12xbf16, #tpu.memory_space<vmem>>, vector<1x272x12xbf16>
    %18 = vector.shape_cast %17 : vector<1x272x12xbf16> to vector<272x12xbf16>
    %c3 = arith.constant 3 : index
    %c0_18 = arith.constant 0 : index
    %c0_19 = arith.constant 0 : index
    %19 = vector.load %arg3[%c3, %c0_18, %c0_19] : memref<4x12x128xbf16, #tpu.memory_space<vmem>>, vector<1x12x128xbf16>
    %20 = vector.shape_cast %19 : vector<1x12x128xbf16> to vector<12x128xbf16>
    %cst_20 = arith.constant dense<0.000000e+00> : vector<272x128xf32>
    %21 = tpu.matmul %18, %20, %cst_20 {dimension_numbers = #tpu.dot_dimension_numbers<[1], [0], [0], [1], [0, 0, 1, 1], [], []>} : vector<272x12xbf16>, vector<12x128xbf16>, vector<272x128xf32> -> vector<272x128xf32>
    %22 = arith.addf %16, %21 : vector<272x128xf32>
    %c0_21 = arith.constant 0 : index
    %c0_22 = arith.constant 0 : index
    %23 = vector.load %arg4[%c0_21, %c0_22] : memref<1x128xf32, #tpu.memory_space<vmem>>, vector<1x128xf32>
    %24 = vector.broadcast %23 : vector<1x128xf32> to vector<272x128xf32>
    %25 = arith.mulf %22, %24 : vector<272x128xf32>
    %c0_23 = arith.constant 0 : index
    %c0_24 = arith.constant 0 : index
    %26 = vector.load %arg5[%c0_23, %c0_24] : memref<1x128xf32, #tpu.memory_space<vmem>>, vector<1x128xf32>
    %27 = vector.broadcast %26 : vector<1x128xf32> to vector<272x128xf32>
    %28 = arith.addf %25, %27 : vector<272x128xf32>
    %cst_25 = arith.constant 2.000000e-01 : f32
    %29 = vector.broadcast %cst_25 : f32 to vector<272x128xf32>
    %30 = arith.mulf %29, %28 : vector<272x128xf32>
    %31 = arith.maximumf %28, %30 : vector<272x128xf32>
    %32 = arith.truncf %31 : vector<272x128xf32> to vector<272x128xbf16>
    %c0_26 = arith.constant 0 : index
    %c0_27 = arith.constant 0 : index
    %c0_28 = arith.constant 0 : index
    %33 = vector.load %arg6[%c0_26, %c0_27, %c0_28] : memref<1x272x128xbf16, #tpu.memory_space<vmem>>, vector<1x272x128xbf16>
    %34 = vector.shape_cast %33 : vector<1x272x128xbf16> to vector<272x128xbf16>
    %35 = vector.shape_cast %32 : vector<272x128xbf16> to vector<1x272x128xbf16>
    tpu.vector_store %arg6[%c0_26, %c0_27, %c0_28], %35 {strides = array<i32>} : memref<1x272x128xbf16, #tpu.memory_space<vmem>>, vector<1x272x128xbf16>,
    return
  }
  func.func @transform_0(%arg0: i32, %arg1: i32) -> (i32, i32, i32) {
    %c0_i32 = arith.constant 0 : i32
    %c0_i32_0 = arith.constant 0 : i32
    %c0_i32_1 = arith.constant 0 : i32
    return %arg0, %c0_i32, %c0_i32_0 : i32, i32, i32
  }
  func.func @transform_1(%arg0: i32, %arg1: i32) -> (i32, i32, i32) {
    %c0_i32 = arith.constant 0 : i32
    %c0_i32_0 = arith.constant 0 : i32
    %c0_i32_1 = arith.constant 0 : i32
    return %c0_i32, %c0_i32_0, %arg1 : i32, i32, i32
  }
  func.func @transform_2(%arg0: i32, %arg1: i32) -> (i32, i32) {
    %c0_i32 = arith.constant 0 : i32
    %c0_i32_0 = arith.constant 0 : i32
    return %c0_i32, %arg1 : i32, i32
  }
  func.func @transform_3(%arg0: i32, %arg1: i32) -> (i32, i32) {
    %c0_i32 = arith.constant 0 : i32
    %c0_i32_0 = arith.constant 0 : i32
    return %c0_i32, %arg1 : i32, i32
  }
  func.func @transform_4(%arg0: i32, %arg1: i32) -> (i32, i32, i32) {
    %c0_i32 = arith.constant 0 : i32
    %c0_i32_0 = arith.constant 0 : i32
    return %arg0, %c0_i32, %arg1 : i32, i32, i32
  }
}

module attributes {stable_mosaic.version = 11 : i64} {
  func.func @kernel(%arg0: i32, %arg1: i32, %arg2: memref<1x82x64xbf16, #tpu.memory_space<vmem>>, %arg3: memref<4x64x128xbf16, #tpu.memory_space<vmem>>, %arg4: memref<1x128xf32, #tpu.memory_space<vmem>>, %arg5: memref<1x128xf32, #tpu.memory_space<vmem>>, %arg6: memref<1x72x128xbf16, #tpu.memory_space<vmem>>) attributes {dimension_semantics = [#tpu.dimension_semantics<parallel>, #tpu.dimension_semantics<parallel>], iteration_bounds = array<i64: 2, 1>, scalar_prefetch = 0 : i64, scratch_operands = 0 : i64, tpu.core_type = #tpu.core_type<tc>, window_params = [{transform_indices = @transform_0, window_bounds = array<i64: 1, 82, 64>}, {transform_indices = @transform_1, window_bounds = array<i64: 4, 64, 128>}, {transform_indices = @transform_2, window_bounds = array<i64: 1, 128>}, {transform_indices = @transform_3, window_bounds = array<i64: 1, 128>}, {transform_indices = @transform_4, window_bounds = array<i64: 1, 72, 128>}]} {
    %c0 = arith.constant 0 : index
    %c0_0 = arith.constant 0 : index
    %c0_1 = arith.constant 0 : index
    %0 = vector.load %arg2[%c0, %c0_0, %c0_1] : memref<1x82x64xbf16, #tpu.memory_space<vmem>>, vector<1x72x64xbf16>
    %1 = vector.shape_cast %0 : vector<1x72x64xbf16> to vector<72x64xbf16>
    %c0_2 = arith.constant 0 : index
    %c0_3 = arith.constant 0 : index
    %c0_4 = arith.constant 0 : index
    %2 = vector.load %arg3[%c0_2, %c0_3, %c0_4] : memref<4x64x128xbf16, #tpu.memory_space<vmem>>, vector<1x64x128xbf16>
    %3 = vector.shape_cast %2 : vector<1x64x128xbf16> to vector<64x128xbf16>
    %cst = arith.constant dense<0.000000e+00> : vector<72x128xf32>
    %4 = tpu.matmul %1, %3, %cst {dimension_numbers = #tpu.dot_dimension_numbers<[1], [0], [0], [1], [0, 0, 1, 1], [], []>} : vector<72x64xbf16>, vector<64x128xbf16>, vector<72x128xf32> -> vector<72x128xf32>
    %c0_5 = arith.constant 0 : index
    %c1 = arith.constant 1 : index
    %c0_6 = arith.constant 0 : index
    %5 = vector.load %arg2[%c0_5, %c1, %c0_6] : memref<1x82x64xbf16, #tpu.memory_space<vmem>>, vector<1x72x64xbf16>
    %6 = vector.shape_cast %5 : vector<1x72x64xbf16> to vector<72x64xbf16>
    %c1_7 = arith.constant 1 : index
    %c0_8 = arith.constant 0 : index
    %c0_9 = arith.constant 0 : index
    %7 = vector.load %arg3[%c1_7, %c0_8, %c0_9] : memref<4x64x128xbf16, #tpu.memory_space<vmem>>, vector<1x64x128xbf16>
    %8 = vector.shape_cast %7 : vector<1x64x128xbf16> to vector<64x128xbf16>
    %cst_10 = arith.constant dense<0.000000e+00> : vector<72x128xf32>
    %9 = tpu.matmul %6, %8, %cst_10 {dimension_numbers = #tpu.dot_dimension_numbers<[1], [0], [0], [1], [0, 0, 1, 1], [], []>} : vector<72x64xbf16>, vector<64x128xbf16>, vector<72x128xf32> -> vector<72x128xf32>
    %10 = arith.addf %4, %9 : vector<72x128xf32>
    %c0_11 = arith.constant 0 : index
    %c9 = arith.constant 9 : index
    %c0_12 = arith.constant 0 : index
    %11 = vector.load %arg2[%c0_11, %c9, %c0_12] : memref<1x82x64xbf16, #tpu.memory_space<vmem>>, vector<1x72x64xbf16>
    %12 = vector.shape_cast %11 : vector<1x72x64xbf16> to vector<72x64xbf16>
    %c2 = arith.constant 2 : index
    %c0_13 = arith.constant 0 : index
    %c0_14 = arith.constant 0 : index
    %13 = vector.load %arg3[%c2, %c0_13, %c0_14] : memref<4x64x128xbf16, #tpu.memory_space<vmem>>, vector<1x64x128xbf16>
    %14 = vector.shape_cast %13 : vector<1x64x128xbf16> to vector<64x128xbf16>
    %cst_15 = arith.constant dense<0.000000e+00> : vector<72x128xf32>
    %15 = tpu.matmul %12, %14, %cst_15 {dimension_numbers = #tpu.dot_dimension_numbers<[1], [0], [0], [1], [0, 0, 1, 1], [], []>} : vector<72x64xbf16>, vector<64x128xbf16>, vector<72x128xf32> -> vector<72x128xf32>
    %16 = arith.addf %10, %15 : vector<72x128xf32>
    %c0_16 = arith.constant 0 : index
    %c10 = arith.constant 10 : index
    %c0_17 = arith.constant 0 : index
    %17 = vector.load %arg2[%c0_16, %c10, %c0_17] : memref<1x82x64xbf16, #tpu.memory_space<vmem>>, vector<1x72x64xbf16>
    %18 = vector.shape_cast %17 : vector<1x72x64xbf16> to vector<72x64xbf16>
    %c3 = arith.constant 3 : index
    %c0_18 = arith.constant 0 : index
    %c0_19 = arith.constant 0 : index
    %19 = vector.load %arg3[%c3, %c0_18, %c0_19] : memref<4x64x128xbf16, #tpu.memory_space<vmem>>, vector<1x64x128xbf16>
    %20 = vector.shape_cast %19 : vector<1x64x128xbf16> to vector<64x128xbf16>
    %cst_20 = arith.constant dense<0.000000e+00> : vector<72x128xf32>
    %21 = tpu.matmul %18, %20, %cst_20 {dimension_numbers = #tpu.dot_dimension_numbers<[1], [0], [0], [1], [0, 0, 1, 1], [], []>} : vector<72x64xbf16>, vector<64x128xbf16>, vector<72x128xf32> -> vector<72x128xf32>
    %22 = arith.addf %16, %21 : vector<72x128xf32>
    %c0_21 = arith.constant 0 : index
    %c0_22 = arith.constant 0 : index
    %23 = vector.load %arg4[%c0_21, %c0_22] : memref<1x128xf32, #tpu.memory_space<vmem>>, vector<1x128xf32>
    %24 = vector.broadcast %23 : vector<1x128xf32> to vector<72x128xf32>
    %25 = arith.mulf %22, %24 : vector<72x128xf32>
    %c0_23 = arith.constant 0 : index
    %c0_24 = arith.constant 0 : index
    %26 = vector.load %arg5[%c0_23, %c0_24] : memref<1x128xf32, #tpu.memory_space<vmem>>, vector<1x128xf32>
    %27 = vector.broadcast %26 : vector<1x128xf32> to vector<72x128xf32>
    %28 = arith.addf %25, %27 : vector<72x128xf32>
    %cst_25 = arith.constant 2.000000e-01 : f32
    %29 = vector.broadcast %cst_25 : f32 to vector<72x128xf32>
    %30 = arith.mulf %29, %28 : vector<72x128xf32>
    %31 = arith.maximumf %28, %30 : vector<72x128xf32>
    %32 = arith.truncf %31 : vector<72x128xf32> to vector<72x128xbf16>
    %c0_26 = arith.constant 0 : index
    %c0_27 = arith.constant 0 : index
    %c0_28 = arith.constant 0 : index
    %33 = vector.load %arg6[%c0_26, %c0_27, %c0_28] : memref<1x72x128xbf16, #tpu.memory_space<vmem>>, vector<1x72x128xbf16>
    %34 = vector.shape_cast %33 : vector<1x72x128xbf16> to vector<72x128xbf16>
    %35 = vector.shape_cast %32 : vector<72x128xbf16> to vector<1x72x128xbf16>
    tpu.vector_store %arg6[%c0_26, %c0_27, %c0_28], %35 {strides = array<i32>} : memref<1x72x128xbf16, #tpu.memory_space<vmem>>, vector<1x72x128xbf16>,
    return
  }
  func.func @transform_0(%arg0: i32, %arg1: i32) -> (i32, i32, i32) {
    %c0_i32 = arith.constant 0 : i32
    %c0_i32_0 = arith.constant 0 : i32
    %c0_i32_1 = arith.constant 0 : i32
    return %arg0, %c0_i32, %c0_i32_0 : i32, i32, i32
  }
  func.func @transform_1(%arg0: i32, %arg1: i32) -> (i32, i32, i32) {
    %c0_i32 = arith.constant 0 : i32
    %c0_i32_0 = arith.constant 0 : i32
    %c0_i32_1 = arith.constant 0 : i32
    return %c0_i32, %c0_i32_0, %arg1 : i32, i32, i32
  }
  func.func @transform_2(%arg0: i32, %arg1: i32) -> (i32, i32) {
    %c0_i32 = arith.constant 0 : i32
    %c0_i32_0 = arith.constant 0 : i32
    return %c0_i32, %arg1 : i32, i32
  }
  func.func @transform_3(%arg0: i32, %arg1: i32) -> (i32, i32) {
    %c0_i32 = arith.constant 0 : i32
    %c0_i32_0 = arith.constant 0 : i32
    return %c0_i32, %arg1 : i32, i32
  }
  func.func @transform_4(%arg0: i32, %arg1: i32) -> (i32, i32, i32) {
    %c0_i32 = arith.constant 0 : i32
    %c0_i32_0 = arith.constant 0 : i32
    return %arg0, %c0_i32, %arg1 : i32, i32, i32
  }
}

module attributes {stable_mosaic.version = 11 : i64} {
  func.func @kernel(%arg0: i32, %arg1: i32, %arg2: memref<1x26x128xbf16, #tpu.memory_space<vmem>>, %arg3: memref<4x128x128xbf16, #tpu.memory_space<vmem>>, %arg4: memref<1x128xf32, #tpu.memory_space<vmem>>, %arg5: memref<1x128xf32, #tpu.memory_space<vmem>>, %arg6: memref<1x20x128xbf16, #tpu.memory_space<vmem>>) attributes {dimension_semantics = [#tpu.dimension_semantics<parallel>, #tpu.dimension_semantics<parallel>], iteration_bounds = array<i64: 2, 1>, scalar_prefetch = 0 : i64, scratch_operands = 0 : i64, tpu.core_type = #tpu.core_type<tc>, window_params = [{transform_indices = @transform_0, window_bounds = array<i64: 1, 26, 128>}, {transform_indices = @transform_1, window_bounds = array<i64: 4, 128, 128>}, {transform_indices = @transform_2, window_bounds = array<i64: 1, 128>}, {transform_indices = @transform_3, window_bounds = array<i64: 1, 128>}, {transform_indices = @transform_4, window_bounds = array<i64: 1, 20, 128>}]} {
    %c0 = arith.constant 0 : index
    %c0_0 = arith.constant 0 : index
    %c0_1 = arith.constant 0 : index
    %0 = vector.load %arg2[%c0, %c0_0, %c0_1] : memref<1x26x128xbf16, #tpu.memory_space<vmem>>, vector<1x20x128xbf16>
    %1 = vector.shape_cast %0 : vector<1x20x128xbf16> to vector<20x128xbf16>
    %c0_2 = arith.constant 0 : index
    %c0_3 = arith.constant 0 : index
    %c0_4 = arith.constant 0 : index
    %2 = vector.load %arg3[%c0_2, %c0_3, %c0_4] : memref<4x128x128xbf16, #tpu.memory_space<vmem>>, vector<1x128x128xbf16>
    %3 = vector.shape_cast %2 : vector<1x128x128xbf16> to vector<128x128xbf16>
    %cst = arith.constant dense<0.000000e+00> : vector<20x128xf32>
    %4 = tpu.matmul %1, %3, %cst {dimension_numbers = #tpu.dot_dimension_numbers<[1], [0], [0], [1], [0, 0, 1, 1], [], []>} : vector<20x128xbf16>, vector<128x128xbf16>, vector<20x128xf32> -> vector<20x128xf32>
    %c0_5 = arith.constant 0 : index
    %c1 = arith.constant 1 : index
    %c0_6 = arith.constant 0 : index
    %5 = vector.load %arg2[%c0_5, %c1, %c0_6] : memref<1x26x128xbf16, #tpu.memory_space<vmem>>, vector<1x20x128xbf16>
    %6 = vector.shape_cast %5 : vector<1x20x128xbf16> to vector<20x128xbf16>
    %c1_7 = arith.constant 1 : index
    %c0_8 = arith.constant 0 : index
    %c0_9 = arith.constant 0 : index
    %7 = vector.load %arg3[%c1_7, %c0_8, %c0_9] : memref<4x128x128xbf16, #tpu.memory_space<vmem>>, vector<1x128x128xbf16>
    %8 = vector.shape_cast %7 : vector<1x128x128xbf16> to vector<128x128xbf16>
    %cst_10 = arith.constant dense<0.000000e+00> : vector<20x128xf32>
    %9 = tpu.matmul %6, %8, %cst_10 {dimension_numbers = #tpu.dot_dimension_numbers<[1], [0], [0], [1], [0, 0, 1, 1], [], []>} : vector<20x128xbf16>, vector<128x128xbf16>, vector<20x128xf32> -> vector<20x128xf32>
    %10 = arith.addf %4, %9 : vector<20x128xf32>
    %c0_11 = arith.constant 0 : index
    %c5 = arith.constant 5 : index
    %c0_12 = arith.constant 0 : index
    %11 = vector.load %arg2[%c0_11, %c5, %c0_12] : memref<1x26x128xbf16, #tpu.memory_space<vmem>>, vector<1x20x128xbf16>
    %12 = vector.shape_cast %11 : vector<1x20x128xbf16> to vector<20x128xbf16>
    %c2 = arith.constant 2 : index
    %c0_13 = arith.constant 0 : index
    %c0_14 = arith.constant 0 : index
    %13 = vector.load %arg3[%c2, %c0_13, %c0_14] : memref<4x128x128xbf16, #tpu.memory_space<vmem>>, vector<1x128x128xbf16>
    %14 = vector.shape_cast %13 : vector<1x128x128xbf16> to vector<128x128xbf16>
    %cst_15 = arith.constant dense<0.000000e+00> : vector<20x128xf32>
    %15 = tpu.matmul %12, %14, %cst_15 {dimension_numbers = #tpu.dot_dimension_numbers<[1], [0], [0], [1], [0, 0, 1, 1], [], []>} : vector<20x128xbf16>, vector<128x128xbf16>, vector<20x128xf32> -> vector<20x128xf32>
    %16 = arith.addf %10, %15 : vector<20x128xf32>
    %c0_16 = arith.constant 0 : index
    %c6 = arith.constant 6 : index
    %c0_17 = arith.constant 0 : index
    %17 = vector.load %arg2[%c0_16, %c6, %c0_17] : memref<1x26x128xbf16, #tpu.memory_space<vmem>>, vector<1x20x128xbf16>
    %18 = vector.shape_cast %17 : vector<1x20x128xbf16> to vector<20x128xbf16>
    %c3 = arith.constant 3 : index
    %c0_18 = arith.constant 0 : index
    %c0_19 = arith.constant 0 : index
    %19 = vector.load %arg3[%c3, %c0_18, %c0_19] : memref<4x128x128xbf16, #tpu.memory_space<vmem>>, vector<1x128x128xbf16>
    %20 = vector.shape_cast %19 : vector<1x128x128xbf16> to vector<128x128xbf16>
    %cst_20 = arith.constant dense<0.000000e+00> : vector<20x128xf32>
    %21 = tpu.matmul %18, %20, %cst_20 {dimension_numbers = #tpu.dot_dimension_numbers<[1], [0], [0], [1], [0, 0, 1, 1], [], []>} : vector<20x128xbf16>, vector<128x128xbf16>, vector<20x128xf32> -> vector<20x128xf32>
    %22 = arith.addf %16, %21 : vector<20x128xf32>
    %c0_21 = arith.constant 0 : index
    %c0_22 = arith.constant 0 : index
    %23 = vector.load %arg4[%c0_21, %c0_22] : memref<1x128xf32, #tpu.memory_space<vmem>>, vector<1x128xf32>
    %24 = vector.broadcast %23 : vector<1x128xf32> to vector<20x128xf32>
    %25 = arith.mulf %22, %24 : vector<20x128xf32>
    %c0_23 = arith.constant 0 : index
    %c0_24 = arith.constant 0 : index
    %26 = vector.load %arg5[%c0_23, %c0_24] : memref<1x128xf32, #tpu.memory_space<vmem>>, vector<1x128xf32>
    %27 = vector.broadcast %26 : vector<1x128xf32> to vector<20x128xf32>
    %28 = arith.addf %25, %27 : vector<20x128xf32>
    %cst_25 = arith.constant 2.000000e-01 : f32
    %29 = vector.broadcast %cst_25 : f32 to vector<20x128xf32>
    %30 = arith.mulf %29, %28 : vector<20x128xf32>
    %31 = arith.maximumf %28, %30 : vector<20x128xf32>
    %32 = arith.truncf %31 : vector<20x128xf32> to vector<20x128xbf16>
    %c0_26 = arith.constant 0 : index
    %c0_27 = arith.constant 0 : index
    %c0_28 = arith.constant 0 : index
    %33 = vector.load %arg6[%c0_26, %c0_27, %c0_28] : memref<1x20x128xbf16, #tpu.memory_space<vmem>>, vector<1x20x128xbf16>
    %34 = vector.shape_cast %33 : vector<1x20x128xbf16> to vector<20x128xbf16>
    %35 = vector.shape_cast %32 : vector<20x128xbf16> to vector<1x20x128xbf16>
    tpu.vector_store %arg6[%c0_26, %c0_27, %c0_28], %35 {strides = array<i32>} : memref<1x20x128xbf16, #tpu.memory_space<vmem>>, vector<1x20x128xbf16>,
    return
  }
  func.func @transform_0(%arg0: i32, %arg1: i32) -> (i32, i32, i32) {
    %c0_i32 = arith.constant 0 : i32
    %c0_i32_0 = arith.constant 0 : i32
    %c0_i32_1 = arith.constant 0 : i32
    return %arg0, %c0_i32, %c0_i32_0 : i32, i32, i32
  }
  func.func @transform_1(%arg0: i32, %arg1: i32) -> (i32, i32, i32) {
    %c0_i32 = arith.constant 0 : i32
    %c0_i32_0 = arith.constant 0 : i32
    %c0_i32_1 = arith.constant 0 : i32
    return %c0_i32, %c0_i32_0, %arg1 : i32, i32, i32
  }
  func.func @transform_2(%arg0: i32, %arg1: i32) -> (i32, i32) {
    %c0_i32 = arith.constant 0 : i32
    %c0_i32_0 = arith.constant 0 : i32
    return %c0_i32, %arg1 : i32, i32
  }
  func.func @transform_3(%arg0: i32, %arg1: i32) -> (i32, i32) {
    %c0_i32 = arith.constant 0 : i32
    %c0_i32_0 = arith.constant 0 : i32
    return %c0_i32, %arg1 : i32, i32
  }
  func.func @transform_4(%arg0: i32, %arg1: i32) -> (i32, i32, i32) {
    %c0_i32 = arith.constant 0 : i32
    %c0_i32_0 = arith.constant 0 : i32
    return %arg0, %c0_i32, %arg1 : i32, i32, i32
  }
}

module attributes {stable_mosaic.version = 11 : i64} {
  func.func @kernel(%arg0: i32, %arg1: i32, %arg2: memref<1x10x256xbf16, #tpu.memory_space<vmem>>, %arg3: memref<4x256x128xbf16, #tpu.memory_space<vmem>>, %arg4: memref<1x128xf32, #tpu.memory_space<vmem>>, %arg5: memref<1x128xf32, #tpu.memory_space<vmem>>, %arg6: memref<1x6x128xbf16, #tpu.memory_space<vmem>>) attributes {dimension_semantics = [#tpu.dimension_semantics<parallel>, #tpu.dimension_semantics<parallel>], iteration_bounds = array<i64: 2, 1>, scalar_prefetch = 0 : i64, scratch_operands = 0 : i64, tpu.core_type = #tpu.core_type<tc>, window_params = [{transform_indices = @transform_0, window_bounds = array<i64: 1, 10, 256>}, {transform_indices = @transform_1, window_bounds = array<i64: 4, 256, 128>}, {transform_indices = @transform_2, window_bounds = array<i64: 1, 128>}, {transform_indices = @transform_3, window_bounds = array<i64: 1, 128>}, {transform_indices = @transform_4, window_bounds = array<i64: 1, 6, 128>}]} {
    %c0 = arith.constant 0 : index
    %c0_0 = arith.constant 0 : index
    %c0_1 = arith.constant 0 : index
    %0 = vector.load %arg2[%c0, %c0_0, %c0_1] : memref<1x10x256xbf16, #tpu.memory_space<vmem>>, vector<1x6x256xbf16>
    %1 = vector.shape_cast %0 : vector<1x6x256xbf16> to vector<6x256xbf16>
    %c0_2 = arith.constant 0 : index
    %c0_3 = arith.constant 0 : index
    %c0_4 = arith.constant 0 : index
    %2 = vector.load %arg3[%c0_2, %c0_3, %c0_4] : memref<4x256x128xbf16, #tpu.memory_space<vmem>>, vector<1x256x128xbf16>
    %3 = vector.shape_cast %2 : vector<1x256x128xbf16> to vector<256x128xbf16>
    %cst = arith.constant dense<0.000000e+00> : vector<6x128xf32>
    %4 = tpu.matmul %1, %3, %cst {dimension_numbers = #tpu.dot_dimension_numbers<[1], [0], [0], [1], [0, 0, 1, 1], [], []>} : vector<6x256xbf16>, vector<256x128xbf16>, vector<6x128xf32> -> vector<6x128xf32>
    %c0_5 = arith.constant 0 : index
    %c1 = arith.constant 1 : index
    %c0_6 = arith.constant 0 : index
    %5 = vector.load %arg2[%c0_5, %c1, %c0_6] : memref<1x10x256xbf16, #tpu.memory_space<vmem>>, vector<1x6x256xbf16>
    %6 = vector.shape_cast %5 : vector<1x6x256xbf16> to vector<6x256xbf16>
    %c1_7 = arith.constant 1 : index
    %c0_8 = arith.constant 0 : index
    %c0_9 = arith.constant 0 : index
    %7 = vector.load %arg3[%c1_7, %c0_8, %c0_9] : memref<4x256x128xbf16, #tpu.memory_space<vmem>>, vector<1x256x128xbf16>
    %8 = vector.shape_cast %7 : vector<1x256x128xbf16> to vector<256x128xbf16>
    %cst_10 = arith.constant dense<0.000000e+00> : vector<6x128xf32>
    %9 = tpu.matmul %6, %8, %cst_10 {dimension_numbers = #tpu.dot_dimension_numbers<[1], [0], [0], [1], [0, 0, 1, 1], [], []>} : vector<6x256xbf16>, vector<256x128xbf16>, vector<6x128xf32> -> vector<6x128xf32>
    %10 = arith.addf %4, %9 : vector<6x128xf32>
    %c0_11 = arith.constant 0 : index
    %c3 = arith.constant 3 : index
    %c0_12 = arith.constant 0 : index
    %11 = vector.load %arg2[%c0_11, %c3, %c0_12] : memref<1x10x256xbf16, #tpu.memory_space<vmem>>, vector<1x6x256xbf16>
    %12 = vector.shape_cast %11 : vector<1x6x256xbf16> to vector<6x256xbf16>
    %c2 = arith.constant 2 : index
    %c0_13 = arith.constant 0 : index
    %c0_14 = arith.constant 0 : index
    %13 = vector.load %arg3[%c2, %c0_13, %c0_14] : memref<4x256x128xbf16, #tpu.memory_space<vmem>>, vector<1x256x128xbf16>
    %14 = vector.shape_cast %13 : vector<1x256x128xbf16> to vector<256x128xbf16>
    %cst_15 = arith.constant dense<0.000000e+00> : vector<6x128xf32>
    %15 = tpu.matmul %12, %14, %cst_15 {dimension_numbers = #tpu.dot_dimension_numbers<[1], [0], [0], [1], [0, 0, 1, 1], [], []>} : vector<6x256xbf16>, vector<256x128xbf16>, vector<6x128xf32> -> vector<6x128xf32>
    %16 = arith.addf %10, %15 : vector<6x128xf32>
    %c0_16 = arith.constant 0 : index
    %c4 = arith.constant 4 : index
    %c0_17 = arith.constant 0 : index
    %17 = vector.load %arg2[%c0_16, %c4, %c0_17] : memref<1x10x256xbf16, #tpu.memory_space<vmem>>, vector<1x6x256xbf16>
    %18 = vector.shape_cast %17 : vector<1x6x256xbf16> to vector<6x256xbf16>
    %c3_18 = arith.constant 3 : index
    %c0_19 = arith.constant 0 : index
    %c0_20 = arith.constant 0 : index
    %19 = vector.load %arg3[%c3_18, %c0_19, %c0_20] : memref<4x256x128xbf16, #tpu.memory_space<vmem>>, vector<1x256x128xbf16>
    %20 = vector.shape_cast %19 : vector<1x256x128xbf16> to vector<256x128xbf16>
    %cst_21 = arith.constant dense<0.000000e+00> : vector<6x128xf32>
    %21 = tpu.matmul %18, %20, %cst_21 {dimension_numbers = #tpu.dot_dimension_numbers<[1], [0], [0], [1], [0, 0, 1, 1], [], []>} : vector<6x256xbf16>, vector<256x128xbf16>, vector<6x128xf32> -> vector<6x128xf32>
    %22 = arith.addf %16, %21 : vector<6x128xf32>
    %c0_22 = arith.constant 0 : index
    %c0_23 = arith.constant 0 : index
    %23 = vector.load %arg4[%c0_22, %c0_23] : memref<1x128xf32, #tpu.memory_space<vmem>>, vector<1x128xf32>
    %24 = vector.broadcast %23 : vector<1x128xf32> to vector<6x128xf32>
    %25 = arith.mulf %22, %24 : vector<6x128xf32>
    %c0_24 = arith.constant 0 : index
    %c0_25 = arith.constant 0 : index
    %26 = vector.load %arg5[%c0_24, %c0_25] : memref<1x128xf32, #tpu.memory_space<vmem>>, vector<1x128xf32>
    %27 = vector.broadcast %26 : vector<1x128xf32> to vector<6x128xf32>
    %28 = arith.addf %25, %27 : vector<6x128xf32>
    %29 = arith.truncf %28 : vector<6x128xf32> to vector<6x128xbf16>
    %c0_26 = arith.constant 0 : index
    %c0_27 = arith.constant 0 : index
    %c0_28 = arith.constant 0 : index
    %30 = vector.load %arg6[%c0_26, %c0_27, %c0_28] : memref<1x6x128xbf16, #tpu.memory_space<vmem>>, vector<1x6x128xbf16>
    %31 = vector.shape_cast %30 : vector<1x6x128xbf16> to vector<6x128xbf16>
    %32 = vector.shape_cast %29 : vector<6x128xbf16> to vector<1x6x128xbf16>
    tpu.vector_store %arg6[%c0_26, %c0_27, %c0_28], %32 {strides = array<i32>} : memref<1x6x128xbf16, #tpu.memory_space<vmem>>, vector<1x6x128xbf16>,
    return
  }
  func.func @transform_0(%arg0: i32, %arg1: i32) -> (i32, i32, i32) {
    %c0_i32 = arith.constant 0 : i32
    %c0_i32_0 = arith.constant 0 : i32
    %c0_i32_1 = arith.constant 0 : i32
    return %arg0, %c0_i32, %c0_i32_0 : i32, i32, i32
  }
  func.func @transform_1(%arg0: i32, %arg1: i32) -> (i32, i32, i32) {
    %c0_i32 = arith.constant 0 : i32
    %c0_i32_0 = arith.constant 0 : i32
    %c0_i32_1 = arith.constant 0 : i32
    return %c0_i32, %c0_i32_0, %arg1 : i32, i32, i32
  }
  func.func @transform_2(%arg0: i32, %arg1: i32) -> (i32, i32) {
    %c0_i32 = arith.constant 0 : i32
    %c0_i32_0 = arith.constant 0 : i32
    return %c0_i32, %arg1 : i32, i32
  }
  func.func @transform_3(%arg0: i32, %arg1: i32) -> (i32, i32) {
    %c0_i32 = arith.constant 0 : i32
    %c0_i32_0 = arith.constant 0 : i32
    return %c0_i32, %arg1 : i32, i32
  }
  func.func @transform_4(%arg0: i32, %arg1: i32) -> (i32, i32, i32) {
    %c0_i32 = arith.constant 0 : i32
    %c0_i32_0 = arith.constant 0 : i32
    return %arg0, %c0_i32, %arg1 : i32, i32, i32
  }
}

module attributes {stable_mosaic.version = 11 : i64} {
  func.func @_fusion_chain_kernel(%arg0: i32, %arg1: memref<8x128xbf16, #tpu.memory_space<vmem>>, %arg2: memref<128x256xbf16, #tpu.memory_space<vmem>>, %arg3: memref<1x256xf32, #tpu.memory_space<vmem>>, %arg4: memref<256x256xbf16, #tpu.memory_space<vmem>>, %arg5: memref<1x256xf32, #tpu.memory_space<vmem>>, %arg6: memref<256x256xbf16, #tpu.memory_space<vmem>>, %arg7: memref<1x256xf32, #tpu.memory_space<vmem>>, %arg8: memref<8x256xbf16, #tpu.memory_space<vmem>>) attributes {dimension_semantics = [#tpu.dimension_semantics<parallel>], iteration_bounds = array<i64: 1>, scalar_prefetch = 0 : i64, scratch_operands = 0 : i64, tpu.core_type = #tpu.core_type<tc>, window_params = [{transform_indices = @transform_0, window_bounds = array<i64: 8, 128>}, {pipeline_mode = #tpu.pipeline_mode<synchronous>, transform_indices = @transform_1, window_bounds = array<i64: 128, 256>}, {pipeline_mode = #tpu.pipeline_mode<synchronous>, transform_indices = @transform_2, window_bounds = array<i64: 1, 256>}, {pipeline_mode = #tpu.pipeline_mode<synchronous>, transform_indices = @transform_3, window_bounds = array<i64: 256, 256>}, {pipeline_mode = #tpu.pipeline_mode<synchronous>, transform_indices = @transform_4, window_bounds = array<i64: 1, 256>}, {pipeline_mode = #tpu.pipeline_mode<synchronous>, transform_indices = @transform_5, window_bounds = array<i64: 256, 256>}, {pipeline_mode = #tpu.pipeline_mode<synchronous>, transform_indices = @transform_6, window_bounds = array<i64: 1, 256>}, {transform_indices = @transform_7, window_bounds = array<i64: 8, 256>}]} {
    %c0 = arith.constant 0 : index
    %c0_0 = arith.constant 0 : index
    %0 = vector.load %arg1[%c0, %c0_0] : memref<8x128xbf16, #tpu.memory_space<vmem>>, vector<8x128xbf16>
    %c0_1 = arith.constant 0 : index
    %c0_2 = arith.constant 0 : index
    %1 = vector.load %arg2[%c0_1, %c0_2] : memref<128x256xbf16, #tpu.memory_space<vmem>>, vector<128x256xbf16>
    %cst = arith.constant dense<0.000000e+00> : vector<8x256xf32>
    %2 = tpu.matmul %0, %1, %cst {dimension_numbers = #tpu.dot_dimension_numbers<[1], [0], [0], [1], [0, 0, 1, 1], [], []>} : vector<8x128xbf16>, vector<128x256xbf16>, vector<8x256xf32> -> vector<8x256xf32>
    %c0_3 = arith.constant 0 : index
    %c0_4 = arith.constant 0 : index
    %3 = vector.load %arg3[%c0_3, %c0_4] : memref<1x256xf32, #tpu.memory_space<vmem>>, vector<1x256xf32>
    %4 = vector.broadcast %3 : vector<1x256xf32> to vector<8x256xf32>
    %5 = arith.addf %2, %4 : vector<8x256xf32>
    %6 = arith.truncf %5 : vector<8x256xf32> to vector<8x256xbf16>
    %c0_5 = arith.constant 0 : index
    %c0_6 = arith.constant 0 : index
    %7 = vector.load %arg4[%c0_5, %c0_6] : memref<256x256xbf16, #tpu.memory_space<vmem>>, vector<256x256xbf16>
    %cst_7 = arith.constant dense<0.000000e+00> : vector<8x256xf32>
    %8 = tpu.matmul %6, %7, %cst_7 {dimension_numbers = #tpu.dot_dimension_numbers<[1], [0], [0], [1], [0, 0, 1, 1], [], []>} : vector<8x256xbf16>, vector<256x256xbf16>, vector<8x256xf32> -> vector<8x256xf32>
    %c0_8 = arith.constant 0 : index
    %c0_9 = arith.constant 0 : index
    %9 = vector.load %arg5[%c0_8, %c0_9] : memref<1x256xf32, #tpu.memory_space<vmem>>, vector<1x256xf32>
    %10 = vector.broadcast %9 : vector<1x256xf32> to vector<8x256xf32>
    %11 = arith.addf %8, %10 : vector<8x256xf32>
    %12 = arith.truncf %11 : vector<8x256xf32> to vector<8x256xbf16>
    %c0_10 = arith.constant 0 : index
    %c0_11 = arith.constant 0 : index
    %13 = vector.load %arg6[%c0_10, %c0_11] : memref<256x256xbf16, #tpu.memory_space<vmem>>, vector<256x256xbf16>
    %cst_12 = arith.constant dense<0.000000e+00> : vector<8x256xf32>
    %14 = tpu.matmul %12, %13, %cst_12 {dimension_numbers = #tpu.dot_dimension_numbers<[1], [0], [0], [1], [0, 0, 1, 1], [], []>} : vector<8x256xbf16>, vector<256x256xbf16>, vector<8x256xf32> -> vector<8x256xf32>
    %c0_13 = arith.constant 0 : index
    %c0_14 = arith.constant 0 : index
    %15 = vector.load %arg7[%c0_13, %c0_14] : memref<1x256xf32, #tpu.memory_space<vmem>>, vector<1x256xf32>
    %16 = vector.broadcast %15 : vector<1x256xf32> to vector<8x256xf32>
    %17 = arith.addf %14, %16 : vector<8x256xf32>
    %18 = arith.truncf %17 : vector<8x256xf32> to vector<8x256xbf16>
    %c0_15 = arith.constant 0 : index
    %c0_16 = arith.constant 0 : index
    %19 = vector.load %arg8[%c0_15, %c0_16] : memref<8x256xbf16, #tpu.memory_space<vmem>>, vector<8x256xbf16>
    tpu.vector_store %arg8[%c0_15, %c0_16], %18 {strides = array<i32>} : memref<8x256xbf16, #tpu.memory_space<vmem>>, vector<8x256xbf16>,
    return
  }
  func.func @transform_0(%arg0: i32) -> (i32, i32) {
    %c0_i32 = arith.constant 0 : i32
    %c0_i32_0 = arith.constant 0 : i32
    return %arg0, %c0_i32 : i32, i32
  }
  func.func @transform_1(%arg0: i32) -> (i32, i32) {
    %c0_i32 = arith.constant 0 : i32
    %c0_i32_0 = arith.constant 0 : i32
    %c0_i32_1 = arith.constant 0 : i32
    return %c0_i32, %c0_i32_0 : i32, i32
  }
  func.func @transform_2(%arg0: i32) -> (i32, i32) {
    %c0_i32 = arith.constant 0 : i32
    %c0_i32_0 = arith.constant 0 : i32
    %c0_i32_1 = arith.constant 0 : i32
    return %c0_i32, %c0_i32_0 : i32, i32
  }
  func.func @transform_3(%arg0: i32) -> (i32, i32) {
    %c0_i32 = arith.constant 0 : i32
    %c0_i32_0 = arith.constant 0 : i32
    %c0_i32_1 = arith.constant 0 : i32
    return %c0_i32, %c0_i32_0 : i32, i32
  }
  func.func @transform_4(%arg0: i32) -> (i32, i32) {
    %c0_i32 = arith.constant 0 : i32
    %c0_i32_0 = arith.constant 0 : i32
    %c0_i32_1 = arith.constant 0 : i32
    return %c0_i32, %c0_i32_0 : i32, i32
  }
  func.func @transform_5(%arg0: i32) -> (i32, i32) {
    %c0_i32 = arith.constant 0 : i32
    %c0_i32_0 = arith.constant 0 : i32
    %c0_i32_1 = arith.constant 0 : i32
    return %c0_i32, %c0_i32_0 : i32, i32
  }
  func.func @transform_6(%arg0: i32) -> (i32, i32) {
    %c0_i32 = arith.constant 0 : i32
    %c0_i32_0 = arith.constant 0 : i32
    %c0_i32_1 = arith.constant 0 : i32
    return %c0_i32, %c0_i32_0 : i32, i32
  }
  func.func @transform_7(%arg0: i32) -> (i32, i32) {
    %c0_i32 = arith.constant 0 : i32
    %c0_i32_0 = arith.constant 0 : i32
    return %arg0, %c0_i32 : i32, i32
  }
}

module attributes {stable_mosaic.version = 11 : i64} {
  func.func @kernel(%arg0: i32, %arg1: i32, %arg2: memref<1x19x256xbf16, #tpu.memory_space<vmem>>, %arg3: memref<16x256x128xbf16, #tpu.memory_space<vmem>>, %arg4: memref<1x128xf32, #tpu.memory_space<vmem>>, %arg5: memref<1x128xf32, #tpu.memory_space<vmem>>, %arg6: memref<1x4x128xf32, #tpu.memory_space<vmem>>) attributes {dimension_semantics = [#tpu.dimension_semantics<parallel>, #tpu.dimension_semantics<parallel>], iteration_bounds = array<i64: 2, 1>, scalar_prefetch = 0 : i64, scratch_operands = 0 : i64, tpu.core_type = #tpu.core_type<tc>, window_params = [{transform_indices = @transform_0, window_bounds = array<i64: 1, 19, 256>}, {transform_indices = @transform_1, window_bounds = array<i64: 16, 256, 128>}, {transform_indices = @transform_2, window_bounds = array<i64: 1, 128>}, {transform_indices = @transform_3, window_bounds = array<i64: 1, 128>}, {transform_indices = @transform_4, window_bounds = array<i64: 1, 4, 128>}]} {
    %c0 = arith.constant 0 : index
    %c0_0 = arith.constant 0 : index
    %c0_1 = arith.constant 0 : index
    %0 = vector.load %arg2[%c0, %c0_0, %c0_1] : memref<1x19x256xbf16, #tpu.memory_space<vmem>>, vector<1x4x256xbf16>
    %1 = vector.shape_cast %0 : vector<1x4x256xbf16> to vector<4x256xbf16>
    %c0_2 = arith.constant 0 : index
    %c0_3 = arith.constant 0 : index
    %c0_4 = arith.constant 0 : index
    %2 = vector.load %arg3[%c0_2, %c0_3, %c0_4] : memref<16x256x128xbf16, #tpu.memory_space<vmem>>, vector<1x256x128xbf16>
    %3 = vector.shape_cast %2 : vector<1x256x128xbf16> to vector<256x128xbf16>
    %cst = arith.constant dense<0.000000e+00> : vector<4x128xf32>
    %4 = tpu.matmul %1, %3, %cst {dimension_numbers = #tpu.dot_dimension_numbers<[1], [0], [0], [1], [0, 0, 1, 1], [], []>} : vector<4x256xbf16>, vector<256x128xbf16>, vector<4x128xf32> -> vector<4x128xf32>
    %c0_5 = arith.constant 0 : index
    %c1 = arith.constant 1 : index
    %c0_6 = arith.constant 0 : index
    %5 = vector.load %arg2[%c0_5, %c1, %c0_6] : memref<1x19x256xbf16, #tpu.memory_space<vmem>>, vector<1x4x256xbf16>
    %6 = vector.shape_cast %5 : vector<1x4x256xbf16> to vector<4x256xbf16>
    %c1_7 = arith.constant 1 : index
    %c0_8 = arith.constant 0 : index
    %c0_9 = arith.constant 0 : index
    %7 = vector.load %arg3[%c1_7, %c0_8, %c0_9] : memref<16x256x128xbf16, #tpu.memory_space<vmem>>, vector<1x256x128xbf16>
    %8 = vector.shape_cast %7 : vector<1x256x128xbf16> to vector<256x128xbf16>
    %cst_10 = arith.constant dense<0.000000e+00> : vector<4x128xf32>
    %9 = tpu.matmul %6, %8, %cst_10 {dimension_numbers = #tpu.dot_dimension_numbers<[1], [0], [0], [1], [0, 0, 1, 1], [], []>} : vector<4x256xbf16>, vector<256x128xbf16>, vector<4x128xf32> -> vector<4x128xf32>
    %10 = arith.addf %4, %9 : vector<4x128xf32>
    %c0_11 = arith.constant 0 : index
    %c2 = arith.constant 2 : index
    %c0_12 = arith.constant 0 : index
    %11 = vector.load %arg2[%c0_11, %c2, %c0_12] : memref<1x19x256xbf16, #tpu.memory_space<vmem>>, vector<1x4x256xbf16>
    %12 = vector.shape_cast %11 : vector<1x4x256xbf16> to vector<4x256xbf16>
    %c2_13 = arith.constant 2 : index
    %c0_14 = arith.constant 0 : index
    %c0_15 = arith.constant 0 : index
    %13 = vector.load %arg3[%c2_13, %c0_14, %c0_15] : memref<16x256x128xbf16, #tpu.memory_space<vmem>>, vector<1x256x128xbf16>
    %14 = vector.shape_cast %13 : vector<1x256x128xbf16> to vector<256x128xbf16>
    %cst_16 = arith.constant dense<0.000000e+00> : vector<4x128xf32>
    %15 = tpu.matmul %12, %14, %cst_16 {dimension_numbers = #tpu.dot_dimension_numbers<[1], [0], [0], [1], [0, 0, 1, 1], [], []>} : vector<4x256xbf16>, vector<256x128xbf16>, vector<4x128xf32> -> vector<4x128xf32>
    %16 = arith.addf %10, %15 : vector<4x128xf32>
    %c0_17 = arith.constant 0 : index
    %c3 = arith.constant 3 : index
    %c0_18 = arith.constant 0 : index
    %17 = vector.load %arg2[%c0_17, %c3, %c0_18] : memref<1x19x256xbf16, #tpu.memory_space<vmem>>, vector<1x4x256xbf16>
    %18 = vector.shape_cast %17 : vector<1x4x256xbf16> to vector<4x256xbf16>
    %c3_19 = arith.constant 3 : index
    %c0_20 = arith.constant 0 : index
    %c0_21 = arith.constant 0 : index
    %19 = vector.load %arg3[%c3_19, %c0_20, %c0_21] : memref<16x256x128xbf16, #tpu.memory_space<vmem>>, vector<1x256x128xbf16>
    %20 = vector.shape_cast %19 : vector<1x256x128xbf16> to vector<256x128xbf16>
    %cst_22 = arith.constant dense<0.000000e+00> : vector<4x128xf32>
    %21 = tpu.matmul %18, %20, %cst_22 {dimension_numbers = #tpu.dot_dimension_numbers<[1], [0], [0], [1], [0, 0, 1, 1], [], []>} : vector<4x256xbf16>, vector<256x128xbf16>, vector<4x128xf32> -> vector<4x128xf32>
    %22 = arith.addf %16, %21 : vector<4x128xf32>
    %c0_23 = arith.constant 0 : index
    %c4 = arith.constant 4 : index
    %c0_24 = arith.constant 0 : index
    %23 = vector.load %arg2[%c0_23, %c4, %c0_24] : memref<1x19x256xbf16, #tpu.memory_space<vmem>>, vector<1x4x256xbf16>
    %24 = vector.shape_cast %23 : vector<1x4x256xbf16> to vector<4x256xbf16>
    %c4_25 = arith.constant 4 : index
    %c0_26 = arith.constant 0 : index
    %c0_27 = arith.constant 0 : index
    %25 = vector.load %arg3[%c4_25, %c0_26, %c0_27] : memref<16x256x128xbf16, #tpu.memory_space<vmem>>, vector<1x256x128xbf16>
    %26 = vector.shape_cast %25 : vector<1x256x128xbf16> to vector<256x128xbf16>
    %cst_28 = arith.constant dense<0.000000e+00> : vector<4x128xf32>
    %27 = tpu.matmul %24, %26, %cst_28 {dimension_numbers = #tpu.dot_dimension_numbers<[1], [0], [0], [1], [0, 0, 1, 1], [], []>} : vector<4x256xbf16>, vector<256x128xbf16>, vector<4x128xf32> -> vector<4x128xf32>
    %28 = arith.addf %22, %27 : vector<4x128xf32>
    %c0_29 = arith.constant 0 : index
    %c5 = arith.constant 5 : index
    %c0_30 = arith.constant 0 : index
    %29 = vector.load %arg2[%c0_29, %c5, %c0_30] : memref<1x19x256xbf16, #tpu.memory_space<vmem>>, vector<1x4x256xbf16>
    %30 = vector.shape_cast %29 : vector<1x4x256xbf16> to vector<4x256xbf16>
    %c5_31 = arith.constant 5 : index
    %c0_32 = arith.constant 0 : index
    %c0_33 = arith.constant 0 : index
    %31 = vector.load %arg3[%c5_31, %c0_32, %c0_33] : memref<16x256x128xbf16, #tpu.memory_space<vmem>>, vector<1x256x128xbf16>
    %32 = vector.shape_cast %31 : vector<1x256x128xbf16> to vector<256x128xbf16>
    %cst_34 = arith.constant dense<0.000000e+00> : vector<4x128xf32>
    %33 = tpu.matmul %30, %32, %cst_34 {dimension_numbers = #tpu.dot_dimension_numbers<[1], [0], [0], [1], [0, 0, 1, 1], [], []>} : vector<4x256xbf16>, vector<256x128xbf16>, vector<4x128xf32> -> vector<4x128xf32>
    %34 = arith.addf %28, %33 : vector<4x128xf32>
    %c0_35 = arith.constant 0 : index
    %c6 = arith.constant 6 : index
    %c0_36 = arith.constant 0 : index
    %35 = vector.load %arg2[%c0_35, %c6, %c0_36] : memref<1x19x256xbf16, #tpu.memory_space<vmem>>, vector<1x4x256xbf16>
    %36 = vector.shape_cast %35 : vector<1x4x256xbf16> to vector<4x256xbf16>
    %c6_37 = arith.constant 6 : index
    %c0_38 = arith.constant 0 : index
    %c0_39 = arith.constant 0 : index
    %37 = vector.load %arg3[%c6_37, %c0_38, %c0_39] : memref<16x256x128xbf16, #tpu.memory_space<vmem>>, vector<1x256x128xbf16>
    %38 = vector.shape_cast %37 : vector<1x256x128xbf16> to vector<256x128xbf16>
    %cst_40 = arith.constant dense<0.000000e+00> : vector<4x128xf32>
    %39 = tpu.matmul %36, %38, %cst_40 {dimension_numbers = #tpu.dot_dimension_numbers<[1], [0], [0], [1], [0, 0, 1, 1], [], []>} : vector<4x256xbf16>, vector<256x128xbf16>, vector<4x128xf32> -> vector<4x128xf32>
    %40 = arith.addf %34, %39 : vector<4x128xf32>
    %c0_41 = arith.constant 0 : index
    %c7 = arith.constant 7 : index
    %c0_42 = arith.constant 0 : index
    %41 = vector.load %arg2[%c0_41, %c7, %c0_42] : memref<1x19x256xbf16, #tpu.memory_space<vmem>>, vector<1x4x256xbf16>
    %42 = vector.shape_cast %41 : vector<1x4x256xbf16> to vector<4x256xbf16>
    %c7_43 = arith.constant 7 : index
    %c0_44 = arith.constant 0 : index
    %c0_45 = arith.constant 0 : index
    %43 = vector.load %arg3[%c7_43, %c0_44, %c0_45] : memref<16x256x128xbf16, #tpu.memory_space<vmem>>, vector<1x256x128xbf16>
    %44 = vector.shape_cast %43 : vector<1x256x128xbf16> to vector<256x128xbf16>
    %cst_46 = arith.constant dense<0.000000e+00> : vector<4x128xf32>
    %45 = tpu.matmul %42, %44, %cst_46 {dimension_numbers = #tpu.dot_dimension_numbers<[1], [0], [0], [1], [0, 0, 1, 1], [], []>} : vector<4x256xbf16>, vector<256x128xbf16>, vector<4x128xf32> -> vector<4x128xf32>
    %46 = arith.addf %40, %45 : vector<4x128xf32>
    %c0_47 = arith.constant 0 : index
    %c8 = arith.constant 8 : index
    %c0_48 = arith.constant 0 : index
    %47 = vector.load %arg2[%c0_47, %c8, %c0_48] : memref<1x19x256xbf16, #tpu.memory_space<vmem>>, vector<1x4x256xbf16>
    %48 = vector.shape_cast %47 : vector<1x4x256xbf16> to vector<4x256xbf16>
    %c8_49 = arith.constant 8 : index
    %c0_50 = arith.constant 0 : index
    %c0_51 = arith.constant 0 : index
    %49 = vector.load %arg3[%c8_49, %c0_50, %c0_51] : memref<16x256x128xbf16, #tpu.memory_space<vmem>>, vector<1x256x128xbf16>
    %50 = vector.shape_cast %49 : vector<1x256x128xbf16> to vector<256x128xbf16>
    %cst_52 = arith.constant dense<0.000000e+00> : vector<4x128xf32>
    %51 = tpu.matmul %48, %50, %cst_52 {dimension_numbers = #tpu.dot_dimension_numbers<[1], [0], [0], [1], [0, 0, 1, 1], [], []>} : vector<4x256xbf16>, vector<256x128xbf16>, vector<4x128xf32> -> vector<4x128xf32>
    %52 = arith.addf %46, %51 : vector<4x128xf32>
    %c0_53 = arith.constant 0 : index
    %c9 = arith.constant 9 : index
    %c0_54 = arith.constant 0 : index
    %53 = vector.load %arg2[%c0_53, %c9, %c0_54] : memref<1x19x256xbf16, #tpu.memory_space<vmem>>, vector<1x4x256xbf16>
    %54 = vector.shape_cast %53 : vector<1x4x256xbf16> to vector<4x256xbf16>
    %c9_55 = arith.constant 9 : index
    %c0_56 = arith.constant 0 : index
    %c0_57 = arith.constant 0 : index
    %55 = vector.load %arg3[%c9_55, %c0_56, %c0_57] : memref<16x256x128xbf16, #tpu.memory_space<vmem>>, vector<1x256x128xbf16>
    %56 = vector.shape_cast %55 : vector<1x256x128xbf16> to vector<256x128xbf16>
    %cst_58 = arith.constant dense<0.000000e+00> : vector<4x128xf32>
    %57 = tpu.matmul %54, %56, %cst_58 {dimension_numbers = #tpu.dot_dimension_numbers<[1], [0], [0], [1], [0, 0, 1, 1], [], []>} : vector<4x256xbf16>, vector<256x128xbf16>, vector<4x128xf32> -> vector<4x128xf32>
    %58 = arith.addf %52, %57 : vector<4x128xf32>
    %c0_59 = arith.constant 0 : index
    %c10 = arith.constant 10 : index
    %c0_60 = arith.constant 0 : index
    %59 = vector.load %arg2[%c0_59, %c10, %c0_60] : memref<1x19x256xbf16, #tpu.memory_space<vmem>>, vector<1x4x256xbf16>
    %60 = vector.shape_cast %59 : vector<1x4x256xbf16> to vector<4x256xbf16>
    %c10_61 = arith.constant 10 : index
    %c0_62 = arith.constant 0 : index
    %c0_63 = arith.constant 0 : index
    %61 = vector.load %arg3[%c10_61, %c0_62, %c0_63] : memref<16x256x128xbf16, #tpu.memory_space<vmem>>, vector<1x256x128xbf16>
    %62 = vector.shape_cast %61 : vector<1x256x128xbf16> to vector<256x128xbf16>
    %cst_64 = arith.constant dense<0.000000e+00> : vector<4x128xf32>
    %63 = tpu.matmul %60, %62, %cst_64 {dimension_numbers = #tpu.dot_dimension_numbers<[1], [0], [0], [1], [0, 0, 1, 1], [], []>} : vector<4x256xbf16>, vector<256x128xbf16>, vector<4x128xf32> -> vector<4x128xf32>
    %64 = arith.addf %58, %63 : vector<4x128xf32>
    %c0_65 = arith.constant 0 : index
    %c11 = arith.constant 11 : index
    %c0_66 = arith.constant 0 : index
    %65 = vector.load %arg2[%c0_65, %c11, %c0_66] : memref<1x19x256xbf16, #tpu.memory_space<vmem>>, vector<1x4x256xbf16>
    %66 = vector.shape_cast %65 : vector<1x4x256xbf16> to vector<4x256xbf16>
    %c11_67 = arith.constant 11 : index
    %c0_68 = arith.constant 0 : index
    %c0_69 = arith.constant 0 : index
    %67 = vector.load %arg3[%c11_67, %c0_68, %c0_69] : memref<16x256x128xbf16, #tpu.memory_space<vmem>>, vector<1x256x128xbf16>
    %68 = vector.shape_cast %67 : vector<1x256x128xbf16> to vector<256x128xbf16>
    %cst_70 = arith.constant dense<0.000000e+00> : vector<4x128xf32>
    %69 = tpu.matmul %66, %68, %cst_70 {dimension_numbers = #tpu.dot_dimension_numbers<[1], [0], [0], [1], [0, 0, 1, 1], [], []>} : vector<4x256xbf16>, vector<256x128xbf16>, vector<4x128xf32> -> vector<4x128xf32>
    %70 = arith.addf %64, %69 : vector<4x128xf32>
    %c0_71 = arith.constant 0 : index
    %c12 = arith.constant 12 : index
    %c0_72 = arith.constant 0 : index
    %71 = vector.load %arg2[%c0_71, %c12, %c0_72] : memref<1x19x256xbf16, #tpu.memory_space<vmem>>, vector<1x4x256xbf16>
    %72 = vector.shape_cast %71 : vector<1x4x256xbf16> to vector<4x256xbf16>
    %c12_73 = arith.constant 12 : index
    %c0_74 = arith.constant 0 : index
    %c0_75 = arith.constant 0 : index
    %73 = vector.load %arg3[%c12_73, %c0_74, %c0_75] : memref<16x256x128xbf16, #tpu.memory_space<vmem>>, vector<1x256x128xbf16>
    %74 = vector.shape_cast %73 : vector<1x256x128xbf16> to vector<256x128xbf16>
    %cst_76 = arith.constant dense<0.000000e+00> : vector<4x128xf32>
    %75 = tpu.matmul %72, %74, %cst_76 {dimension_numbers = #tpu.dot_dimension_numbers<[1], [0], [0], [1], [0, 0, 1, 1], [], []>} : vector<4x256xbf16>, vector<256x128xbf16>, vector<4x128xf32> -> vector<4x128xf32>
    %76 = arith.addf %70, %75 : vector<4x128xf32>
    %c0_77 = arith.constant 0 : index
    %c13 = arith.constant 13 : index
    %c0_78 = arith.constant 0 : index
    %77 = vector.load %arg2[%c0_77, %c13, %c0_78] : memref<1x19x256xbf16, #tpu.memory_space<vmem>>, vector<1x4x256xbf16>
    %78 = vector.shape_cast %77 : vector<1x4x256xbf16> to vector<4x256xbf16>
    %c13_79 = arith.constant 13 : index
    %c0_80 = arith.constant 0 : index
    %c0_81 = arith.constant 0 : index
    %79 = vector.load %arg3[%c13_79, %c0_80, %c0_81] : memref<16x256x128xbf16, #tpu.memory_space<vmem>>, vector<1x256x128xbf16>
    %80 = vector.shape_cast %79 : vector<1x256x128xbf16> to vector<256x128xbf16>
    %cst_82 = arith.constant dense<0.000000e+00> : vector<4x128xf32>
    %81 = tpu.matmul %78, %80, %cst_82 {dimension_numbers = #tpu.dot_dimension_numbers<[1], [0], [0], [1], [0, 0, 1, 1], [], []>} : vector<4x256xbf16>, vector<256x128xbf16>, vector<4x128xf32> -> vector<4x128xf32>
    %82 = arith.addf %76, %81 : vector<4x128xf32>
    %c0_83 = arith.constant 0 : index
    %c14 = arith.constant 14 : index
    %c0_84 = arith.constant 0 : index
    %83 = vector.load %arg2[%c0_83, %c14, %c0_84] : memref<1x19x256xbf16, #tpu.memory_space<vmem>>, vector<1x4x256xbf16>
    %84 = vector.shape_cast %83 : vector<1x4x256xbf16> to vector<4x256xbf16>
    %c14_85 = arith.constant 14 : index
    %c0_86 = arith.constant 0 : index
    %c0_87 = arith.constant 0 : index
    %85 = vector.load %arg3[%c14_85, %c0_86, %c0_87] : memref<16x256x128xbf16, #tpu.memory_space<vmem>>, vector<1x256x128xbf16>
    %86 = vector.shape_cast %85 : vector<1x256x128xbf16> to vector<256x128xbf16>
    %cst_88 = arith.constant dense<0.000000e+00> : vector<4x128xf32>
    %87 = tpu.matmul %84, %86, %cst_88 {dimension_numbers = #tpu.dot_dimension_numbers<[1], [0], [0], [1], [0, 0, 1, 1], [], []>} : vector<4x256xbf16>, vector<256x128xbf16>, vector<4x128xf32> -> vector<4x128xf32>
    %88 = arith.addf %82, %87 : vector<4x128xf32>
    %c0_89 = arith.constant 0 : index
    %c15 = arith.constant 15 : index
    %c0_90 = arith.constant 0 : index
    %89 = vector.load %arg2[%c0_89, %c15, %c0_90] : memref<1x19x256xbf16, #tpu.memory_space<vmem>>, vector<1x4x256xbf16>
    %90 = vector.shape_cast %89 : vector<1x4x256xbf16> to vector<4x256xbf16>
    %c15_91 = arith.constant 15 : index
    %c0_92 = arith.constant 0 : index
    %c0_93 = arith.constant 0 : index
    %91 = vector.load %arg3[%c15_91, %c0_92, %c0_93] : memref<16x256x128xbf16, #tpu.memory_space<vmem>>, vector<1x256x128xbf16>
    %92 = vector.shape_cast %91 : vector<1x256x128xbf16> to vector<256x128xbf16>
    %cst_94 = arith.constant dense<0.000000e+00> : vector<4x128xf32>
    %93 = tpu.matmul %90, %92, %cst_94 {dimension_numbers = #tpu.dot_dimension_numbers<[1], [0], [0], [1], [0, 0, 1, 1], [], []>} : vector<4x256xbf16>, vector<256x128xbf16>, vector<4x128xf32> -> vector<4x128xf32>
    %94 = arith.addf %88, %93 : vector<4x128xf32>
    %c0_95 = arith.constant 0 : index
    %c0_96 = arith.constant 0 : index
    %95 = vector.load %arg4[%c0_95, %c0_96] : memref<1x128xf32, #tpu.memory_space<vmem>>, vector<1x128xf32>
    %96 = vector.broadcast %95 : vector<1x128xf32> to vector<4x128xf32>
    %97 = arith.mulf %94, %96 : vector<4x128xf32>
    %c0_97 = arith.constant 0 : index
    %c0_98 = arith.constant 0 : index
    %98 = vector.load %arg5[%c0_97, %c0_98] : memref<1x128xf32, #tpu.memory_space<vmem>>, vector<1x128xf32>
    %99 = vector.broadcast %98 : vector<1x128xf32> to vector<4x128xf32>
    %100 = arith.addf %97, %99 : vector<4x128xf32>
    %c0_99 = arith.constant 0 : index
    %c0_100 = arith.constant 0 : index
    %c0_101 = arith.constant 0 : index
    %101 = vector.load %arg6[%c0_99, %c0_100, %c0_101] : memref<1x4x128xf32, #tpu.memory_space<vmem>>, vector<1x4x128xf32>
    %102 = vector.shape_cast %101 : vector<1x4x128xf32> to vector<4x128xf32>
    %103 = vector.shape_cast %100 : vector<4x128xf32> to vector<1x4x128xf32>
    tpu.vector_store %arg6[%c0_99, %c0_100, %c0_101], %103 {strides = array<i32>} : memref<1x4x128xf32, #tpu.memory_space<vmem>>, vector<1x4x128xf32>,
    return
  }
  func.func @transform_0(%arg0: i32, %arg1: i32) -> (i32, i32, i32) {
    %c0_i32 = arith.constant 0 : i32
    %c0_i32_0 = arith.constant 0 : i32
    %c0_i32_1 = arith.constant 0 : i32
    return %arg0, %c0_i32, %c0_i32_0 : i32, i32, i32
  }
  func.func @transform_1(%arg0: i32, %arg1: i32) -> (i32, i32, i32) {
    %c0_i32 = arith.constant 0 : i32
    %c0_i32_0 = arith.constant 0 : i32
    %c0_i32_1 = arith.constant 0 : i32
    return %c0_i32, %c0_i32_0, %arg1 : i32, i32, i32
  }
  func.func @transform_2(%arg0: i32, %arg1: i32) -> (i32, i32) {
    %c0_i32 = arith.constant 0 : i32
    %c0_i32_0 = arith.constant 0 : i32
    return %c0_i32, %arg1 : i32, i32
  }
  func.func @transform_3(%arg0: i32, %arg1: i32) -> (i32, i32) {
    %c0_i32 = arith.constant 0 : i32
    %c0_i32_0 = arith.constant 0 : i32
    return %c0_i32, %arg1 : i32, i32
  }
  func.func @transform_4(%arg0: i32, %arg1: i32) -> (i32, i32, i32) {
    %c0_i32 = arith.constant 0 : i32
    %c0_i32_0 = arith.constant 0 : i32
    return %arg0, %c0_i32, %arg1 : i32, i32, i32
  }
}

</mosaic_0001>

<llo_original>
// kernel: patch_discriminator_with_sed.6
$region0: #{patch_discriminator_with_sed.6}
  #allocation0 [shape = 'u32[]', space=smem, size = 0x4, offset = 0x4, fixed_abs, tag = 'smem constant byte address 0x4 - core index']
  #allocation1 [shape = 'u32[144,128]{1,0:T(1,128)}', space=vmem, size = 0x12000, scoped, tag = 'internal scratch']
  %s0 = inlined_call_operand.vmem [shape: bf16[2,290,12], index: 0, kind: input, shape index: {}]
  %s1 = inlined_call_operand.vmem [shape: bf16[4,12,128], index: 1, kind: input, shape index: {}]
  %s2 = inlined_call_operand.vmem [shape: f32[1,128], index: 2, kind: input, shape index: {}]
  %s3 = inlined_call_operand.vmem [shape: f32[1,128], index: 3, kind: input, shape index: {}]
  %s4 = inlined_call_operand.vmem [shape: bf16[2,272,128], index: 4, kind: output, shape index: {}]
  %s5 = sld [smem:[#allocation0]]
  $region49: #{patch_discriminator_with_sed.6} parent=0
    _
  %s7 = ssub.s32 1, %s5
  %s8 = scalar_select 0, %s7, %s5
  loop: start=0, step=1, limit=4
  $region2: #{patch_discriminator_with_sed.6} parent=0 // loop_pre_header
    _
  $region3: #{patch_discriminator_with_sed.6} parent=0 // loop_header
    %s10 = sphi 0, %s14
    %p11 = scmp.ge.s32.totalorder %s10, 4
    %s17 = sphi 0, %s29
    %s18 = sphi 0, %s25
    %s19 = sphi 0, %s17
    %s20 = sphi 0, %s18
    %s21 = sphi 0, %s19
    %s22 = sphi 0, %s20
    %s32 = sphi 0, %s34
    %s35 = sphi 0, %s32
    %s36 = sphi 0, %s35
    %s52 = sphi 0, %s36
    %s58 = sphi 0, %s60
    %s61 = sphi 0, %s58
    %s62 = sphi 0, %s61
    %s78 = sphi 0, %s62
    %s84 = sphi 0, %s86
    %s87 = sphi 0, %s84
    %s88 = sphi 0, %s87
    %s104 = sphi 0, %s88
    %s110 = sphi 0, %s112
    %s113 = sphi 0, %s110
    %s114 = sphi 0, %s113
    %s130 = sphi 0, %s114
    %s138 = sphi 0, %s140
    %s141 = sphi 0, %s138
    %s142 = sphi 0, %s141
    %s158 = sphi 0, %s142
  $region4: #{patch_discriminator_with_sed.6} parent=0 // loop_header_branch
    %13 = sbr.rel (%p11) target = $region8
  $region5: #{patch_discriminator_with_sed.6} parent=0 // loop_body
    %s15 = ssub.s32 %s10, 1
    %s16 = ssub.s32 %s10, 2
    %s23 = sadd.s32 1, %s18
    %p24 = scmp.ge.s32.totalorder %s23, 1
    %s25 = scalar_select %p24, 0, %s23
    %s26 = sadd.s32 1, %s17
    %s27 = scalar_select %p24, %s26, %s17
    %p28 = scmp.ge.s32.totalorder %s27, 2
    %s29 = scalar_select %p28, 0, %s27
    %s30 = ssub.s32 %s17, %s29
    %p31 = scmp.eq.s32.totalorder %s30, 0
    %s33 = sadd.s32 %s32, 1
    %s34 = scalar_select %p31, %s32, %s33
    %p37 = pneg %p31
    %p38 = scmp.eq.s32.totalorder %s10, 1
    %p39 = por %p37, %p38
    %p40 = scmp.ne.s32.totalorder %s32, %s35
    %p41 = scmp.eq.s32.totalorder %s10, 0
    %p42 = por %p40, %p41
    %p43 = scmp.ne.s32.totalorder %s32, %s35
    %p44 = scmp.eq.s32.totalorder %s15, 1
    %p45 = por %p43, %p44
    %p46 = scmp.ne.s32.totalorder %s35, %s36
    %p47 = scmp.eq.s32.totalorder %s15, 0
    %p48 = por %p46, %p47
    %p49 = scmp.ne.s32.totalorder %s35, %s36
    %p50 = scmp.eq.s32.totalorder %s16, 1
    %p51 = por %p49, %p50
    %p53 = scmp.ne.s32.totalorder %s36, %s52
    %p54 = scmp.eq.s32.totalorder %s16, 0
    %p55 = por %p53, %p54
    %s56 = ssub.s32 %s18, %s25
    %p57 = scmp.eq.s32.totalorder %s56, 0
    %s59 = sadd.s32 %s58, 1
    %s60 = scalar_select %p57, %s58, %s59
    %p63 = pneg %p57
    %p64 = scmp.eq.s32.totalorder %s10, 1
    %p65 = por %p63, %p64
    %p66 = scmp.ne.s32.totalorder %s58, %s61
    %p67 = scmp.eq.s32.totalorder %s10, 0
    %p68 = por %p66, %p67
    %p69 = scmp.ne.s32.totalorder %s58, %s61
    %p70 = scmp.eq.s32.totalorder %s15, 1
    %p71 = por %p69, %p70
    %p72 = scmp.ne.s32.totalorder %s61, %s62
    %p73 = scmp.eq.s32.totalorder %s15, 0
    %p74 = por %p72, %p73
    %p75 = scmp.ne.s32.totalorder %s61, %s62
    %p76 = scmp.eq.s32.totalorder %s16, 1
    %p77 = por %p75, %p76
    %p79 = scmp.ne.s32.totalorder %s62, %s78
    %p80 = scmp.eq.s32.totalorder %s16, 0
    %p81 = por %p79, %p80
    %s82 = ssub.s32 %s18, %s25
    %p83 = scmp.eq.s32.totalorder %s82, 0
    %s85 = sadd.s32 %s84, 1
    %s86 = scalar_select %p83, %s84, %s85
    %p89 = pneg %p83
    %p90 = scmp.eq.s32.totalorder %s10, 1
    %p91 = por %p89, %p90
    %p92 = scmp.ne.s32.totalorder %s84, %s87
    %p93 = scmp.eq.s32.totalorder %s10, 0
    %p94 = por %p92, %p93
    %p95 = scmp.ne.s32.totalorder %s84, %s87
    %p96 = scmp.eq.s32.totalorder %s15, 1
    %p97 = por %p95, %p96
    %p98 = scmp.ne.s32.totalorder %s87, %s88
    %p99 = scmp.eq.s32.totalorder %s15, 0
    %p100 = por %p98, %p99
    %p101 = scmp.ne.s32.totalorder %s87, %s88
    %p102 = scmp.eq.s32.totalorder %s16, 1
    %p103 = por %p101, %p102
    %p105 = scmp.ne.s32.totalorder %s88, %s104
    %p106 = scmp.eq.s32.totalorder %s16, 0
    %p107 = por %p105, %p106
    %s108 = ssub.s32 %s18, %s25
    %p109 = scmp.eq.s32.totalorder %s108, 0
    %s111 = sadd.s32 %s110, 1
    %s112 = scalar_select %p109, %s110, %s111
    %p115 = pneg %p109
    %p116 = scmp.eq.s32.totalorder %s10, 1
    %p117 = por %p115, %p116
    %p118 = scmp.ne.s32.totalorder %s110, %s113
    %p119 = scmp.eq.s32.totalorder %s10, 0
    %p120 = por %p118, %p119
    %p121 = scmp.ne.s32.totalorder %s110, %s113
    %p122 = scmp.eq.s32.totalorder %s15, 1
    %p123 = por %p121, %p122
    %p124 = scmp.ne.s32.totalorder %s113, %s114
    %p125 = scmp.eq.s32.totalorder %s15, 0
    %p126 = por %p124, %p125
    %p127 = scmp.ne.s32.totalorder %s113, %s114
    %p128 = scmp.eq.s32.totalorder %s16, 1
    %p129 = por %p127, %p128
    %p131 = scmp.ne.s32.totalorder %s114, %s130
    %p132 = scmp.eq.s32.totalorder %s16, 0
    %p133 = por %p131, %p132
    %s134 = ssub.s32 %s17, %s29
    %s135 = ssub.s32 %s18, %s25
    %s136 = sor.u32 %s134, %s135
    %p137 = scmp.eq.s32.totalorder %s136, 0
    %s139 = sadd.s32 %s138, 1
    %s140 = scalar_select %p137, %s138, %s139
    %p143 = pneg %p137
    %p144 = scmp.eq.s32.totalorder %s10, 1
    %p145 = por %p143, %p144
    %p146 = scmp.ne.s32.totalorder %s138, %s141
    %p147 = scmp.eq.s32.totalorder %s10, 0
    %p148 = por %p146, %p147
    %p149 = scmp.ne.s32.totalorder %s138, %s141
    %p150 = scmp.eq.s32.totalorder %s15, 1
    %p151 = por %p149, %p150
    %p152 = scmp.ne.s32.totalorder %s141, %s142
    %p153 = scmp.eq.s32.totalorder %s15, 0
    %p154 = por %p152, %p153
    %p155 = scmp.ne.s32.totalorder %s141, %s142
    %p156 = scmp.eq.s32.totalorder %s16, 1
    %p157 = por %p155, %p156
    %p159 = scmp.ne.s32.totalorder %s142, %s158
    %p160 = scmp.eq.s32.totalorder %s16, 0
    %p161 = por %p159, %p160
    %p162 = scmp.le.s32.totalorder 1, %s10
    %p163 = scmp.lt.s32.totalorder %s10, 3
    %p164 = pnand %p162, %p163
    %p165 = pneg %p164
    // Predicated region
    $region9: #{patch_discriminator_with_sed.6} parent=5 // pred_check
      _
    $region10: #{patch_discriminator_with_sed.6} parent=5 // pred_check_branch
      %167 = sbr.rel (%p164) target = $region12
    $region11: #{patch_discriminator_with_sed.6} parent=5 // pred_region
      %s168 = ssub.s32 %s10, 1
      // Predicated region
      $region13: #{patch_discriminator_with_sed.6} parent=11 // pred_check
        %p169 = pneg %p74
      $region14: #{patch_discriminator_with_sed.6} parent=11 // pred_check_branch
        %171 = sbr.rel (%p169) target = $region16
      $region15: #{patch_discriminator_with_sed.6} parent=11 // pred_region
        %p172 = scmp.lt.s32.totalorder %s20, 0
        %s173 = scalar_select %p172, %s20, 0
        %s174 = smul.addr %s173, 4
        %s175 = scalar_lea.vmem %s1, %s174
      $region16: #{patch_discriminator_with_sed.6} parent=11 // pred_fallthru
        _
      // Predicated region
      $region17: #{patch_discriminator_with_sed.6} parent=11 // pred_check
        %p176 = pneg %p100
      $region18: #{patch_discriminator_with_sed.6} parent=11 // pred_check_branch
        %178 = sbr.rel (%p176) target = $region20
      $region19: #{patch_discriminator_with_sed.6} parent=11 // pred_region
        %p179 = scmp.lt.s32.totalorder %s20, 0
        %s180 = scalar_select %p179, %s20, 0
        %s181 = scalar_lea.vmem %s2, %s180
      $region20: #{patch_discriminator_with_sed.6} parent=11 // pred_fallthru
        _
      // Predicated region
      $region21: #{patch_discriminator_with_sed.6} parent=11 // pred_check
        %p182 = pneg %p126
      $region22: #{patch_discriminator_with_sed.6} parent=11 // pred_check_branch
        %184 = sbr.rel (%p182) target = $region24
      $region23: #{patch_discriminator_with_sed.6} parent=11 // pred_region
        %p185 = scmp.lt.s32.totalorder %s20, 0
        %s186 = scalar_select %p185, %s20, 0
        %s187 = scalar_lea.vmem %s3, %s186
      $region24: #{patch_discriminator_with_sed.6} parent=11 // pred_fallthru
        _
    $region12: #{patch_discriminator_with_sed.6} parent=5 // pred_fallthru
      _
    %p188 = scmp.lt.s32.totalorder %s10, 2
    // Predicated region
    $region25: #{patch_discriminator_with_sed.6} parent=5 // pred_check
      %p189 = pneg %p188
    $region26: #{patch_discriminator_with_sed.6} parent=5 // pred_check_branch
      %191 = sbr.rel (%p189) target = $region28
    $region27: #{patch_discriminator_with_sed.6} parent=5 // pred_region
      // Predicated region
      $region29: #{patch_discriminator_with_sed.6} parent=27 // pred_check
        %p192 = pneg %p42
      $region30: #{patch_discriminator_with_sed.6} parent=27 // pred_check_branch
        %194 = sbr.rel (%p192) target = $region32
      $region31: #{patch_discriminator_with_sed.6} parent=27 // pred_region
        %p195 = scmp.lt.s32.totalorder %s17, 1
        %s196 = scalar_select %p195, %s17, 1
        %s197 = smul.addr %s196, 37
        %s198 = smul.addr %s197, 4
        %s199 = scalar_lea.vmem %s0, %s198
      $region32: #{patch_discriminator_with_sed.6} parent=27 // pred_fallthru
        _
    $region28: #{patch_discriminator_with_sed.6} parent=5 // pred_fallthru
      _
    %p200 = scmp.le.s32.totalorder 1, %s10
    %p201 = scmp.lt.s32.totalorder %s10, 3
    %p202 = pnand %p200, %p201
    %p203 = pneg %p202
    // Predicated region
    $region33: #{patch_discriminator_with_sed.6} parent=5 // pred_check
      _
    $region34: #{patch_discriminator_with_sed.6} parent=5 // pred_check_branch
      %205 = sbr.rel (%p202) target = $region36
    $region35: #{patch_discriminator_with_sed.6} parent=5 // pred_region
      %s206 = ssub.s32 %s10, 1
      %p207 = scmp.lt.s32.totalorder %s19, 1
      %s208 = scalar_select %p207, %s19, 1
      %s209 = smul.addr %s208, 37
      %s210 = smul.addr %s209, 4
      %s211 = scalar_lea.vmem %s0, %s210
      %p212 = pneg %p48
      %p213 = pneg %p45
      %p214 = scmp.lt.s32.totalorder %s20, 0
      %s215 = scalar_select %p214, %s20, 0
      %s216 = smul.addr %s215, 4
      %s217 = scalar_lea.vmem %s1, %s216
      %p218 = pneg %p74
      %p219 = pneg %p71
      %p220 = scmp.lt.s32.totalorder %s20, 0
      %s221 = scalar_select %p220, %s20, 0
      %s222 = scalar_lea.vmem %s2, %s221
      %p223 = pneg %p100
      %p224 = pneg %p97
      %p225 = scmp.lt.s32.totalorder %s20, 0
      %s226 = scalar_select %p225, %s20, 0
      %s227 = scalar_lea.vmem %s3, %s226
      %p228 = pneg %p126
      %p229 = pneg %p123
      %p230 = pneg %p154
      %p231 = pneg %p151
      %p232 = scmp.lt.s32.totalorder %s19, 1
      %s233 = scalar_select %p232, %s19, 1
      %p234 = scmp.lt.s32.totalorder %s20, 0
      %s235 = scalar_select %p234, %s20, 0
      %s236 = smul.addr %s233, 34
      %s237 = sadd.s32 %s235, %s236
      %s238 = smul.addr %s237, 4
      %s239 = scalar_lea.vmem %s4, %s238
      %p240 = scmp.lt.s32.totalorder %s19, 1
      %s241 = scalar_select %p240, %s19, 1
      %s242 = smul.addr %s241, 37
      %s243 = smul.addr %s242, 4
      %s244 = scalar_lea.vmem %s0, %s243
      %p245 = scmp.lt.s32.totalorder %s20, 0
      %s246 = scalar_select %p245, %s20, 0
      %s247 = smul.addr %s246, 4
      %s248 = scalar_lea.vmem %s1, %s247
      %p249 = scmp.lt.s32.totalorder %s20, 0
      %s250 = scalar_select %p249, %s20, 0
      %s251 = scalar_lea.vmem %s2, %s250
      %p252 = scmp.lt.s32.totalorder %s20, 0
      %s253 = scalar_select %p252, %s20, 0
      %s254 = scalar_lea.vmem %s3, %s253
      %p255 = scmp.lt.s32.totalorder %s19, 1
      %s256 = scalar_select %p255, %s19, 1
      %p257 = scmp.lt.s32.totalorder %s20, 0
      %s258 = scalar_select %p257, %s20, 0
      %s259 = smul.addr %s256, 34
      %s260 = sadd.s32 %s258, %s259
      %s261 = smul.addr %s260, 4
      %s262 = scalar_lea.vmem %s4, %s261
      %v264 = vld [vmem:[%s244] sm:$0xf]
      %v265 = vld [vmem:[%s244 + $0x4] sm:$0xf]
      %v266 = vld [vmem:[%s244 + $0x8] sm:$0xf]
      %v267 = vld [vmem:[%s244 + $0xc] sm:$0xf]
      %v268 = vld [vmem:[%s244 + $0x10] sm:$0xf]
      %v269 = vld [vmem:[%s244 + $0x14] sm:$0xf]
      %v270 = vld [vmem:[%s244 + $0x18] sm:$0xf]
      %v271 = vld [vmem:[%s244 + $0x1c] sm:$0xf]
      %v272 = vld [vmem:[%s244 + $0x20] sm:$0xf]
      %v273 = vld [vmem:[%s244 + $0x24] sm:$0xf]
      %v274 = vld [vmem:[%s244 + $0x28] sm:$0xf]
      %v275 = vld [vmem:[%s244 + $0x2c] sm:$0xf]
      %v276 = vld [vmem:[%s244 + $0x30] sm:$0xf]
      %v277 = vld [vmem:[%s244 + $0x34] sm:$0xf]
      %v278 = vld [vmem:[%s244 + $0x38] sm:$0xf]
      %v279 = vld [vmem:[%s244 + $0x3c] sm:$0xf]
      %v280 = vld [vmem:[%s244 + $0x40] sm:$0xf]
      %v281 = vld [vmem:[%s244 + $0x44] sm:$0xf]
      %v282 = vld [vmem:[%s244 + $0x48] sm:$0xf]
      %v283 = vld [vmem:[%s244 + $0x4c] sm:$0xf]
      %v284 = vld [vmem:[%s244 + $0x50] sm:$0xf]
      %v285 = vld [vmem:[%s244 + $0x54] sm:$0xf]
      %v286 = vld [vmem:[%s244 + $0x58] sm:$0xf]
      %v287 = vld [vmem:[%s244 + $0x5c] sm:$0xf]
      %v288 = vld [vmem:[%s244 + $0x60] sm:$0xf]
      %v289 = vld [vmem:[%s244 + $0x64] sm:$0xf]
      %v290 = vld [vmem:[%s244 + $0x68] sm:$0xf]
      %v291 = vld [vmem:[%s244 + $0x6c] sm:$0xf]
      %v292 = vld [vmem:[%s244 + $0x70] sm:$0xf]
      %v293 = vld [vmem:[%s244 + $0x74] sm:$0xf]
      %v294 = vld [vmem:[%s244 + $0x78] sm:$0xf]
      %v295 = vld [vmem:[%s244 + $0x7c] sm:$0xf]
      %v296 = vld [vmem:[%s244 + $0x80] sm:$0xf]
      %v297 = vld [vmem:[%s244 + $0x84] sm:$0xf]
      %v298 = vld [vmem:[%s248] sm:$0xf]
      %v299 = vld [vmem:[%s248 + $0x4] sm:$0x3]
      %v300 = vld [vmem:[%s244 + $0x88] sm:$0x1]
      %s301 = scalar_lea.vmem %s248, 8
      %v302 = vld [vmem:[%s301] sm:$0xf]
      %v303 = vld [vmem:[%s301 + $0x4] sm:$0x3]
      %v339 = vunpack.c.l.b16 %v264
      %v340 = vunpack.c.l.b16 %v265
      %v341 = vunpack.c.l.b16 %v266
      %v342 = vunpack.c.l.b16 %v267
      %v343 = vunpack.c.l.b16 %v268
      %v344 = vunpack.c.l.b16 %v269
      %v345 = vunpack.c.l.b16 %v270
      %v346 = vunpack.c.l.b16 %v271
      %v347 = vunpack.c.l.b16 %v272
      %v348 = vunpack.c.l.b16 %v273
      %v349 = vunpack.c.l.b16 %v274
      %v350 = vunpack.c.l.b16 %v275
      %v351 = vunpack.c.l.b16 %v276
      %v352 = vunpack.c.l.b16 %v277
      %v353 = vunpack.c.l.b16 %v278
      %v354 = vunpack.c.l.b16 %v279
      %v355 = vunpack.c.l.b16 %v280
      %v356 = vunpack.c.l.b16 %v281
      %v357 = vunpack.c.l.b16 %v282
      %v358 = vunpack.c.l.b16 %v283
      %v359 = vunpack.c.l.b16 %v284
      %v360 = vunpack.c.l.b16 %v285
      %v361 = vunpack.c.l.b16 %v286
      %v362 = vunpack.c.l.b16 %v287
      %v363 = vunpack.c.l.b16 %v288
      %v364 = vunpack.c.l.b16 %v289
      %v365 = vunpack.c.l.b16 %v290
      %v366 = vunpack.c.l.b16 %v291
      %v367 = vunpack.c.l.b16 %v292
      %v368 = vunpack.c.l.b16 %v293
      %v369 = vunpack.c.l.b16 %v294
      %v370 = vunpack.c.l.b16 %v295
      %v371 = vunpack.c.l.b16 %v296
      %v372 = vunpack.c.l.b16 %v297
      %v373 = vunpack.c.l.b16 %v300
      %v374 = vpack.c.b16 %v340, %v339
      %v375 = vpack.c.b16 %v342, %v341
      %v376 = vpack.c.b16 %v344, %v343
      %v377 = vpack.c.b16 %v346, %v345
      %v378 = vpack.c.b16 %v348, %v347
      %v379 = vpack.c.b16 %v350, %v349
      %v380 = vpack.c.b16 %v352, %v351
      %v381 = vpack.c.b16 %v354, %v353
      %v382 = vpack.c.b16 %v356, %v355
      %v383 = vpack.c.b16 %v358, %v357
      %v384 = vpack.c.b16 %v360, %v359
      %v385 = vpack.c.b16 %v362, %v361
      %v386 = vpack.c.b16 %v364, %v363
      %v387 = vpack.c.b16 %v366, %v365
      %v388 = vpack.c.b16 %v368, %v367
      %v389 = vpack.c.b16 %v370, %v369
      %v390 = vpack.c.b16 %v372, %v371
      %v391 = vpack.c.b16 %v373, %v373
      %vm392 = vsmask.f32 7424
      %v394 = vshrl.u32 %v374, 16
      %v396 = vshll.u32 %v374, 16
      %v398 = vrot.slane %v396, 1
      %v399 = vor.u32 %v394, %v398
      %v401 = vshll.u32 %v375, 16
      %v403 = vrot.slane %v401, 1
      %v404 = vsel %vm392, %v399, %v403
      %v405 = vshrl.u32 %v375, 16
      %v407 = vor.u32 %v405, %v403
      %v409 = vshll.u32 %v376, 16
      %v411 = vrot.slane %v409, 1
      %v412 = vsel %vm392, %v407, %v411
      %v413 = vshrl.u32 %v376, 16
      %v415 = vor.u32 %v413, %v411
      %v417 = vshll.u32 %v377, 16
      %v419 = vrot.slane %v417, 1
      %v420 = vsel %vm392, %v415, %v419
      %v421 = vshrl.u32 %v377, 16
      %v423 = vor.u32 %v421, %v419
      %v425 = vshll.u32 %v378, 16
      %v427 = vrot.slane %v425, 1
      %v428 = vsel %vm392, %v423, %v427
      %v429 = vshrl.u32 %v378, 16
      %v431 = vor.u32 %v429, %v427
      %v433 = vshll.u32 %v379, 16
      %v435 = vrot.slane %v433, 1
      %v436 = vsel %vm392, %v431, %v435
      %v437 = vshrl.u32 %v379, 16
      %v439 = vor.u32 %v437, %v435
      %v441 = vshll.u32 %v380, 16
      %v443 = vrot.slane %v441, 1
      %v444 = vsel %vm392, %v439, %v443
      %v445 = vshrl.u32 %v380, 16
      %v447 = vor.u32 %v445, %v443
      %v449 = vshll.u32 %v381, 16
      %v451 = vrot.slane %v449, 1
      %v452 = vsel %vm392, %v447, %v451
      %v453 = vshrl.u32 %v381, 16
      %v455 = vor.u32 %v453, %v451
      %v457 = vshll.u32 %v382, 16
      %v459 = vrot.slane %v457, 1
      %v460 = vsel %vm392, %v455, %v459
      %v461 = vshrl.u32 %v382, 16
      %v463 = vor.u32 %v461, %v459
      %v465 = vshll.u32 %v383, 16
      %v467 = vrot.slane %v465, 1
      %v468 = vsel %vm392, %v463, %v467
      %v469 = vshrl.u32 %v383, 16
      %v471 = vor.u32 %v469, %v467
      %v473 = vshll.u32 %v384, 16
      %v475 = vrot.slane %v473, 1
      %v476 = vsel %vm392, %v471, %v475
      %v477 = vshrl.u32 %v384, 16
      %v479 = vor.u32 %v477, %v475
      %v481 = vshll.u32 %v385, 16
      %v483 = vrot.slane %v481, 1
      %v484 = vsel %vm392, %v479, %v483
      %v485 = vshrl.u32 %v385, 16
      %v487 = vor.u32 %v485, %v483
      %v489 = vshll.u32 %v386, 16
      %v491 = vrot.slane %v489, 1
      %v492 = vsel %vm392, %v487, %v491
      %v493 = vshrl.u32 %v386, 16
      %v495 = vor.u32 %v493, %v491
      %v497 = vshll.u32 %v387, 16
      %v499 = vrot.slane %v497, 1
      %v500 = vsel %vm392, %v495, %v499
      %v501 = vshrl.u32 %v387, 16
      %v503 = vor.u32 %v501, %v499
      %v505 = vshll.u32 %v388, 16
      %v507 = vrot.slane %v505, 1
      %v508 = vsel %vm392, %v503, %v507
      %v509 = vshrl.u32 %v388, 16
      %v511 = vor.u32 %v509, %v507
      %v513 = vshll.u32 %v389, 16
      %v515 = vrot.slane %v513, 1
      %v516 = vsel %vm392, %v511, %v515
      %v517 = vshrl.u32 %v389, 16
      %v519 = vor.u32 %v517, %v515
      %v521 = vshll.u32 %v390, 16
      %v523 = vrot.slane %v521, 1
      %v524 = vsel %vm392, %v519, %v523
      %v525 = vshrl.u32 %v390, 16
      %v527 = vor.u32 %v525, %v523
      %v529 = vshll.u32 %v391, 16
      %v531 = vrot.slane %v529, 1
      %v532 = vsel %vm392, %v527, %v531
      %v535 = vunpack.c.l.b16 %v302
      %v536 = vunpack.c.l.b16 %v303
      %v537 = vpack.c.b16 %v536, %v535
      %vm538 = vcmask 97280
      %v540 = vsel %vm538, %v404, 0
      %v543 = vsel %vm538, %v412, 0
      %v546 = vsel %vm538, %v420, 0
      %v549 = vsel %vm538, %v428, 0
      %v552 = vsel %vm538, %v436, 0
      %v555 = vsel %vm538, %v444, 0
      %v558 = vsel %vm538, %v452, 0
      %v561 = vsel %vm538, %v460, 0
      %v564 = vsel %vm538, %v468, 0
      %v567 = vsel %vm538, %v476, 0
      %v570 = vsel %vm538, %v484, 0
      %v573 = vsel %vm538, %v492, 0
      %v576 = vsel %vm538, %v500, 0
      %v579 = vsel %vm538, %v508, 0
      %v582 = vsel %vm538, %v516, 0
      %v585 = vsel %vm538, %v524, 0
      %v588 = vsel %vm538, %v532, 0
      %vm590 = vcmask 1045504
      %v592 = vsel %vm590, %v537, 0
      %594 = vmatprep.subr.bf16.mxu0 0
      %595 = vmatpush1.bf16.msra.mxu0 %v592
      %596 = vmatprep.subr.bf16.mxu0 0
      %597 = vmatpush1.bf16.msra.mxu0 0
      %598 = vmatprep.subr.bf16.mxu0 0
      %599 = vmatpush1.bf16.msra.mxu0 0
      %600 = vmatprep.subr.bf16.mxu0 0
      %601 = vmatpush1.bf16.msra.mxu0 0
      %602 = vmatprep.subr.bf16.mxu0 0
      %603 = vmatpush1.bf16.msra.mxu0 0
      %604 = vmatprep.subr.bf16.mxu0 0
      %605 = vmatpush1.bf16.msra.mxu0 0
      %606 = vmatprep.subr.bf16.mxu0 0
      %607 = vmatpush1.bf16.msra.mxu0 0
      %608 = vmatprep.subr.bf16.mxu0 0
      %609 = vmatpush1.bf16.msra.mxu0 0
      %610 = vmatprep.subr.bf16.mxu0 0
      %611 = vmatpush1.bf16.msra.mxu0 0
      %612 = vmatprep.subr.bf16.mxu0 0
      %613 = vmatpush1.bf16.msra.mxu0 0
      %614 = vmatprep.subr.bf16.mxu0 0
      %615 = vmatpush1.bf16.msra.mxu0 0
      %616 = vmatprep.subr.bf16.mxu0 0
      %617 = vmatpush1.bf16.msra.mxu0 0
      %618 = vmatprep.subr.bf16.mxu0 0
      %619 = vmatpush1.bf16.msra.mxu0 0
      %620 = vmatprep.subr.bf16.mxu0 0
      %621 = vmatpush1.bf16.msra.mxu0 0
      %622 = vmatprep.subr.bf16.mxu0 0
      %623 = vmatpush1.bf16.msra.mxu0 0
      %624 = vmatprep.subr.bf16.mxu0 0
      %625 = vmatpush1.bf16.msra.mxu0 0
      %626 = vmatprep.mubr.bf16.mxu0 0
      %627 = vmatmul.mubr.bf16.gmra.mrb[0].mxu0 %v540
      %v628 = vpop.f32.mrb[0].mxu0
      %v629 = vadd.f32 0.0, %v628
      %v630 = vpop.f32.mrb[0].mxu0
      %v631 = vpop.f32.mrb[0].mxu0
      %v632 = vadd.f32 0.0, %v631
      %v633 = vpop.f32.mrb[0].mxu0
      %634 = vmatprep.mubr.bf16.mxu0 0
      %635 = vmatmul.mubr.bf16.gmra.mrb[0].mxu0 %v543
      %v636 = vpop.f32.mrb[0].mxu0
      %v637 = vadd.f32 0.0, %v636
      %v638 = vpop.f32.mrb[0].mxu0
      %v639 = vpop.f32.mrb[0].mxu0
      %v640 = vadd.f32 0.0, %v639
      %v641 = vpop.f32.mrb[0].mxu0
      %642 = vmatprep.mubr.bf16.mxu0 0
      %643 = vmatmul.mubr.bf16.gmra.mrb[0].mxu0 %v546
      %v644 = vpop.f32.mrb[0].mxu0
      %v645 = vadd.f32 0.0, %v644
      %v646 = vpop.f32.mrb[0].mxu0
      %v647 = vpop.f32.mrb[0].mxu0
      %v648 = vadd.f32 0.0, %v647
      %v649 = vpop.f32.mrb[0].mxu0
      %650 = vmatprep.mubr.bf16.mxu0 0
      %651 = vmatmul.mubr.bf16.gmra.mrb[0].mxu0 %v549
      %v652 = vpop.f32.mrb[0].mxu0
      %v653 = vadd.f32 0.0, %v652
      %v654 = vpop.f32.mrb[0].mxu0
      %v655 = vpop.f32.mrb[0].mxu0
      %v656 = vadd.f32 0.0, %v655
      %v657 = vpop.f32.mrb[0].mxu0
      %658 = vmatprep.mubr.bf16.mxu0 0
      %659 = vmatmul.mubr.bf16.gmra.mrb[0].mxu0 %v552
      %v660 = vpop.f32.mrb[0].mxu0
      %v661 = vadd.f32 0.0, %v660
      %v662 = vpop.f32.mrb[0].mxu0
      %v663 = vpop.f32.mrb[0].mxu0
      %v664 = vadd.f32 0.0, %v663
      %v665 = vpop.f32.mrb[0].mxu0
      %666 = vmatprep.mubr.bf16.mxu0 0
      %667 = vmatmul.mubr.bf16.gmra.mrb[0].mxu0 %v555
      %v668 = vpop.f32.mrb[0].mxu0
      %v669 = vadd.f32 0.0, %v668
      %v670 = vpop.f32.mrb[0].mxu0
      %v671 = vpop.f32.mrb[0].mxu0
      %v672 = vadd.f32 0.0, %v671
      %v673 = vpop.f32.mrb[0].mxu0
      %674 = vmatprep.mubr.bf16.mxu0 0
      %675 = vmatmul.mubr.bf16.gmra.mrb[0].mxu0 %v558
      %v676 = vpop.f32.mrb[0].mxu0
      %v677 = vadd.f32 0.0, %v676
      %v678 = vpop.f32.mrb[0].mxu0
      %v679 = vpop.f32.mrb[0].mxu0
      %v680 = vadd.f32 0.0, %v679
      %v681 = vpop.f32.mrb[0].mxu0
      %682 = vmatprep.mubr.bf16.mxu0 0
      %683 = vmatmul.mubr.bf16.gmra.mrb[0].mxu0 %v561
      %v684 = vpop.f32.mrb[0].mxu0
      %v685 = vadd.f32 0.0, %v684
      %v686 = vpop.f32.mrb[0].mxu0
      %v687 = vpop.f32.mrb[0].mxu0
      %v688 = vadd.f32 0.0, %v687
      %v689 = vpop.f32.mrb[0].mxu0
      %690 = vmatprep.mubr.bf16.mxu0 0
      %691 = vmatmul.mubr.bf16.gmra.mrb[0].mxu0 %v564
      %v692 = vpop.f32.mrb[0].mxu0
      %v693 = vadd.f32 0.0, %v692
      %v694 = vpop.f32.mrb[0].mxu0
      %v695 = vpop.f32.mrb[0].mxu0
      %v696 = vadd.f32 0.0, %v695
      %v697 = vpop.f32.mrb[0].mxu0
      %698 = vmatprep.mubr.bf16.mxu0 0
      %699 = vmatmul.mubr.bf16.gmra.mrb[0].mxu0 %v567
      %v700 = vpop.f32.mrb[0].mxu0
      %v701 = vadd.f32 0.0, %v700
      %v702 = vpop.f32.mrb[0].mxu0
      %v703 = vpop.f32.mrb[0].mxu0
      %v704 = vadd.f32 0.0, %v703
      %v705 = vpop.f32.mrb[0].mxu0
      %706 = vmatprep.mubr.bf16.mxu0 0
      %707 = vmatmul.mubr.bf16.gmra.mrb[0].mxu0 %v570
      %v708 = vpop.f32.mrb[0].mxu0
      %v709 = vadd.f32 0.0, %v708
      %v710 = vpop.f32.mrb[0].mxu0
      %v711 = vpop.f32.mrb[0].mxu0
      %v712 = vadd.f32 0.0, %v711
      %v713 = vpop.f32.mrb[0].mxu0
      %714 = vmatprep.mubr.bf16.mxu0 0
      %715 = vmatmul.mubr.bf16.gmra.mrb[0].mxu0 %v573
      %v716 = vpop.f32.mrb[0].mxu0
      %v717 = vadd.f32 0.0, %v716
      %v718 = vpop.f32.mrb[0].mxu0
      %v719 = vpop.f32.mrb[0].mxu0
      %v720 = vadd.f32 0.0, %v719
      %v721 = vpop.f32.mrb[0].mxu0
      %722 = vmatprep.mubr.bf16.mxu0 0
      %723 = vmatmul.mubr.bf16.gmra.mrb[0].mxu0 %v576
      %v724 = vpop.f32.mrb[0].mxu0
      %v725 = vadd.f32 0.0, %v724
      %v726 = vpop.f32.mrb[0].mxu0
      %v727 = vpop.f32.mrb[0].mxu0
      %v728 = vadd.f32 0.0, %v727
      %v729 = vpop.f32.mrb[0].mxu0
      %730 = vmatprep.mubr.bf16.mxu0 0
      %731 = vmatmul.mubr.bf16.gmra.mrb[0].mxu0 %v579
      %v732 = vpop.f32.mrb[0].mxu0
      %v733 = vadd.f32 0.0, %v732
      %v734 = vpop.f32.mrb[0].mxu0
      %v735 = vpop.f32.mrb[0].mxu0
      %v736 = vadd.f32 0.0, %v735
      %v737 = vpop.f32.mrb[0].mxu0
      %738 = vmatprep.mubr.bf16.mxu0 0
      %739 = vmatmul.mubr.bf16.gmra.mrb[0].mxu0 %v582
      %v740 = vpop.f32.mrb[0].mxu0
      %v741 = vadd.f32 0.0, %v740
      %v742 = vpop.f32.mrb[0].mxu0
      %v743 = vpop.f32.mrb[0].mxu0
      %v744 = vadd.f32 0.0, %v743
      %v745 = vpop.f32.mrb[0].mxu0
      %746 = vmatprep.mubr.bf16.mxu0 0
      %747 = vmatmul.mubr.bf16.gmra.mrb[0].mxu0 %v585
      %v748 = vpop.f32.mrb[0].mxu0
      %v749 = vadd.f32 0.0, %v748
      %v750 = vpop.f32.mrb[0].mxu0
      %v751 = vpop.f32.mrb[0].mxu0
      %v752 = vadd.f32 0.0, %v751
      %v753 = vpop.f32.mrb[0].mxu0
      %754 = vmatprep.mubr.bf16.mxu0 0
      %755 = vmatmul.mubr.bf16.gmra.mrb[0].mxu0 %v588
      %v756 = vpop.f32.mrb[0].mxu0
      %v757 = vadd.f32 0.0, %v756
      %v758 = vpop.f32.mrb[0].mxu0
      %v759 = vpop.f32.mrb[0].mxu0
      %v760 = vadd.f32 0.0, %v759
      %v761 = vpop.f32.mrb[0].mxu0
      %762 = vdwg.mxu0
      %v765 = vunpack.c.l.b16 %v298
      %v766 = vunpack.c.l.b16 %v299
      %v767 = vpack.c.b16 %v766, %v765
      %v768 = vsel %vm538, %v374, 0
      %v770 = vsel %vm538, %v375, 0
      %v772 = vsel %vm538, %v376, 0
      %v774 = vsel %vm538, %v377, 0
      %v776 = vsel %vm538, %v378, 0
      %v778 = vsel %vm538, %v379, 0
      %v780 = vsel %vm538, %v380, 0
      %v782 = vsel %vm538, %v381, 0
      %v784 = vsel %vm538, %v382, 0
      %v786 = vsel %vm538, %v383, 0
      %v788 = vsel %vm538, %v384, 0
      %v790 = vsel %vm538, %v385, 0
      %v792 = vsel %vm538, %v386, 0
      %v794 = vsel %vm538, %v387, 0
      %v796 = vsel %vm538, %v388, 0
      %v798 = vsel %vm538, %v389, 0
      %v800 = vsel %vm538, %v390, 0
      %v803 = vsel %vm590, %v767, 0
      %805 = vmatprep.subr.bf16.mxu0 0
      %806 = vmatpush1.bf16.msra.mxu0 %v803
      %807 = vmatprep.subr.bf16.mxu0 0
      %808 = vmatpush1.bf16.msra.mxu0 0
      %809 = vmatprep.subr.bf16.mxu0 0
      %810 = vmatpush1.bf16.msra.mxu0 0
      %811 = vmatprep.subr.bf16.mxu0 0
      %812 = vmatpush1.bf16.msra.mxu0 0
      %813 = vmatprep.subr.bf16.mxu0 0
      %814 = vmatpush1.bf16.msra.mxu0 0
      %815 = vmatprep.subr.bf16.mxu0 0
      %816 = vmatpush1.bf16.msra.mxu0 0
      %817 = vmatprep.subr.bf16.mxu0 0
      %818 = vmatpush1.bf16.msra.mxu0 0
      %819 = vmatprep.subr.bf16.mxu0 0
      %820 = vmatpush1.bf16.msra.mxu0 0
      %821 = vmatprep.subr.bf16.mxu0 0
      %822 = vmatpush1.bf16.msra.mxu0 0
      %823 = vmatprep.subr.bf16.mxu0 0
      %824 = vmatpush1.bf16.msra.mxu0 0
      %825 = vmatprep.subr.bf16.mxu0 0
      %826 = vmatpush1.bf16.msra.mxu0 0
      %827 = vmatprep.subr.bf16.mxu0 0
      %828 = vmatpush1.bf16.msra.mxu0 0
      %829 = vmatprep.subr.bf16.mxu0 0
      %830 = vmatpush1.bf16.msra.mxu0 0
      %831 = vmatprep.subr.bf16.mxu0 0
      %832 = vmatpush1.bf16.msra.mxu0 0
      %833 = vmatprep.subr.bf16.mxu0 0
      %834 = vmatpush1.bf16.msra.mxu0 0
      %835 = vmatprep.subr.bf16.mxu0 0
      %836 = vmatpush1.bf16.msra.mxu0 0
      %837 = vmatprep.mubr.bf16.mxu0 0
      %838 = vmatmul.mubr.bf16.gmra.mrb[0].mxu0 %v768
      %v839 = vpop.f32.mrb[0].mxu0
      %v840 = vadd.f32 %v629, %v839
      %v841 = vpop.f32.mrb[0].mxu0
      %v842 = vpop.f32.mrb[0].mxu0
      %v843 = vadd.f32 %v632, %v842
      %v844 = vpop.f32.mrb[0].mxu0
      %845 = vmatprep.mubr.bf16.mxu0 0
      %846 = vmatmul.mubr.bf16.gmra.mrb[0].mxu0 %v770
      %v847 = vpop.f32.mrb[0].mxu0
      %v848 = vadd.f32 %v637, %v847
      %v849 = vpop.f32.mrb[0].mxu0
      %v850 = vpop.f32.mrb[0].mxu0
      %v851 = vadd.f32 %v640, %v850
      %v852 = vpop.f32.mrb[0].mxu0
      %853 = vmatprep.mubr.bf16.mxu0 0
      %854 = vmatmul.mubr.bf16.gmra.mrb[0].mxu0 %v772
      %v855 = vpop.f32.mrb[0].mxu0
      %v856 = vadd.f32 %v645, %v855
      %v857 = vpop.f32.mrb[0].mxu0
      %v858 = vpop.f32.mrb[0].mxu0
      %v859 = vadd.f32 %v648, %v858
      %v860 = vpop.f32.mrb[0].mxu0
      %861 = vmatprep.mubr.bf16.mxu0 0
      %862 = vmatmul.mubr.bf16.gmra.mrb[0].mxu0 %v774
      %v863 = vpop.f32.mrb[0].mxu0
      %v864 = vadd.f32 %v653, %v863
      %v865 = vpop.f32.mrb[0].mxu0
      %v866 = vpop.f32.mrb[0].mxu0
      %v867 = vadd.f32 %v656, %v866
      %v868 = vpop.f32.mrb[0].mxu0
      %869 = vmatprep.mubr.bf16.mxu0 0
      %870 = vmatmul.mubr.bf16.gmra.mrb[0].mxu0 %v776
      %v871 = vpop.f32.mrb[0].mxu0
      %v872 = vadd.f32 %v661, %v871
      %v873 = vpop.f32.mrb[0].mxu0
      %v874 = vpop.f32.mrb[0].mxu0
      %v875 = vadd.f32 %v664, %v874
      %v876 = vpop.f32.mrb[0].mxu0
      %877 = vmatprep.mubr.bf16.mxu0 0
      %878 = vmatmul.mubr.bf16.gmra.mrb[0].mxu0 %v778
      %v879 = vpop.f32.mrb[0].mxu0
      %v880 = vadd.f32 %v669, %v879
      %v881 = vpop.f32.mrb[0].mxu0
      %v882 = vpop.f32.mrb[0].mxu0
      %v883 = vadd.f32 %v672, %v882
      %v884 = vpop.f32.mrb[0].mxu0
      %885 = vmatprep.mubr.bf16.mxu0 0
      %886 = vmatmul.mubr.bf16.gmra.mrb[0].mxu0 %v780
      %v887 = vpop.f32.mrb[0].mxu0
      %v888 = vadd.f32 %v677, %v887
      %v889 = vpop.f32.mrb[0].mxu0
      %v890 = vpop.f32.mrb[0].mxu0
      %v891 = vadd.f32 %v680, %v890
      %v892 = vpop.f32.mrb[0].mxu0
      %893 = vmatprep.mubr.bf16.mxu0 0
      %894 = vmatmul.mubr.bf16.gmra.mrb[0].mxu0 %v782
      %v895 = vpop.f32.mrb[0].mxu0
      %v896 = vadd.f32 %v685, %v895
      %v897 = vpop.f32.mrb[0].mxu0
      %v898 = vpop.f32.mrb[0].mxu0
      %v899 = vadd.f32 %v688, %v898
      %v900 = vpop.f32.mrb[0].mxu0
      %901 = vmatprep.mubr.bf16.mxu0 0
      %902 = vmatmul.mubr.bf16.gmra.mrb[0].mxu0 %v784
      %v903 = vpop.f32.mrb[0].mxu0
      %v904 = vadd.f32 %v693, %v903
      %v905 = vpop.f32.mrb[0].mxu0
      %v906 = vpop.f32.mrb[0].mxu0
      %v907 = vadd.f32 %v696, %v906
      %v908 = vpop.f32.mrb[0].mxu0
      %909 = vmatprep.mubr.bf16.mxu0 0
      %910 = vmatmul.mubr.bf16.gmra.mrb[0].mxu0 %v786
      %v911 = vpop.f32.mrb[0].mxu0
      %v912 = vadd.f32 %v701, %v911
      %v913 = vpop.f32.mrb[0].mxu0
      %v914 = vpop.f32.mrb[0].mxu0
      %v915 = vadd.f32 %v704, %v914
      %v916 = vpop.f32.mrb[0].mxu0
      %917 = vmatprep.mubr.bf16.mxu0 0
      %918 = vmatmul.mubr.bf16.gmra.mrb[0].mxu0 %v788
      %v919 = vpop.f32.mrb[0].mxu0
      %v920 = vadd.f32 %v709, %v919
      %v921 = vpop.f32.mrb[0].mxu0
      %v922 = vpop.f32.mrb[0].mxu0
      %v923 = vadd.f32 %v712, %v922
      %v924 = vpop.f32.mrb[0].mxu0
      %925 = vmatprep.mubr.bf16.mxu0 0
      %926 = vmatmul.mubr.bf16.gmra.mrb[0].mxu0 %v790
      %v927 = vpop.f32.mrb[0].mxu0
      %v928 = vadd.f32 %v717, %v927
      %v929 = vpop.f32.mrb[0].mxu0
      %v930 = vpop.f32.mrb[0].mxu0
      %v931 = vadd.f32 %v720, %v930
      %v932 = vpop.f32.mrb[0].mxu0
      %933 = vmatprep.mubr.bf16.mxu0 0
      %934 = vmatmul.mubr.bf16.gmra.mrb[0].mxu0 %v792
      %v935 = vpop.f32.mrb[0].mxu0
      %v936 = vadd.f32 %v725, %v935
      %v937 = vpop.f32.mrb[0].mxu0
      %v938 = vpop.f32.mrb[0].mxu0
      %v939 = vadd.f32 %v728, %v938
      %v940 = vpop.f32.mrb[0].mxu0
      %941 = vmatprep.mubr.bf16.mxu0 0
      %942 = vmatmul.mubr.bf16.gmra.mrb[0].mxu0 %v794
      %v943 = vpop.f32.mrb[0].mxu0
      %v944 = vadd.f32 %v733, %v943
      %v945 = vpop.f32.mrb[0].mxu0
      %v946 = vpop.f32.mrb[0].mxu0
      %v947 = vadd.f32 %v736, %v946
      %v948 = vpop.f32.mrb[0].mxu0
      %949 = vmatprep.mubr.bf16.mxu0 0
      %950 = vmatmul.mubr.bf16.gmra.mrb[0].mxu0 %v796
      %v951 = vpop.f32.mrb[0].mxu0
      %v952 = vadd.f32 %v741, %v951
      %v953 = vpop.f32.mrb[0].mxu0
      %v954 = vpop.f32.mrb[0].mxu0
      %v955 = vadd.f32 %v744, %v954
      %v956 = vpop.f32.mrb[0].mxu0
      %957 = vmatprep.mubr.bf16.mxu0 0
      %958 = vmatmul.mubr.bf16.gmra.mrb[0].mxu0 %v798
      %v959 = vpop.f32.mrb[0].mxu0
      %v960 = vadd.f32 %v749, %v959
      %v961 = vpop.f32.mrb[0].mxu0
      %v962 = vpop.f32.mrb[0].mxu0
      %v963 = vadd.f32 %v752, %v962
      %v964 = vpop.f32.mrb[0].mxu0
      %965 = vmatprep.mubr.bf16.mxu0 0
      %966 = vmatmul.mubr.bf16.gmra.mrb[0].mxu0 %v800
      %v967 = vpop.f32.mrb[0].mxu0
      %v968 = vadd.f32 %v757, %v967
      %v969 = vpop.f32.mrb[0].mxu0
      %v970 = vpop.f32.mrb[0].mxu0
      %v971 = vadd.f32 %v760, %v970
      %v972 = vpop.f32.mrb[0].mxu0
      %973 = vdwg.mxu0
      %v974 = vld [vmem:[%s244 + $0x8] sm:$0xf]
      %v975 = vld [vmem:[%s244 + $0xc] sm:$0xf]
      %v976 = vld [vmem:[%s244 + $0x10] sm:$0xf]
      %v977 = vld [vmem:[%s244 + $0x14] sm:$0xf]
      %v978 = vld [vmem:[%s244 + $0x18] sm:$0xf]
      %v979 = vld [vmem:[%s244 + $0x1c] sm:$0xf]
      %v980 = vld [vmem:[%s244 + $0x20] sm:$0xf]
      %v981 = vld [vmem:[%s244 + $0x24] sm:$0xf]
      %v982 = vld [vmem:[%s244 + $0x28] sm:$0xf]
      %v983 = vld [vmem:[%s244 + $0x2c] sm:$0xf]
      %v984 = vld [vmem:[%s244 + $0x30] sm:$0xf]
      %v985 = vld [vmem:[%s244 + $0x34] sm:$0xf]
      %v986 = vld [vmem:[%s244 + $0x38] sm:$0xf]
      %v987 = vld [vmem:[%s244 + $0x3c] sm:$0xf]
      %v988 = vld [vmem:[%s244 + $0x40] sm:$0xf]
      %v989 = vld [vmem:[%s244 + $0x44] sm:$0xf]
      %v990 = vld [vmem:[%s244 + $0x48] sm:$0xf]
      %v991 = vld [vmem:[%s244 + $0x4c] sm:$0xf]
      %v992 = vld [vmem:[%s244 + $0x50] sm:$0xf]
      %v993 = vld [vmem:[%s244 + $0x54] sm:$0xf]
      %v994 = vld [vmem:[%s244 + $0x58] sm:$0xf]
      %v995 = vld [vmem:[%s244 + $0x5c] sm:$0xf]
      %v996 = vld [vmem:[%s244 + $0x60] sm:$0xf]
      %v997 = vld [vmem:[%s244 + $0x64] sm:$0xf]
      %v998 = vld [vmem:[%s244 + $0x68] sm:$0xf]
      %v999 = vld [vmem:[%s244 + $0x6c] sm:$0xf]
      %v1000 = vld [vmem:[%s244 + $0x70] sm:$0xf]
      %v1001 = vld [vmem:[%s244 + $0x74] sm:$0xf]
      %v1002 = vld [vmem:[%s244 + $0x78] sm:$0xf]
      %v1003 = vld [vmem:[%s244 + $0x7c] sm:$0xf]
      %v1004 = vld [vmem:[%s244 + $0x80] sm:$0xf]
      %v1005 = vld [vmem:[%s244 + $0x84] sm:$0xf]
      %v1006 = vld [vmem:[%s244 + $0x88] sm:$0xf]
      %v1007 = vld [vmem:[%s244 + $0x8c] sm:$0xf]
      %v1008 = vld [vmem:[%s244 + $0x90] sm:$0x1]
      %s1009 = scalar_lea.vmem %s248, 16
      %v1010 = vld [vmem:[%s1009] sm:$0xf]
      %v1011 = vld [vmem:[%s1009 + $0x4] sm:$0x3]
      %v1047 = vunpack.c.l.b16 %v974
      %v1048 = vunpack.c.l.b16 %v975
      %v1049 = vunpack.c.l.b16 %v976
      %v1050 = vunpack.c.l.b16 %v977
      %v1051 = vunpack.c.l.b16 %v978
      %v1052 = vunpack.c.l.b16 %v979
      %v1053 = vunpack.c.l.b16 %v980
      %v1054 = vunpack.c.l.b16 %v981
      %v1055 = vunpack.c.l.b16 %v982
      %v1056 = vunpack.c.l.b16 %v983
      %v1057 = vunpack.c.l.b16 %v984
      %v1058 = vunpack.c.l.b16 %v985
      %v1059 = vunpack.c.l.b16 %v986
      %v1060 = vunpack.c.l.b16 %v987
      %v1061 = vunpack.c.l.b16 %v988
      %v1062 = vunpack.c.l.b16 %v989
      %v1063 = vunpack.c.l.b16 %v990
      %v1064 = vunpack.c.l.b16 %v991
      %v1065 = vunpack.c.l.b16 %v992
      %v1066 = vunpack.c.l.b16 %v993
      %v1067 = vunpack.c.l.b16 %v994
      %v1068 = vunpack.c.l.b16 %v995
      %v1069 = vunpack.c.l.b16 %v996
      %v1070 = vunpack.c.l.b16 %v997
      %v1071 = vunpack.c.l.b16 %v998
      %v1072 = vunpack.c.l.b16 %v999
      %v1073 = vunpack.c.l.b16 %v1000
      %v1074 = vunpack.c.l.b16 %v1001
      %v1075 = vunpack.c.l.b16 %v1002
      %v1076 = vunpack.c.l.b16 %v1003
      %v1077 = vunpack.c.l.b16 %v1004
      %v1078 = vunpack.c.l.b16 %v1005
      %v1079 = vunpack.c.l.b16 %v1006
      %v1080 = vunpack.c.l.b16 %v1007
      %v1081 = vunpack.c.l.b16 %v1008
      %v1082 = vpack.c.b16 %v1048, %v1047
      %v1083 = vpack.c.b16 %v1050, %v1049
      %v1084 = vpack.c.b16 %v1052, %v1051
      %v1085 = vpack.c.b16 %v1054, %v1053
      %v1086 = vpack.c.b16 %v1056, %v1055
      %v1087 = vpack.c.b16 %v1058, %v1057
      %v1088 = vpack.c.b16 %v1060, %v1059
      %v1089 = vpack.c.b16 %v1062, %v1061
      %v1090 = vpack.c.b16 %v1064, %v1063
      %v1091 = vpack.c.b16 %v1066, %v1065
      %v1092 = vpack.c.b16 %v1068, %v1067
      %v1093 = vpack.c.b16 %v1070, %v1069
      %v1094 = vpack.c.b16 %v1072, %v1071
      %v1095 = vpack.c.b16 %v1074, %v1073
      %v1096 = vpack.c.b16 %v1076, %v1075
      %v1097 = vpack.c.b16 %v1078, %v1077
      %v1098 = vpack.c.b16 %v1080, %v1079
      %v1099 = vpack.c.b16 %v1081, %v1081
      %v1101 = vshrl.u32 %v1082, 16
      %v1103 = vshll.u32 %v1082, 16
      %v1105 = vrot.slane %v1103, 1
      %v1106 = vor.u32 %v1101, %v1105
      %v1108 = vshll.u32 %v1083, 16
      %v1110 = vrot.slane %v1108, 1
      %v1111 = vsel %vm392, %v1106, %v1110
      %v1112 = vshrl.u32 %v1083, 16
      %v1114 = vor.u32 %v1112, %v1110
      %v1116 = vshll.u32 %v1084, 16
      %v1118 = vrot.slane %v1116, 1
      %v1119 = vsel %vm392, %v1114, %v1118
      %v1120 = vshrl.u32 %v1084, 16
      %v1122 = vor.u32 %v1120, %v1118
      %v1124 = vshll.u32 %v1085, 16
      %v1126 = vrot.slane %v1124, 1
      %v1127 = vsel %vm392, %v1122, %v1126
      %v1128 = vshrl.u32 %v1085, 16
      %v1130 = vor.u32 %v1128, %v1126
      %v1132 = vshll.u32 %v1086, 16
      %v1134 = vrot.slane %v1132, 1
      %v1135 = vsel %vm392, %v1130, %v1134
      %v1136 = vshrl.u32 %v1086, 16
      %v1138 = vor.u32 %v1136, %v1134
      %v1140 = vshll.u32 %v1087, 16
      %v1142 = vrot.slane %v1140, 1
      %v1143 = vsel %vm392, %v1138, %v1142
      %v1144 = vshrl.u32 %v1087, 16
      %v1146 = vor.u32 %v1144, %v1142
      %v1148 = vshll.u32 %v1088, 16
      %v1150 = vrot.slane %v1148, 1
      %v1151 = vsel %vm392, %v1146, %v1150
      %v1152 = vshrl.u32 %v1088, 16
      %v1154 = vor.u32 %v1152, %v1150
      %v1156 = vshll.u32 %v1089, 16
      %v1158 = vrot.slane %v1156, 1
      %v1159 = vsel %vm392, %v1154, %v1158
      %v1160 = vshrl.u32 %v1089, 16
      %v1162 = vor.u32 %v1160, %v1158
      %v1164 = vshll.u32 %v1090, 16
      %v1166 = vrot.slane %v1164, 1
      %v1167 = vsel %vm392, %v1162, %v1166
      %v1168 = vshrl.u32 %v1090, 16
      %v1170 = vor.u32 %v1168, %v1166
      %v1172 = vshll.u32 %v1091, 16
      %v1174 = vrot.slane %v1172, 1
      %v1175 = vsel %vm392, %v1170, %v1174
      %v1176 = vshrl.u32 %v1091, 16
      %v1178 = vor.u32 %v1176, %v1174
      %v1180 = vshll.u32 %v1092, 16
      %v1182 = vrot.slane %v1180, 1
      %v1183 = vsel %vm392, %v1178, %v1182
      %v1184 = vshrl.u32 %v1092, 16
      %v1186 = vor.u32 %v1184, %v1182
      %v1188 = vshll.u32 %v1093, 16
      %v1190 = vrot.slane %v1188, 1
      %v1191 = vsel %vm392, %v1186, %v1190
      %v1192 = vshrl.u32 %v1093, 16
      %v1194 = vor.u32 %v1192, %v1190
      %v1196 = vshll.u32 %v1094, 16
      %v1198 = vrot.slane %v1196, 1
      %v1199 = vsel %vm392, %v1194, %v1198
      %v1200 = vshrl.u32 %v1094, 16
      %v1202 = vor.u32 %v1200, %v1198
      %v1204 = vshll.u32 %v1095, 16
      %v1206 = vrot.slane %v1204, 1
      %v1207 = vsel %vm392, %v1202, %v1206
      %v1208 = vshrl.u32 %v1095, 16
      %v1210 = vor.u32 %v1208, %v1206
      %v1212 = vshll.u32 %v1096, 16
      %v1214 = vrot.slane %v1212, 1
      %v1215 = vsel %vm392, %v1210, %v1214
      %v1216 = vshrl.u32 %v1096, 16
      %v1218 = vor.u32 %v1216, %v1214
      %v1220 = vshll.u32 %v1097, 16
      %v1222 = vrot.slane %v1220, 1
      %v1223 = vsel %vm392, %v1218, %v1222
      %v1224 = vshrl.u32 %v1097, 16
      %v1226 = vor.u32 %v1224, %v1222
      %v1228 = vshll.u32 %v1098, 16
      %v1230 = vrot.slane %v1228, 1
      %v1231 = vsel %vm392, %v1226, %v1230
      %v1232 = vshrl.u32 %v1098, 16
      %v1234 = vor.u32 %v1232, %v1230
      %v1236 = vshll.u32 %v1099, 16
      %v1238 = vrot.slane %v1236, 1
      %v1239 = vsel %vm392, %v1234, %v1238
      %v1242 = vunpack.c.l.b16 %v1010
      %v1243 = vunpack.c.l.b16 %v1011
      %v1244 = vpack.c.b16 %v1243, %v1242
      %v1246 = vsel %vm538, %v1111, 0
      %v1249 = vsel %vm538, %v1119, 0
      %v1252 = vsel %vm538, %v1127, 0
      %v1255 = vsel %vm538, %v1135, 0
      %v1258 = vsel %vm538, %v1143, 0
      %v1261 = vsel %vm538, %v1151, 0
      %v1264 = vsel %vm538, %v1159, 0
      %v1267 = vsel %vm538, %v1167, 0
      %v1270 = vsel %vm538, %v1175, 0
      %v1273 = vsel %vm538, %v1183, 0
      %v1276 = vsel %vm538, %v1191, 0
      %v1279 = vsel %vm538, %v1199, 0
      %v1282 = vsel %vm538, %v1207, 0
      %v1285 = vsel %vm538, %v1215, 0
      %v1288 = vsel %vm538, %v1223, 0
      %v1291 = vsel %vm538, %v1231, 0
      %v1294 = vsel %vm538, %v1239, 0
      %v1297 = vsel %vm590, %v1244, 0
      %1299 = vmatprep.subr.bf16.mxu0 0
      %1300 = vmatpush1.bf16.msra.mxu0 %v1297
      %1301 = vmatprep.subr.bf16.mxu0 0
      %1302 = vmatpush1.bf16.msra.mxu0 0
      %1303 = vmatprep.subr.bf16.mxu0 0
      %1304 = vmatpush1.bf16.msra.mxu0 0
      %1305 = vmatprep.subr.bf16.mxu0 0
      %1306 = vmatpush1.bf16.msra.mxu0 0
      %1307 = vmatprep.subr.bf16.mxu0 0
      %1308 = vmatpush1.bf16.msra.mxu0 0
      %1309 = vmatprep.subr.bf16.mxu0 0
      %1310 = vmatpush1.bf16.msra.mxu0 0
      %1311 = vmatprep.subr.bf16.mxu0 0
      %1312 = vmatpush1.bf16.msra.mxu0 0
      %1313 = vmatprep.subr.bf16.mxu0 0
      %1314 = vmatpush1.bf16.msra.mxu0 0
      %1315 = vmatprep.subr.bf16.mxu0 0
      %1316 = vmatpush1.bf16.msra.mxu0 0
      %1317 = vmatprep.subr.bf16.mxu0 0
      %1318 = vmatpush1.bf16.msra.mxu0 0
      %1319 = vmatprep.subr.bf16.mxu0 0
      %1320 = vmatpush1.bf16.msra.mxu0 0
      %1321 = vmatprep.subr.bf16.mxu0 0
      %1322 = vmatpush1.bf16.msra.mxu0 0
      %1323 = vmatprep.subr.bf16.mxu0 0
      %1324 = vmatpush1.bf16.msra.mxu0 0
      %1325 = vmatprep.subr.bf16.mxu0 0
      %1326 = vmatpush1.bf16.msra.mxu0 0
      %1327 = vmatprep.subr.bf16.mxu0 0
      %1328 = vmatpush1.bf16.msra.mxu0 0
      %1329 = vmatprep.subr.bf16.mxu0 0
      %1330 = vmatpush1.bf16.msra.mxu0 0
      %1331 = vmatprep.mubr.bf16.mxu0 0
      %1332 = vmatmul.mubr.bf16.gmra.mrb[0].mxu0 %v1246
      %v1333 = vpop.f32.mrb[0].mxu0
      %v1334 = vadd.f32 0.0, %v1333
      %v1335 = vpop.f32.mrb[0].mxu0
      %v1336 = vpop.f32.mrb[0].mxu0
      %v1337 = vadd.f32 0.0, %v1336
      %v1338 = vpop.f32.mrb[0].mxu0
      %1339 = vmatprep.mubr.bf16.mxu0 0
      %1340 = vmatmul.mubr.bf16.gmra.mrb[0].mxu0 %v1249
      %v1341 = vpop.f32.mrb[0].mxu0
      %v1342 = vadd.f32 0.0, %v1341
      %v1343 = vpop.f32.mrb[0].mxu0
      %v1344 = vpop.f32.mrb[0].mxu0
      %v1345 = vadd.f32 0.0, %v1344
      %v1346 = vpop.f32.mrb[0].mxu0
      %1347 = vmatprep.mubr.bf16.mxu0 0
      %1348 = vmatmul.mubr.bf16.gmra.mrb[0].mxu0 %v1252
      %v1349 = vpop.f32.mrb[0].mxu0
      %v1350 = vadd.f32 0.0, %v1349
      %v1351 = vpop.f32.mrb[0].mxu0
      %v1352 = vpop.f32.mrb[0].mxu0
      %v1353 = vadd.f32 0.0, %v1352
      %v1354 = vpop.f32.mrb[0].mxu0
      %1355 = vmatprep.mubr.bf16.mxu0 0
      %1356 = vmatmul.mubr.bf16.gmra.mrb[0].mxu0 %v1255
      %v1357 = vpop.f32.mrb[0].mxu0
      %v1358 = vadd.f32 0.0, %v1357
      %v1359 = vpop.f32.mrb[0].mxu0
      %v1360 = vpop.f32.mrb[0].mxu0
      %v1361 = vadd.f32 0.0, %v1360
      %v1362 = vpop.f32.mrb[0].mxu0
      %1363 = vmatprep.mubr.bf16.mxu0 0
      %1364 = vmatmul.mubr.bf16.gmra.mrb[0].mxu0 %v1258
      %v1365 = vpop.f32.mrb[0].mxu0
      %v1366 = vadd.f32 0.0, %v1365
      %v1367 = vpop.f32.mrb[0].mxu0
      %v1368 = vpop.f32.mrb[0].mxu0
      %v1369 = vadd.f32 0.0, %v1368
      %v1370 = vpop.f32.mrb[0].mxu0
      %1371 = vmatprep.mubr.bf16.mxu0 0
      %1372 = vmatmul.mubr.bf16.gmra.mrb[0].mxu0 %v1261
      %v1373 = vpop.f32.mrb[0].mxu0
      %v1374 = vadd.f32 0.0, %v1373
      %v1375 = vpop.f32.mrb[0].mxu0
      %v1376 = vpop.f32.mrb[0].mxu0
      %v1377 = vadd.f32 0.0, %v1376
      %v1378 = vpop.f32.mrb[0].mxu0
      %1379 = vmatprep.mubr.bf16.mxu0 0
      %1380 = vmatmul.mubr.bf16.gmra.mrb[0].mxu0 %v1264
      %v1381 = vpop.f32.mrb[0].mxu0
      %v1382 = vadd.f32 0.0, %v1381
      %v1383 = vpop.f32.mrb[0].mxu0
      %v1384 = vpop.f32.mrb[0].mxu0
      %v1385 = vadd.f32 0.0, %v1384
      %v1386 = vpop.f32.mrb[0].mxu0
      %1387 = vmatprep.mubr.bf16.mxu0 0
      %1388 = vmatmul.mubr.bf16.gmra.mrb[0].mxu0 %v1267
      %v1389 = vpop.f32.mrb[0].mxu0
      %v1390 = vadd.f32 0.0, %v1389
      %v1391 = vpop.f32.mrb[0].mxu0
      %v1392 = vpop.f32.mrb[0].mxu0
      %v1393 = vadd.f32 0.0, %v1392
      %v1394 = vpop.f32.mrb[0].mxu0
      %1395 = vmatprep.mubr.bf16.mxu0 0
      %1396 = vmatmul.mubr.bf16.gmra.mrb[0].mxu0 %v1270
      %v1397 = vpop.f32.mrb[0].mxu0
      %v1398 = vadd.f32 0.0, %v1397
      %v1399 = vpop.f32.mrb[0].mxu0
      %v1400 = vpop.f32.mrb[0].mxu0
      %v1401 = vadd.f32 0.0, %v1400
      %v1402 = vpop.f32.mrb[0].mxu0
      %1403 = vmatprep.mubr.bf16.mxu0 0
      %1404 = vmatmul.mubr.bf16.gmra.mrb[0].mxu0 %v1273
      %v1405 = vpop.f32.mrb[0].mxu0
      %v1406 = vadd.f32 0.0, %v1405
      %v1407 = vpop.f32.mrb[0].mxu0
      %v1408 = vpop.f32.mrb[0].mxu0
      %v1409 = vadd.f32 0.0, %v1408
      %v1410 = vpop.f32.mrb[0].mxu0
      %1411 = vmatprep.mubr.bf16.mxu0 0
      %1412 = vmatmul.mubr.bf16.gmra.mrb[0].mxu0 %v1276
      %v1413 = vpop.f32.mrb[0].mxu0
      %v1414 = vadd.f32 0.0, %v1413
      %v1415 = vpop.f32.mrb[0].mxu0
      %v1416 = vpop.f32.mrb[0].mxu0
      %v1417 = vadd.f32 0.0, %v1416
      %v1418 = vpop.f32.mrb[0].mxu0
      %1419 = vmatprep.mubr.bf16.mxu0 0
      %1420 = vmatmul.mubr.bf16.gmra.mrb[0].mxu0 %v1279
      %v1421 = vpop.f32.mrb[0].mxu0
      %v1422 = vadd.f32 0.0, %v1421
      %v1423 = vpop.f32.mrb[0].mxu0
      %v1424 = vpop.f32.mrb[0].mxu0
      %v1425 = vadd.f32 0.0, %v1424
      %v1426 = vpop.f32.mrb[0].mxu0
      %1427 = vmatprep.mubr.bf16.mxu0 0
      %1428 = vmatmul.mubr.bf16.gmra.mrb[0].mxu0 %v1282
      %v1429 = vpop.f32.mrb[0].mxu0
      %v1430 = vadd.f32 0.0, %v1429
      %v1431 = vpop.f32.mrb[0].mxu0
      %v1432 = vpop.f32.mrb[0].mxu0
      %v1433 = vadd.f32 0.0, %v1432
      %v1434 = vpop.f32.mrb[0].mxu0
      %1435 = vmatprep.mubr.bf16.mxu0 0
      %1436 = vmatmul.mubr.bf16.gmra.mrb[0].mxu0 %v1285
      %v1437 = vpop.f32.mrb[0].mxu0
      %v1438 = vadd.f32 0.0, %v1437
      %v1439 = vpop.f32.mrb[0].mxu0
      %v1440 = vpop.f32.mrb[0].mxu0
      %v1441 = vadd.f32 0.0, %v1440
      %v1442 = vpop.f32.mrb[0].mxu0
      %1443 = vmatprep.mubr.bf16.mxu0 0
      %1444 = vmatmul.mubr.bf16.gmra.mrb[0].mxu0 %v1288
      %v1445 = vpop.f32.mrb[0].mxu0
      %v1446 = vadd.f32 0.0, %v1445
      %v1447 = vpop.f32.mrb[0].mxu0
      %v1448 = vpop.f32.mrb[0].mxu0
      %v1449 = vadd.f32 0.0, %v1448
      %v1450 = vpop.f32.mrb[0].mxu0
      %1451 = vmatprep.mubr.bf16.mxu0 0
      %1452 = vmatmul.mubr.bf16.gmra.mrb[0].mxu0 %v1291
      %v1453 = vpop.f32.mrb[0].mxu0
      %v1454 = vadd.f32 0.0, %v1453
      %v1455 = vpop.f32.mrb[0].mxu0
      %v1456 = vpop.f32.mrb[0].mxu0
      %v1457 = vadd.f32 0.0, %v1456
      %v1458 = vpop.f32.mrb[0].mxu0
      %1459 = vmatprep.mubr.bf16.mxu0 0
      %1460 = vmatmul.mubr.bf16.gmra.mrb[0].mxu0 %v1294
      %v1461 = vpop.f32.mrb[0].mxu0
      %v1462 = vadd.f32 0.0, %v1461
      %v1463 = vpop.f32.mrb[0].mxu0
      %v1464 = vpop.f32.mrb[0].mxu0
      %v1465 = vadd.f32 0.0, %v1464
      %v1466 = vpop.f32.mrb[0].mxu0
      %1467 = vdwg.mxu0
      %v1468 = vadd.f32 %v840, %v1334
      %v1469 = vadd.f32 %v843, %v1337
      %v1470 = vadd.f32 %v848, %v1342
      %v1471 = vadd.f32 %v851, %v1345
      %v1472 = vadd.f32 %v856, %v1350
      %v1473 = vadd.f32 %v859, %v1353
      %v1474 = vadd.f32 %v864, %v1358
      %v1475 = vadd.f32 %v867, %v1361
      %v1476 = vadd.f32 %v872, %v1366
      %v1477 = vadd.f32 %v875, %v1369
      %v1478 = vadd.f32 %v880, %v1374
      %v1479 = vadd.f32 %v883, %v1377
      %v1480 = vadd.f32 %v888, %v1382
      %v1481 = vadd.f32 %v891, %v1385
      %v1482 = vadd.f32 %v896, %v1390
      %v1483 = vadd.f32 %v899, %v1393
      %v1484 = vadd.f32 %v904, %v1398
      %v1485 = vadd.f32 %v907, %v1401
      %v1486 = vadd.f32 %v912, %v1406
      %v1487 = vadd.f32 %v915, %v1409
      %v1488 = vadd.f32 %v920, %v1414
      %v1489 = vadd.f32 %v923, %v1417
      %v1490 = vadd.f32 %v928, %v1422
      %v1491 = vadd.f32 %v931, %v1425
      %v1492 = vadd.f32 %v936, %v1430
      %v1493 = vadd.f32 %v939, %v1433
      %v1494 = vadd.f32 %v944, %v1438
      %v1495 = vadd.f32 %v947, %v1441
      %v1496 = vadd.f32 %v952, %v1446
      %v1497 = vadd.f32 %v955, %v1449
      %v1498 = vadd.f32 %v960, %v1454
      %v1499 = vadd.f32 %v963, %v1457
      %v1500 = vadd.f32 %v968, %v1462
      %v1501 = vadd.f32 %v971, %v1465
      %v1502 = vld [vmem:[%s244 + $0x8] sm:$0xe]
      %s1503 = scalar_lea.vmem %s248, 24
      %v1504 = vld [vmem:[%s1503] sm:$0xf]
      %v1505 = vld [vmem:[%s1503 + $0x4] sm:$0x3]
      %v1507 = vunpack.c.l.b16 %v1502
      %v1508 = vpack.c.b16 %v1048, %v1507
      %vm1509 = vcmask 1046528
      %v1510 = vrot.slane %v1508, 1
      %v1511 = vrot.slane %v1083, 1
      %v1512 = vsel %vm1509, %v1510, %v1511
      %v1513 = vrot.slane %v1084, 1
      %v1514 = vsel %vm1509, %v1511, %v1513
      %v1515 = vrot.slane %v1085, 1
      %v1516 = vsel %vm1509, %v1513, %v1515
      %v1517 = vrot.slane %v1086, 1
      %v1518 = vsel %vm1509, %v1515, %v1517
      %v1519 = vrot.slane %v1087, 1
      %v1520 = vsel %vm1509, %v1517, %v1519
      %v1521 = vrot.slane %v1088, 1
      %v1522 = vsel %vm1509, %v1519, %v1521
      %v1523 = vrot.slane %v1089, 1
      %v1524 = vsel %vm1509, %v1521, %v1523
      %v1525 = vrot.slane %v1090, 1
      %v1526 = vsel %vm1509, %v1523, %v1525
      %v1527 = vrot.slane %v1091, 1
      %v1528 = vsel %vm1509, %v1525, %v1527
      %v1529 = vrot.slane %v1092, 1
      %v1530 = vsel %vm1509, %v1527, %v1529
      %v1531 = vrot.slane %v1093, 1
      %v1532 = vsel %vm1509, %v1529, %v1531
      %v1533 = vrot.slane %v1094, 1
      %v1534 = vsel %vm1509, %v1531, %v1533
      %v1535 = vrot.slane %v1095, 1
      %v1536 = vsel %vm1509, %v1533, %v1535
      %v1537 = vrot.slane %v1096, 1
      %v1538 = vsel %vm1509, %v1535, %v1537
      %v1539 = vrot.slane %v1097, 1
      %v1540 = vsel %vm1509, %v1537, %v1539
      %v1541 = vrot.slane %v1098, 1
      %v1542 = vsel %vm1509, %v1539, %v1541
      %v1543 = vrot.slane %v1099, 1
      %v1544 = vsel %vm1509, %v1541, %v1543
      %v1547 = vunpack.c.l.b16 %v1504
      %v1548 = vunpack.c.l.b16 %v1505
      %v1549 = vpack.c.b16 %v1548, %v1547
      %v1551 = vsel %vm538, %v1512, 0
      %v1554 = vsel %vm538, %v1514, 0
      %v1557 = vsel %vm538, %v1516, 0
      %v1560 = vsel %vm538, %v1518, 0
      %v1563 = vsel %vm538, %v1520, 0
      %v1566 = vsel %vm538, %v1522, 0
      %v1569 = vsel %vm538, %v1524, 0
      %v1572 = vsel %vm538, %v1526, 0
      %v1575 = vsel %vm538, %v1528, 0
      %v1578 = vsel %vm538, %v1530, 0
      %v1581 = vsel %vm538, %v1532, 0
      %v1584 = vsel %vm538, %v1534, 0
      %v1587 = vsel %vm538, %v1536, 0
      %v1590 = vsel %vm538, %v1538, 0
      %v1593 = vsel %vm538, %v1540, 0
      %v1596 = vsel %vm538, %v1542, 0
      %v1599 = vsel %vm538, %v1544, 0
      %v1602 = vsel %vm590, %v1549, 0
      %1604 = vmatprep.subr.bf16.mxu0 0
      %1605 = vmatpush1.bf16.msra.mxu0 %v1602
      %1606 = vmatprep.subr.bf16.mxu0 0
      %1607 = vmatpush1.bf16.msra.mxu0 0
      %1608 = vmatprep.subr.bf16.mxu0 0
      %1609 = vmatpush1.bf16.msra.mxu0 0
      %1610 = vmatprep.subr.bf16.mxu0 0
      %1611 = vmatpush1.bf16.msra.mxu0 0
      %1612 = vmatprep.subr.bf16.mxu0 0
      %1613 = vmatpush1.bf16.msra.mxu0 0
      %1614 = vmatprep.subr.bf16.mxu0 0
      %1615 = vmatpush1.bf16.msra.mxu0 0
      %1616 = vmatprep.subr.bf16.mxu0 0
      %1617 = vmatpush1.bf16.msra.mxu0 0
      %1618 = vmatprep.subr.bf16.mxu0 0
      %1619 = vmatpush1.bf16.msra.mxu0 0
      %1620 = vmatprep.subr.bf16.mxu0 0
      %1621 = vmatpush1.bf16.msra.mxu0 0
      %1622 = vmatprep.subr.bf16.mxu0 0
      %1623 = vmatpush1.bf16.msra.mxu0 0
      %1624 = vmatprep.subr.bf16.mxu0 0
      %1625 = vmatpush1.bf16.msra.mxu0 0
      %1626 = vmatprep.subr.bf16.mxu0 0
      %1627 = vmatpush1.bf16.msra.mxu0 0
      %1628 = vmatprep.subr.bf16.mxu0 0
      %1629 = vmatpush1.bf16.msra.mxu0 0
      %1630 = vmatprep.subr.bf16.mxu0 0
      %1631 = vmatpush1.bf16.msra.mxu0 0
      %1632 = vmatprep.subr.bf16.mxu0 0
      %1633 = vmatpush1.bf16.msra.mxu0 0
      %1634 = vmatprep.subr.bf16.mxu0 0
      %1635 = vmatpush1.bf16.msra.mxu0 0
      %1636 = vmatprep.mubr.bf16.mxu0 0
      %1637 = vmatmul.mubr.bf16.gmra.mrb[0].mxu0 %v1551
      %v1638 = vpop.f32.mrb[0].mxu0
      %v1639 = vadd.f32 0.0, %v1638
      %v1640 = vpop.f32.mrb[0].mxu0
      %v1641 = vpop.f32.mrb[0].mxu0
      %v1642 = vadd.f32 0.0, %v1641
      %v1643 = vpop.f32.mrb[0].mxu0
      %1644 = vmatprep.mubr.bf16.mxu0 0
      %1645 = vmatmul.mubr.bf16.gmra.mrb[0].mxu0 %v1554
      %v1646 = vpop.f32.mrb[0].mxu0
      %v1647 = vadd.f32 0.0, %v1646
      %v1648 = vpop.f32.mrb[0].mxu0
      %v1649 = vpop.f32.mrb[0].mxu0
      %v1650 = vadd.f32 0.0, %v1649
      %v1651 = vpop.f32.mrb[0].mxu0
      %1652 = vmatprep.mubr.bf16.mxu0 0
      %1653 = vmatmul.mubr.bf16.gmra.mrb[0].mxu0 %v1557
      %v1654 = vpop.f32.mrb[0].mxu0
      %v1655 = vadd.f32 0.0, %v1654
      %v1656 = vpop.f32.mrb[0].mxu0
      %v1657 = vpop.f32.mrb[0].mxu0
      %v1658 = vadd.f32 0.0, %v1657
      %v1659 = vpop.f32.mrb[0].mxu0
      %1660 = vmatprep.mubr.bf16.mxu0 0
      %1661 = vmatmul.mubr.bf16.gmra.mrb[0].mxu0 %v1560
      %v1662 = vpop.f32.mrb[0].mxu0
      %v1663 = vadd.f32 0.0, %v1662
      %v1664 = vpop.f32.mrb[0].mxu0
      %v1665 = vpop.f32.mrb[0].mxu0
      %v1666 = vadd.f32 0.0, %v1665
      %v1667 = vpop.f32.mrb[0].mxu0
      %1668 = vmatprep.mubr.bf16.mxu0 0
      %1669 = vmatmul.mubr.bf16.gmra.mrb[0].mxu0 %v1563
      %v1670 = vpop.f32.mrb[0].mxu0
      %v1671 = vadd.f32 0.0, %v1670
      %v1672 = vpop.f32.mrb[0].mxu0
      %v1673 = vpop.f32.mrb[0].mxu0
      %v1674 = vadd.f32 0.0, %v1673
      %v1675 = vpop.f32.mrb[0].mxu0
      %1676 = vmatprep.mubr.bf16.mxu0 0
      %1677 = vmatmul.mubr.bf16.gmra.mrb[0].mxu0 %v1566
      %v1678 = vpop.f32.mrb[0].mxu0
      %v1679 = vadd.f32 0.0, %v1678
      %v1680 = vpop.f32.mrb[0].mxu0
      %v1681 = vpop.f32.mrb[0].mxu0
      %v1682 = vadd.f32 0.0, %v1681
      %v1683 = vpop.f32.mrb[0].mxu0
      %1684 = vmatprep.mubr.bf16.mxu0 0
      %1685 = vmatmul.mubr.bf16.gmra.mrb[0].mxu0 %v1569
      %v1686 = vpop.f32.mrb[0].mxu0
      %v1687 = vadd.f32 0.0, %v1686
      %v1688 = vpop.f32.mrb[0].mxu0
      %v1689 = vpop.f32.mrb[0].mxu0
      %v1690 = vadd.f32 0.0, %v1689
      %v1691 = vpop.f32.mrb[0].mxu0
      %1692 = vmatprep.mubr.bf16.mxu0 0
      %1693 = vmatmul.mubr.bf16.gmra.mrb[0].mxu0 %v1572
      %v1694 = vpop.f32.mrb[0].mxu0
      %v1695 = vadd.f32 0.0, %v1694
      %v1696 = vpop.f32.mrb[0].mxu0
      %v1697 = vpop.f32.mrb[0].mxu0
      %v1698 = vadd.f32 0.0, %v1697
      %v1699 = vpop.f32.mrb[0].mxu0
      %1700 = vmatprep.mubr.bf16.mxu0 0
      %1701 = vmatmul.mubr.bf16.gmra.mrb[0].mxu0 %v1575
      %v1702 = vpop.f32.mrb[0].mxu0
      %v1703 = vadd.f32 0.0, %v1702
      %v1704 = vpop.f32.mrb[0].mxu0
      %v1705 = vpop.f32.mrb[0].mxu0
      %v1706 = vadd.f32 0.0, %v1705
      %v1707 = vpop.f32.mrb[0].mxu0
      %1708 = vmatprep.mubr.bf16.mxu0 0
      %1709 = vmatmul.mubr.bf16.gmra.mrb[0].mxu0 %v1578
      %v1710 = vpop.f32.mrb[0].mxu0
      %v1711 = vadd.f32 0.0, %v1710
      %v1712 = vpop.f32.mrb[0].mxu0
      %v1713 = vpop.f32.mrb[0].mxu0
      %v1714 = vadd.f32 0.0, %v1713
      %v1715 = vpop.f32.mrb[0].mxu0
      %1716 = vmatprep.mubr.bf16.mxu0 0
      %1717 = vmatmul.mubr.bf16.gmra.mrb[0].mxu0 %v1581
      %v1718 = vpop.f32.mrb[0].mxu0
      %v1719 = vadd.f32 0.0, %v1718
      %v1720 = vpop.f32.mrb[0].mxu0
      %v1721 = vpop.f32.mrb[0].mxu0
      %v1722 = vadd.f32 0.0, %v1721
      %v1723 = vpop.f32.mrb[0].mxu0
      %1724 = vmatprep.mubr.bf16.mxu0 0
      %1725 = vmatmul.mubr.bf16.gmra.mrb[0].mxu0 %v1584
      %v1726 = vpop.f32.mrb[0].mxu0
      %v1727 = vadd.f32 0.0, %v1726
      %v1728 = vpop.f32.mrb[0].mxu0
      %v1729 = vpop.f32.mrb[0].mxu0
      %v1730 = vadd.f32 0.0, %v1729
      %v1731 = vpop.f32.mrb[0].mxu0
      %1732 = vmatprep.mubr.bf16.mxu0 0
      %1733 = vmatmul.mubr.bf16.gmra.mrb[0].mxu0 %v1587
      %v1734 = vpop.f32.mrb[0].mxu0
      %v1735 = vadd.f32 0.0, %v1734
      %v1736 = vpop.f32.mrb[0].mxu0
      %v1737 = vpop.f32.mrb[0].mxu0
      %v1738 = vadd.f32 0.0, %v1737
      %v1739 = vpop.f32.mrb[0].mxu0
      %1740 = vmatprep.mubr.bf16.mxu0 0
      %1741 = vmatmul.mubr.bf16.gmra.mrb[0].mxu0 %v1590
      %v1742 = vpop.f32.mrb[0].mxu0
      %v1743 = vadd.f32 0.0, %v1742
      %v1744 = vpop.f32.mrb[0].mxu0
      %v1745 = vpop.f32.mrb[0].mxu0
      %v1746 = vadd.f32 0.0, %v1745
      %v1747 = vpop.f32.mrb[0].mxu0
      %1748 = vmatprep.mubr.bf16.mxu0 0
      %1749 = vmatmul.mubr.bf16.gmra.mrb[0].mxu0 %v1593
      %v1750 = vpop.f32.mrb[0].mxu0
      %v1751 = vadd.f32 0.0, %v1750
      %v1752 = vpop.f32.mrb[0].mxu0
      %v1753 = vpop.f32.mrb[0].mxu0
      %v1754 = vadd.f32 0.0, %v1753
      %v1755 = vpop.f32.mrb[0].mxu0
      %1756 = vmatprep.mubr.bf16.mxu0 0
      %1757 = vmatmul.mubr.bf16.gmra.mrb[0].mxu0 %v1596
      %v1758 = vpop.f32.mrb[0].mxu0
      %v1759 = vadd.f32 0.0, %v1758
      %v1760 = vpop.f32.mrb[0].mxu0
      %v1761 = vpop.f32.mrb[0].mxu0
      %v1762 = vadd.f32 0.0, %v1761
      %v1763 = vpop.f32.mrb[0].mxu0
      %1764 = vmatprep.mubr.bf16.mxu0 0
      %1765 = vmatmul.mubr.bf16.gmra.mrb[0].mxu0 %v1599
      %v1766 = vpop.f32.mrb[0].mxu0
      %v1767 = vadd.f32 0.0, %v1766
      %v1768 = vpop.f32.mrb[0].mxu0
      %v1769 = vpop.f32.mrb[0].mxu0
      %v1770 = vadd.f32 0.0, %v1769
      %v1771 = vpop.f32.mrb[0].mxu0
      %1772 = vdwg.mxu0
      %v1773 = vadd.f32 %v1468, %v1639
      %v1774 = vadd.f32 %v1469, %v1642
      %v1775 = vadd.f32 %v1470, %v1647
      %v1776 = vadd.f32 %v1471, %v1650
      %v1777 = vadd.f32 %v1472, %v1655
      %v1778 = vadd.f32 %v1473, %v1658
      %v1779 = vadd.f32 %v1474, %v1663
      %v1780 = vadd.f32 %v1475, %v1666
      %v1781 = vadd.f32 %v1476, %v1671
      %v1782 = vadd.f32 %v1477, %v1674
      %v1783 = vadd.f32 %v1478, %v1679
      %v1784 = vadd.f32 %v1479, %v1682
      %v1785 = vadd.f32 %v1480, %v1687
      %v1786 = vadd.f32 %v1481, %v1690
      %v1787 = vadd.f32 %v1482, %v1695
      %v1788 = vadd.f32 %v1483, %v1698
      %v1789 = vadd.f32 %v1484, %v1703
      %v1790 = vadd.f32 %v1485, %v1706
      %v1791 = vadd.f32 %v1486, %v1711
      %v1792 = vadd.f32 %v1487, %v1714
      %v1793 = vadd.f32 %v1488, %v1719
      %v1794 = vadd.f32 %v1489, %v1722
      %v1795 = vadd.f32 %v1490, %v1727
      %v1796 = vadd.f32 %v1491, %v1730
      %v1797 = vadd.f32 %v1492, %v1735
      %v1798 = vadd.f32 %v1493, %v1738
      %v1799 = vadd.f32 %v1494, %v1743
      %v1800 = vadd.f32 %v1495, %v1746
      %v1801 = vadd.f32 %v1496, %v1751
      %v1802 = vadd.f32 %v1497, %v1754
      %v1803 = vadd.f32 %v1498, %v1759
      %v1804 = vadd.f32 %v1499, %v1762
      %v1805 = vadd.f32 %v1500, %v1767
      %v1806 = vadd.f32 %v1501, %v1770
      %v1807 = vld [vmem:[%s251] sm:$0x1]
      %v1809 = vlaneseq
      %v1810 = vshrl.u32 %v1809, 7
      %v1811 = vsub.s32 0, %v1810
      %v1812 = vrot.slane %v1807, %v1811
      %v1814 = vmul.f32 %v1773, %v1812
      %v1815 = vmul.f32 %v1774, %v1812
      %v1816 = vmul.f32 %v1775, %v1812
      %v1817 = vmul.f32 %v1776, %v1812
      %v1818 = vmul.f32 %v1777, %v1812
      %v1819 = vmul.f32 %v1778, %v1812
      %v1820 = vmul.f32 %v1779, %v1812
      %v1821 = vmul.f32 %v1780, %v1812
      %v1822 = vmul.f32 %v1781, %v1812
      %v1823 = vmul.f32 %v1782, %v1812
      %v1824 = vmul.f32 %v1783, %v1812
      %v1825 = vmul.f32 %v1784, %v1812
      %v1826 = vmul.f32 %v1785, %v1812
      %v1827 = vmul.f32 %v1786, %v1812
      %v1828 = vmul.f32 %v1787, %v1812
      %v1829 = vmul.f32 %v1788, %v1812
      %v1830 = vmul.f32 %v1789, %v1812
      %v1831 = vmul.f32 %v1790, %v1812
      %v1832 = vmul.f32 %v1791, %v1812
      %v1833 = vmul.f32 %v1792, %v1812
      %v1834 = vmul.f32 %v1793, %v1812
      %v1835 = vmul.f32 %v1794, %v1812
      %v1836 = vmul.f32 %v1795, %v1812
      %v1837 = vmul.f32 %v1796, %v1812
      %v1838 = vmul.f32 %v1797, %v1812
      %v1839 = vmul.f32 %v1798, %v1812
      %v1840 = vmul.f32 %v1799, %v1812
      %v1841 = vmul.f32 %v1800, %v1812
      %v1842 = vmul.f32 %v1801, %v1812
      %v1843 = vmul.f32 %v1802, %v1812
      %v1844 = vmul.f32 %v1803, %v1812
      %v1845 = vmul.f32 %v1804, %v1812
      %v1846 = vmul.f32 %v1805, %v1812
      %v1847 = vmul.f32 %v1806, %v1812
      %v1848 = vld [vmem:[%s254] sm:$0x1]
      %v1850 = vlaneseq
      %v1851 = vshrl.u32 %v1850, 7
      %v1852 = vsub.s32 0, %v1851
      %v1853 = vrot.slane %v1848, %v1852
      %v1855 = vadd.f32 %v1814, %v1853
      %v1856 = vadd.f32 %v1815, %v1853
      %v1857 = vadd.f32 %v1816, %v1853
      %v1858 = vadd.f32 %v1817, %v1853
      %v1859 = vadd.f32 %v1818, %v1853
      %v1860 = vadd.f32 %v1819, %v1853
      %v1861 = vadd.f32 %v1820, %v1853
      %v1862 = vadd.f32 %v1821, %v1853
      %v1863 = vadd.f32 %v1822, %v1853
      %v1864 = vadd.f32 %v1823, %v1853
      %v1865 = vadd.f32 %v1824, %v1853
      %v1866 = vadd.f32 %v1825, %v1853
      %v1867 = vadd.f32 %v1826, %v1853
      %v1868 = vadd.f32 %v1827, %v1853
      %v1869 = vadd.f32 %v1828, %v1853
      %v1870 = vadd.f32 %v1829, %v1853
      %v1871 = vadd.f32 %v1830, %v1853
      %v1872 = vadd.f32 %v1831, %v1853
      %v1873 = vadd.f32 %v1832, %v1853
      %v1874 = vadd.f32 %v1833, %v1853
      %v1875 = vadd.f32 %v1834, %v1853
      %v1876 = vadd.f32 %v1835, %v1853
      %v1877 = vadd.f32 %v1836, %v1853
      %v1878 = vadd.f32 %v1837, %v1853
      %v1879 = vadd.f32 %v1838, %v1853
      %v1880 = vadd.f32 %v1839, %v1853
      %v1881 = vadd.f32 %v1840, %v1853
      %v1882 = vadd.f32 %v1841, %v1853
      %v1883 = vadd.f32 %v1842, %v1853
      %v1884 = vadd.f32 %v1843, %v1853
      %v1885 = vadd.f32 %v1844, %v1853
      %v1886 = vadd.f32 %v1845, %v1853
      %v1887 = vadd.f32 %v1846, %v1853
      %v1888 = vadd.f32 %v1847, %v1853
      %v1889 = vmul.f32 %v1855, 0.2
      %v1890 = vmul.f32 %v1856, 0.2
      %v1891 = vmul.f32 %v1857, 0.2
      %v1892 = vmul.f32 %v1858, 0.2
      %v1893 = vmul.f32 %v1859, 0.2
      %v1894 = vmul.f32 %v1860, 0.2
      %v1895 = vmul.f32 %v1861, 0.2
      %v1896 = vmul.f32 %v1862, 0.2
      %v1897 = vmul.f32 %v1863, 0.2
      %v1898 = vmul.f32 %v1864, 0.2
      %v1899 = vmul.f32 %v1865, 0.2
      %v1900 = vmul.f32 %v1866, 0.2
      %v1901 = vmul.f32 %v1867, 0.2
      %v1902 = vmul.f32 %v1868, 0.2
      %v1903 = vmul.f32 %v1869, 0.2
      %v1904 = vmul.f32 %v1870, 0.2
      %v1905 = vmul.f32 %v1871, 0.2
      %v1906 = vmul.f32 %v1872, 0.2
      %v1907 = vmul.f32 %v1873, 0.2
      %v1908 = vmul.f32 %v1874, 0.2
      %v1909 = vmul.f32 %v1875, 0.2
      %v1910 = vmul.f32 %v1876, 0.2
      %v1911 = vmul.f32 %v1877, 0.2
      %v1912 = vmul.f32 %v1878, 0.2
      %v1913 = vmul.f32 %v1879, 0.2
      %v1914 = vmul.f32 %v1880, 0.2
      %v1915 = vmul.f32 %v1881, 0.2
      %v1916 = vmul.f32 %v1882, 0.2
      %v1917 = vmul.f32 %v1883, 0.2
      %v1918 = vmul.f32 %v1884, 0.2
      %v1919 = vmul.f32 %v1885, 0.2
      %v1920 = vmul.f32 %v1886, 0.2
      %v1921 = vmul.f32 %v1887, 0.2
      %v1922 = vmul.f32 %v1888, 0.2
      %v1923 = vmax.f32 %v1855, %v1889
      %v1924 = vmax.f32 %v1856, %v1890
      %v1925 = vmax.f32 %v1857, %v1891
      %v1926 = vmax.f32 %v1858, %v1892
      %v1927 = vmax.f32 %v1859, %v1893
      %v1928 = vmax.f32 %v1860, %v1894
      %v1929 = vmax.f32 %v1861, %v1895
      %v1930 = vmax.f32 %v1862, %v1896
      %v1931 = vmax.f32 %v1863, %v1897
      %v1932 = vmax.f32 %v1864, %v1898
      %v1933 = vmax.f32 %v1865, %v1899
      %v1934 = vmax.f32 %v1866, %v1900
      %v1935 = vmax.f32 %v1867, %v1901
      %v1936 = vmax.f32 %v1868, %v1902
      %v1937 = vmax.f32 %v1869, %v1903
      %v1938 = vmax.f32 %v1870, %v1904
      %v1939 = vmax.f32 %v1871, %v1905
      %v1940 = vmax.f32 %v1872, %v1906
      %v1941 = vmax.f32 %v1873, %v1907
      %v1942 = vmax.f32 %v1874, %v1908
      %v1943 = vmax.f32 %v1875, %v1909
      %v1944 = vmax.f32 %v1876, %v1910
      %v1945 = vmax.f32 %v1877, %v1911
      %v1946 = vmax.f32 %v1878, %v1912
      %v1947 = vmax.f32 %v1879, %v1913
      %v1948 = vmax.f32 %v1880, %v1914
      %v1949 = vmax.f32 %v1881, %v1915
      %v1950 = vmax.f32 %v1882, %v1916
      %v1951 = vmax.f32 %v1883, %v1917
      %v1952 = vmax.f32 %v1884, %v1918
      %v1953 = vmax.f32 %v1885, %v1919
      %v1954 = vmax.f32 %v1886, %v1920
      %v1955 = vmax.f32 %v1887, %v1921
      %v1956 = vmax.f32 %v1888, %v1922
      %v1957 = vpack.c.bf16 %v1924, %v1923
      %v1958 = vpack.c.bf16 %v1926, %v1925
      %v1959 = vpack.c.bf16 %v1928, %v1927
      %v1960 = vpack.c.bf16 %v1930, %v1929
      %v1961 = vpack.c.bf16 %v1932, %v1931
      %v1962 = vpack.c.bf16 %v1934, %v1933
      %v1963 = vpack.c.bf16 %v1936, %v1935
      %v1964 = vpack.c.bf16 %v1938, %v1937
      %v1965 = vpack.c.bf16 %v1940, %v1939
      %v1966 = vpack.c.bf16 %v1942, %v1941
      %v1967 = vpack.c.bf16 %v1944, %v1943
      %v1968 = vpack.c.bf16 %v1946, %v1945
      %v1969 = vpack.c.bf16 %v1948, %v1947
      %v1970 = vpack.c.bf16 %v1950, %v1949
      %v1971 = vpack.c.bf16 %v1952, %v1951
      %v1972 = vpack.c.bf16 %v1954, %v1953
      %v1973 = vpack.c.bf16 %v1956, %v1955
      %v1991 = vunpack.c.l.b16 %v1957
      %v1992 = vunpack.c.h.b16 %v1957
      %v1993 = vunpack.c.l.b16 %v1958
      %v1994 = vunpack.c.h.b16 %v1958
      %v1995 = vunpack.c.l.b16 %v1959
      %v1996 = vunpack.c.h.b16 %v1959
      %v1997 = vunpack.c.l.b16 %v1960
      %v1998 = vunpack.c.h.b16 %v1960
      %v1999 = vunpack.c.l.b16 %v1961
      %v2000 = vunpack.c.h.b16 %v1961
      %v2001 = vunpack.c.l.b16 %v1962
      %v2002 = vunpack.c.h.b16 %v1962
      %v2003 = vunpack.c.l.b16 %v1963
      %v2004 = vunpack.c.h.b16 %v1963
      %v2005 = vunpack.c.l.b16 %v1964
      %v2006 = vunpack.c.h.b16 %v1964
      %v2007 = vunpack.c.l.b16 %v1965
      %v2008 = vunpack.c.h.b16 %v1965
      %v2009 = vunpack.c.l.b16 %v1966
      %v2010 = vunpack.c.h.b16 %v1966
      %v2011 = vunpack.c.l.b16 %v1967
      %v2012 = vunpack.c.h.b16 %v1967
      %v2013 = vunpack.c.l.b16 %v1968
      %v2014 = vunpack.c.h.b16 %v1968
      %v2015 = vunpack.c.l.b16 %v1969
      %v2016 = vunpack.c.h.b16 %v1969
      %v2017 = vunpack.c.l.b16 %v1970
      %v2018 = vunpack.c.h.b16 %v1970
      %v2019 = vunpack.c.l.b16 %v1971
      %v2020 = vunpack.c.h.b16 %v1971
      %v2021 = vunpack.c.l.b16 %v1972
      %v2022 = vunpack.c.h.b16 %v1972
      %v2023 = vunpack.c.l.b16 %v1973
      %v2024 = vunpack.c.h.b16 %v1973
      %v2025 = vpack.c.b16 %v1991, %v1991
      %v2026 = vpack.c.b16 %v1992, %v1992
      %v2027 = vpack.c.b16 %v1993, %v1993
      %v2028 = vpack.c.b16 %v1994, %v1994
      %v2029 = vpack.c.b16 %v1995, %v1995
      %v2030 = vpack.c.b16 %v1996, %v1996
      %v2031 = vpack.c.b16 %v1997, %v1997
      %v2032 = vpack.c.b16 %v1998, %v1998
      %v2033 = vpack.c.b16 %v1999, %v1999
      %v2034 = vpack.c.b16 %v2000, %v2000
      %v2035 = vpack.c.b16 %v2001, %v2001
      %v2036 = vpack.c.b16 %v2002, %v2002
      %v2037 = vpack.c.b16 %v2003, %v2003
      %v2038 = vpack.c.b16 %v2004, %v2004
      %v2039 = vpack.c.b16 %v2005, %v2005
      %v2040 = vpack.c.b16 %v2006, %v2006
      %v2041 = vpack.c.b16 %v2007, %v2007
      %v2042 = vpack.c.b16 %v2008, %v2008
      %v2043 = vpack.c.b16 %v2009, %v2009
      %v2044 = vpack.c.b16 %v2010, %v2010
      %v2045 = vpack.c.b16 %v2011, %v2011
      %v2046 = vpack.c.b16 %v2012, %v2012
      %v2047 = vpack.c.b16 %v2013, %v2013
      %v2048 = vpack.c.b16 %v2014, %v2014
      %v2049 = vpack.c.b16 %v2015, %v2015
      %v2050 = vpack.c.b16 %v2016, %v2016
      %v2051 = vpack.c.b16 %v2017, %v2017
      %v2052 = vpack.c.b16 %v2018, %v2018
      %v2053 = vpack.c.b16 %v2019, %v2019
      %v2054 = vpack.c.b16 %v2020, %v2020
      %v2055 = vpack.c.b16 %v2021, %v2021
      %v2056 = vpack.c.b16 %v2022, %v2022
      %v2057 = vpack.c.b16 %v2023, %v2023
      %v2058 = vpack.c.b16 %v2024, %v2024
      %2093 = vst [vmem:[%s262] sm:$0xf] %v2025
      %2094 = vst [vmem:[%s262 + $0x4] sm:$0xf] %v2026
      %2095 = vst [vmem:[%s262 + $0x8] sm:$0xf] %v2027
      %2096 = vst [vmem:[%s262 + $0xc] sm:$0xf] %v2028
      %2097 = vst [vmem:[%s262 + $0x10] sm:$0xf] %v2029
      %2098 = vst [vmem:[%s262 + $0x14] sm:$0xf] %v2030
      %2099 = vst [vmem:[%s262 + $0x18] sm:$0xf] %v2031
      %2100 = vst [vmem:[%s262 + $0x1c] sm:$0xf] %v2032
      %2101 = vst [vmem:[%s262 + $0x20] sm:$0xf] %v2033
      %2102 = vst [vmem:[%s262 + $0x24] sm:$0xf] %v2034
      %2103 = vst [vmem:[%s262 + $0x28] sm:$0xf] %v2035
      %2104 = vst [vmem:[%s262 + $0x2c] sm:$0xf] %v2036
      %2105 = vst [vmem:[%s262 + $0x30] sm:$0xf] %v2037
      %2106 = vst [vmem:[%s262 + $0x34] sm:$0xf] %v2038
      %2107 = vst [vmem:[%s262 + $0x38] sm:$0xf] %v2039
      %2108 = vst [vmem:[%s262 + $0x3c] sm:$0xf] %v2040
      %2109 = vst [vmem:[%s262 + $0x40] sm:$0xf] %v2041
      %2110 = vst [vmem:[%s262 + $0x44] sm:$0xf] %v2042
      %2111 = vst [vmem:[%s262 + $0x48] sm:$0xf] %v2043
      %2112 = vst [vmem:[%s262 + $0x4c] sm:$0xf] %v2044
      %2113 = vst [vmem:[%s262 + $0x50] sm:$0xf] %v2045
      %2114 = vst [vmem:[%s262 + $0x54] sm:$0xf] %v2046
      %2115 = vst [vmem:[%s262 + $0x58] sm:$0xf] %v2047
      %2116 = vst [vmem:[%s262 + $0x5c] sm:$0xf] %v2048
      %2117 = vst [vmem:[%s262 + $0x60] sm:$0xf] %v2049
      %2118 = vst [vmem:[%s262 + $0x64] sm:$0xf] %v2050
      %2119 = vst [vmem:[%s262 + $0x68] sm:$0xf] %v2051
      %2120 = vst [vmem:[%s262 + $0x6c] sm:$0xf] %v2052
      %2121 = vst [vmem:[%s262 + $0x70] sm:$0xf] %v2053
      %2122 = vst [vmem:[%s262 + $0x74] sm:$0xf] %v2054
      %2123 = vst [vmem:[%s262 + $0x78] sm:$0xf] %v2055
      %2124 = vst [vmem:[%s262 + $0x7c] sm:$0xf] %v2056
      %2125 = vst [vmem:[%s262 + $0x80] sm:$0xf] %v2057
      %2126 = vst [vmem:[%s262 + $0x84] sm:$0xf] %v2058
      %p2127 = scmp.lt.s32.totalorder %s19, 1
      %s2128 = scalar_select %p2127, %s19, 1
      %p2129 = scmp.lt.s32.totalorder %s20, 0
      %s2130 = scalar_select %p2129, %s20, 0
      %s2131 = smul.addr %s2128, 34
      %s2132 = sadd.s32 %s2130, %s2131
      %s2133 = smul.addr %s2132, 4
      %s2134 = scalar_lea.vmem %s4, %s2133
      // Predicated region
      $region37: #{patch_discriminator_with_sed.6} parent=35 // pred_check
        %p2135 = pneg %p151
      $region38: #{patch_discriminator_with_sed.6} parent=35 // pred_check_branch
        %2137 = sbr.rel (%p2135) target = $region40
      $region39: #{patch_discriminator_with_sed.6} parent=35 // pred_region
        _
      $region40: #{patch_discriminator_with_sed.6} parent=35 // pred_fallthru
        _
    $region36: #{patch_discriminator_with_sed.6} parent=5 // pred_fallthru
      _
    %p2138 = scmp.le.s32.totalorder 2, %s10
    // Predicated region
    $region41: #{patch_discriminator_with_sed.6} parent=5 // pred_check
      %p2139 = pneg %p2138
    $region42: #{patch_discriminator_with_sed.6} parent=5 // pred_check_branch
      %2141 = sbr.rel (%p2139) target = $region44
    $region43: #{patch_discriminator_with_sed.6} parent=5 // pred_region
      %s2142 = ssub.s32 %s10, 2
      // Predicated region
      $region45: #{patch_discriminator_with_sed.6} parent=43 // pred_check
        %p2143 = pneg %p157
      $region46: #{patch_discriminator_with_sed.6} parent=43 // pred_check_branch
        %2145 = sbr.rel (%p2143) target = $region48
      $region47: #{patch_discriminator_with_sed.6} parent=43 // pred_region
        %p2146 = scmp.lt.s32.totalorder %s21, 1
        %s2147 = scalar_select %p2146, %s21, 1
        %p2148 = scmp.lt.s32.totalorder %s22, 0
        %s2149 = scalar_select %p2148, %s22, 0
        %s2150 = smul.addr %s2147, 34
        %s2151 = sadd.s32 %s2149, %s2150
        %s2152 = smul.addr %s2151, 4
        %s2153 = scalar_lea.vmem %s4, %s2152
      $region48: #{patch_discriminator_with_sed.6} parent=43 // pred_fallthru
        _
    $region44: #{patch_discriminator_with_sed.6} parent=5 // pred_fallthru
      _
  $region6: #{patch_discriminator_with_sed.6} parent=0 // loop_footer
    %s14 = sadd.s32 1, %s10
  $region7: #{patch_discriminator_with_sed.6} parent=0 // loop_footer_branch
    %9 = sbr.rel target = $region3
  $region8: #{patch_discriminator_with_sed.6} parent=0 // loop_exit
    _

// kernel: patch_discriminator_with_sed.7
$region0: #{patch_discriminator_with_sed.7}
  #allocation0 [shape = 'u32[]', space=smem, size = 0x4, offset = 0x4, fixed_abs, tag = 'smem constant byte address 0x4 - core index']
  #allocation1 [shape = 'u32[144,128]{1,0:T(1,128)}', space=vmem, size = 0x12000, scoped, tag = 'internal scratch']
  %s0 = inlined_call_operand.vmem [shape: bf16[2,82,64], index: 0, kind: input, shape index: {}]
  %s1 = inlined_call_operand.vmem [shape: bf16[4,64,128], index: 1, kind: input, shape index: {}]
  %s2 = inlined_call_operand.vmem [shape: f32[1,128], index: 2, kind: input, shape index: {}]
  %s3 = inlined_call_operand.vmem [shape: f32[1,128], index: 3, kind: input, shape index: {}]
  %s4 = inlined_call_operand.vmem [shape: bf16[2,72,128], index: 4, kind: output, shape index: {}]
  %s5 = sld [smem:[#allocation0]]
  $region49: #{patch_discriminator_with_sed.7} parent=0
    _
  %s7 = ssub.s32 1, %s5
  %s8 = scalar_select 0, %s7, %s5
  loop: start=0, step=1, limit=4
  $region2: #{patch_discriminator_with_sed.7} parent=0 // loop_pre_header
    _
  $region3: #{patch_discriminator_with_sed.7} parent=0 // loop_header
    %s10 = sphi 0, %s14
    %p11 = scmp.ge.s32.totalorder %s10, 4
    %s17 = sphi 0, %s29
    %s18 = sphi 0, %s25
    %s19 = sphi 0, %s17
    %s20 = sphi 0, %s18
    %s21 = sphi 0, %s19
    %s22 = sphi 0, %s20
    %s32 = sphi 0, %s34
    %s35 = sphi 0, %s32
    %s36 = sphi 0, %s35
    %s52 = sphi 0, %s36
    %s58 = sphi 0, %s60
    %s61 = sphi 0, %s58
    %s62 = sphi 0, %s61
    %s78 = sphi 0, %s62
    %s84 = sphi 0, %s86
    %s87 = sphi 0, %s84
    %s88 = sphi 0, %s87
    %s104 = sphi 0, %s88
    %s110 = sphi 0, %s112
    %s113 = sphi 0, %s110
    %s114 = sphi 0, %s113
    %s130 = sphi 0, %s114
    %s138 = sphi 0, %s140
    %s141 = sphi 0, %s138
    %s142 = sphi 0, %s141
    %s158 = sphi 0, %s142
  $region4: #{patch_discriminator_with_sed.7} parent=0 // loop_header_branch
    %13 = sbr.rel (%p11) target = $region8
  $region5: #{patch_discriminator_with_sed.7} parent=0 // loop_body
    %s15 = ssub.s32 %s10, 1
    %s16 = ssub.s32 %s10, 2
    %s23 = sadd.s32 1, %s18
    %p24 = scmp.ge.s32.totalorder %s23, 1
    %s25 = scalar_select %p24, 0, %s23
    %s26 = sadd.s32 1, %s17
    %s27 = scalar_select %p24, %s26, %s17
    %p28 = scmp.ge.s32.totalorder %s27, 2
    %s29 = scalar_select %p28, 0, %s27
    %s30 = ssub.s32 %s17, %s29
    %p31 = scmp.eq.s32.totalorder %s30, 0
    %s33 = sadd.s32 %s32, 1
    %s34 = scalar_select %p31, %s32, %s33
    %p37 = pneg %p31
    %p38 = scmp.eq.s32.totalorder %s10, 1
    %p39 = por %p37, %p38
    %p40 = scmp.ne.s32.totalorder %s32, %s35
    %p41 = scmp.eq.s32.totalorder %s10, 0
    %p42 = por %p40, %p41
    %p43 = scmp.ne.s32.totalorder %s32, %s35
    %p44 = scmp.eq.s32.totalorder %s15, 1
    %p45 = por %p43, %p44
    %p46 = scmp.ne.s32.totalorder %s35, %s36
    %p47 = scmp.eq.s32.totalorder %s15, 0
    %p48 = por %p46, %p47
    %p49 = scmp.ne.s32.totalorder %s35, %s36
    %p50 = scmp.eq.s32.totalorder %s16, 1
    %p51 = por %p49, %p50
    %p53 = scmp.ne.s32.totalorder %s36, %s52
    %p54 = scmp.eq.s32.totalorder %s16, 0
    %p55 = por %p53, %p54
    %s56 = ssub.s32 %s18, %s25
    %p57 = scmp.eq.s32.totalorder %s56, 0
    %s59 = sadd.s32 %s58, 1
    %s60 = scalar_select %p57, %s58, %s59
    %p63 = pneg %p57
    %p64 = scmp.eq.s32.totalorder %s10, 1
    %p65 = por %p63, %p64
    %p66 = scmp.ne.s32.totalorder %s58, %s61
    %p67 = scmp.eq.s32.totalorder %s10, 0
    %p68 = por %p66, %p67
    %p69 = scmp.ne.s32.totalorder %s58, %s61
    %p70 = scmp.eq.s32.totalorder %s15, 1
    %p71 = por %p69, %p70
    %p72 = scmp.ne.s32.totalorder %s61, %s62
    %p73 = scmp.eq.s32.totalorder %s15, 0
    %p74 = por %p72, %p73
    %p75 = scmp.ne.s32.totalorder %s61, %s62
    %p76 = scmp.eq.s32.totalorder %s16, 1
    %p77 = por %p75, %p76
    %p79 = scmp.ne.s32.totalorder %s62, %s78
    %p80 = scmp.eq.s32.totalorder %s16, 0
    %p81 = por %p79, %p80
    %s82 = ssub.s32 %s18, %s25
    %p83 = scmp.eq.s32.totalorder %s82, 0
    %s85 = sadd.s32 %s84, 1
    %s86 = scalar_select %p83, %s84, %s85
    %p89 = pneg %p83
    %p90 = scmp.eq.s32.totalorder %s10, 1
    %p91 = por %p89, %p90
    %p92 = scmp.ne.s32.totalorder %s84, %s87
    %p93 = scmp.eq.s32.totalorder %s10, 0
    %p94 = por %p92, %p93
    %p95 = scmp.ne.s32.totalorder %s84, %s87
    %p96 = scmp.eq.s32.totalorder %s15, 1
    %p97 = por %p95, %p96
    %p98 = scmp.ne.s32.totalorder %s87, %s88
    %p99 = scmp.eq.s32.totalorder %s15, 0
    %p100 = por %p98, %p99
    %p101 = scmp.ne.s32.totalorder %s87, %s88
    %p102 = scmp.eq.s32.totalorder %s16, 1
    %p103 = por %p101, %p102
    %p105 = scmp.ne.s32.totalorder %s88, %s104
    %p106 = scmp.eq.s32.totalorder %s16, 0
    %p107 = por %p105, %p106
    %s108 = ssub.s32 %s18, %s25
    %p109 = scmp.eq.s32.totalorder %s108, 0
    %s111 = sadd.s32 %s110, 1
    %s112 = scalar_select %p109, %s110, %s111
    %p115 = pneg %p109
    %p116 = scmp.eq.s32.totalorder %s10, 1
    %p117 = por %p115, %p116
    %p118 = scmp.ne.s32.totalorder %s110, %s113
    %p119 = scmp.eq.s32.totalorder %s10, 0
    %p120 = por %p118, %p119
    %p121 = scmp.ne.s32.totalorder %s110, %s113
    %p122 = scmp.eq.s32.totalorder %s15, 1
    %p123 = por %p121, %p122
    %p124 = scmp.ne.s32.totalorder %s113, %s114
    %p125 = scmp.eq.s32.totalorder %s15, 0
    %p126 = por %p124, %p125
    %p127 = scmp.ne.s32.totalorder %s113, %s114
    %p128 = scmp.eq.s32.totalorder %s16, 1
    %p129 = por %p127, %p128
    %p131 = scmp.ne.s32.totalorder %s114, %s130
    %p132 = scmp.eq.s32.totalorder %s16, 0
    %p133 = por %p131, %p132
    %s134 = ssub.s32 %s17, %s29
    %s135 = ssub.s32 %s18, %s25
    %s136 = sor.u32 %s134, %s135
    %p137 = scmp.eq.s32.totalorder %s136, 0
    %s139 = sadd.s32 %s138, 1
    %s140 = scalar_select %p137, %s138, %s139
    %p143 = pneg %p137
    %p144 = scmp.eq.s32.totalorder %s10, 1
    %p145 = por %p143, %p144
    %p146 = scmp.ne.s32.totalorder %s138, %s141
    %p147 = scmp.eq.s32.totalorder %s10, 0
    %p148 = por %p146, %p147
    %p149 = scmp.ne.s32.totalorder %s138, %s141
    %p150 = scmp.eq.s32.totalorder %s15, 1
    %p151 = por %p149, %p150
    %p152 = scmp.ne.s32.totalorder %s141, %s142
    %p153 = scmp.eq.s32.totalorder %s15, 0
    %p154 = por %p152, %p153
    %p155 = scmp.ne.s32.totalorder %s141, %s142
    %p156 = scmp.eq.s32.totalorder %s16, 1
    %p157 = por %p155, %p156
    %p159 = scmp.ne.s32.totalorder %s142, %s158
    %p160 = scmp.eq.s32.totalorder %s16, 0
    %p161 = por %p159, %p160
    %p162 = scmp.le.s32.totalorder 1, %s10
    %p163 = scmp.lt.s32.totalorder %s10, 3
    %p164 = pnand %p162, %p163
    %p165 = pneg %p164
    // Predicated region
    $region9: #{patch_discriminator_with_sed.7} parent=5 // pred_check
      _
    $region10: #{patch_discriminator_with_sed.7} parent=5 // pred_check_branch
      %167 = sbr.rel (%p164) target = $region12
    $region11: #{patch_discriminator_with_sed.7} parent=5 // pred_region
      %s168 = ssub.s32 %s10, 1
      // Predicated region
      $region13: #{patch_discriminator_with_sed.7} parent=11 // pred_check
        %p169 = pneg %p74
      $region14: #{patch_discriminator_with_sed.7} parent=11 // pred_check_branch
        %171 = sbr.rel (%p169) target = $region16
      $region15: #{patch_discriminator_with_sed.7} parent=11 // pred_region
        %p172 = scmp.lt.s32.totalorder %s20, 0
        %s173 = scalar_select %p172, %s20, 0
        %s174 = smul.addr %s173, 4
        %s175 = scalar_lea.vmem %s1, %s174
      $region16: #{patch_discriminator_with_sed.7} parent=11 // pred_fallthru
        _
      // Predicated region
      $region17: #{patch_discriminator_with_sed.7} parent=11 // pred_check
        %p176 = pneg %p100
      $region18: #{patch_discriminator_with_sed.7} parent=11 // pred_check_branch
        %178 = sbr.rel (%p176) target = $region20
      $region19: #{patch_discriminator_with_sed.7} parent=11 // pred_region
        %p179 = scmp.lt.s32.totalorder %s20, 0
        %s180 = scalar_select %p179, %s20, 0
        %s181 = scalar_lea.vmem %s2, %s180
      $region20: #{patch_discriminator_with_sed.7} parent=11 // pred_fallthru
        _
      // Predicated region
      $region21: #{patch_discriminator_with_sed.7} parent=11 // pred_check
        %p182 = pneg %p126
      $region22: #{patch_discriminator_with_sed.7} parent=11 // pred_check_branch
        %184 = sbr.rel (%p182) target = $region24
      $region23: #{patch_discriminator_with_sed.7} parent=11 // pred_region
        %p185 = scmp.lt.s32.totalorder %s20, 0
        %s186 = scalar_select %p185, %s20, 0
        %s187 = scalar_lea.vmem %s3, %s186
      $region24: #{patch_discriminator_with_sed.7} parent=11 // pred_fallthru
        _
    $region12: #{patch_discriminator_with_sed.7} parent=5 // pred_fallthru
      _
    %p188 = scmp.lt.s32.totalorder %s10, 2
    // Predicated region
    $region25: #{patch_discriminator_with_sed.7} parent=5 // pred_check
      %p189 = pneg %p188
    $region26: #{patch_discriminator_with_sed.7} parent=5 // pred_check_branch
      %191 = sbr.rel (%p189) target = $region28
    $region27: #{patch_discriminator_with_sed.7} parent=5 // pred_region
      // Predicated region
      $region29: #{patch_discriminator_with_sed.7} parent=27 // pred_check
        %p192 = pneg %p42
      $region30: #{patch_discriminator_with_sed.7} parent=27 // pred_check_branch
        %194 = sbr.rel (%p192) target = $region32
      $region31: #{patch_discriminator_with_sed.7} parent=27 // pred_region
        %p195 = scmp.lt.s32.totalorder %s17, 1
        %s196 = scalar_select %p195, %s17, 1
        %s197 = smul.addr %s196, 11
        %s198 = smul.addr %s197, 4
        %s199 = scalar_lea.vmem %s0, %s198
      $region32: #{patch_discriminator_with_sed.7} parent=27 // pred_fallthru
        _
    $region28: #{patch_discriminator_with_sed.7} parent=5 // pred_fallthru
      _
    %p200 = scmp.le.s32.totalorder 1, %s10
    %p201 = scmp.lt.s32.totalorder %s10, 3
    %p202 = pnand %p200, %p201
    %p203 = pneg %p202
    // Predicated region
    $region33: #{patch_discriminator_with_sed.7} parent=5 // pred_check
      _
    $region34: #{patch_discriminator_with_sed.7} parent=5 // pred_check_branch
      %205 = sbr.rel (%p202) target = $region36
    $region35: #{patch_discriminator_with_sed.7} parent=5 // pred_region
      %s206 = ssub.s32 %s10, 1
      %p207 = scmp.lt.s32.totalorder %s19, 1
      %s208 = scalar_select %p207, %s19, 1
      %s209 = smul.addr %s208, 11
      %s210 = smul.addr %s209, 4
      %s211 = scalar_lea.vmem %s0, %s210
      %p212 = pneg %p48
      %p213 = pneg %p45
      %p214 = scmp.lt.s32.totalorder %s20, 0
      %s215 = scalar_select %p214, %s20, 0
      %s216 = smul.addr %s215, 4
      %s217 = scalar_lea.vmem %s1, %s216
      %p218 = pneg %p74
      %p219 = pneg %p71
      %p220 = scmp.lt.s32.totalorder %s20, 0
      %s221 = scalar_select %p220, %s20, 0
      %s222 = scalar_lea.vmem %s2, %s221
      %p223 = pneg %p100
      %p224 = pneg %p97
      %p225 = scmp.lt.s32.totalorder %s20, 0
      %s226 = scalar_select %p225, %s20, 0
      %s227 = scalar_lea.vmem %s3, %s226
      %p228 = pneg %p126
      %p229 = pneg %p123
      %p230 = pneg %p154
      %p231 = pneg %p151
      %p232 = scmp.lt.s32.totalorder %s19, 1
      %s233 = scalar_select %p232, %s19, 1
      %p234 = scmp.lt.s32.totalorder %s20, 0
      %s235 = scalar_select %p234, %s20, 0
      %s236 = smul.addr %s233, 9
      %s237 = sadd.s32 %s235, %s236
      %s238 = smul.addr %s237, 4
      %s239 = scalar_lea.vmem %s4, %s238
      %p240 = scmp.lt.s32.totalorder %s19, 1
      %s241 = scalar_select %p240, %s19, 1
      %s242 = smul.addr %s241, 11
      %s243 = smul.addr %s242, 4
      %s244 = scalar_lea.vmem %s0, %s243
      %p245 = scmp.lt.s32.totalorder %s20, 0
      %s246 = scalar_select %p245, %s20, 0
      %s247 = smul.addr %s246, 4
      %s248 = scalar_lea.vmem %s1, %s247
      %p249 = scmp.lt.s32.totalorder %s20, 0
      %s250 = scalar_select %p249, %s20, 0
      %s251 = scalar_lea.vmem %s2, %s250
      %p252 = scmp.lt.s32.totalorder %s20, 0
      %s253 = scalar_select %p252, %s20, 0
      %s254 = scalar_lea.vmem %s3, %s253
      %p255 = scmp.lt.s32.totalorder %s19, 1
      %s256 = scalar_select %p255, %s19, 1
      %p257 = scmp.lt.s32.totalorder %s20, 0
      %s258 = scalar_select %p257, %s20, 0
      %s259 = smul.addr %s256, 9
      %s260 = sadd.s32 %s258, %s259
      %s261 = smul.addr %s260, 4
      %s262 = scalar_lea.vmem %s4, %s261
      %v264 = vld [vmem:[%s244] sm:$0xf]
      %v265 = vld [vmem:[%s244 + $0x4] sm:$0xf]
      %v266 = vld [vmem:[%s244 + $0x8] sm:$0xf]
      %v267 = vld [vmem:[%s244 + $0xc] sm:$0xf]
      %v268 = vld [vmem:[%s244 + $0x10] sm:$0xf]
      %v269 = vld [vmem:[%s244 + $0x14] sm:$0xf]
      %v270 = vld [vmem:[%s244 + $0x18] sm:$0xf]
      %v271 = vld [vmem:[%s244 + $0x1c] sm:$0xf]
      %v272 = vld [vmem:[%s244 + $0x20] sm:$0xf]
      %v273 = vld [vmem:[%s248] sm:$0xf]
      %v274 = vld [vmem:[%s248 + $0x4] sm:$0xf]
      %v275 = vld [vmem:[%s248 + $0x8] sm:$0xf]
      %v276 = vld [vmem:[%s248 + $0xc] sm:$0xf]
      %v277 = vld [vmem:[%s248 + $0x10] sm:$0xf]
      %v278 = vld [vmem:[%s248 + $0x14] sm:$0xf]
      %v279 = vld [vmem:[%s248 + $0x18] sm:$0xf]
      %v280 = vld [vmem:[%s248 + $0x1c] sm:$0xf]
      %v281 = vld [vmem:[%s244 + $0x24] sm:$0x1]
      %s282 = scalar_lea.vmem %s248, 32
      %v283 = vld [vmem:[%s282] sm:$0xf]
      %v284 = vld [vmem:[%s282 + $0x4] sm:$0xf]
      %v285 = vld [vmem:[%s282 + $0x8] sm:$0xf]
      %v286 = vld [vmem:[%s282 + $0xc] sm:$0xf]
      %v287 = vld [vmem:[%s282 + $0x10] sm:$0xf]
      %v288 = vld [vmem:[%s282 + $0x14] sm:$0xf]
      %v289 = vld [vmem:[%s282 + $0x18] sm:$0xf]
      %v290 = vld [vmem:[%s282 + $0x1c] sm:$0xf]
      %v301 = vunpack.c.l.b16 %v264
      %v302 = vunpack.c.l.b16 %v265
      %v303 = vunpack.c.l.b16 %v266
      %v304 = vunpack.c.l.b16 %v267
      %v305 = vunpack.c.l.b16 %v268
      %v306 = vunpack.c.l.b16 %v269
      %v307 = vunpack.c.l.b16 %v270
      %v308 = vunpack.c.l.b16 %v271
      %v309 = vunpack.c.l.b16 %v272
      %v310 = vunpack.c.l.b16 %v281
      %v311 = vpack.c.b16 %v302, %v301
      %v312 = vpack.c.b16 %v304, %v303
      %v313 = vpack.c.b16 %v306, %v305
      %v314 = vpack.c.b16 %v308, %v307
      %v315 = vpack.c.b16 %v310, %v309
      %vm316 = vsmask.f32 7424
      %v318 = vshrl.u32 %v311, 16
      %v320 = vshll.u32 %v311, 16
      %v322 = vrot.slane %v320, 1
      %v323 = vor.u32 %v318, %v322
      %v325 = vshll.u32 %v312, 16
      %v327 = vrot.slane %v325, 1
      %v328 = vsel %vm316, %v323, %v327
      %v329 = vshrl.u32 %v312, 16
      %v331 = vor.u32 %v329, %v327
      %v333 = vshll.u32 %v313, 16
      %v335 = vrot.slane %v333, 1
      %v336 = vsel %vm316, %v331, %v335
      %v337 = vshrl.u32 %v313, 16
      %v339 = vor.u32 %v337, %v335
      %v341 = vshll.u32 %v314, 16
      %v343 = vrot.slane %v341, 1
      %v344 = vsel %vm316, %v339, %v343
      %v345 = vshrl.u32 %v314, 16
      %v347 = vor.u32 %v345, %v343
      %v349 = vshll.u32 %v315, 16
      %v351 = vrot.slane %v349, 1
      %v352 = vsel %vm316, %v347, %v351
      %v353 = vshrl.u32 %v315, 16
      %v355 = vor.u32 %v353, %v351
      %v364 = vunpack.c.l.b16 %v283
      %v365 = vunpack.c.l.b16 %v284
      %v366 = vunpack.c.l.b16 %v285
      %v367 = vunpack.c.l.b16 %v286
      %v368 = vunpack.c.l.b16 %v287
      %v369 = vunpack.c.l.b16 %v288
      %v370 = vunpack.c.l.b16 %v289
      %v371 = vunpack.c.l.b16 %v290
      %v372 = vpack.c.b16 %v365, %v364
      %v373 = vpack.c.b16 %v367, %v366
      %v374 = vpack.c.b16 %v369, %v368
      %v375 = vpack.c.b16 %v371, %v370
      %vm380 = vcmask 523264
      %v382 = vsel %vm380, %v328, 0
      %v385 = vsel %vm380, %v336, 0
      %v388 = vsel %vm380, %v344, 0
      %v391 = vsel %vm380, %v352, 0
      %v394 = vsel %vm380, %v355, 0
      %396 = vmatprep.subr.bf16.mxu0 0
      %397 = vmatpush1.bf16.msra.mxu0 %v372
      %398 = vmatprep.subr.bf16.mxu0 0
      %399 = vmatpush1.bf16.msra.mxu0 %v373
      %400 = vmatprep.subr.bf16.mxu0 0
      %401 = vmatpush1.bf16.msra.mxu0 %v374
      %402 = vmatprep.subr.bf16.mxu0 0
      %403 = vmatpush1.bf16.msra.mxu0 %v375
      %404 = vmatprep.subr.bf16.mxu0 0
      %405 = vmatpush1.bf16.msra.mxu0 0
      %406 = vmatprep.subr.bf16.mxu0 0
      %407 = vmatpush1.bf16.msra.mxu0 0
      %408 = vmatprep.subr.bf16.mxu0 0
      %409 = vmatpush1.bf16.msra.mxu0 0
      %410 = vmatprep.subr.bf16.mxu0 0
      %411 = vmatpush1.bf16.msra.mxu0 0
      %412 = vmatprep.subr.bf16.mxu0 0
      %413 = vmatpush1.bf16.msra.mxu0 0
      %414 = vmatprep.subr.bf16.mxu0 0
      %415 = vmatpush1.bf16.msra.mxu0 0
      %416 = vmatprep.subr.bf16.mxu0 0
      %417 = vmatpush1.bf16.msra.mxu0 0
      %418 = vmatprep.subr.bf16.mxu0 0
      %419 = vmatpush1.bf16.msra.mxu0 0
      %420 = vmatprep.subr.bf16.mxu0 0
      %421 = vmatpush1.bf16.msra.mxu0 0
      %422 = vmatprep.subr.bf16.mxu0 0
      %423 = vmatpush1.bf16.msra.mxu0 0
      %424 = vmatprep.subr.bf16.mxu0 0
      %425 = vmatpush1.bf16.msra.mxu0 0
      %426 = vmatprep.subr.bf16.mxu0 0
      %427 = vmatpush1.bf16.msra.mxu0 0
      %428 = vmatprep.mubr.bf16.mxu0 0
      %429 = vmatmul.mubr.bf16.gmra.mrb[0].mxu0 %v382
      %v430 = vpop.f32.mrb[0].mxu0
      %v431 = vadd.f32 0.0, %v430
      %v432 = vpop.f32.mrb[0].mxu0
      %v433 = vpop.f32.mrb[0].mxu0
      %v434 = vadd.f32 0.0, %v433
      %v435 = vpop.f32.mrb[0].mxu0
      %436 = vmatprep.mubr.bf16.mxu0 0
      %437 = vmatmul.mubr.bf16.gmra.mrb[0].mxu0 %v385
      %v438 = vpop.f32.mrb[0].mxu0
      %v439 = vadd.f32 0.0, %v438
      %v440 = vpop.f32.mrb[0].mxu0
      %v441 = vpop.f32.mrb[0].mxu0
      %v442 = vadd.f32 0.0, %v441
      %v443 = vpop.f32.mrb[0].mxu0
      %444 = vmatprep.mubr.bf16.mxu0 0
      %445 = vmatmul.mubr.bf16.gmra.mrb[0].mxu0 %v388
      %v446 = vpop.f32.mrb[0].mxu0
      %v447 = vadd.f32 0.0, %v446
      %v448 = vpop.f32.mrb[0].mxu0
      %v449 = vpop.f32.mrb[0].mxu0
      %v450 = vadd.f32 0.0, %v449
      %v451 = vpop.f32.mrb[0].mxu0
      %452 = vmatprep.mubr.bf16.mxu0 0
      %453 = vmatmul.mubr.bf16.gmra.mrb[0].mxu0 %v391
      %v454 = vpop.f32.mrb[0].mxu0
      %v455 = vadd.f32 0.0, %v454
      %v456 = vpop.f32.mrb[0].mxu0
      %v457 = vpop.f32.mrb[0].mxu0
      %v458 = vadd.f32 0.0, %v457
      %v459 = vpop.f32.mrb[0].mxu0
      %460 = vmatprep.mubr.bf16.mxu0 0
      %461 = vmatmul.mubr.bf16.gmra.mrb[0].mxu0 %v394
      %v462 = vpop.f32.mrb[0].mxu0
      %v463 = vadd.f32 0.0, %v462
      %v464 = vpop.f32.mrb[0].mxu0
      %v465 = vpop.f32.mrb[0].mxu0
      %v466 = vpop.f32.mrb[0].mxu0
      %467 = vdwg.mxu0
      %v468 = vpack.c.b16 %v309, %v309
      %v477 = vunpack.c.l.b16 %v273
      %v478 = vunpack.c.l.b16 %v274
      %v479 = vunpack.c.l.b16 %v275
      %v480 = vunpack.c.l.b16 %v276
      %v481 = vunpack.c.l.b16 %v277
      %v482 = vunpack.c.l.b16 %v278
      %v483 = vunpack.c.l.b16 %v279
      %v484 = vunpack.c.l.b16 %v280
      %v485 = vpack.c.b16 %v478, %v477
      %v486 = vpack.c.b16 %v480, %v479
      %v487 = vpack.c.b16 %v482, %v481
      %v488 = vpack.c.b16 %v484, %v483
      %v493 = vsel %vm380, %v311, 0
      %v495 = vsel %vm380, %v312, 0
      %v497 = vsel %vm380, %v313, 0
      %v499 = vsel %vm380, %v314, 0
      %v502 = vsel %vm380, %v468, 0
      %504 = vmatprep.subr.bf16.mxu0 0
      %505 = vmatpush1.bf16.msra.mxu0 %v485
      %506 = vmatprep.subr.bf16.mxu0 0
      %507 = vmatpush1.bf16.msra.mxu0 %v486
      %508 = vmatprep.subr.bf16.mxu0 0
      %509 = vmatpush1.bf16.msra.mxu0 %v487
      %510 = vmatprep.subr.bf16.mxu0 0
      %511 = vmatpush1.bf16.msra.mxu0 %v488
      %512 = vmatprep.subr.bf16.mxu0 0
      %513 = vmatpush1.bf16.msra.mxu0 0
      %514 = vmatprep.subr.bf16.mxu0 0
      %515 = vmatpush1.bf16.msra.mxu0 0
      %516 = vmatprep.subr.bf16.mxu0 0
      %517 = vmatpush1.bf16.msra.mxu0 0
      %518 = vmatprep.subr.bf16.mxu0 0
      %519 = vmatpush1.bf16.msra.mxu0 0
      %520 = vmatprep.subr.bf16.mxu0 0
      %521 = vmatpush1.bf16.msra.mxu0 0
      %522 = vmatprep.subr.bf16.mxu0 0
      %523 = vmatpush1.bf16.msra.mxu0 0
      %524 = vmatprep.subr.bf16.mxu0 0
      %525 = vmatpush1.bf16.msra.mxu0 0
      %526 = vmatprep.subr.bf16.mxu0 0
      %527 = vmatpush1.bf16.msra.mxu0 0
      %528 = vmatprep.subr.bf16.mxu0 0
      %529 = vmatpush1.bf16.msra.mxu0 0
      %530 = vmatprep.subr.bf16.mxu0 0
      %531 = vmatpush1.bf16.msra.mxu0 0
      %532 = vmatprep.subr.bf16.mxu0 0
      %533 = vmatpush1.bf16.msra.mxu0 0
      %534 = vmatprep.subr.bf16.mxu0 0
      %535 = vmatpush1.bf16.msra.mxu0 0
      %536 = vmatprep.mubr.bf16.mxu0 0
      %537 = vmatmul.mubr.bf16.gmra.mrb[0].mxu0 %v493
      %v538 = vpop.f32.mrb[0].mxu0
      %v539 = vadd.f32 %v431, %v538
      %v540 = vpop.f32.mrb[0].mxu0
      %v541 = vpop.f32.mrb[0].mxu0
      %v542 = vadd.f32 %v434, %v541
      %v543 = vpop.f32.mrb[0].mxu0
      %544 = vmatprep.mubr.bf16.mxu0 0
      %545 = vmatmul.mubr.bf16.gmra.mrb[0].mxu0 %v495
      %v546 = vpop.f32.mrb[0].mxu0
      %v547 = vadd.f32 %v439, %v546
      %v548 = vpop.f32.mrb[0].mxu0
      %v549 = vpop.f32.mrb[0].mxu0
      %v550 = vadd.f32 %v442, %v549
      %v551 = vpop.f32.mrb[0].mxu0
      %552 = vmatprep.mubr.bf16.mxu0 0
      %553 = vmatmul.mubr.bf16.gmra.mrb[0].mxu0 %v497
      %v554 = vpop.f32.mrb[0].mxu0
      %v555 = vadd.f32 %v447, %v554
      %v556 = vpop.f32.mrb[0].mxu0
      %v557 = vpop.f32.mrb[0].mxu0
      %v558 = vadd.f32 %v450, %v557
      %v559 = vpop.f32.mrb[0].mxu0
      %560 = vmatprep.mubr.bf16.mxu0 0
      %561 = vmatmul.mubr.bf16.gmra.mrb[0].mxu0 %v499
      %v562 = vpop.f32.mrb[0].mxu0
      %v563 = vadd.f32 %v455, %v562
      %v564 = vpop.f32.mrb[0].mxu0
      %v565 = vpop.f32.mrb[0].mxu0
      %v566 = vadd.f32 %v458, %v565
      %v567 = vpop.f32.mrb[0].mxu0
      %568 = vmatprep.mubr.bf16.mxu0 0
      %569 = vmatmul.mubr.bf16.gmra.mrb[0].mxu0 %v502
      %v570 = vpop.f32.mrb[0].mxu0
      %v571 = vadd.f32 %v463, %v570
      %v572 = vpop.f32.mrb[0].mxu0
      %v573 = vpop.f32.mrb[0].mxu0
      %v574 = vpop.f32.mrb[0].mxu0
      %575 = vdwg.mxu0
      %v576 = vld [vmem:[%s244 + $0x4] sm:$0xf]
      %v577 = vld [vmem:[%s244 + $0x8] sm:$0xf]
      %v578 = vld [vmem:[%s244 + $0xc] sm:$0xf]
      %v579 = vld [vmem:[%s244 + $0x10] sm:$0xf]
      %v580 = vld [vmem:[%s244 + $0x14] sm:$0xf]
      %v581 = vld [vmem:[%s244 + $0x18] sm:$0xf]
      %v582 = vld [vmem:[%s244 + $0x1c] sm:$0xf]
      %v583 = vld [vmem:[%s244 + $0x20] sm:$0xf]
      %v584 = vld [vmem:[%s244 + $0x24] sm:$0xf]
      %v585 = vld [vmem:[%s244 + $0x28] sm:$0x1]
      %s586 = scalar_lea.vmem %s248, 64
      %v587 = vld [vmem:[%s586] sm:$0xf]
      %v588 = vld [vmem:[%s586 + $0x4] sm:$0xf]
      %v589 = vld [vmem:[%s586 + $0x8] sm:$0xf]
      %v590 = vld [vmem:[%s586 + $0xc] sm:$0xf]
      %v591 = vld [vmem:[%s586 + $0x10] sm:$0xf]
      %v592 = vld [vmem:[%s586 + $0x14] sm:$0xf]
      %v593 = vld [vmem:[%s586 + $0x18] sm:$0xf]
      %v594 = vld [vmem:[%s586 + $0x1c] sm:$0xf]
      %v605 = vunpack.c.l.b16 %v576
      %v606 = vunpack.c.l.b16 %v577
      %v607 = vunpack.c.l.b16 %v578
      %v608 = vunpack.c.l.b16 %v579
      %v609 = vunpack.c.l.b16 %v580
      %v610 = vunpack.c.l.b16 %v581
      %v611 = vunpack.c.l.b16 %v582
      %v612 = vunpack.c.l.b16 %v583
      %v613 = vunpack.c.l.b16 %v584
      %v614 = vunpack.c.l.b16 %v585
      %v615 = vpack.c.b16 %v606, %v605
      %v616 = vpack.c.b16 %v608, %v607
      %v617 = vpack.c.b16 %v610, %v609
      %v618 = vpack.c.b16 %v612, %v611
      %v619 = vpack.c.b16 %v614, %v613
      %v621 = vshrl.u32 %v615, 16
      %v623 = vshll.u32 %v615, 16
      %v625 = vrot.slane %v623, 1
      %v626 = vor.u32 %v621, %v625
      %v628 = vshll.u32 %v616, 16
      %v630 = vrot.slane %v628, 1
      %v631 = vsel %vm316, %v626, %v630
      %v632 = vshrl.u32 %v616, 16
      %v634 = vor.u32 %v632, %v630
      %v636 = vshll.u32 %v617, 16
      %v638 = vrot.slane %v636, 1
      %v639 = vsel %vm316, %v634, %v638
      %v640 = vshrl.u32 %v617, 16
      %v642 = vor.u32 %v640, %v638
      %v644 = vshll.u32 %v618, 16
      %v646 = vrot.slane %v644, 1
      %v647 = vsel %vm316, %v642, %v646
      %v648 = vshrl.u32 %v618, 16
      %v650 = vor.u32 %v648, %v646
      %v652 = vshll.u32 %v619, 16
      %v654 = vrot.slane %v652, 1
      %v655 = vsel %vm316, %v650, %v654
      %v656 = vshrl.u32 %v619, 16
      %v658 = vor.u32 %v656, %v654
      %v667 = vunpack.c.l.b16 %v587
      %v668 = vunpack.c.l.b16 %v588
      %v669 = vunpack.c.l.b16 %v589
      %v670 = vunpack.c.l.b16 %v590
      %v671 = vunpack.c.l.b16 %v591
      %v672 = vunpack.c.l.b16 %v592
      %v673 = vunpack.c.l.b16 %v593
      %v674 = vunpack.c.l.b16 %v594
      %v675 = vpack.c.b16 %v668, %v667
      %v676 = vpack.c.b16 %v670, %v669
      %v677 = vpack.c.b16 %v672, %v671
      %v678 = vpack.c.b16 %v674, %v673
      %v684 = vsel %vm380, %v631, 0
      %v687 = vsel %vm380, %v639, 0
      %v690 = vsel %vm380, %v647, 0
      %v693 = vsel %vm380, %v655, 0
      %v696 = vsel %vm380, %v658, 0
      %698 = vmatprep.subr.bf16.mxu0 0
      %699 = vmatpush1.bf16.msra.mxu0 %v675
      %700 = vmatprep.subr.bf16.mxu0 0
      %701 = vmatpush1.bf16.msra.mxu0 %v676
      %702 = vmatprep.subr.bf16.mxu0 0
      %703 = vmatpush1.bf16.msra.mxu0 %v677
      %704 = vmatprep.subr.bf16.mxu0 0
      %705 = vmatpush1.bf16.msra.mxu0 %v678
      %706 = vmatprep.subr.bf16.mxu0 0
      %707 = vmatpush1.bf16.msra.mxu0 0
      %708 = vmatprep.subr.bf16.mxu0 0
      %709 = vmatpush1.bf16.msra.mxu0 0
      %710 = vmatprep.subr.bf16.mxu0 0
      %711 = vmatpush1.bf16.msra.mxu0 0
      %712 = vmatprep.subr.bf16.mxu0 0
      %713 = vmatpush1.bf16.msra.mxu0 0
      %714 = vmatprep.subr.bf16.mxu0 0
      %715 = vmatpush1.bf16.msra.mxu0 0
      %716 = vmatprep.subr.bf16.mxu0 0
      %717 = vmatpush1.bf16.msra.mxu0 0
      %718 = vmatprep.subr.bf16.mxu0 0
      %719 = vmatpush1.bf16.msra.mxu0 0
      %720 = vmatprep.subr.bf16.mxu0 0
      %721 = vmatpush1.bf16.msra.mxu0 0
      %722 = vmatprep.subr.bf16.mxu0 0
      %723 = vmatpush1.bf16.msra.mxu0 0
      %724 = vmatprep.subr.bf16.mxu0 0
      %725 = vmatpush1.bf16.msra.mxu0 0
      %726 = vmatprep.subr.bf16.mxu0 0
      %727 = vmatpush1.bf16.msra.mxu0 0
      %728 = vmatprep.subr.bf16.mxu0 0
      %729 = vmatpush1.bf16.msra.mxu0 0
      %730 = vmatprep.mubr.bf16.mxu0 0
      %731 = vmatmul.mubr.bf16.gmra.mrb[0].mxu0 %v684
      %v732 = vpop.f32.mrb[0].mxu0
      %v733 = vadd.f32 0.0, %v732
      %v734 = vpop.f32.mrb[0].mxu0
      %v735 = vpop.f32.mrb[0].mxu0
      %v736 = vadd.f32 0.0, %v735
      %v737 = vpop.f32.mrb[0].mxu0
      %738 = vmatprep.mubr.bf16.mxu0 0
      %739 = vmatmul.mubr.bf16.gmra.mrb[0].mxu0 %v687
      %v740 = vpop.f32.mrb[0].mxu0
      %v741 = vadd.f32 0.0, %v740
      %v742 = vpop.f32.mrb[0].mxu0
      %v743 = vpop.f32.mrb[0].mxu0
      %v744 = vadd.f32 0.0, %v743
      %v745 = vpop.f32.mrb[0].mxu0
      %746 = vmatprep.mubr.bf16.mxu0 0
      %747 = vmatmul.mubr.bf16.gmra.mrb[0].mxu0 %v690
      %v748 = vpop.f32.mrb[0].mxu0
      %v749 = vadd.f32 0.0, %v748
      %v750 = vpop.f32.mrb[0].mxu0
      %v751 = vpop.f32.mrb[0].mxu0
      %v752 = vadd.f32 0.0, %v751
      %v753 = vpop.f32.mrb[0].mxu0
      %754 = vmatprep.mubr.bf16.mxu0 0
      %755 = vmatmul.mubr.bf16.gmra.mrb[0].mxu0 %v693
      %v756 = vpop.f32.mrb[0].mxu0
      %v757 = vadd.f32 0.0, %v756
      %v758 = vpop.f32.mrb[0].mxu0
      %v759 = vpop.f32.mrb[0].mxu0
      %v760 = vadd.f32 0.0, %v759
      %v761 = vpop.f32.mrb[0].mxu0
      %762 = vmatprep.mubr.bf16.mxu0 0
      %763 = vmatmul.mubr.bf16.gmra.mrb[0].mxu0 %v696
      %v764 = vpop.f32.mrb[0].mxu0
      %v765 = vadd.f32 0.0, %v764
      %v766 = vpop.f32.mrb[0].mxu0
      %v767 = vpop.f32.mrb[0].mxu0
      %v768 = vpop.f32.mrb[0].mxu0
      %769 = vdwg.mxu0
      %v770 = vadd.f32 %v539, %v733
      %v771 = vadd.f32 %v542, %v736
      %v772 = vadd.f32 %v547, %v741
      %v773 = vadd.f32 %v550, %v744
      %v774 = vadd.f32 %v555, %v749
      %v775 = vadd.f32 %v558, %v752
      %v776 = vadd.f32 %v563, %v757
      %v777 = vadd.f32 %v566, %v760
      %v778 = vadd.f32 %v571, %v765
      %v779 = vld [vmem:[%s244 + $0x4] sm:$0xe]
      %s780 = scalar_lea.vmem %s248, 96
      %v781 = vld [vmem:[%s780] sm:$0xf]
      %v782 = vld [vmem:[%s780 + $0x4] sm:$0xf]
      %v783 = vld [vmem:[%s780 + $0x8] sm:$0xf]
      %v784 = vld [vmem:[%s780 + $0xc] sm:$0xf]
      %v785 = vld [vmem:[%s780 + $0x10] sm:$0xf]
      %v786 = vld [vmem:[%s780 + $0x14] sm:$0xf]
      %v787 = vld [vmem:[%s780 + $0x18] sm:$0xf]
      %v788 = vld [vmem:[%s780 + $0x1c] sm:$0xf]
      %v790 = vunpack.c.l.b16 %v779
      %v791 = vpack.c.b16 %v606, %v790
      %vm792 = vcmask 1046528
      %v793 = vrot.slane %v791, 1
      %v794 = vrot.slane %v616, 1
      %v795 = vsel %vm792, %v793, %v794
      %v796 = vrot.slane %v617, 1
      %v797 = vsel %vm792, %v794, %v796
      %v798 = vrot.slane %v618, 1
      %v799 = vsel %vm792, %v796, %v798
      %v800 = vrot.slane %v619, 1
      %v801 = vsel %vm792, %v798, %v800
      %v810 = vunpack.c.l.b16 %v781
      %v811 = vunpack.c.l.b16 %v782
      %v812 = vunpack.c.l.b16 %v783
      %v813 = vunpack.c.l.b16 %v784
      %v814 = vunpack.c.l.b16 %v785
      %v815 = vunpack.c.l.b16 %v786
      %v816 = vunpack.c.l.b16 %v787
      %v817 = vunpack.c.l.b16 %v788
      %v818 = vpack.c.b16 %v811, %v810
      %v819 = vpack.c.b16 %v813, %v812
      %v820 = vpack.c.b16 %v815, %v814
      %v821 = vpack.c.b16 %v817, %v816
      %v827 = vsel %vm380, %v795, 0
      %v830 = vsel %vm380, %v797, 0
      %v833 = vsel %vm380, %v799, 0
      %v836 = vsel %vm380, %v801, 0
      %v839 = vsel %vm380, %v800, 0
      %841 = vmatprep.subr.bf16.mxu0 0
      %842 = vmatpush1.bf16.msra.mxu0 %v818
      %843 = vmatprep.subr.bf16.mxu0 0
      %844 = vmatpush1.bf16.msra.mxu0 %v819
      %845 = vmatprep.subr.bf16.mxu0 0
      %846 = vmatpush1.bf16.msra.mxu0 %v820
      %847 = vmatprep.subr.bf16.mxu0 0
      %848 = vmatpush1.bf16.msra.mxu0 %v821
      %849 = vmatprep.subr.bf16.mxu0 0
      %850 = vmatpush1.bf16.msra.mxu0 0
      %851 = vmatprep.subr.bf16.mxu0 0
      %852 = vmatpush1.bf16.msra.mxu0 0
      %853 = vmatprep.subr.bf16.mxu0 0
      %854 = vmatpush1.bf16.msra.mxu0 0
      %855 = vmatprep.subr.bf16.mxu0 0
      %856 = vmatpush1.bf16.msra.mxu0 0
      %857 = vmatprep.subr.bf16.mxu0 0
      %858 = vmatpush1.bf16.msra.mxu0 0
      %859 = vmatprep.subr.bf16.mxu0 0
      %860 = vmatpush1.bf16.msra.mxu0 0
      %861 = vmatprep.subr.bf16.mxu0 0
      %862 = vmatpush1.bf16.msra.mxu0 0
      %863 = vmatprep.subr.bf16.mxu0 0
      %864 = vmatpush1.bf16.msra.mxu0 0
      %865 = vmatprep.subr.bf16.mxu0 0
      %866 = vmatpush1.bf16.msra.mxu0 0
      %867 = vmatprep.subr.bf16.mxu0 0
      %868 = vmatpush1.bf16.msra.mxu0 0
      %869 = vmatprep.subr.bf16.mxu0 0
      %870 = vmatpush1.bf16.msra.mxu0 0
      %871 = vmatprep.subr.bf16.mxu0 0
      %872 = vmatpush1.bf16.msra.mxu0 0
      %873 = vmatprep.mubr.bf16.mxu0 0
      %874 = vmatmul.mubr.bf16.gmra.mrb[0].mxu0 %v827
      %v875 = vpop.f32.mrb[0].mxu0
      %v876 = vadd.f32 0.0, %v875
      %v877 = vpop.f32.mrb[0].mxu0
      %v878 = vpop.f32.mrb[0].mxu0
      %v879 = vadd.f32 0.0, %v878
      %v880 = vpop.f32.mrb[0].mxu0
      %881 = vmatprep.mubr.bf16.mxu0 0
      %882 = vmatmul.mubr.bf16.gmra.mrb[0].mxu0 %v830
      %v883 = vpop.f32.mrb[0].mxu0
      %v884 = vadd.f32 0.0, %v883
      %v885 = vpop.f32.mrb[0].mxu0
      %v886 = vpop.f32.mrb[0].mxu0
      %v887 = vadd.f32 0.0, %v886
      %v888 = vpop.f32.mrb[0].mxu0
      %889 = vmatprep.mubr.bf16.mxu0 0
      %890 = vmatmul.mubr.bf16.gmra.mrb[0].mxu0 %v833
      %v891 = vpop.f32.mrb[0].mxu0
      %v892 = vadd.f32 0.0, %v891
      %v893 = vpop.f32.mrb[0].mxu0
      %v894 = vpop.f32.mrb[0].mxu0
      %v895 = vadd.f32 0.0, %v894
      %v896 = vpop.f32.mrb[0].mxu0
      %897 = vmatprep.mubr.bf16.mxu0 0
      %898 = vmatmul.mubr.bf16.gmra.mrb[0].mxu0 %v836
      %v899 = vpop.f32.mrb[0].mxu0
      %v900 = vadd.f32 0.0, %v899
      %v901 = vpop.f32.mrb[0].mxu0
      %v902 = vpop.f32.mrb[0].mxu0
      %v903 = vadd.f32 0.0, %v902
      %v904 = vpop.f32.mrb[0].mxu0
      %905 = vmatprep.mubr.bf16.mxu0 0
      %906 = vmatmul.mubr.bf16.gmra.mrb[0].mxu0 %v839
      %v907 = vpop.f32.mrb[0].mxu0
      %v908 = vadd.f32 0.0, %v907
      %v909 = vpop.f32.mrb[0].mxu0
      %v910 = vpop.f32.mrb[0].mxu0
      %v911 = vpop.f32.mrb[0].mxu0
      %912 = vdwg.mxu0
      %v913 = vadd.f32 %v770, %v876
      %v914 = vadd.f32 %v771, %v879
      %v915 = vadd.f32 %v772, %v884
      %v916 = vadd.f32 %v773, %v887
      %v917 = vadd.f32 %v774, %v892
      %v918 = vadd.f32 %v775, %v895
      %v919 = vadd.f32 %v776, %v900
      %v920 = vadd.f32 %v777, %v903
      %v921 = vadd.f32 %v778, %v908
      %v922 = vld [vmem:[%s251] sm:$0x1]
      %v924 = vlaneseq
      %v925 = vshrl.u32 %v924, 7
      %v926 = vsub.s32 0, %v925
      %v927 = vrot.slane %v922, %v926
      %v929 = vmul.f32 %v913, %v927
      %v930 = vmul.f32 %v914, %v927
      %v931 = vmul.f32 %v915, %v927
      %v932 = vmul.f32 %v916, %v927
      %v933 = vmul.f32 %v917, %v927
      %v934 = vmul.f32 %v918, %v927
      %v935 = vmul.f32 %v919, %v927
      %v936 = vmul.f32 %v920, %v927
      %v937 = vmul.f32 %v921, %v927
      %v938 = vld [vmem:[%s254] sm:$0x1]
      %v940 = vlaneseq
      %v941 = vshrl.u32 %v940, 7
      %v942 = vsub.s32 0, %v941
      %v943 = vrot.slane %v938, %v942
      %v945 = vadd.f32 %v929, %v943
      %v946 = vadd.f32 %v930, %v943
      %v947 = vadd.f32 %v931, %v943
      %v948 = vadd.f32 %v932, %v943
      %v949 = vadd.f32 %v933, %v943
      %v950 = vadd.f32 %v934, %v943
      %v951 = vadd.f32 %v935, %v943
      %v952 = vadd.f32 %v936, %v943
      %v953 = vadd.f32 %v937, %v943
      %v954 = vmul.f32 %v945, 0.2
      %v955 = vmul.f32 %v946, 0.2
      %v956 = vmul.f32 %v947, 0.2
      %v957 = vmul.f32 %v948, 0.2
      %v958 = vmul.f32 %v949, 0.2
      %v959 = vmul.f32 %v950, 0.2
      %v960 = vmul.f32 %v951, 0.2
      %v961 = vmul.f32 %v952, 0.2
      %v962 = vmul.f32 %v953, 0.2
      %v963 = vmax.f32 %v945, %v954
      %v964 = vmax.f32 %v946, %v955
      %v965 = vmax.f32 %v947, %v956
      %v966 = vmax.f32 %v948, %v957
      %v967 = vmax.f32 %v949, %v958
      %v968 = vmax.f32 %v950, %v959
      %v969 = vmax.f32 %v951, %v960
      %v970 = vmax.f32 %v952, %v961
      %v971 = vmax.f32 %v953, %v962
      %v972 = vpack.c.bf16 %v964, %v963
      %v973 = vpack.c.bf16 %v966, %v965
      %v974 = vpack.c.bf16 %v968, %v967
      %v975 = vpack.c.bf16 %v970, %v969
      %v976 = vpack.c.bf16 %v971, %v971
      %v982 = vunpack.c.l.b16 %v972
      %v983 = vunpack.c.h.b16 %v972
      %v984 = vunpack.c.l.b16 %v973
      %v985 = vunpack.c.h.b16 %v973
      %v986 = vunpack.c.l.b16 %v974
      %v987 = vunpack.c.h.b16 %v974
      %v988 = vunpack.c.l.b16 %v975
      %v989 = vunpack.c.h.b16 %v975
      %v990 = vunpack.c.l.b16 %v976
      %v991 = vpack.c.b16 %v982, %v982
      %v992 = vpack.c.b16 %v983, %v983
      %v993 = vpack.c.b16 %v984, %v984
      %v994 = vpack.c.b16 %v985, %v985
      %v995 = vpack.c.b16 %v986, %v986
      %v996 = vpack.c.b16 %v987, %v987
      %v997 = vpack.c.b16 %v988, %v988
      %v998 = vpack.c.b16 %v989, %v989
      %v999 = vpack.c.b16 %v990, %v990
      %1009 = vst [vmem:[%s262] sm:$0xf] %v991
      %1010 = vst [vmem:[%s262 + $0x4] sm:$0xf] %v992
      %1011 = vst [vmem:[%s262 + $0x8] sm:$0xf] %v993
      %1012 = vst [vmem:[%s262 + $0xc] sm:$0xf] %v994
      %1013 = vst [vmem:[%s262 + $0x10] sm:$0xf] %v995
      %1014 = vst [vmem:[%s262 + $0x14] sm:$0xf] %v996
      %1015 = vst [vmem:[%s262 + $0x18] sm:$0xf] %v997
      %1016 = vst [vmem:[%s262 + $0x1c] sm:$0xf] %v998
      %1017 = vst [vmem:[%s262 + $0x20] sm:$0xf] %v999
      %p1018 = scmp.lt.s32.totalorder %s19, 1
      %s1019 = scalar_select %p1018, %s19, 1
      %p1020 = scmp.lt.s32.totalorder %s20, 0
      %s1021 = scalar_select %p1020, %s20, 0
      %s1022 = smul.addr %s1019, 9
      %s1023 = sadd.s32 %s1021, %s1022
      %s1024 = smul.addr %s1023, 4
      %s1025 = scalar_lea.vmem %s4, %s1024
      // Predicated region
      $region37: #{patch_discriminator_with_sed.7} parent=35 // pred_check
        %p1026 = pneg %p151
      $region38: #{patch_discriminator_with_sed.7} parent=35 // pred_check_branch
        %1028 = sbr.rel (%p1026) target = $region40
      $region39: #{patch_discriminator_with_sed.7} parent=35 // pred_region
        _
      $region40: #{patch_discriminator_with_sed.7} parent=35 // pred_fallthru
        _
    $region36: #{patch_discriminator_with_sed.7} parent=5 // pred_fallthru
      _
    %p1029 = scmp.le.s32.totalorder 2, %s10
    // Predicated region
    $region41: #{patch_discriminator_with_sed.7} parent=5 // pred_check
      %p1030 = pneg %p1029
    $region42: #{patch_discriminator_with_sed.7} parent=5 // pred_check_branch
      %1032 = sbr.rel (%p1030) target = $region44
    $region43: #{patch_discriminator_with_sed.7} parent=5 // pred_region
      %s1033 = ssub.s32 %s10, 2
      // Predicated region
      $region45: #{patch_discriminator_with_sed.7} parent=43 // pred_check
        %p1034 = pneg %p157
      $region46: #{patch_discriminator_with_sed.7} parent=43 // pred_check_branch
        %1036 = sbr.rel (%p1034) target = $region48
      $region47: #{patch_discriminator_with_sed.7} parent=43 // pred_region
        %p1037 = scmp.lt.s32.totalorder %s21, 1
        %s1038 = scalar_select %p1037, %s21, 1
        %p1039 = scmp.lt.s32.totalorder %s22, 0
        %s1040 = scalar_select %p1039, %s22, 0
        %s1041 = smul.addr %s1038, 9
        %s1042 = sadd.s32 %s1040, %s1041
        %s1043 = smul.addr %s1042, 4
        %s1044 = scalar_lea.vmem %s4, %s1043
      $region48: #{patch_discriminator_with_sed.7} parent=43 // pred_fallthru
        _
    $region44: #{patch_discriminator_with_sed.7} parent=5 // pred_fallthru
      _
  $region6: #{patch_discriminator_with_sed.7} parent=0 // loop_footer
    %s14 = sadd.s32 1, %s10
  $region7: #{patch_discriminator_with_sed.7} parent=0 // loop_footer_branch
    %9 = sbr.rel target = $region3
  $region8: #{patch_discriminator_with_sed.7} parent=0 // loop_exit
    _

// kernel: patch_discriminator_with_sed.8
$region0: #{patch_discriminator_with_sed.8}
  #allocation0 [shape = 'u32[]', space=smem, size = 0x4, offset = 0x4, fixed_abs, tag = 'smem constant byte address 0x4 - core index']
  #allocation1 [shape = 'u32[144,128]{1,0:T(1,128)}', space=vmem, size = 0x12000, scoped, tag = 'internal scratch']
  %s0 = inlined_call_operand.vmem [shape: bf16[2,26,128], index: 0, kind: input, shape index: {}]
  %s1 = inlined_call_operand.vmem [shape: bf16[4,128,128], index: 1, kind: input, shape index: {}]
  %s2 = inlined_call_operand.vmem [shape: f32[1,128], index: 2, kind: input, shape index: {}]
  %s3 = inlined_call_operand.vmem [shape: f32[1,128], index: 3, kind: input, shape index: {}]
  %s4 = inlined_call_operand.vmem [shape: bf16[2,20,128], index: 4, kind: output, shape index: {}]
  %s5 = sld [smem:[#allocation0]]
  $region49: #{patch_discriminator_with_sed.8} parent=0
    _
  %s7 = ssub.s32 1, %s5
  %s8 = scalar_select 0, %s7, %s5
  loop: start=0, step=1, limit=4
  $region2: #{patch_discriminator_with_sed.8} parent=0 // loop_pre_header
    _
  $region3: #{patch_discriminator_with_sed.8} parent=0 // loop_header
    %s10 = sphi 0, %s14
    %p11 = scmp.ge.s32.totalorder %s10, 4
    %s17 = sphi 0, %s29
    %s18 = sphi 0, %s25
    %s19 = sphi 0, %s17
    %s20 = sphi 0, %s18
    %s21 = sphi 0, %s19
    %s22 = sphi 0, %s20
    %s32 = sphi 0, %s34
    %s35 = sphi 0, %s32
    %s36 = sphi 0, %s35
    %s52 = sphi 0, %s36
    %s58 = sphi 0, %s60
    %s61 = sphi 0, %s58
    %s62 = sphi 0, %s61
    %s78 = sphi 0, %s62
    %s84 = sphi 0, %s86
    %s87 = sphi 0, %s84
    %s88 = sphi 0, %s87
    %s104 = sphi 0, %s88
    %s110 = sphi 0, %s112
    %s113 = sphi 0, %s110
    %s114 = sphi 0, %s113
    %s130 = sphi 0, %s114
    %s138 = sphi 0, %s140
    %s141 = sphi 0, %s138
    %s142 = sphi 0, %s141
    %s158 = sphi 0, %s142
  $region4: #{patch_discriminator_with_sed.8} parent=0 // loop_header_branch
    %13 = sbr.rel (%p11) target = $region8
  $region5: #{patch_discriminator_with_sed.8} parent=0 // loop_body
    %s15 = ssub.s32 %s10, 1
    %s16 = ssub.s32 %s10, 2
    %s23 = sadd.s32 1, %s18
    %p24 = scmp.ge.s32.totalorder %s23, 1
    %s25 = scalar_select %p24, 0, %s23
    %s26 = sadd.s32 1, %s17
    %s27 = scalar_select %p24, %s26, %s17
    %p28 = scmp.ge.s32.totalorder %s27, 2
    %s29 = scalar_select %p28, 0, %s27
    %s30 = ssub.s32 %s17, %s29
    %p31 = scmp.eq.s32.totalorder %s30, 0
    %s33 = sadd.s32 %s32, 1
    %s34 = scalar_select %p31, %s32, %s33
    %p37 = pneg %p31
    %p38 = scmp.eq.s32.totalorder %s10, 1
    %p39 = por %p37, %p38
    %p40 = scmp.ne.s32.totalorder %s32, %s35
    %p41 = scmp.eq.s32.totalorder %s10, 0
    %p42 = por %p40, %p41
    %p43 = scmp.ne.s32.totalorder %s32, %s35
    %p44 = scmp.eq.s32.totalorder %s15, 1
    %p45 = por %p43, %p44
    %p46 = scmp.ne.s32.totalorder %s35, %s36
    %p47 = scmp.eq.s32.totalorder %s15, 0
    %p48 = por %p46, %p47
    %p49 = scmp.ne.s32.totalorder %s35, %s36
    %p50 = scmp.eq.s32.totalorder %s16, 1
    %p51 = por %p49, %p50
    %p53 = scmp.ne.s32.totalorder %s36, %s52
    %p54 = scmp.eq.s32.totalorder %s16, 0
    %p55 = por %p53, %p54
    %s56 = ssub.s32 %s18, %s25
    %p57 = scmp.eq.s32.totalorder %s56, 0
    %s59 = sadd.s32 %s58, 1
    %s60 = scalar_select %p57, %s58, %s59
    %p63 = pneg %p57
    %p64 = scmp.eq.s32.totalorder %s10, 1
    %p65 = por %p63, %p64
    %p66 = scmp.ne.s32.totalorder %s58, %s61
    %p67 = scmp.eq.s32.totalorder %s10, 0
    %p68 = por %p66, %p67
    %p69 = scmp.ne.s32.totalorder %s58, %s61
    %p70 = scmp.eq.s32.totalorder %s15, 1
    %p71 = por %p69, %p70
    %p72 = scmp.ne.s32.totalorder %s61, %s62
    %p73 = scmp.eq.s32.totalorder %s15, 0
    %p74 = por %p72, %p73
    %p75 = scmp.ne.s32.totalorder %s61, %s62
    %p76 = scmp.eq.s32.totalorder %s16, 1
    %p77 = por %p75, %p76
    %p79 = scmp.ne.s32.totalorder %s62, %s78
    %p80 = scmp.eq.s32.totalorder %s16, 0
    %p81 = por %p79, %p80
    %s82 = ssub.s32 %s18, %s25
    %p83 = scmp.eq.s32.totalorder %s82, 0
    %s85 = sadd.s32 %s84, 1
    %s86 = scalar_select %p83, %s84, %s85
    %p89 = pneg %p83
    %p90 = scmp.eq.s32.totalorder %s10, 1
    %p91 = por %p89, %p90
    %p92 = scmp.ne.s32.totalorder %s84, %s87
    %p93 = scmp.eq.s32.totalorder %s10, 0
    %p94 = por %p92, %p93
    %p95 = scmp.ne.s32.totalorder %s84, %s87
    %p96 = scmp.eq.s32.totalorder %s15, 1
    %p97 = por %p95, %p96
    %p98 = scmp.ne.s32.totalorder %s87, %s88
    %p99 = scmp.eq.s32.totalorder %s15, 0
    %p100 = por %p98, %p99
    %p101 = scmp.ne.s32.totalorder %s87, %s88
    %p102 = scmp.eq.s32.totalorder %s16, 1
    %p103 = por %p101, %p102
    %p105 = scmp.ne.s32.totalorder %s88, %s104
    %p106 = scmp.eq.s32.totalorder %s16, 0
    %p107 = por %p105, %p106
    %s108 = ssub.s32 %s18, %s25
    %p109 = scmp.eq.s32.totalorder %s108, 0
    %s111 = sadd.s32 %s110, 1
    %s112 = scalar_select %p109, %s110, %s111
    %p115 = pneg %p109
    %p116 = scmp.eq.s32.totalorder %s10, 1
    %p117 = por %p115, %p116
    %p118 = scmp.ne.s32.totalorder %s110, %s113
    %p119 = scmp.eq.s32.totalorder %s10, 0
    %p120 = por %p118, %p119
    %p121 = scmp.ne.s32.totalorder %s110, %s113
    %p122 = scmp.eq.s32.totalorder %s15, 1
    %p123 = por %p121, %p122
    %p124 = scmp.ne.s32.totalorder %s113, %s114
    %p125 = scmp.eq.s32.totalorder %s15, 0
    %p126 = por %p124, %p125
    %p127 = scmp.ne.s32.totalorder %s113, %s114
    %p128 = scmp.eq.s32.totalorder %s16, 1
    %p129 = por %p127, %p128
    %p131 = scmp.ne.s32.totalorder %s114, %s130
    %p132 = scmp.eq.s32.totalorder %s16, 0
    %p133 = por %p131, %p132
    %s134 = ssub.s32 %s17, %s29
    %s135 = ssub.s32 %s18, %s25
    %s136 = sor.u32 %s134, %s135
    %p137 = scmp.eq.s32.totalorder %s136, 0
    %s139 = sadd.s32 %s138, 1
    %s140 = scalar_select %p137, %s138, %s139
    %p143 = pneg %p137
    %p144 = scmp.eq.s32.totalorder %s10, 1
    %p145 = por %p143, %p144
    %p146 = scmp.ne.s32.totalorder %s138, %s141
    %p147 = scmp.eq.s32.totalorder %s10, 0
    %p148 = por %p146, %p147
    %p149 = scmp.ne.s32.totalorder %s138, %s141
    %p150 = scmp.eq.s32.totalorder %s15, 1
    %p151 = por %p149, %p150
    %p152 = scmp.ne.s32.totalorder %s141, %s142
    %p153 = scmp.eq.s32.totalorder %s15, 0
    %p154 = por %p152, %p153
    %p155 = scmp.ne.s32.totalorder %s141, %s142
    %p156 = scmp.eq.s32.totalorder %s16, 1
    %p157 = por %p155, %p156
    %p159 = scmp.ne.s32.totalorder %s142, %s158
    %p160 = scmp.eq.s32.totalorder %s16, 0
    %p161 = por %p159, %p160
    %p162 = scmp.le.s32.totalorder 1, %s10
    %p163 = scmp.lt.s32.totalorder %s10, 3
    %p164 = pnand %p162, %p163
    %p165 = pneg %p164
    // Predicated region
    $region9: #{patch_discriminator_with_sed.8} parent=5 // pred_check
      _
    $region10: #{patch_discriminator_with_sed.8} parent=5 // pred_check_branch
      %167 = sbr.rel (%p164) target = $region12
    $region11: #{patch_discriminator_with_sed.8} parent=5 // pred_region
      %s168 = ssub.s32 %s10, 1
      // Predicated region
      $region13: #{patch_discriminator_with_sed.8} parent=11 // pred_check
        %p169 = pneg %p74
      $region14: #{patch_discriminator_with_sed.8} parent=11 // pred_check_branch
        %171 = sbr.rel (%p169) target = $region16
      $region15: #{patch_discriminator_with_sed.8} parent=11 // pred_region
        %p172 = scmp.lt.s32.totalorder %s20, 0
        %s173 = scalar_select %p172, %s20, 0
        %s174 = smul.addr %s173, 4
        %s175 = scalar_lea.vmem %s1, %s174
      $region16: #{patch_discriminator_with_sed.8} parent=11 // pred_fallthru
        _
      // Predicated region
      $region17: #{patch_discriminator_with_sed.8} parent=11 // pred_check
        %p176 = pneg %p100
      $region18: #{patch_discriminator_with_sed.8} parent=11 // pred_check_branch
        %178 = sbr.rel (%p176) target = $region20
      $region19: #{patch_discriminator_with_sed.8} parent=11 // pred_region
        %p179 = scmp.lt.s32.totalorder %s20, 0
        %s180 = scalar_select %p179, %s20, 0
        %s181 = scalar_lea.vmem %s2, %s180
      $region20: #{patch_discriminator_with_sed.8} parent=11 // pred_fallthru
        _
      // Predicated region
      $region21: #{patch_discriminator_with_sed.8} parent=11 // pred_check
        %p182 = pneg %p126
      $region22: #{patch_discriminator_with_sed.8} parent=11 // pred_check_branch
        %184 = sbr.rel (%p182) target = $region24
      $region23: #{patch_discriminator_with_sed.8} parent=11 // pred_region
        %p185 = scmp.lt.s32.totalorder %s20, 0
        %s186 = scalar_select %p185, %s20, 0
        %s187 = scalar_lea.vmem %s3, %s186
      $region24: #{patch_discriminator_with_sed.8} parent=11 // pred_fallthru
        _
    $region12: #{patch_discriminator_with_sed.8} parent=5 // pred_fallthru
      _
    %p188 = scmp.lt.s32.totalorder %s10, 2
    // Predicated region
    $region25: #{patch_discriminator_with_sed.8} parent=5 // pred_check
      %p189 = pneg %p188
    $region26: #{patch_discriminator_with_sed.8} parent=5 // pred_check_branch
      %191 = sbr.rel (%p189) target = $region28
    $region27: #{patch_discriminator_with_sed.8} parent=5 // pred_region
      // Predicated region
      $region29: #{patch_discriminator_with_sed.8} parent=27 // pred_check
        %p192 = pneg %p42
      $region30: #{patch_discriminator_with_sed.8} parent=27 // pred_check_branch
        %194 = sbr.rel (%p192) target = $region32
      $region31: #{patch_discriminator_with_sed.8} parent=27 // pred_region
        %p195 = scmp.lt.s32.totalorder %s17, 1
        %s196 = scalar_select %p195, %s17, 1
        %s197 = smul.addr %s196, 4
        %s198 = smul.addr %s197, 4
        %s199 = scalar_lea.vmem %s0, %s198
      $region32: #{patch_discriminator_with_sed.8} parent=27 // pred_fallthru
        _
    $region28: #{patch_discriminator_with_sed.8} parent=5 // pred_fallthru
      _
    %p200 = scmp.le.s32.totalorder 1, %s10
    %p201 = scmp.lt.s32.totalorder %s10, 3
    %p202 = pnand %p200, %p201
    %p203 = pneg %p202
    // Predicated region
    $region33: #{patch_discriminator_with_sed.8} parent=5 // pred_check
      _
    $region34: #{patch_discriminator_with_sed.8} parent=5 // pred_check_branch
      %205 = sbr.rel (%p202) target = $region36
    $region35: #{patch_discriminator_with_sed.8} parent=5 // pred_region
      %s206 = ssub.s32 %s10, 1
      %p207 = scmp.lt.s32.totalorder %s19, 1
      %s208 = scalar_select %p207, %s19, 1
      %s209 = smul.addr %s208, 4
      %s210 = smul.addr %s209, 4
      %s211 = scalar_lea.vmem %s0, %s210
      %p212 = pneg %p48
      %p213 = pneg %p45
      %p214 = scmp.lt.s32.totalorder %s20, 0
      %s215 = scalar_select %p214, %s20, 0
      %s216 = smul.addr %s215, 4
      %s217 = scalar_lea.vmem %s1, %s216
      %p218 = pneg %p74
      %p219 = pneg %p71
      %p220 = scmp.lt.s32.totalorder %s20, 0
      %s221 = scalar_select %p220, %s20, 0
      %s222 = scalar_lea.vmem %s2, %s221
      %p223 = pneg %p100
      %p224 = pneg %p97
      %p225 = scmp.lt.s32.totalorder %s20, 0
      %s226 = scalar_select %p225, %s20, 0
      %s227 = scalar_lea.vmem %s3, %s226
      %p228 = pneg %p126
      %p229 = pneg %p123
      %p230 = pneg %p154
      %p231 = pneg %p151
      %p232 = scmp.lt.s32.totalorder %s19, 1
      %s233 = scalar_select %p232, %s19, 1
      %p234 = scmp.lt.s32.totalorder %s20, 0
      %s235 = scalar_select %p234, %s20, 0
      %s236 = smul.addr %s233, 3
      %s237 = sadd.s32 %s235, %s236
      %s238 = smul.addr %s237, 4
      %s239 = scalar_lea.vmem %s4, %s238
      %p240 = scmp.lt.s32.totalorder %s19, 1
      %s241 = scalar_select %p240, %s19, 1
      %s242 = smul.addr %s241, 4
      %s243 = smul.addr %s242, 4
      %s244 = scalar_lea.vmem %s0, %s243
      %p245 = scmp.lt.s32.totalorder %s20, 0
      %s246 = scalar_select %p245, %s20, 0
      %s247 = smul.addr %s246, 4
      %s248 = scalar_lea.vmem %s1, %s247
      %p249 = scmp.lt.s32.totalorder %s20, 0
      %s250 = scalar_select %p249, %s20, 0
      %s251 = scalar_lea.vmem %s2, %s250
      %p252 = scmp.lt.s32.totalorder %s20, 0
      %s253 = scalar_select %p252, %s20, 0
      %s254 = scalar_lea.vmem %s3, %s253
      %p255 = scmp.lt.s32.totalorder %s19, 1
      %s256 = scalar_select %p255, %s19, 1
      %p257 = scmp.lt.s32.totalorder %s20, 0
      %s258 = scalar_select %p257, %s20, 0
      %s259 = smul.addr %s256, 3
      %s260 = sadd.s32 %s258, %s259
      %s261 = smul.addr %s260, 4
      %s262 = scalar_lea.vmem %s4, %s261
      %v264 = vld [vmem:[%s244] sm:$0xf]
      %v265 = vld [vmem:[%s244 + $0x4] sm:$0xf]
      %v266 = vld [vmem:[%s244 + $0x8] sm:$0x3]
      %v267 = vld [vmem:[%s248] sm:$0xf]
      %v268 = vld [vmem:[%s248 + $0x4] sm:$0xf]
      %v269 = vld [vmem:[%s248 + $0x8] sm:$0xf]
      %v270 = vld [vmem:[%s248 + $0xc] sm:$0xf]
      %v271 = vld [vmem:[%s248 + $0x10] sm:$0xf]
      %v272 = vld [vmem:[%s248 + $0x14] sm:$0xf]
      %v273 = vld [vmem:[%s248 + $0x18] sm:$0xf]
      %v274 = vld [vmem:[%s248 + $0x1c] sm:$0xf]
      %v275 = vld [vmem:[%s248 + $0x20] sm:$0xf]
      %v276 = vld [vmem:[%s248 + $0x24] sm:$0xf]
      %v277 = vld [vmem:[%s248 + $0x28] sm:$0xf]
      %v278 = vld [vmem:[%s248 + $0x2c] sm:$0xf]
      %v279 = vld [vmem:[%s248 + $0x30] sm:$0xf]
      %v280 = vld [vmem:[%s248 + $0x34] sm:$0xf]
      %v281 = vld [vmem:[%s248 + $0x38] sm:$0xf]
      %v282 = vld [vmem:[%s248 + $0x3c] sm:$0xf]
      %v283 = vld [vmem:[%s244 + $0x8] sm:$0x7]
      %s284 = scalar_lea.vmem %s248, 64
      %v285 = vld [vmem:[%s284] sm:$0xf]
      %v286 = vld [vmem:[%s284 + $0x4] sm:$0xf]
      %v287 = vld [vmem:[%s284 + $0x8] sm:$0xf]
      %v288 = vld [vmem:[%s284 + $0xc] sm:$0xf]
      %v289 = vld [vmem:[%s284 + $0x10] sm:$0xf]
      %v290 = vld [vmem:[%s284 + $0x14] sm:$0xf]
      %v291 = vld [vmem:[%s284 + $0x18] sm:$0xf]
      %v292 = vld [vmem:[%s284 + $0x1c] sm:$0xf]
      %v293 = vld [vmem:[%s284 + $0x20] sm:$0xf]
      %v294 = vld [vmem:[%s284 + $0x24] sm:$0xf]
      %v295 = vld [vmem:[%s284 + $0x28] sm:$0xf]
      %v296 = vld [vmem:[%s284 + $0x2c] sm:$0xf]
      %v297 = vld [vmem:[%s284 + $0x30] sm:$0xf]
      %v298 = vld [vmem:[%s284 + $0x34] sm:$0xf]
      %v299 = vld [vmem:[%s284 + $0x38] sm:$0xf]
      %v300 = vld [vmem:[%s284 + $0x3c] sm:$0xf]
      %v304 = vunpack.c.l.b16 %v264
      %v305 = vunpack.c.l.b16 %v265
      %v306 = vunpack.c.l.b16 %v283
      %v307 = vpack.c.b16 %v305, %v304
      %v308 = vpack.c.b16 %v306, %v306
      %vm309 = vsmask.f32 7424
      %v311 = vshrl.u32 %v307, 16
      %v313 = vshll.u32 %v307, 16
      %v315 = vrot.slane %v313, 1
      %v316 = vor.u32 %v311, %v315
      %v318 = vshll.u32 %v308, 16
      %v320 = vrot.slane %v318, 1
      %v321 = vsel %vm309, %v316, %v320
      %v322 = vshrl.u32 %v308, 16
      %v324 = vor.u32 %v322, %v320
      %v343 = vunpack.c.l.b16 %v285
      %v344 = vunpack.c.l.b16 %v286
      %v345 = vunpack.c.l.b16 %v287
      %v346 = vunpack.c.l.b16 %v288
      %v347 = vunpack.c.l.b16 %v289
      %v348 = vunpack.c.l.b16 %v290
      %v349 = vunpack.c.l.b16 %v291
      %v350 = vunpack.c.l.b16 %v292
      %v351 = vunpack.c.l.b16 %v293
      %v352 = vunpack.c.l.b16 %v294
      %v353 = vunpack.c.l.b16 %v295
      %v354 = vunpack.c.l.b16 %v296
      %v355 = vunpack.c.l.b16 %v297
      %v356 = vunpack.c.l.b16 %v298
      %v357 = vunpack.c.l.b16 %v299
      %v358 = vunpack.c.l.b16 %v300
      %v359 = vpack.c.b16 %v344, %v343
      %v360 = vpack.c.b16 %v346, %v345
      %v361 = vpack.c.b16 %v348, %v347
      %v362 = vpack.c.b16 %v350, %v349
      %v363 = vpack.c.b16 %v352, %v351
      %v364 = vpack.c.b16 %v354, %v353
      %v365 = vpack.c.b16 %v356, %v355
      %v366 = vpack.c.b16 %v358, %v357
      %375 = vmatprep.subr.bf16.mxu0 0
      %376 = vmatpush1.bf16.msra.mxu0 %v359
      %377 = vmatprep.subr.bf16.mxu0 0
      %378 = vmatpush1.bf16.msra.mxu0 %v360
      %379 = vmatprep.subr.bf16.mxu0 0
      %380 = vmatpush1.bf16.msra.mxu0 %v361
      %381 = vmatprep.subr.bf16.mxu0 0
      %382 = vmatpush1.bf16.msra.mxu0 %v362
      %383 = vmatprep.subr.bf16.mxu0 0
      %384 = vmatpush1.bf16.msra.mxu0 %v363
      %385 = vmatprep.subr.bf16.mxu0 0
      %386 = vmatpush1.bf16.msra.mxu0 %v364
      %387 = vmatprep.subr.bf16.mxu0 0
      %388 = vmatpush1.bf16.msra.mxu0 %v365
      %389 = vmatprep.subr.bf16.mxu0 0
      %390 = vmatpush1.bf16.msra.mxu0 %v366
      %391 = vmatprep.subr.bf16.mxu0 0
      %392 = vmatpush1.bf16.msra.mxu0 0
      %393 = vmatprep.subr.bf16.mxu0 0
      %394 = vmatpush1.bf16.msra.mxu0 0
      %395 = vmatprep.subr.bf16.mxu0 0
      %396 = vmatpush1.bf16.msra.mxu0 0
      %397 = vmatprep.subr.bf16.mxu0 0
      %398 = vmatpush1.bf16.msra.mxu0 0
      %399 = vmatprep.subr.bf16.mxu0 0
      %400 = vmatpush1.bf16.msra.mxu0 0
      %401 = vmatprep.subr.bf16.mxu0 0
      %402 = vmatpush1.bf16.msra.mxu0 0
      %403 = vmatprep.subr.bf16.mxu0 0
      %404 = vmatpush1.bf16.msra.mxu0 0
      %405 = vmatprep.subr.bf16.mxu0 0
      %406 = vmatpush1.bf16.msra.mxu0 0
      %407 = vmatprep.mubr.bf16.mxu0 0
      %408 = vmatmul.mubr.bf16.gmra.mrb[0].mxu0 %v321
      %v409 = vpop.f32.mrb[0].mxu0
      %v410 = vadd.f32 0.0, %v409
      %v411 = vpop.f32.mrb[0].mxu0
      %v412 = vpop.f32.mrb[0].mxu0
      %v413 = vadd.f32 0.0, %v412
      %v414 = vpop.f32.mrb[0].mxu0
      %415 = vmatprep.mubr.bf16.mxu0 0
      %416 = vmatmul.mubr.bf16.gmra.mrb[0].mxu0 %v324
      %v417 = vpop.f32.mrb[0].mxu0
      %v418 = vadd.f32 0.0, %v417
      %v419 = vpop.f32.mrb[0].mxu0
      %v420 = vpop.f32.mrb[0].mxu0
      %v421 = vpop.f32.mrb[0].mxu0
      %422 = vdwg.mxu0
      %v424 = vunpack.c.l.b16 %v266
      %v425 = vpack.c.b16 %v424, %v424
      %v444 = vunpack.c.l.b16 %v267
      %v445 = vunpack.c.l.b16 %v268
      %v446 = vunpack.c.l.b16 %v269
      %v447 = vunpack.c.l.b16 %v270
      %v448 = vunpack.c.l.b16 %v271
      %v449 = vunpack.c.l.b16 %v272
      %v450 = vunpack.c.l.b16 %v273
      %v451 = vunpack.c.l.b16 %v274
      %v452 = vunpack.c.l.b16 %v275
      %v453 = vunpack.c.l.b16 %v276
      %v454 = vunpack.c.l.b16 %v277
      %v455 = vunpack.c.l.b16 %v278
      %v456 = vunpack.c.l.b16 %v279
      %v457 = vunpack.c.l.b16 %v280
      %v458 = vunpack.c.l.b16 %v281
      %v459 = vunpack.c.l.b16 %v282
      %v460 = vpack.c.b16 %v445, %v444
      %v461 = vpack.c.b16 %v447, %v446
      %v462 = vpack.c.b16 %v449, %v448
      %v463 = vpack.c.b16 %v451, %v450
      %v464 = vpack.c.b16 %v453, %v452
      %v465 = vpack.c.b16 %v455, %v454
      %v466 = vpack.c.b16 %v457, %v456
      %v467 = vpack.c.b16 %v459, %v458
      %476 = vmatprep.subr.bf16.mxu0 0
      %477 = vmatpush1.bf16.msra.mxu0 %v460
      %478 = vmatprep.subr.bf16.mxu0 0
      %479 = vmatpush1.bf16.msra.mxu0 %v461
      %480 = vmatprep.subr.bf16.mxu0 0
      %481 = vmatpush1.bf16.msra.mxu0 %v462
      %482 = vmatprep.subr.bf16.mxu0 0
      %483 = vmatpush1.bf16.msra.mxu0 %v463
      %484 = vmatprep.subr.bf16.mxu0 0
      %485 = vmatpush1.bf16.msra.mxu0 %v464
      %486 = vmatprep.subr.bf16.mxu0 0
      %487 = vmatpush1.bf16.msra.mxu0 %v465
      %488 = vmatprep.subr.bf16.mxu0 0
      %489 = vmatpush1.bf16.msra.mxu0 %v466
      %490 = vmatprep.subr.bf16.mxu0 0
      %491 = vmatpush1.bf16.msra.mxu0 %v467
      %492 = vmatprep.subr.bf16.mxu0 0
      %493 = vmatpush1.bf16.msra.mxu0 0
      %494 = vmatprep.subr.bf16.mxu0 0
      %495 = vmatpush1.bf16.msra.mxu0 0
      %496 = vmatprep.subr.bf16.mxu0 0
      %497 = vmatpush1.bf16.msra.mxu0 0
      %498 = vmatprep.subr.bf16.mxu0 0
      %499 = vmatpush1.bf16.msra.mxu0 0
      %500 = vmatprep.subr.bf16.mxu0 0
      %501 = vmatpush1.bf16.msra.mxu0 0
      %502 = vmatprep.subr.bf16.mxu0 0
      %503 = vmatpush1.bf16.msra.mxu0 0
      %504 = vmatprep.subr.bf16.mxu0 0
      %505 = vmatpush1.bf16.msra.mxu0 0
      %506 = vmatprep.subr.bf16.mxu0 0
      %507 = vmatpush1.bf16.msra.mxu0 0
      %508 = vmatprep.mubr.bf16.mxu0 0
      %509 = vmatmul.mubr.bf16.gmra.mrb[0].mxu0 %v307
      %v510 = vpop.f32.mrb[0].mxu0
      %v511 = vadd.f32 %v410, %v510
      %v512 = vpop.f32.mrb[0].mxu0
      %v513 = vpop.f32.mrb[0].mxu0
      %v514 = vadd.f32 %v413, %v513
      %v515 = vpop.f32.mrb[0].mxu0
      %516 = vmatprep.mubr.bf16.mxu0 0
      %517 = vmatmul.mubr.bf16.gmra.mrb[0].mxu0 %v425
      %v518 = vpop.f32.mrb[0].mxu0
      %v519 = vadd.f32 %v418, %v518
      %v520 = vpop.f32.mrb[0].mxu0
      %v521 = vpop.f32.mrb[0].mxu0
      %v522 = vpop.f32.mrb[0].mxu0
      %523 = vdwg.mxu0
      %v524 = vld [vmem:[%s244] sm:$0xc]
      %v525 = vld [vmem:[%s244 + $0x4] sm:$0xf]
      %v526 = vld [vmem:[%s244 + $0x8] sm:$0xf]
      %v527 = vld [vmem:[%s244 + $0xc] sm:$0x1]
      %s528 = scalar_lea.vmem %s248, 128
      %v529 = vld [vmem:[%s528] sm:$0xf]
      %v530 = vld [vmem:[%s528 + $0x4] sm:$0xf]
      %v531 = vld [vmem:[%s528 + $0x8] sm:$0xf]
      %v532 = vld [vmem:[%s528 + $0xc] sm:$0xf]
      %v533 = vld [vmem:[%s528 + $0x10] sm:$0xf]
      %v534 = vld [vmem:[%s528 + $0x14] sm:$0xf]
      %v535 = vld [vmem:[%s528 + $0x18] sm:$0xf]
      %v536 = vld [vmem:[%s528 + $0x1c] sm:$0xf]
      %v537 = vld [vmem:[%s528 + $0x20] sm:$0xf]
      %v538 = vld [vmem:[%s528 + $0x24] sm:$0xf]
      %v539 = vld [vmem:[%s528 + $0x28] sm:$0xf]
      %v540 = vld [vmem:[%s528 + $0x2c] sm:$0xf]
      %v541 = vld [vmem:[%s528 + $0x30] sm:$0xf]
      %v542 = vld [vmem:[%s528 + $0x34] sm:$0xf]
      %v543 = vld [vmem:[%s528 + $0x38] sm:$0xf]
      %v544 = vld [vmem:[%s528 + $0x3c] sm:$0xf]
      %v549 = vunpack.c.l.b16 %v524
      %v550 = vunpack.c.l.b16 %v525
      %v551 = vunpack.c.l.b16 %v526
      %v552 = vunpack.c.l.b16 %v527
      %v553 = vpack.c.b16 %v550, %v549
      %v554 = vpack.c.b16 %v552, %v551
      %vm555 = vsmask.f32 5376
      %v557 = vshrl.u32 %v553, 16
      %v559 = vrot.slane %v557, 2
      %v560 = vshll.u32 %v553, 16
      %v562 = vrot.slane %v560, 3
      %v563 = vor.u32 %v559, %v562
      %v565 = vshrl.u32 %v554, 16
      %v567 = vrot.slane %v565, 2
      %v568 = vshll.u32 %v554, 16
      %v570 = vrot.slane %v568, 3
      %v571 = vor.u32 %v567, %v570
      %v572 = vsel %vm555, %v563, %v571
      %v591 = vunpack.c.l.b16 %v529
      %v592 = vunpack.c.l.b16 %v530
      %v593 = vunpack.c.l.b16 %v531
      %v594 = vunpack.c.l.b16 %v532
      %v595 = vunpack.c.l.b16 %v533
      %v596 = vunpack.c.l.b16 %v534
      %v597 = vunpack.c.l.b16 %v535
      %v598 = vunpack.c.l.b16 %v536
      %v599 = vunpack.c.l.b16 %v537
      %v600 = vunpack.c.l.b16 %v538
      %v601 = vunpack.c.l.b16 %v539
      %v602 = vunpack.c.l.b16 %v540
      %v603 = vunpack.c.l.b16 %v541
      %v604 = vunpack.c.l.b16 %v542
      %v605 = vunpack.c.l.b16 %v543
      %v606 = vunpack.c.l.b16 %v544
      %v607 = vpack.c.b16 %v592, %v591
      %v608 = vpack.c.b16 %v594, %v593
      %v609 = vpack.c.b16 %v596, %v595
      %v610 = vpack.c.b16 %v598, %v597
      %v611 = vpack.c.b16 %v600, %v599
      %v612 = vpack.c.b16 %v602, %v601
      %v613 = vpack.c.b16 %v604, %v603
      %v614 = vpack.c.b16 %v606, %v605
      %623 = vmatprep.subr.bf16.mxu0 0
      %624 = vmatpush1.bf16.msra.mxu0 %v607
      %625 = vmatprep.subr.bf16.mxu0 0
      %626 = vmatpush1.bf16.msra.mxu0 %v608
      %627 = vmatprep.subr.bf16.mxu0 0
      %628 = vmatpush1.bf16.msra.mxu0 %v609
      %629 = vmatprep.subr.bf16.mxu0 0
      %630 = vmatpush1.bf16.msra.mxu0 %v610
      %631 = vmatprep.subr.bf16.mxu0 0
      %632 = vmatpush1.bf16.msra.mxu0 %v611
      %633 = vmatprep.subr.bf16.mxu0 0
      %634 = vmatpush1.bf16.msra.mxu0 %v612
      %635 = vmatprep.subr.bf16.mxu0 0
      %636 = vmatpush1.bf16.msra.mxu0 %v613
      %637 = vmatprep.subr.bf16.mxu0 0
      %638 = vmatpush1.bf16.msra.mxu0 %v614
      %639 = vmatprep.subr.bf16.mxu0 0
      %640 = vmatpush1.bf16.msra.mxu0 0
      %641 = vmatprep.subr.bf16.mxu0 0
      %642 = vmatpush1.bf16.msra.mxu0 0
      %643 = vmatprep.subr.bf16.mxu0 0
      %644 = vmatpush1.bf16.msra.mxu0 0
      %645 = vmatprep.subr.bf16.mxu0 0
      %646 = vmatpush1.bf16.msra.mxu0 0
      %647 = vmatprep.subr.bf16.mxu0 0
      %648 = vmatpush1.bf16.msra.mxu0 0
      %649 = vmatprep.subr.bf16.mxu0 0
      %650 = vmatpush1.bf16.msra.mxu0 0
      %651 = vmatprep.subr.bf16.mxu0 0
      %652 = vmatpush1.bf16.msra.mxu0 0
      %653 = vmatprep.subr.bf16.mxu0 0
      %654 = vmatpush1.bf16.msra.mxu0 0
      %655 = vmatprep.mubr.bf16.mxu0 0
      %656 = vmatmul.mubr.bf16.gmra.mrb[0].mxu0 %v572
      %v657 = vpop.f32.mrb[0].mxu0
      %v658 = vadd.f32 0.0, %v657
      %v659 = vpop.f32.mrb[0].mxu0
      %v660 = vpop.f32.mrb[0].mxu0
      %v661 = vadd.f32 0.0, %v660
      %v662 = vpop.f32.mrb[0].mxu0
      %663 = vmatprep.mubr.bf16.mxu0 0
      %664 = vmatmul.mubr.bf16.gmra.mrb[0].mxu0 %v571
      %v665 = vpop.f32.mrb[0].mxu0
      %v666 = vadd.f32 0.0, %v665
      %v667 = vpop.f32.mrb[0].mxu0
      %v668 = vpop.f32.mrb[0].mxu0
      %v669 = vpop.f32.mrb[0].mxu0
      %670 = vdwg.mxu0
      %v671 = vadd.f32 %v511, %v658
      %v672 = vadd.f32 %v514, %v661
      %v673 = vadd.f32 %v519, %v666
      %v674 = vld [vmem:[%s244] sm:$0x8]
      %s675 = scalar_lea.vmem %s248, 192
      %v676 = vld [vmem:[%s675] sm:$0xf]
      %v677 = vld [vmem:[%s675 + $0x4] sm:$0xf]
      %v678 = vld [vmem:[%s675 + $0x8] sm:$0xf]
      %v679 = vld [vmem:[%s675 + $0xc] sm:$0xf]
      %v680 = vld [vmem:[%s675 + $0x10] sm:$0xf]
      %v681 = vld [vmem:[%s675 + $0x14] sm:$0xf]
      %v682 = vld [vmem:[%s675 + $0x18] sm:$0xf]
      %v683 = vld [vmem:[%s675 + $0x1c] sm:$0xf]
      %v684 = vld [vmem:[%s675 + $0x20] sm:$0xf]
      %v685 = vld [vmem:[%s675 + $0x24] sm:$0xf]
      %v686 = vld [vmem:[%s675 + $0x28] sm:$0xf]
      %v687 = vld [vmem:[%s675 + $0x2c] sm:$0xf]
      %v688 = vld [vmem:[%s675 + $0x30] sm:$0xf]
      %v689 = vld [vmem:[%s675 + $0x34] sm:$0xf]
      %v690 = vld [vmem:[%s675 + $0x38] sm:$0xf]
      %v691 = vld [vmem:[%s675 + $0x3c] sm:$0xf]
      %v693 = vunpack.c.l.b16 %v674
      %v694 = vpack.c.b16 %v550, %v693
      %vm695 = vcmask 1044480
      %v696 = vrot.slane %v694, 3
      %v697 = vrot.slane %v554, 3
      %v698 = vsel %vm695, %v696, %v697
      %v717 = vunpack.c.l.b16 %v676
      %v718 = vunpack.c.l.b16 %v677
      %v719 = vunpack.c.l.b16 %v678
      %v720 = vunpack.c.l.b16 %v679
      %v721 = vunpack.c.l.b16 %v680
      %v722 = vunpack.c.l.b16 %v681
      %v723 = vunpack.c.l.b16 %v682
      %v724 = vunpack.c.l.b16 %v683
      %v725 = vunpack.c.l.b16 %v684
      %v726 = vunpack.c.l.b16 %v685
      %v727 = vunpack.c.l.b16 %v686
      %v728 = vunpack.c.l.b16 %v687
      %v729 = vunpack.c.l.b16 %v688
      %v730 = vunpack.c.l.b16 %v689
      %v731 = vunpack.c.l.b16 %v690
      %v732 = vunpack.c.l.b16 %v691
      %v733 = vpack.c.b16 %v718, %v717
      %v734 = vpack.c.b16 %v720, %v719
      %v735 = vpack.c.b16 %v722, %v721
      %v736 = vpack.c.b16 %v724, %v723
      %v737 = vpack.c.b16 %v726, %v725
      %v738 = vpack.c.b16 %v728, %v727
      %v739 = vpack.c.b16 %v730, %v729
      %v740 = vpack.c.b16 %v732, %v731
      %749 = vmatprep.subr.bf16.mxu0 0
      %750 = vmatpush1.bf16.msra.mxu0 %v733
      %751 = vmatprep.subr.bf16.mxu0 0
      %752 = vmatpush1.bf16.msra.mxu0 %v734
      %753 = vmatprep.subr.bf16.mxu0 0
      %754 = vmatpush1.bf16.msra.mxu0 %v735
      %755 = vmatprep.subr.bf16.mxu0 0
      %756 = vmatpush1.bf16.msra.mxu0 %v736
      %757 = vmatprep.subr.bf16.mxu0 0
      %758 = vmatpush1.bf16.msra.mxu0 %v737
      %759 = vmatprep.subr.bf16.mxu0 0
      %760 = vmatpush1.bf16.msra.mxu0 %v738
      %761 = vmatprep.subr.bf16.mxu0 0
      %762 = vmatpush1.bf16.msra.mxu0 %v739
      %763 = vmatprep.subr.bf16.mxu0 0
      %764 = vmatpush1.bf16.msra.mxu0 %v740
      %765 = vmatprep.subr.bf16.mxu0 0
      %766 = vmatpush1.bf16.msra.mxu0 0
      %767 = vmatprep.subr.bf16.mxu0 0
      %768 = vmatpush1.bf16.msra.mxu0 0
      %769 = vmatprep.subr.bf16.mxu0 0
      %770 = vmatpush1.bf16.msra.mxu0 0
      %771 = vmatprep.subr.bf16.mxu0 0
      %772 = vmatpush1.bf16.msra.mxu0 0
      %773 = vmatprep.subr.bf16.mxu0 0
      %774 = vmatpush1.bf16.msra.mxu0 0
      %775 = vmatprep.subr.bf16.mxu0 0
      %776 = vmatpush1.bf16.msra.mxu0 0
      %777 = vmatprep.subr.bf16.mxu0 0
      %778 = vmatpush1.bf16.msra.mxu0 0
      %779 = vmatprep.subr.bf16.mxu0 0
      %780 = vmatpush1.bf16.msra.mxu0 0
      %781 = vmatprep.mubr.bf16.mxu0 0
      %782 = vmatmul.mubr.bf16.gmra.mrb[0].mxu0 %v698
      %v783 = vpop.f32.mrb[0].mxu0
      %v784 = vadd.f32 0.0, %v783
      %v785 = vpop.f32.mrb[0].mxu0
      %v786 = vpop.f32.mrb[0].mxu0
      %v787 = vadd.f32 0.0, %v786
      %v788 = vpop.f32.mrb[0].mxu0
      %789 = vmatprep.mubr.bf16.mxu0 0
      %790 = vmatmul.mubr.bf16.gmra.mrb[0].mxu0 %v697
      %v791 = vpop.f32.mrb[0].mxu0
      %v792 = vadd.f32 0.0, %v791
      %v793 = vpop.f32.mrb[0].mxu0
      %v794 = vpop.f32.mrb[0].mxu0
      %v795 = vpop.f32.mrb[0].mxu0
      %796 = vdwg.mxu0
      %v797 = vadd.f32 %v671, %v784
      %v798 = vadd.f32 %v672, %v787
      %v799 = vadd.f32 %v673, %v792
      %v800 = vld [vmem:[%s251] sm:$0x1]
      %v802 = vlaneseq
      %v803 = vshrl.u32 %v802, 7
      %v804 = vsub.s32 0, %v803
      %v805 = vrot.slane %v800, %v804
      %v807 = vmul.f32 %v797, %v805
      %v808 = vmul.f32 %v798, %v805
      %v809 = vmul.f32 %v799, %v805
      %v810 = vld [vmem:[%s254] sm:$0x1]
      %v812 = vlaneseq
      %v813 = vshrl.u32 %v812, 7
      %v814 = vsub.s32 0, %v813
      %v815 = vrot.slane %v810, %v814
      %v817 = vadd.f32 %v807, %v815
      %v818 = vadd.f32 %v808, %v815
      %v819 = vadd.f32 %v809, %v815
      %v820 = vmul.f32 %v817, 0.2
      %v821 = vmul.f32 %v818, 0.2
      %v822 = vmul.f32 %v819, 0.2
      %v823 = vmax.f32 %v817, %v820
      %v824 = vmax.f32 %v818, %v821
      %v825 = vmax.f32 %v819, %v822
      %v826 = vpack.c.bf16 %v824, %v823
      %v827 = vpack.c.bf16 %v825, %v825
      %v830 = vunpack.c.l.b16 %v826
      %v831 = vunpack.c.h.b16 %v826
      %v832 = vunpack.c.l.b16 %v827
      %v833 = vpack.c.b16 %v830, %v830
      %v834 = vpack.c.b16 %v831, %v831
      %v835 = vpack.c.b16 %v832, %v832
      %839 = vst [vmem:[%s262] sm:$0xf] %v833
      %840 = vst [vmem:[%s262 + $0x4] sm:$0xf] %v834
      %841 = vst [vmem:[%s262 + $0x8] sm:$0x3] %v835
      %p842 = scmp.lt.s32.totalorder %s19, 1
      %s843 = scalar_select %p842, %s19, 1
      %p844 = scmp.lt.s32.totalorder %s20, 0
      %s845 = scalar_select %p844, %s20, 0
      %s846 = smul.addr %s843, 3
      %s847 = sadd.s32 %s845, %s846
      %s848 = smul.addr %s847, 4
      %s849 = scalar_lea.vmem %s4, %s848
      // Predicated region
      $region37: #{patch_discriminator_with_sed.8} parent=35 // pred_check
        %p850 = pneg %p151
      $region38: #{patch_discriminator_with_sed.8} parent=35 // pred_check_branch
        %852 = sbr.rel (%p850) target = $region40
      $region39: #{patch_discriminator_with_sed.8} parent=35 // pred_region
        _
      $region40: #{patch_discriminator_with_sed.8} parent=35 // pred_fallthru
        _
    $region36: #{patch_discriminator_with_sed.8} parent=5 // pred_fallthru
      _
    %p853 = scmp.le.s32.totalorder 2, %s10
    // Predicated region
    $region41: #{patch_discriminator_with_sed.8} parent=5 // pred_check
      %p854 = pneg %p853
    $region42: #{patch_discriminator_with_sed.8} parent=5 // pred_check_branch
      %856 = sbr.rel (%p854) target = $region44
    $region43: #{patch_discriminator_with_sed.8} parent=5 // pred_region
      %s857 = ssub.s32 %s10, 2
      // Predicated region
      $region45: #{patch_discriminator_with_sed.8} parent=43 // pred_check
        %p858 = pneg %p157
      $region46: #{patch_discriminator_with_sed.8} parent=43 // pred_check_branch
        %860 = sbr.rel (%p858) target = $region48
      $region47: #{patch_discriminator_with_sed.8} parent=43 // pred_region
        %p861 = scmp.lt.s32.totalorder %s21, 1
        %s862 = scalar_select %p861, %s21, 1
        %p863 = scmp.lt.s32.totalorder %s22, 0
        %s864 = scalar_select %p863, %s22, 0
        %s865 = smul.addr %s862, 3
        %s866 = sadd.s32 %s864, %s865
        %s867 = smul.addr %s866, 4
        %s868 = scalar_lea.vmem %s4, %s867
      $region48: #{patch_discriminator_with_sed.8} parent=43 // pred_fallthru
        _
    $region44: #{patch_discriminator_with_sed.8} parent=5 // pred_fallthru
      _
  $region6: #{patch_discriminator_with_sed.8} parent=0 // loop_footer
    %s14 = sadd.s32 1, %s10
  $region7: #{patch_discriminator_with_sed.8} parent=0 // loop_footer_branch
    %9 = sbr.rel target = $region3
  $region8: #{patch_discriminator_with_sed.8} parent=0 // loop_exit
    _

// kernel: patch_discriminator_with_sed.9
$region0: #{patch_discriminator_with_sed.9}
  #allocation0 [shape = 'u32[]', space=smem, size = 0x4, offset = 0x4, fixed_abs, tag = 'smem constant byte address 0x4 - core index']
  #allocation1 [shape = 'u32[144,128]{1,0:T(1,128)}', space=vmem, size = 0x12000, scoped, tag = 'internal scratch']
  %s0 = inlined_call_operand.vmem [shape: bf16[2,10,256], index: 0, kind: input, shape index: {}]
  %s1 = inlined_call_operand.vmem [shape: bf16[4,256,128], index: 1, kind: input, shape index: {}]
  %s2 = inlined_call_operand.vmem [shape: f32[1,128], index: 2, kind: input, shape index: {}]
  %s3 = inlined_call_operand.vmem [shape: f32[1,128], index: 3, kind: input, shape index: {}]
  %s4 = inlined_call_operand.vmem [shape: bf16[2,6,128], index: 4, kind: output, shape index: {}]
  %s5 = sld [smem:[#allocation0]]
  $region49: #{patch_discriminator_with_sed.9} parent=0
    _
  %s7 = ssub.s32 1, %s5
  %s8 = scalar_select 0, %s7, %s5
  loop: start=0, step=1, limit=4
  $region2: #{patch_discriminator_with_sed.9} parent=0 // loop_pre_header
    _
  $region3: #{patch_discriminator_with_sed.9} parent=0 // loop_header
    %s10 = sphi 0, %s14
    %p11 = scmp.ge.s32.totalorder %s10, 4
    %s17 = sphi 0, %s29
    %s18 = sphi 0, %s25
    %s19 = sphi 0, %s17
    %s20 = sphi 0, %s18
    %s21 = sphi 0, %s19
    %s22 = sphi 0, %s20
    %s32 = sphi 0, %s34
    %s35 = sphi 0, %s32
    %s36 = sphi 0, %s35
    %s52 = sphi 0, %s36
    %s58 = sphi 0, %s60
    %s61 = sphi 0, %s58
    %s62 = sphi 0, %s61
    %s78 = sphi 0, %s62
    %s84 = sphi 0, %s86
    %s87 = sphi 0, %s84
    %s88 = sphi 0, %s87
    %s104 = sphi 0, %s88
    %s110 = sphi 0, %s112
    %s113 = sphi 0, %s110
    %s114 = sphi 0, %s113
    %s130 = sphi 0, %s114
    %s138 = sphi 0, %s140
    %s141 = sphi 0, %s138
    %s142 = sphi 0, %s141
    %s158 = sphi 0, %s142
  $region4: #{patch_discriminator_with_sed.9} parent=0 // loop_header_branch
    %13 = sbr.rel (%p11) target = $region8
  $region5: #{patch_discriminator_with_sed.9} parent=0 // loop_body
    %s15 = ssub.s32 %s10, 1
    %s16 = ssub.s32 %s10, 2
    %s23 = sadd.s32 1, %s18
    %p24 = scmp.ge.s32.totalorder %s23, 1
    %s25 = scalar_select %p24, 0, %s23
    %s26 = sadd.s32 1, %s17
    %s27 = scalar_select %p24, %s26, %s17
    %p28 = scmp.ge.s32.totalorder %s27, 2
    %s29 = scalar_select %p28, 0, %s27
    %s30 = ssub.s32 %s17, %s29
    %p31 = scmp.eq.s32.totalorder %s30, 0
    %s33 = sadd.s32 %s32, 1
    %s34 = scalar_select %p31, %s32, %s33
    %p37 = pneg %p31
    %p38 = scmp.eq.s32.totalorder %s10, 1
    %p39 = por %p37, %p38
    %p40 = scmp.ne.s32.totalorder %s32, %s35
    %p41 = scmp.eq.s32.totalorder %s10, 0
    %p42 = por %p40, %p41
    %p43 = scmp.ne.s32.totalorder %s32, %s35
    %p44 = scmp.eq.s32.totalorder %s15, 1
    %p45 = por %p43, %p44
    %p46 = scmp.ne.s32.totalorder %s35, %s36
    %p47 = scmp.eq.s32.totalorder %s15, 0
    %p48 = por %p46, %p47
    %p49 = scmp.ne.s32.totalorder %s35, %s36
    %p50 = scmp.eq.s32.totalorder %s16, 1
    %p51 = por %p49, %p50
    %p53 = scmp.ne.s32.totalorder %s36, %s52
    %p54 = scmp.eq.s32.totalorder %s16, 0
    %p55 = por %p53, %p54
    %s56 = ssub.s32 %s18, %s25
    %p57 = scmp.eq.s32.totalorder %s56, 0
    %s59 = sadd.s32 %s58, 1
    %s60 = scalar_select %p57, %s58, %s59
    %p63 = pneg %p57
    %p64 = scmp.eq.s32.totalorder %s10, 1
    %p65 = por %p63, %p64
    %p66 = scmp.ne.s32.totalorder %s58, %s61
    %p67 = scmp.eq.s32.totalorder %s10, 0
    %p68 = por %p66, %p67
    %p69 = scmp.ne.s32.totalorder %s58, %s61
    %p70 = scmp.eq.s32.totalorder %s15, 1
    %p71 = por %p69, %p70
    %p72 = scmp.ne.s32.totalorder %s61, %s62
    %p73 = scmp.eq.s32.totalorder %s15, 0
    %p74 = por %p72, %p73
    %p75 = scmp.ne.s32.totalorder %s61, %s62
    %p76 = scmp.eq.s32.totalorder %s16, 1
    %p77 = por %p75, %p76
    %p79 = scmp.ne.s32.totalorder %s62, %s78
    %p80 = scmp.eq.s32.totalorder %s16, 0
    %p81 = por %p79, %p80
    %s82 = ssub.s32 %s18, %s25
    %p83 = scmp.eq.s32.totalorder %s82, 0
    %s85 = sadd.s32 %s84, 1
    %s86 = scalar_select %p83, %s84, %s85
    %p89 = pneg %p83
    %p90 = scmp.eq.s32.totalorder %s10, 1
    %p91 = por %p89, %p90
    %p92 = scmp.ne.s32.totalorder %s84, %s87
    %p93 = scmp.eq.s32.totalorder %s10, 0
    %p94 = por %p92, %p93
    %p95 = scmp.ne.s32.totalorder %s84, %s87
    %p96 = scmp.eq.s32.totalorder %s15, 1
    %p97 = por %p95, %p96
    %p98 = scmp.ne.s32.totalorder %s87, %s88
    %p99 = scmp.eq.s32.totalorder %s15, 0
    %p100 = por %p98, %p99
    %p101 = scmp.ne.s32.totalorder %s87, %s88
    %p102 = scmp.eq.s32.totalorder %s16, 1
    %p103 = por %p101, %p102
    %p105 = scmp.ne.s32.totalorder %s88, %s104
    %p106 = scmp.eq.s32.totalorder %s16, 0
    %p107 = por %p105, %p106
    %s108 = ssub.s32 %s18, %s25
    %p109 = scmp.eq.s32.totalorder %s108, 0
    %s111 = sadd.s32 %s110, 1
    %s112 = scalar_select %p109, %s110, %s111
    %p115 = pneg %p109
    %p116 = scmp.eq.s32.totalorder %s10, 1
    %p117 = por %p115, %p116
    %p118 = scmp.ne.s32.totalorder %s110, %s113
    %p119 = scmp.eq.s32.totalorder %s10, 0
    %p120 = por %p118, %p119
    %p121 = scmp.ne.s32.totalorder %s110, %s113
    %p122 = scmp.eq.s32.totalorder %s15, 1
    %p123 = por %p121, %p122
    %p124 = scmp.ne.s32.totalorder %s113, %s114
    %p125 = scmp.eq.s32.totalorder %s15, 0
    %p126 = por %p124, %p125
    %p127 = scmp.ne.s32.totalorder %s113, %s114
    %p128 = scmp.eq.s32.totalorder %s16, 1
    %p129 = por %p127, %p128
    %p131 = scmp.ne.s32.totalorder %s114, %s130
    %p132 = scmp.eq.s32.totalorder %s16, 0
    %p133 = por %p131, %p132
    %s134 = ssub.s32 %s17, %s29
    %s135 = ssub.s32 %s18, %s25
    %s136 = sor.u32 %s134, %s135
    %p137 = scmp.eq.s32.totalorder %s136, 0
    %s139 = sadd.s32 %s138, 1
    %s140 = scalar_select %p137, %s138, %s139
    %p143 = pneg %p137
    %p144 = scmp.eq.s32.totalorder %s10, 1
    %p145 = por %p143, %p144
    %p146 = scmp.ne.s32.totalorder %s138, %s141
    %p147 = scmp.eq.s32.totalorder %s10, 0
    %p148 = por %p146, %p147
    %p149 = scmp.ne.s32.totalorder %s138, %s141
    %p150 = scmp.eq.s32.totalorder %s15, 1
    %p151 = por %p149, %p150
    %p152 = scmp.ne.s32.totalorder %s141, %s142
    %p153 = scmp.eq.s32.totalorder %s15, 0
    %p154 = por %p152, %p153
    %p155 = scmp.ne.s32.totalorder %s141, %s142
    %p156 = scmp.eq.s32.totalorder %s16, 1
    %p157 = por %p155, %p156
    %p159 = scmp.ne.s32.totalorder %s142, %s158
    %p160 = scmp.eq.s32.totalorder %s16, 0
    %p161 = por %p159, %p160
    %p162 = scmp.le.s32.totalorder 1, %s10
    %p163 = scmp.lt.s32.totalorder %s10, 3
    %p164 = pnand %p162, %p163
    %p165 = pneg %p164
    // Predicated region
    $region9: #{patch_discriminator_with_sed.9} parent=5 // pred_check
      _
    $region10: #{patch_discriminator_with_sed.9} parent=5 // pred_check_branch
      %167 = sbr.rel (%p164) target = $region12
    $region11: #{patch_discriminator_with_sed.9} parent=5 // pred_region
      %s168 = ssub.s32 %s10, 1
      // Predicated region
      $region13: #{patch_discriminator_with_sed.9} parent=11 // pred_check
        %p169 = pneg %p74
      $region14: #{patch_discriminator_with_sed.9} parent=11 // pred_check_branch
        %171 = sbr.rel (%p169) target = $region16
      $region15: #{patch_discriminator_with_sed.9} parent=11 // pred_region
        %p172 = scmp.lt.s32.totalorder %s20, 0
        %s173 = scalar_select %p172, %s20, 0
        %s174 = smul.addr %s173, 4
        %s175 = scalar_lea.vmem %s1, %s174
      $region16: #{patch_discriminator_with_sed.9} parent=11 // pred_fallthru
        _
      // Predicated region
      $region17: #{patch_discriminator_with_sed.9} parent=11 // pred_check
        %p176 = pneg %p100
      $region18: #{patch_discriminator_with_sed.9} parent=11 // pred_check_branch
        %178 = sbr.rel (%p176) target = $region20
      $region19: #{patch_discriminator_with_sed.9} parent=11 // pred_region
        %p179 = scmp.lt.s32.totalorder %s20, 0
        %s180 = scalar_select %p179, %s20, 0
        %s181 = scalar_lea.vmem %s2, %s180
      $region20: #{patch_discriminator_with_sed.9} parent=11 // pred_fallthru
        _
      // Predicated region
      $region21: #{patch_discriminator_with_sed.9} parent=11 // pred_check
        %p182 = pneg %p126
      $region22: #{patch_discriminator_with_sed.9} parent=11 // pred_check_branch
        %184 = sbr.rel (%p182) target = $region24
      $region23: #{patch_discriminator_with_sed.9} parent=11 // pred_region
        %p185 = scmp.lt.s32.totalorder %s20, 0
        %s186 = scalar_select %p185, %s20, 0
        %s187 = scalar_lea.vmem %s3, %s186
      $region24: #{patch_discriminator_with_sed.9} parent=11 // pred_fallthru
        _
    $region12: #{patch_discriminator_with_sed.9} parent=5 // pred_fallthru
      _
    %p188 = scmp.lt.s32.totalorder %s10, 2
    // Predicated region
    $region25: #{patch_discriminator_with_sed.9} parent=5 // pred_check
      %p189 = pneg %p188
    $region26: #{patch_discriminator_with_sed.9} parent=5 // pred_check_branch
      %191 = sbr.rel (%p189) target = $region28
    $region27: #{patch_discriminator_with_sed.9} parent=5 // pred_region
      // Predicated region
      $region29: #{patch_discriminator_with_sed.9} parent=27 // pred_check
        %p192 = pneg %p42
      $region30: #{patch_discriminator_with_sed.9} parent=27 // pred_check_branch
        %194 = sbr.rel (%p192) target = $region32
      $region31: #{patch_discriminator_with_sed.9} parent=27 // pred_region
        %p195 = scmp.lt.s32.totalorder %s17, 1
        %s196 = scalar_select %p195, %s17, 1
        %s197 = smul.addr %s196, 4
        %s198 = smul.addr %s197, 4
        %s199 = scalar_lea.vmem %s0, %s198
      $region32: #{patch_discriminator_with_sed.9} parent=27 // pred_fallthru
        _
    $region28: #{patch_discriminator_with_sed.9} parent=5 // pred_fallthru
      _
    %p200 = scmp.le.s32.totalorder 1, %s10
    %p201 = scmp.lt.s32.totalorder %s10, 3
    %p202 = pnand %p200, %p201
    %p203 = pneg %p202
    // Predicated region
    $region33: #{patch_discriminator_with_sed.9} parent=5 // pred_check
      _
    $region34: #{patch_discriminator_with_sed.9} parent=5 // pred_check_branch
      %205 = sbr.rel (%p202) target = $region36
    $region35: #{patch_discriminator_with_sed.9} parent=5 // pred_region
      %s206 = ssub.s32 %s10, 1
      %p207 = scmp.lt.s32.totalorder %s19, 1
      %s208 = scalar_select %p207, %s19, 1
      %s209 = smul.addr %s208, 4
      %s210 = smul.addr %s209, 4
      %s211 = scalar_lea.vmem %s0, %s210
      %p212 = pneg %p48
      %p213 = pneg %p45
      %p214 = scmp.lt.s32.totalorder %s20, 0
      %s215 = scalar_select %p214, %s20, 0
      %s216 = smul.addr %s215, 4
      %s217 = scalar_lea.vmem %s1, %s216
      %p218 = pneg %p74
      %p219 = pneg %p71
      %p220 = scmp.lt.s32.totalorder %s20, 0
      %s221 = scalar_select %p220, %s20, 0
      %s222 = scalar_lea.vmem %s2, %s221
      %p223 = pneg %p100
      %p224 = pneg %p97
      %p225 = scmp.lt.s32.totalorder %s20, 0
      %s226 = scalar_select %p225, %s20, 0
      %s227 = scalar_lea.vmem %s3, %s226
      %p228 = pneg %p126
      %p229 = pneg %p123
      %p230 = pneg %p154
      %p231 = pneg %p151
      %p232 = scmp.lt.s32.totalorder %s19, 1
      %s233 = scalar_select %p232, %s19, 1
      %p234 = scmp.lt.s32.totalorder %s20, 0
      %s235 = scalar_select %p234, %s20, 0
      %s236 = sadd.s32 %s235, %s233
      %s237 = smul.addr %s236, 4
      %s238 = scalar_lea.vmem %s4, %s237
      %p239 = scmp.lt.s32.totalorder %s19, 1
      %s240 = scalar_select %p239, %s19, 1
      %s241 = smul.addr %s240, 4
      %s242 = smul.addr %s241, 4
      %s243 = scalar_lea.vmem %s0, %s242
      %p244 = scmp.lt.s32.totalorder %s20, 0
      %s245 = scalar_select %p244, %s20, 0
      %s246 = smul.addr %s245, 4
      %s247 = scalar_lea.vmem %s1, %s246
      %p248 = scmp.lt.s32.totalorder %s20, 0
      %s249 = scalar_select %p248, %s20, 0
      %s250 = scalar_lea.vmem %s2, %s249
      %p251 = scmp.lt.s32.totalorder %s20, 0
      %s252 = scalar_select %p251, %s20, 0
      %s253 = scalar_lea.vmem %s3, %s252
      %p254 = scmp.lt.s32.totalorder %s19, 1
      %s255 = scalar_select %p254, %s19, 1
      %p256 = scmp.lt.s32.totalorder %s20, 0
      %s257 = scalar_select %p256, %s20, 0
      %s258 = sadd.s32 %s257, %s255
      %s259 = smul.addr %s258, 4
      %s260 = scalar_lea.vmem %s4, %s259
      %v262 = vld [vmem:[%s243] sm:$0x77]
      %v263 = vld [vmem:[%s247] sm:$0xf]
      %v264 = vld [vmem:[%s247 + $0x4] sm:$0xf]
      %v265 = vld [vmem:[%s247 + $0x8] sm:$0xf]
      %v266 = vld [vmem:[%s247 + $0xc] sm:$0xf]
      %v267 = vld [vmem:[%s247 + $0x10] sm:$0xf]
      %v268 = vld [vmem:[%s247 + $0x14] sm:$0xf]
      %v269 = vld [vmem:[%s247 + $0x18] sm:$0xf]
      %v270 = vld [vmem:[%s247 + $0x1c] sm:$0xf]
      %v271 = vld [vmem:[%s247 + $0x20] sm:$0xf]
      %v272 = vld [vmem:[%s247 + $0x24] sm:$0xf]
      %v273 = vld [vmem:[%s247 + $0x28] sm:$0xf]
      %v274 = vld [vmem:[%s247 + $0x2c] sm:$0xf]
      %v275 = vld [vmem:[%s247 + $0x30] sm:$0xf]
      %v276 = vld [vmem:[%s247 + $0x34] sm:$0xf]
      %v277 = vld [vmem:[%s247 + $0x38] sm:$0xf]
      %v278 = vld [vmem:[%s247 + $0x3c] sm:$0xf]
      %v279 = vld [vmem:[%s247 + $0x40] sm:$0xf]
      %v280 = vld [vmem:[%s247 + $0x44] sm:$0xf]
      %v281 = vld [vmem:[%s247 + $0x48] sm:$0xf]
      %v282 = vld [vmem:[%s247 + $0x4c] sm:$0xf]
      %v283 = vld [vmem:[%s247 + $0x50] sm:$0xf]
      %v284 = vld [vmem:[%s247 + $0x54] sm:$0xf]
      %v285 = vld [vmem:[%s247 + $0x58] sm:$0xf]
      %v286 = vld [vmem:[%s247 + $0x5c] sm:$0xf]
      %v287 = vld [vmem:[%s247 + $0x60] sm:$0xf]
      %v288 = vld [vmem:[%s247 + $0x64] sm:$0xf]
      %v289 = vld [vmem:[%s247 + $0x68] sm:$0xf]
      %v290 = vld [vmem:[%s247 + $0x6c] sm:$0xf]
      %v291 = vld [vmem:[%s247 + $0x70] sm:$0xf]
      %v292 = vld [vmem:[%s247 + $0x74] sm:$0xf]
      %v293 = vld [vmem:[%s247 + $0x78] sm:$0xf]
      %v294 = vld [vmem:[%s247 + $0x7c] sm:$0xf]
      %v295 = vld [vmem:[%s243] sm:$0xff]
      %s296 = scalar_lea.vmem %s247, 128
      %v297 = vld [vmem:[%s296] sm:$0xf]
      %v298 = vld [vmem:[%s296 + $0x4] sm:$0xf]
      %v299 = vld [vmem:[%s296 + $0x8] sm:$0xf]
      %v300 = vld [vmem:[%s296 + $0xc] sm:$0xf]
      %v301 = vld [vmem:[%s296 + $0x10] sm:$0xf]
      %v302 = vld [vmem:[%s296 + $0x14] sm:$0xf]
      %v303 = vld [vmem:[%s296 + $0x18] sm:$0xf]
      %v304 = vld [vmem:[%s296 + $0x1c] sm:$0xf]
      %v305 = vld [vmem:[%s296 + $0x20] sm:$0xf]
      %v306 = vld [vmem:[%s296 + $0x24] sm:$0xf]
      %v307 = vld [vmem:[%s296 + $0x28] sm:$0xf]
      %v308 = vld [vmem:[%s296 + $0x2c] sm:$0xf]
      %v309 = vld [vmem:[%s296 + $0x30] sm:$0xf]
      %v310 = vld [vmem:[%s296 + $0x34] sm:$0xf]
      %v311 = vld [vmem:[%s296 + $0x38] sm:$0xf]
      %v312 = vld [vmem:[%s296 + $0x3c] sm:$0xf]
      %v313 = vld [vmem:[%s296 + $0x40] sm:$0xf]
      %v314 = vld [vmem:[%s296 + $0x44] sm:$0xf]
      %v315 = vld [vmem:[%s296 + $0x48] sm:$0xf]
      %v316 = vld [vmem:[%s296 + $0x4c] sm:$0xf]
      %v317 = vld [vmem:[%s296 + $0x50] sm:$0xf]
      %v318 = vld [vmem:[%s296 + $0x54] sm:$0xf]
      %v319 = vld [vmem:[%s296 + $0x58] sm:$0xf]
      %v320 = vld [vmem:[%s296 + $0x5c] sm:$0xf]
      %v321 = vld [vmem:[%s296 + $0x60] sm:$0xf]
      %v322 = vld [vmem:[%s296 + $0x64] sm:$0xf]
      %v323 = vld [vmem:[%s296 + $0x68] sm:$0xf]
      %v324 = vld [vmem:[%s296 + $0x6c] sm:$0xf]
      %v325 = vld [vmem:[%s296 + $0x70] sm:$0xf]
      %v326 = vld [vmem:[%s296 + $0x74] sm:$0xf]
      %v327 = vld [vmem:[%s296 + $0x78] sm:$0xf]
      %v328 = vld [vmem:[%s296 + $0x7c] sm:$0xf]
      %v330 = vunpack.c.l.b16 %v295
      %v331 = vunpack.c.h.b16 %v295
      %v332 = vpack.c.b16 %v330, %v330
      %v333 = vpack.c.b16 %v331, %v331
      %v335 = vshrl.u32 %v332, 16
      %v337 = vshll.u32 %v332, 16
      %v339 = vrot.slane %v337, 1
      %v340 = vor.u32 %v335, %v339
      %v342 = vshrl.u32 %v333, 16
      %v344 = vshll.u32 %v333, 16
      %v346 = vrot.slane %v344, 1
      %v347 = vor.u32 %v342, %v346
      %v382 = vunpack.c.l.b16 %v297
      %v383 = vunpack.c.l.b16 %v298
      %v384 = vunpack.c.l.b16 %v299
      %v385 = vunpack.c.l.b16 %v300
      %v386 = vunpack.c.l.b16 %v301
      %v387 = vunpack.c.l.b16 %v302
      %v388 = vunpack.c.l.b16 %v303
      %v389 = vunpack.c.l.b16 %v304
      %v390 = vunpack.c.l.b16 %v305
      %v391 = vunpack.c.l.b16 %v306
      %v392 = vunpack.c.l.b16 %v307
      %v393 = vunpack.c.l.b16 %v308
      %v394 = vunpack.c.l.b16 %v309
      %v395 = vunpack.c.l.b16 %v310
      %v396 = vunpack.c.l.b16 %v311
      %v397 = vunpack.c.l.b16 %v312
      %v398 = vunpack.c.l.b16 %v313
      %v399 = vunpack.c.l.b16 %v314
      %v400 = vunpack.c.l.b16 %v315
      %v401 = vunpack.c.l.b16 %v316
      %v402 = vunpack.c.l.b16 %v317
      %v403 = vunpack.c.l.b16 %v318
      %v404 = vunpack.c.l.b16 %v319
      %v405 = vunpack.c.l.b16 %v320
      %v406 = vunpack.c.l.b16 %v321
      %v407 = vunpack.c.l.b16 %v322
      %v408 = vunpack.c.l.b16 %v323
      %v409 = vunpack.c.l.b16 %v324
      %v410 = vunpack.c.l.b16 %v325
      %v411 = vunpack.c.l.b16 %v326
      %v412 = vunpack.c.l.b16 %v327
      %v413 = vunpack.c.l.b16 %v328
      %v414 = vpack.c.b16 %v383, %v382
      %v415 = vpack.c.b16 %v385, %v384
      %v416 = vpack.c.b16 %v387, %v386
      %v417 = vpack.c.b16 %v389, %v388
      %v418 = vpack.c.b16 %v391, %v390
      %v419 = vpack.c.b16 %v393, %v392
      %v420 = vpack.c.b16 %v395, %v394
      %v421 = vpack.c.b16 %v397, %v396
      %v422 = vpack.c.b16 %v399, %v398
      %v423 = vpack.c.b16 %v401, %v400
      %v424 = vpack.c.b16 %v403, %v402
      %v425 = vpack.c.b16 %v405, %v404
      %v426 = vpack.c.b16 %v407, %v406
      %v427 = vpack.c.b16 %v409, %v408
      %v428 = vpack.c.b16 %v411, %v410
      %v429 = vpack.c.b16 %v413, %v412
      %446 = vmatprep.subr.bf16.mxu0 0
      %447 = vmatpush1.bf16.msra.mxu0 %v414
      %448 = vmatprep.subr.bf16.mxu0 0
      %449 = vmatpush1.bf16.msra.mxu0 %v415
      %450 = vmatprep.subr.bf16.mxu0 0
      %451 = vmatpush1.bf16.msra.mxu0 %v416
      %452 = vmatprep.subr.bf16.mxu0 0
      %453 = vmatpush1.bf16.msra.mxu0 %v417
      %454 = vmatprep.subr.bf16.mxu0 0
      %455 = vmatpush1.bf16.msra.mxu0 %v418
      %456 = vmatprep.subr.bf16.mxu0 0
      %457 = vmatpush1.bf16.msra.mxu0 %v419
      %458 = vmatprep.subr.bf16.mxu0 0
      %459 = vmatpush1.bf16.msra.mxu0 %v420
      %460 = vmatprep.subr.bf16.mxu0 0
      %461 = vmatpush1.bf16.msra.mxu0 %v421
      %462 = vmatprep.subr.bf16.mxu0 0
      %463 = vmatpush1.bf16.msra.mxu0 %v422
      %464 = vmatprep.subr.bf16.mxu0 0
      %465 = vmatpush1.bf16.msra.mxu0 %v423
      %466 = vmatprep.subr.bf16.mxu0 0
      %467 = vmatpush1.bf16.msra.mxu0 %v424
      %468 = vmatprep.subr.bf16.mxu0 0
      %469 = vmatpush1.bf16.msra.mxu0 %v425
      %470 = vmatprep.subr.bf16.mxu0 0
      %471 = vmatpush1.bf16.msra.mxu0 %v426
      %472 = vmatprep.subr.bf16.mxu0 0
      %473 = vmatpush1.bf16.msra.mxu0 %v427
      %474 = vmatprep.subr.bf16.mxu0 0
      %475 = vmatpush1.bf16.msra.mxu0 %v428
      %476 = vmatprep.subr.bf16.mxu0 0
      %477 = vmatpush1.bf16.msra.mxu0 %v429
      %478 = vmatprep.mubr.bf16.mxu0 %v347
      %479 = vmatmul.mubr.bf16.gmra.mrb[0].mxu0 %v340
      %v480 = vpop.f32.mrb[0].mxu0
      %v481 = vadd.f32 0.0, %v480
      %v482 = vpop.f32.mrb[0].mxu0
      %v483 = vpop.f32.mrb[0].mxu0
      %v484 = vpop.f32.mrb[0].mxu0
      %485 = vdwg.mxu0
      %v487 = vunpack.c.l.b16 %v262
      %v488 = vunpack.c.h.b16 %v262
      %v489 = vpack.c.b16 %v487, %v487
      %v490 = vpack.c.b16 %v488, %v488
      %v525 = vunpack.c.l.b16 %v263
      %v526 = vunpack.c.l.b16 %v264
      %v527 = vunpack.c.l.b16 %v265
      %v528 = vunpack.c.l.b16 %v266
      %v529 = vunpack.c.l.b16 %v267
      %v530 = vunpack.c.l.b16 %v268
      %v531 = vunpack.c.l.b16 %v269
      %v532 = vunpack.c.l.b16 %v270
      %v533 = vunpack.c.l.b16 %v271
      %v534 = vunpack.c.l.b16 %v272
      %v535 = vunpack.c.l.b16 %v273
      %v536 = vunpack.c.l.b16 %v274
      %v537 = vunpack.c.l.b16 %v275
      %v538 = vunpack.c.l.b16 %v276
      %v539 = vunpack.c.l.b16 %v277
      %v540 = vunpack.c.l.b16 %v278
      %v541 = vunpack.c.l.b16 %v279
      %v542 = vunpack.c.l.b16 %v280
      %v543 = vunpack.c.l.b16 %v281
      %v544 = vunpack.c.l.b16 %v282
      %v545 = vunpack.c.l.b16 %v283
      %v546 = vunpack.c.l.b16 %v284
      %v547 = vunpack.c.l.b16 %v285
      %v548 = vunpack.c.l.b16 %v286
      %v549 = vunpack.c.l.b16 %v287
      %v550 = vunpack.c.l.b16 %v288
      %v551 = vunpack.c.l.b16 %v289
      %v552 = vunpack.c.l.b16 %v290
      %v553 = vunpack.c.l.b16 %v291
      %v554 = vunpack.c.l.b16 %v292
      %v555 = vunpack.c.l.b16 %v293
      %v556 = vunpack.c.l.b16 %v294
      %v557 = vpack.c.b16 %v526, %v525
      %v558 = vpack.c.b16 %v528, %v527
      %v559 = vpack.c.b16 %v530, %v529
      %v560 = vpack.c.b16 %v532, %v531
      %v561 = vpack.c.b16 %v534, %v533
      %v562 = vpack.c.b16 %v536, %v535
      %v563 = vpack.c.b16 %v538, %v537
      %v564 = vpack.c.b16 %v540, %v539
      %v565 = vpack.c.b16 %v542, %v541
      %v566 = vpack.c.b16 %v544, %v543
      %v567 = vpack.c.b16 %v546, %v545
      %v568 = vpack.c.b16 %v548, %v547
      %v569 = vpack.c.b16 %v550, %v549
      %v570 = vpack.c.b16 %v552, %v551
      %v571 = vpack.c.b16 %v554, %v553
      %v572 = vpack.c.b16 %v556, %v555
      %589 = vmatprep.subr.bf16.mxu0 0
      %590 = vmatpush1.bf16.msra.mxu0 %v557
      %591 = vmatprep.subr.bf16.mxu0 0
      %592 = vmatpush1.bf16.msra.mxu0 %v558
      %593 = vmatprep.subr.bf16.mxu0 0
      %594 = vmatpush1.bf16.msra.mxu0 %v559
      %595 = vmatprep.subr.bf16.mxu0 0
      %596 = vmatpush1.bf16.msra.mxu0 %v560
      %597 = vmatprep.subr.bf16.mxu0 0
      %598 = vmatpush1.bf16.msra.mxu0 %v561
      %599 = vmatprep.subr.bf16.mxu0 0
      %600 = vmatpush1.bf16.msra.mxu0 %v562
      %601 = vmatprep.subr.bf16.mxu0 0
      %602 = vmatpush1.bf16.msra.mxu0 %v563
      %603 = vmatprep.subr.bf16.mxu0 0
      %604 = vmatpush1.bf16.msra.mxu0 %v564
      %605 = vmatprep.subr.bf16.mxu0 0
      %606 = vmatpush1.bf16.msra.mxu0 %v565
      %607 = vmatprep.subr.bf16.mxu0 0
      %608 = vmatpush1.bf16.msra.mxu0 %v566
      %609 = vmatprep.subr.bf16.mxu0 0
      %610 = vmatpush1.bf16.msra.mxu0 %v567
      %611 = vmatprep.subr.bf16.mxu0 0
      %612 = vmatpush1.bf16.msra.mxu0 %v568
      %613 = vmatprep.subr.bf16.mxu0 0
      %614 = vmatpush1.bf16.msra.mxu0 %v569
      %615 = vmatprep.subr.bf16.mxu0 0
      %616 = vmatpush1.bf16.msra.mxu0 %v570
      %617 = vmatprep.subr.bf16.mxu0 0
      %618 = vmatpush1.bf16.msra.mxu0 %v571
      %619 = vmatprep.subr.bf16.mxu0 0
      %620 = vmatpush1.bf16.msra.mxu0 %v572
      %621 = vmatprep.mubr.bf16.mxu0 %v490
      %622 = vmatmul.mubr.bf16.gmra.mrb[0].mxu0 %v489
      %v623 = vpop.f32.mrb[0].mxu0
      %v624 = vadd.f32 %v481, %v623
      %v625 = vpop.f32.mrb[0].mxu0
      %v626 = vpop.f32.mrb[0].mxu0
      %v627 = vpop.f32.mrb[0].mxu0
      %628 = vdwg.mxu0
      %v629 = vld [vmem:[%s243] sm:$0xee]
      %v630 = vld [vmem:[%s243 + $0x8] sm:$0x11]
      %s631 = scalar_lea.vmem %s247, 256
      %v632 = vld [vmem:[%s631] sm:$0xf]
      %v633 = vld [vmem:[%s631 + $0x4] sm:$0xf]
      %v634 = vld [vmem:[%s631 + $0x8] sm:$0xf]
      %v635 = vld [vmem:[%s631 + $0xc] sm:$0xf]
      %v636 = vld [vmem:[%s631 + $0x10] sm:$0xf]
      %v637 = vld [vmem:[%s631 + $0x14] sm:$0xf]
      %v638 = vld [vmem:[%s631 + $0x18] sm:$0xf]
      %v639 = vld [vmem:[%s631 + $0x1c] sm:$0xf]
      %v640 = vld [vmem:[%s631 + $0x20] sm:$0xf]
      %v641 = vld [vmem:[%s631 + $0x24] sm:$0xf]
      %v642 = vld [vmem:[%s631 + $0x28] sm:$0xf]
      %v643 = vld [vmem:[%s631 + $0x2c] sm:$0xf]
      %v644 = vld [vmem:[%s631 + $0x30] sm:$0xf]
      %v645 = vld [vmem:[%s631 + $0x34] sm:$0xf]
      %v646 = vld [vmem:[%s631 + $0x38] sm:$0xf]
      %v647 = vld [vmem:[%s631 + $0x3c] sm:$0xf]
      %v648 = vld [vmem:[%s631 + $0x40] sm:$0xf]
      %v649 = vld [vmem:[%s631 + $0x44] sm:$0xf]
      %v650 = vld [vmem:[%s631 + $0x48] sm:$0xf]
      %v651 = vld [vmem:[%s631 + $0x4c] sm:$0xf]
      %v652 = vld [vmem:[%s631 + $0x50] sm:$0xf]
      %v653 = vld [vmem:[%s631 + $0x54] sm:$0xf]
      %v654 = vld [vmem:[%s631 + $0x58] sm:$0xf]
      %v655 = vld [vmem:[%s631 + $0x5c] sm:$0xf]
      %v656 = vld [vmem:[%s631 + $0x60] sm:$0xf]
      %v657 = vld [vmem:[%s631 + $0x64] sm:$0xf]
      %v658 = vld [vmem:[%s631 + $0x68] sm:$0xf]
      %v659 = vld [vmem:[%s631 + $0x6c] sm:$0xf]
      %v660 = vld [vmem:[%s631 + $0x70] sm:$0xf]
      %v661 = vld [vmem:[%s631 + $0x74] sm:$0xf]
      %v662 = vld [vmem:[%s631 + $0x78] sm:$0xf]
      %v663 = vld [vmem:[%s631 + $0x7c] sm:$0xf]
      %v666 = vunpack.c.l.b16 %v629
      %v667 = vunpack.c.h.b16 %v629
      %v668 = vunpack.c.l.b16 %v630
      %v669 = vunpack.c.h.b16 %v630
      %v670 = vpack.c.b16 %v668, %v666
      %v671 = vpack.c.b16 %v669, %v667
      %v673 = vshrl.u32 %v670, 16
      %v675 = vrot.slane %v673, 1
      %v676 = vshll.u32 %v670, 16
      %v678 = vrot.slane %v676, 2
      %v679 = vor.u32 %v675, %v678
      %v681 = vshrl.u32 %v671, 16
      %v683 = vrot.slane %v681, 1
      %v684 = vshll.u32 %v671, 16
      %v686 = vrot.slane %v684, 2
      %v687 = vor.u32 %v683, %v686
      %v722 = vunpack.c.l.b16 %v632
      %v723 = vunpack.c.l.b16 %v633
      %v724 = vunpack.c.l.b16 %v634
      %v725 = vunpack.c.l.b16 %v635
      %v726 = vunpack.c.l.b16 %v636
      %v727 = vunpack.c.l.b16 %v637
      %v728 = vunpack.c.l.b16 %v638
      %v729 = vunpack.c.l.b16 %v639
      %v730 = vunpack.c.l.b16 %v640
      %v731 = vunpack.c.l.b16 %v641
      %v732 = vunpack.c.l.b16 %v642
      %v733 = vunpack.c.l.b16 %v643
      %v734 = vunpack.c.l.b16 %v644
      %v735 = vunpack.c.l.b16 %v645
      %v736 = vunpack.c.l.b16 %v646
      %v737 = vunpack.c.l.b16 %v647
      %v738 = vunpack.c.l.b16 %v648
      %v739 = vunpack.c.l.b16 %v649
      %v740 = vunpack.c.l.b16 %v650
      %v741 = vunpack.c.l.b16 %v651
      %v742 = vunpack.c.l.b16 %v652
      %v743 = vunpack.c.l.b16 %v653
      %v744 = vunpack.c.l.b16 %v654
      %v745 = vunpack.c.l.b16 %v655
      %v746 = vunpack.c.l.b16 %v656
      %v747 = vunpack.c.l.b16 %v657
      %v748 = vunpack.c.l.b16 %v658
      %v749 = vunpack.c.l.b16 %v659
      %v750 = vunpack.c.l.b16 %v660
      %v751 = vunpack.c.l.b16 %v661
      %v752 = vunpack.c.l.b16 %v662
      %v753 = vunpack.c.l.b16 %v663
      %v754 = vpack.c.b16 %v723, %v722
      %v755 = vpack.c.b16 %v725, %v724
      %v756 = vpack.c.b16 %v727, %v726
      %v757 = vpack.c.b16 %v729, %v728
      %v758 = vpack.c.b16 %v731, %v730
      %v759 = vpack.c.b16 %v733, %v732
      %v760 = vpack.c.b16 %v735, %v734
      %v761 = vpack.c.b16 %v737, %v736
      %v762 = vpack.c.b16 %v739, %v738
      %v763 = vpack.c.b16 %v741, %v740
      %v764 = vpack.c.b16 %v743, %v742
      %v765 = vpack.c.b16 %v745, %v744
      %v766 = vpack.c.b16 %v747, %v746
      %v767 = vpack.c.b16 %v749, %v748
      %v768 = vpack.c.b16 %v751, %v750
      %v769 = vpack.c.b16 %v753, %v752
      %786 = vmatprep.subr.bf16.mxu0 0
      %787 = vmatpush1.bf16.msra.mxu0 %v754
      %788 = vmatprep.subr.bf16.mxu0 0
      %789 = vmatpush1.bf16.msra.mxu0 %v755
      %790 = vmatprep.subr.bf16.mxu0 0
      %791 = vmatpush1.bf16.msra.mxu0 %v756
      %792 = vmatprep.subr.bf16.mxu0 0
      %793 = vmatpush1.bf16.msra.mxu0 %v757
      %794 = vmatprep.subr.bf16.mxu0 0
      %795 = vmatpush1.bf16.msra.mxu0 %v758
      %796 = vmatprep.subr.bf16.mxu0 0
      %797 = vmatpush1.bf16.msra.mxu0 %v759
      %798 = vmatprep.subr.bf16.mxu0 0
      %799 = vmatpush1.bf16.msra.mxu0 %v760
      %800 = vmatprep.subr.bf16.mxu0 0
      %801 = vmatpush1.bf16.msra.mxu0 %v761
      %802 = vmatprep.subr.bf16.mxu0 0
      %803 = vmatpush1.bf16.msra.mxu0 %v762
      %804 = vmatprep.subr.bf16.mxu0 0
      %805 = vmatpush1.bf16.msra.mxu0 %v763
      %806 = vmatprep.subr.bf16.mxu0 0
      %807 = vmatpush1.bf16.msra.mxu0 %v764
      %808 = vmatprep.subr.bf16.mxu0 0
      %809 = vmatpush1.bf16.msra.mxu0 %v765
      %810 = vmatprep.subr.bf16.mxu0 0
      %811 = vmatpush1.bf16.msra.mxu0 %v766
      %812 = vmatprep.subr.bf16.mxu0 0
      %813 = vmatpush1.bf16.msra.mxu0 %v767
      %814 = vmatprep.subr.bf16.mxu0 0
      %815 = vmatpush1.bf16.msra.mxu0 %v768
      %816 = vmatprep.subr.bf16.mxu0 0
      %817 = vmatpush1.bf16.msra.mxu0 %v769
      %818 = vmatprep.mubr.bf16.mxu0 %v687
      %819 = vmatmul.mubr.bf16.gmra.mrb[0].mxu0 %v679
      %v820 = vpop.f32.mrb[0].mxu0
      %v821 = vadd.f32 0.0, %v820
      %v822 = vpop.f32.mrb[0].mxu0
      %v823 = vpop.f32.mrb[0].mxu0
      %v824 = vpop.f32.mrb[0].mxu0
      %825 = vdwg.mxu0
      %v826 = vadd.f32 %v624, %v821
      %v827 = vld [vmem:[%s243] sm:$0xcc]
      %s828 = scalar_lea.vmem %s247, 384
      %v829 = vld [vmem:[%s828] sm:$0xf]
      %v830 = vld [vmem:[%s828 + $0x4] sm:$0xf]
      %v831 = vld [vmem:[%s828 + $0x8] sm:$0xf]
      %v832 = vld [vmem:[%s828 + $0xc] sm:$0xf]
      %v833 = vld [vmem:[%s828 + $0x10] sm:$0xf]
      %v834 = vld [vmem:[%s828 + $0x14] sm:$0xf]
      %v835 = vld [vmem:[%s828 + $0x18] sm:$0xf]
      %v836 = vld [vmem:[%s828 + $0x1c] sm:$0xf]
      %v837 = vld [vmem:[%s828 + $0x20] sm:$0xf]
      %v838 = vld [vmem:[%s828 + $0x24] sm:$0xf]
      %v839 = vld [vmem:[%s828 + $0x28] sm:$0xf]
      %v840 = vld [vmem:[%s828 + $0x2c] sm:$0xf]
      %v841 = vld [vmem:[%s828 + $0x30] sm:$0xf]
      %v842 = vld [vmem:[%s828 + $0x34] sm:$0xf]
      %v843 = vld [vmem:[%s828 + $0x38] sm:$0xf]
      %v844 = vld [vmem:[%s828 + $0x3c] sm:$0xf]
      %v845 = vld [vmem:[%s828 + $0x40] sm:$0xf]
      %v846 = vld [vmem:[%s828 + $0x44] sm:$0xf]
      %v847 = vld [vmem:[%s828 + $0x48] sm:$0xf]
      %v848 = vld [vmem:[%s828 + $0x4c] sm:$0xf]
      %v849 = vld [vmem:[%s828 + $0x50] sm:$0xf]
      %v850 = vld [vmem:[%s828 + $0x54] sm:$0xf]
      %v851 = vld [vmem:[%s828 + $0x58] sm:$0xf]
      %v852 = vld [vmem:[%s828 + $0x5c] sm:$0xf]
      %v853 = vld [vmem:[%s828 + $0x60] sm:$0xf]
      %v854 = vld [vmem:[%s828 + $0x64] sm:$0xf]
      %v855 = vld [vmem:[%s828 + $0x68] sm:$0xf]
      %v856 = vld [vmem:[%s828 + $0x6c] sm:$0xf]
      %v857 = vld [vmem:[%s828 + $0x70] sm:$0xf]
      %v858 = vld [vmem:[%s828 + $0x74] sm:$0xf]
      %v859 = vld [vmem:[%s828 + $0x78] sm:$0xf]
      %v860 = vld [vmem:[%s828 + $0x7c] sm:$0xf]
      %v862 = vunpack.c.l.b16 %v827
      %v863 = vunpack.c.h.b16 %v827
      %v864 = vpack.c.b16 %v668, %v862
      %v865 = vpack.c.b16 %v669, %v863
      %v866 = vrot.slane %v864, 2
      %v867 = vrot.slane %v865, 2
      %v902 = vunpack.c.l.b16 %v829
      %v903 = vunpack.c.l.b16 %v830
      %v904 = vunpack.c.l.b16 %v831
      %v905 = vunpack.c.l.b16 %v832
      %v906 = vunpack.c.l.b16 %v833
      %v907 = vunpack.c.l.b16 %v834
      %v908 = vunpack.c.l.b16 %v835
      %v909 = vunpack.c.l.b16 %v836
      %v910 = vunpack.c.l.b16 %v837
      %v911 = vunpack.c.l.b16 %v838
      %v912 = vunpack.c.l.b16 %v839
      %v913 = vunpack.c.l.b16 %v840
      %v914 = vunpack.c.l.b16 %v841
      %v915 = vunpack.c.l.b16 %v842
      %v916 = vunpack.c.l.b16 %v843
      %v917 = vunpack.c.l.b16 %v844
      %v918 = vunpack.c.l.b16 %v845
      %v919 = vunpack.c.l.b16 %v846
      %v920 = vunpack.c.l.b16 %v847
      %v921 = vunpack.c.l.b16 %v848
      %v922 = vunpack.c.l.b16 %v849
      %v923 = vunpack.c.l.b16 %v850
      %v924 = vunpack.c.l.b16 %v851
      %v925 = vunpack.c.l.b16 %v852
      %v926 = vunpack.c.l.b16 %v853
      %v927 = vunpack.c.l.b16 %v854
      %v928 = vunpack.c.l.b16 %v855
      %v929 = vunpack.c.l.b16 %v856
      %v930 = vunpack.c.l.b16 %v857
      %v931 = vunpack.c.l.b16 %v858
      %v932 = vunpack.c.l.b16 %v859
      %v933 = vunpack.c.l.b16 %v860
      %v934 = vpack.c.b16 %v903, %v902
      %v935 = vpack.c.b16 %v905, %v904
      %v936 = vpack.c.b16 %v907, %v906
      %v937 = vpack.c.b16 %v909, %v908
      %v938 = vpack.c.b16 %v911, %v910
      %v939 = vpack.c.b16 %v913, %v912
      %v940 = vpack.c.b16 %v915, %v914
      %v941 = vpack.c.b16 %v917, %v916
      %v942 = vpack.c.b16 %v919, %v918
      %v943 = vpack.c.b16 %v921, %v920
      %v944 = vpack.c.b16 %v923, %v922
      %v945 = vpack.c.b16 %v925, %v924
      %v946 = vpack.c.b16 %v927, %v926
      %v947 = vpack.c.b16 %v929, %v928
      %v948 = vpack.c.b16 %v931, %v930
      %v949 = vpack.c.b16 %v933, %v932
      %966 = vmatprep.subr.bf16.mxu0 0
      %967 = vmatpush1.bf16.msra.mxu0 %v934
      %968 = vmatprep.subr.bf16.mxu0 0
      %969 = vmatpush1.bf16.msra.mxu0 %v935
      %970 = vmatprep.subr.bf16.mxu0 0
      %971 = vmatpush1.bf16.msra.mxu0 %v936
      %972 = vmatprep.subr.bf16.mxu0 0
      %973 = vmatpush1.bf16.msra.mxu0 %v937
      %974 = vmatprep.subr.bf16.mxu0 0
      %975 = vmatpush1.bf16.msra.mxu0 %v938
      %976 = vmatprep.subr.bf16.mxu0 0
      %977 = vmatpush1.bf16.msra.mxu0 %v939
      %978 = vmatprep.subr.bf16.mxu0 0
      %979 = vmatpush1.bf16.msra.mxu0 %v940
      %980 = vmatprep.subr.bf16.mxu0 0
      %981 = vmatpush1.bf16.msra.mxu0 %v941
      %982 = vmatprep.subr.bf16.mxu0 0
      %983 = vmatpush1.bf16.msra.mxu0 %v942
      %984 = vmatprep.subr.bf16.mxu0 0
      %985 = vmatpush1.bf16.msra.mxu0 %v943
      %986 = vmatprep.subr.bf16.mxu0 0
      %987 = vmatpush1.bf16.msra.mxu0 %v944
      %988 = vmatprep.subr.bf16.mxu0 0
      %989 = vmatpush1.bf16.msra.mxu0 %v945
      %990 = vmatprep.subr.bf16.mxu0 0
      %991 = vmatpush1.bf16.msra.mxu0 %v946
      %992 = vmatprep.subr.bf16.mxu0 0
      %993 = vmatpush1.bf16.msra.mxu0 %v947
      %994 = vmatprep.subr.bf16.mxu0 0
      %995 = vmatpush1.bf16.msra.mxu0 %v948
      %996 = vmatprep.subr.bf16.mxu0 0
      %997 = vmatpush1.bf16.msra.mxu0 %v949
      %998 = vmatprep.mubr.bf16.mxu0 %v867
      %999 = vmatmul.mubr.bf16.gmra.mrb[0].mxu0 %v866
      %v1000 = vpop.f32.mrb[0].mxu0
      %v1001 = vadd.f32 0.0, %v1000
      %v1002 = vpop.f32.mrb[0].mxu0
      %v1003 = vpop.f32.mrb[0].mxu0
      %v1004 = vpop.f32.mrb[0].mxu0
      %1005 = vdwg.mxu0
      %v1006 = vadd.f32 %v826, %v1001
      %v1007 = vld [vmem:[%s250] sm:$0x1]
      %v1009 = vlaneseq
      %v1010 = vshrl.u32 %v1009, 7
      %v1011 = vsub.s32 0, %v1010
      %v1012 = vrot.slane %v1007, %v1011
      %v1014 = vmul.f32 %v1006, %v1012
      %v1015 = vld [vmem:[%s253] sm:$0x1]
      %v1017 = vlaneseq
      %v1018 = vshrl.u32 %v1017, 7
      %v1019 = vsub.s32 0, %v1018
      %v1020 = vrot.slane %v1015, %v1019
      %v1022 = vadd.f32 %v1014, %v1020
      %v1023 = vpack.c.bf16 %v1022, %v1022
      %1024 = vst [vmem:[%s260] sm:$0x7] %v1023
      %p1025 = scmp.lt.s32.totalorder %s19, 1
      %s1026 = scalar_select %p1025, %s19, 1
      %p1027 = scmp.lt.s32.totalorder %s20, 0
      %s1028 = scalar_select %p1027, %s20, 0
      %s1029 = sadd.s32 %s1028, %s1026
      %s1030 = smul.addr %s1029, 4
      %s1031 = scalar_lea.vmem %s4, %s1030
      // Predicated region
      $region37: #{patch_discriminator_with_sed.9} parent=35 // pred_check
        %p1032 = pneg %p151
      $region38: #{patch_discriminator_with_sed.9} parent=35 // pred_check_branch
        %1034 = sbr.rel (%p1032) target = $region40
      $region39: #{patch_discriminator_with_sed.9} parent=35 // pred_region
        _
      $region40: #{patch_discriminator_with_sed.9} parent=35 // pred_fallthru
        _
    $region36: #{patch_discriminator_with_sed.9} parent=5 // pred_fallthru
      _
    %p1035 = scmp.le.s32.totalorder 2, %s10
    // Predicated region
    $region41: #{patch_discriminator_with_sed.9} parent=5 // pred_check
      %p1036 = pneg %p1035
    $region42: #{patch_discriminator_with_sed.9} parent=5 // pred_check_branch
      %1038 = sbr.rel (%p1036) target = $region44
    $region43: #{patch_discriminator_with_sed.9} parent=5 // pred_region
      %s1039 = ssub.s32 %s10, 2
      // Predicated region
      $region45: #{patch_discriminator_with_sed.9} parent=43 // pred_check
        %p1040 = pneg %p157
      $region46: #{patch_discriminator_with_sed.9} parent=43 // pred_check_branch
        %1042 = sbr.rel (%p1040) target = $region48
      $region47: #{patch_discriminator_with_sed.9} parent=43 // pred_region
        %p1043 = scmp.lt.s32.totalorder %s21, 1
        %s1044 = scalar_select %p1043, %s21, 1
        %p1045 = scmp.lt.s32.totalorder %s22, 0
        %s1046 = scalar_select %p1045, %s22, 0
        %s1047 = sadd.s32 %s1046, %s1044
        %s1048 = smul.addr %s1047, 4
        %s1049 = scalar_lea.vmem %s4, %s1048
      $region48: #{patch_discriminator_with_sed.9} parent=43 // pred_fallthru
        _
    $region44: #{patch_discriminator_with_sed.9} parent=5 // pred_fallthru
      _
  $region6: #{patch_discriminator_with_sed.9} parent=0 // loop_footer
    %s14 = sadd.s32 1, %s10
  $region7: #{patch_discriminator_with_sed.9} parent=0 // loop_footer_branch
    %9 = sbr.rel target = $region3
  $region8: #{patch_discriminator_with_sed.9} parent=0 // loop_exit
    _

// kernel: patch_discriminator_with_sed.10
$region0: #{patch_discriminator_with_sed.10}
  #allocation0 [shape = 'u32[]', space=smem, size = 0x4, offset = 0x4, fixed_abs, tag = 'smem constant byte address 0x4 - core index']
  #allocation1 [shape = 'u32[144,128]{1,0:T(1,128)}', space=vmem, size = 0x12000, scoped, tag = 'internal scratch']
  %s0 = inlined_call_operand.vmem [shape: bf16[8,128], index: 0, kind: input, shape index: {}]
  %s1 = inlined_call_operand.vmem [shape: bf16[128,256], index: 1, kind: input, shape index: {}]
  %s2 = inlined_call_operand.vmem [shape: f32[1,256], index: 2, kind: input, shape index: {}]
  %s3 = inlined_call_operand.vmem [shape: bf16[256,256], index: 3, kind: input, shape index: {}]
  %s4 = inlined_call_operand.vmem [shape: f32[1,256], index: 4, kind: input, shape index: {}]
  %s5 = inlined_call_operand.vmem [shape: bf16[256,256], index: 5, kind: input, shape index: {}]
  %s6 = inlined_call_operand.vmem [shape: f32[1,256], index: 6, kind: input, shape index: {}]
  %s7 = inlined_call_operand.vmem [shape: bf16[8,256], index: 7, kind: output, shape index: {}]
  %s8 = sld [smem:[#allocation0]]
  $region38: #{patch_discriminator_with_sed.10} parent=0
    _
  %s10 = ssub.s32 1, %s8
  %s11 = scalar_select 0, %s10, %s8
  // Predicated region
  $region2: #{patch_discriminator_with_sed.10} parent=0 // pred_check
    _
  $region3: #{patch_discriminator_with_sed.10} parent=0 // pred_check_branch
    %13 = sbr.rel (0) target = $region5
  $region4: #{patch_discriminator_with_sed.10} parent=0 // pred_region
    _
  $region5: #{patch_discriminator_with_sed.10} parent=0 // pred_fallthru
    _
  // Predicated region
  $region6: #{patch_discriminator_with_sed.10} parent=0 // pred_check
    _
  $region7: #{patch_discriminator_with_sed.10} parent=0 // pred_check_branch
    %15 = sbr.rel (0) target = $region9
  $region8: #{patch_discriminator_with_sed.10} parent=0 // pred_region
    _
  $region9: #{patch_discriminator_with_sed.10} parent=0 // pred_fallthru
    _
  // Predicated region
  $region10: #{patch_discriminator_with_sed.10} parent=0 // pred_check
    _
  $region11: #{patch_discriminator_with_sed.10} parent=0 // pred_check_branch
    %17 = sbr.rel (0) target = $region13
  $region12: #{patch_discriminator_with_sed.10} parent=0 // pred_region
    _
  $region13: #{patch_discriminator_with_sed.10} parent=0 // pred_fallthru
    _
  // Predicated region
  $region14: #{patch_discriminator_with_sed.10} parent=0 // pred_check
    _
  $region15: #{patch_discriminator_with_sed.10} parent=0 // pred_check_branch
    %19 = sbr.rel (0) target = $region17
  $region16: #{patch_discriminator_with_sed.10} parent=0 // pred_region
    _
  $region17: #{patch_discriminator_with_sed.10} parent=0 // pred_fallthru
    _
  // Predicated region
  $region18: #{patch_discriminator_with_sed.10} parent=0 // pred_check
    _
  $region19: #{patch_discriminator_with_sed.10} parent=0 // pred_check_branch
    %21 = sbr.rel (0) target = $region21
  $region20: #{patch_discriminator_with_sed.10} parent=0 // pred_region
    _
  $region21: #{patch_discriminator_with_sed.10} parent=0 // pred_fallthru
    _
  // Predicated region
  $region22: #{patch_discriminator_with_sed.10} parent=0 // pred_check
    _
  $region23: #{patch_discriminator_with_sed.10} parent=0 // pred_check_branch
    %23 = sbr.rel (0) target = $region25
  $region24: #{patch_discriminator_with_sed.10} parent=0 // pred_region
    _
  $region25: #{patch_discriminator_with_sed.10} parent=0 // pred_fallthru
    _
  // Predicated region
  $region26: #{patch_discriminator_with_sed.10} parent=0 // pred_check
    _
  $region27: #{patch_discriminator_with_sed.10} parent=0 // pred_check_branch
    %25 = sbr.rel (0) target = $region29
  $region28: #{patch_discriminator_with_sed.10} parent=0 // pred_region
    _
  $region29: #{patch_discriminator_with_sed.10} parent=0 // pred_fallthru
    _
  %v27 = vld [vmem:[%s0] sm:$0xf]
  %v28 = vld [vmem:[%s1] sm:$0xff]
  %v29 = vld [vmem:[%s1 + $0x8] sm:$0xff]
  %v30 = vld [vmem:[%s1 + $0x10] sm:$0xff]
  %v31 = vld [vmem:[%s1 + $0x18] sm:$0xff]
  %v32 = vld [vmem:[%s1 + $0x20] sm:$0xff]
  %v33 = vld [vmem:[%s1 + $0x28] sm:$0xff]
  %v34 = vld [vmem:[%s1 + $0x30] sm:$0xff]
  %v35 = vld [vmem:[%s1 + $0x38] sm:$0xff]
  %v36 = vld [vmem:[%s1 + $0x40] sm:$0xff]
  %v37 = vld [vmem:[%s1 + $0x48] sm:$0xff]
  %v38 = vld [vmem:[%s1 + $0x50] sm:$0xff]
  %v39 = vld [vmem:[%s1 + $0x58] sm:$0xff]
  %v40 = vld [vmem:[%s1 + $0x60] sm:$0xff]
  %v41 = vld [vmem:[%s1 + $0x68] sm:$0xff]
  %v42 = vld [vmem:[%s1 + $0x70] sm:$0xff]
  %v43 = vld [vmem:[%s1 + $0x78] sm:$0xff]
  %v44 = vld [vmem:[%s2] sm:$0x3]
  %v46 = vlaneseq
  %v47 = vshrl.u32 %v46, 7
  %v48 = vsub.s32 0, %v47
  %v49 = vrot.slane %v44, %v48
  %v50 = vlaneseq
  %v51 = vshrl.u32 %v50, 7
  %v52 = vsub.s32 1, %v51
  %v53 = vrot.slane %v44, %v52
  %v72 = vunpack.c.l.b16 %v28
  %v73 = vunpack.c.h.b16 %v28
  %v74 = vunpack.c.l.b16 %v29
  %v75 = vunpack.c.h.b16 %v29
  %v76 = vunpack.c.l.b16 %v30
  %v77 = vunpack.c.h.b16 %v30
  %v78 = vunpack.c.l.b16 %v31
  %v79 = vunpack.c.h.b16 %v31
  %v80 = vunpack.c.l.b16 %v32
  %v81 = vunpack.c.h.b16 %v32
  %v82 = vunpack.c.l.b16 %v33
  %v83 = vunpack.c.h.b16 %v33
  %v84 = vunpack.c.l.b16 %v34
  %v85 = vunpack.c.h.b16 %v34
  %v86 = vunpack.c.l.b16 %v35
  %v87 = vunpack.c.h.b16 %v35
  %v88 = vunpack.c.l.b16 %v36
  %v89 = vunpack.c.h.b16 %v36
  %v90 = vunpack.c.l.b16 %v37
  %v91 = vunpack.c.h.b16 %v37
  %v92 = vunpack.c.l.b16 %v38
  %v93 = vunpack.c.h.b16 %v38
  %v94 = vunpack.c.l.b16 %v39
  %v95 = vunpack.c.h.b16 %v39
  %v96 = vunpack.c.l.b16 %v40
  %v97 = vunpack.c.h.b16 %v40
  %v98 = vunpack.c.l.b16 %v41
  %v99 = vunpack.c.h.b16 %v41
  %v100 = vunpack.c.l.b16 %v42
  %v101 = vunpack.c.h.b16 %v42
  %v102 = vunpack.c.l.b16 %v43
  %v103 = vunpack.c.h.b16 %v43
  %v104 = vpack.c.b16 %v74, %v72
  %v105 = vpack.c.b16 %v75, %v73
  %v106 = vpack.c.b16 %v78, %v76
  %v107 = vpack.c.b16 %v79, %v77
  %v108 = vpack.c.b16 %v82, %v80
  %v109 = vpack.c.b16 %v83, %v81
  %v110 = vpack.c.b16 %v86, %v84
  %v111 = vpack.c.b16 %v87, %v85
  %v112 = vpack.c.b16 %v90, %v88
  %v113 = vpack.c.b16 %v91, %v89
  %v114 = vpack.c.b16 %v94, %v92
  %v115 = vpack.c.b16 %v95, %v93
  %v116 = vpack.c.b16 %v98, %v96
  %v117 = vpack.c.b16 %v99, %v97
  %v118 = vpack.c.b16 %v102, %v100
  %v119 = vpack.c.b16 %v103, %v101
  %136 = vmatprep.subr.bf16.mxu0 %v105
  %137 = vmatpush1.bf16.msra.mxu0 %v104
  %138 = vmatprep.subr.bf16.mxu0 %v107
  %139 = vmatpush1.bf16.msra.mxu0 %v106
  %140 = vmatprep.subr.bf16.mxu0 %v109
  %141 = vmatpush1.bf16.msra.mxu0 %v108
  %142 = vmatprep.subr.bf16.mxu0 %v111
  %143 = vmatpush1.bf16.msra.mxu0 %v110
  %144 = vmatprep.subr.bf16.mxu0 %v113
  %145 = vmatpush1.bf16.msra.mxu0 %v112
  %146 = vmatprep.subr.bf16.mxu0 %v115
  %147 = vmatpush1.bf16.msra.mxu0 %v114
  %148 = vmatprep.subr.bf16.mxu0 %v117
  %149 = vmatpush1.bf16.msra.mxu0 %v116
  %150 = vmatprep.subr.bf16.mxu0 %v119
  %151 = vmatpush1.bf16.msra.mxu0 %v118
  %152 = vmatprep.subr.bf16.mxu0 0
  %153 = vmatpush1.bf16.msra.mxu0 0
  %154 = vmatprep.subr.bf16.mxu0 0
  %155 = vmatpush1.bf16.msra.mxu0 0
  %156 = vmatprep.subr.bf16.mxu0 0
  %157 = vmatpush1.bf16.msra.mxu0 0
  %158 = vmatprep.subr.bf16.mxu0 0
  %159 = vmatpush1.bf16.msra.mxu0 0
  %160 = vmatprep.subr.bf16.mxu0 0
  %161 = vmatpush1.bf16.msra.mxu0 0
  %162 = vmatprep.subr.bf16.mxu0 0
  %163 = vmatpush1.bf16.msra.mxu0 0
  %164 = vmatprep.subr.bf16.mxu0 0
  %165 = vmatpush1.bf16.msra.mxu0 0
  %166 = vmatprep.subr.bf16.mxu0 0
  %167 = vmatpush1.bf16.msra.mxu0 0
  %168 = vmatprep.mubr.bf16.mxu0 0
  %169 = vmatmul.mubr.bf16.gmra.mrb[0].mxu0 %v27
  %v170 = vpop.f32.mrb[0].mxu0
  %v171 = vadd.f32 %v49, %v170
  %v172 = vpop.f32.mrb[0].mxu0
  %v173 = vadd.f32 %v53, %v172
  %v174 = vpop.f32.mrb[0].mxu0
  %v175 = vpop.f32.mrb[0].mxu0
  %176 = vdwg.mxu0
  %v177 = vpack.c.bf16 %v171, %v171
  %v178 = vpack.c.bf16 %v173, %v173
  %v179 = vld [vmem:[%s3] sm:$0xff]
  %v180 = vld [vmem:[%s3 + $0x8] sm:$0xff]
  %v181 = vld [vmem:[%s3 + $0x10] sm:$0xff]
  %v182 = vld [vmem:[%s3 + $0x18] sm:$0xff]
  %v183 = vld [vmem:[%s3 + $0x20] sm:$0xff]
  %v184 = vld [vmem:[%s3 + $0x28] sm:$0xff]
  %v185 = vld [vmem:[%s3 + $0x30] sm:$0xff]
  %v186 = vld [vmem:[%s3 + $0x38] sm:$0xff]
  %v187 = vld [vmem:[%s3 + $0x40] sm:$0xff]
  %v188 = vld [vmem:[%s3 + $0x48] sm:$0xff]
  %v189 = vld [vmem:[%s3 + $0x50] sm:$0xff]
  %v190 = vld [vmem:[%s3 + $0x58] sm:$0xff]
  %v191 = vld [vmem:[%s3 + $0x60] sm:$0xff]
  %v192 = vld [vmem:[%s3 + $0x68] sm:$0xff]
  %v193 = vld [vmem:[%s3 + $0x70] sm:$0xff]
  %v194 = vld [vmem:[%s3 + $0x78] sm:$0xff]
  %v195 = vld [vmem:[%s3 + $0x80] sm:$0xff]
  %v196 = vld [vmem:[%s3 + $0x88] sm:$0xff]
  %v197 = vld [vmem:[%s3 + $0x90] sm:$0xff]
  %v198 = vld [vmem:[%s3 + $0x98] sm:$0xff]
  %v199 = vld [vmem:[%s3 + $0xa0] sm:$0xff]
  %v200 = vld [vmem:[%s3 + $0xa8] sm:$0xff]
  %v201 = vld [vmem:[%s3 + $0xb0] sm:$0xff]
  %v202 = vld [vmem:[%s3 + $0xb8] sm:$0xff]
  %v203 = vld [vmem:[%s3 + $0xc0] sm:$0xff]
  %v204 = vld [vmem:[%s3 + $0xc8] sm:$0xff]
  %v205 = vld [vmem:[%s3 + $0xd0] sm:$0xff]
  %v206 = vld [vmem:[%s3 + $0xd8] sm:$0xff]
  %v207 = vld [vmem:[%s3 + $0xe0] sm:$0xff]
  %v208 = vld [vmem:[%s3 + $0xe8] sm:$0xff]
  %v209 = vld [vmem:[%s3 + $0xf0] sm:$0xff]
  %v210 = vld [vmem:[%s3 + $0xf8] sm:$0xff]
  %v211 = vld [vmem:[%s4] sm:$0x3]
  %v213 = vlaneseq
  %v214 = vshrl.u32 %v213, 7
  %v215 = vsub.s32 0, %v214
  %v216 = vrot.slane %v211, %v215
  %v217 = vlaneseq
  %v218 = vshrl.u32 %v217, 7
  %v219 = vsub.s32 1, %v218
  %v220 = vrot.slane %v211, %v219
  %v255 = vunpack.c.l.b16 %v179
  %v256 = vunpack.c.h.b16 %v179
  %v257 = vunpack.c.l.b16 %v180
  %v258 = vunpack.c.h.b16 %v180
  %v259 = vunpack.c.l.b16 %v181
  %v260 = vunpack.c.h.b16 %v181
  %v261 = vunpack.c.l.b16 %v182
  %v262 = vunpack.c.h.b16 %v182
  %v263 = vunpack.c.l.b16 %v183
  %v264 = vunpack.c.h.b16 %v183
  %v265 = vunpack.c.l.b16 %v184
  %v266 = vunpack.c.h.b16 %v184
  %v267 = vunpack.c.l.b16 %v185
  %v268 = vunpack.c.h.b16 %v185
  %v269 = vunpack.c.l.b16 %v186
  %v270 = vunpack.c.h.b16 %v186
  %v271 = vunpack.c.l.b16 %v187
  %v272 = vunpack.c.h.b16 %v187
  %v273 = vunpack.c.l.b16 %v188
  %v274 = vunpack.c.h.b16 %v188
  %v275 = vunpack.c.l.b16 %v189
  %v276 = vunpack.c.h.b16 %v189
  %v277 = vunpack.c.l.b16 %v190
  %v278 = vunpack.c.h.b16 %v190
  %v279 = vunpack.c.l.b16 %v191
  %v280 = vunpack.c.h.b16 %v191
  %v281 = vunpack.c.l.b16 %v192
  %v282 = vunpack.c.h.b16 %v192
  %v283 = vunpack.c.l.b16 %v193
  %v284 = vunpack.c.h.b16 %v193
  %v285 = vunpack.c.l.b16 %v194
  %v286 = vunpack.c.h.b16 %v194
  %v287 = vunpack.c.l.b16 %v195
  %v288 = vunpack.c.h.b16 %v195
  %v289 = vunpack.c.l.b16 %v196
  %v290 = vunpack.c.h.b16 %v196
  %v291 = vunpack.c.l.b16 %v197
  %v292 = vunpack.c.h.b16 %v197
  %v293 = vunpack.c.l.b16 %v198
  %v294 = vunpack.c.h.b16 %v198
  %v295 = vunpack.c.l.b16 %v199
  %v296 = vunpack.c.h.b16 %v199
  %v297 = vunpack.c.l.b16 %v200
  %v298 = vunpack.c.h.b16 %v200
  %v299 = vunpack.c.l.b16 %v201
  %v300 = vunpack.c.h.b16 %v201
  %v301 = vunpack.c.l.b16 %v202
  %v302 = vunpack.c.h.b16 %v202
  %v303 = vunpack.c.l.b16 %v203
  %v304 = vunpack.c.h.b16 %v203
  %v305 = vunpack.c.l.b16 %v204
  %v306 = vunpack.c.h.b16 %v204
  %v307 = vunpack.c.l.b16 %v205
  %v308 = vunpack.c.h.b16 %v205
  %v309 = vunpack.c.l.b16 %v206
  %v310 = vunpack.c.h.b16 %v206
  %v311 = vunpack.c.l.b16 %v207
  %v312 = vunpack.c.h.b16 %v207
  %v313 = vunpack.c.l.b16 %v208
  %v314 = vunpack.c.h.b16 %v208
  %v315 = vunpack.c.l.b16 %v209
  %v316 = vunpack.c.h.b16 %v209
  %v317 = vunpack.c.l.b16 %v210
  %v318 = vunpack.c.h.b16 %v210
  %v319 = vpack.c.b16 %v257, %v255
  %v320 = vpack.c.b16 %v258, %v256
  %v321 = vpack.c.b16 %v261, %v259
  %v322 = vpack.c.b16 %v262, %v260
  %v323 = vpack.c.b16 %v265, %v263
  %v324 = vpack.c.b16 %v266, %v264
  %v325 = vpack.c.b16 %v269, %v267
  %v326 = vpack.c.b16 %v270, %v268
  %v327 = vpack.c.b16 %v273, %v271
  %v328 = vpack.c.b16 %v274, %v272
  %v329 = vpack.c.b16 %v277, %v275
  %v330 = vpack.c.b16 %v278, %v276
  %v331 = vpack.c.b16 %v281, %v279
  %v332 = vpack.c.b16 %v282, %v280
  %v333 = vpack.c.b16 %v285, %v283
  %v334 = vpack.c.b16 %v286, %v284
  %v335 = vpack.c.b16 %v289, %v287
  %v336 = vpack.c.b16 %v290, %v288
  %v337 = vpack.c.b16 %v293, %v291
  %v338 = vpack.c.b16 %v294, %v292
  %v339 = vpack.c.b16 %v297, %v295
  %v340 = vpack.c.b16 %v298, %v296
  %v341 = vpack.c.b16 %v301, %v299
  %v342 = vpack.c.b16 %v302, %v300
  %v343 = vpack.c.b16 %v305, %v303
  %v344 = vpack.c.b16 %v306, %v304
  %v345 = vpack.c.b16 %v309, %v307
  %v346 = vpack.c.b16 %v310, %v308
  %v347 = vpack.c.b16 %v313, %v311
  %v348 = vpack.c.b16 %v314, %v312
  %v349 = vpack.c.b16 %v317, %v315
  %v350 = vpack.c.b16 %v318, %v316
  %383 = vmatprep.subr.bf16.mxu0 %v320
  %384 = vmatpush1.bf16.msra.mxu0 %v319
  %385 = vmatprep.subr.bf16.mxu0 %v322
  %386 = vmatpush1.bf16.msra.mxu0 %v321
  %387 = vmatprep.subr.bf16.mxu0 %v324
  %388 = vmatpush1.bf16.msra.mxu0 %v323
  %389 = vmatprep.subr.bf16.mxu0 %v326
  %390 = vmatpush1.bf16.msra.mxu0 %v325
  %391 = vmatprep.subr.bf16.mxu0 %v328
  %392 = vmatpush1.bf16.msra.mxu0 %v327
  %393 = vmatprep.subr.bf16.mxu0 %v330
  %394 = vmatpush1.bf16.msra.mxu0 %v329
  %395 = vmatprep.subr.bf16.mxu0 %v332
  %396 = vmatpush1.bf16.msra.mxu0 %v331
  %397 = vmatprep.subr.bf16.mxu0 %v334
  %398 = vmatpush1.bf16.msra.mxu0 %v333
  %399 = vmatprep.subr.bf16.mxu0 %v336
  %400 = vmatpush1.bf16.msra.mxu0 %v335
  %401 = vmatprep.subr.bf16.mxu0 %v338
  %402 = vmatpush1.bf16.msra.mxu0 %v337
  %403 = vmatprep.subr.bf16.mxu0 %v340
  %404 = vmatpush1.bf16.msra.mxu0 %v339
  %405 = vmatprep.subr.bf16.mxu0 %v342
  %406 = vmatpush1.bf16.msra.mxu0 %v341
  %407 = vmatprep.subr.bf16.mxu0 %v344
  %408 = vmatpush1.bf16.msra.mxu0 %v343
  %409 = vmatprep.subr.bf16.mxu0 %v346
  %410 = vmatpush1.bf16.msra.mxu0 %v345
  %411 = vmatprep.subr.bf16.mxu0 %v348
  %412 = vmatpush1.bf16.msra.mxu0 %v347
  %413 = vmatprep.subr.bf16.mxu0 %v350
  %414 = vmatpush1.bf16.msra.mxu0 %v349
  %415 = vmatprep.mubr.bf16.mxu0 %v178
  %416 = vmatmul.mubr.bf16.gmra.mrb[0].mxu0 %v177
  %v417 = vpop.f32.mrb[0].mxu0
  %v418 = vadd.f32 %v216, %v417
  %v419 = vpop.f32.mrb[0].mxu0
  %v420 = vadd.f32 %v220, %v419
  %v421 = vpop.f32.mrb[0].mxu0
  %v422 = vpop.f32.mrb[0].mxu0
  %423 = vdwg.mxu0
  %v424 = vpack.c.bf16 %v418, %v418
  %v425 = vpack.c.bf16 %v420, %v420
  %v426 = vld [vmem:[%s5] sm:$0xff]
  %v427 = vld [vmem:[%s5 + $0x8] sm:$0xff]
  %v428 = vld [vmem:[%s5 + $0x10] sm:$0xff]
  %v429 = vld [vmem:[%s5 + $0x18] sm:$0xff]
  %v430 = vld [vmem:[%s5 + $0x20] sm:$0xff]
  %v431 = vld [vmem:[%s5 + $0x28] sm:$0xff]
  %v432 = vld [vmem:[%s5 + $0x30] sm:$0xff]
  %v433 = vld [vmem:[%s5 + $0x38] sm:$0xff]
  %v434 = vld [vmem:[%s5 + $0x40] sm:$0xff]
  %v435 = vld [vmem:[%s5 + $0x48] sm:$0xff]
  %v436 = vld [vmem:[%s5 + $0x50] sm:$0xff]
  %v437 = vld [vmem:[%s5 + $0x58] sm:$0xff]
  %v438 = vld [vmem:[%s5 + $0x60] sm:$0xff]
  %v439 = vld [vmem:[%s5 + $0x68] sm:$0xff]
  %v440 = vld [vmem:[%s5 + $0x70] sm:$0xff]
  %v441 = vld [vmem:[%s5 + $0x78] sm:$0xff]
  %v442 = vld [vmem:[%s5 + $0x80] sm:$0xff]
  %v443 = vld [vmem:[%s5 + $0x88] sm:$0xff]
  %v444 = vld [vmem:[%s5 + $0x90] sm:$0xff]
  %v445 = vld [vmem:[%s5 + $0x98] sm:$0xff]
  %v446 = vld [vmem:[%s5 + $0xa0] sm:$0xff]
  %v447 = vld [vmem:[%s5 + $0xa8] sm:$0xff]
  %v448 = vld [vmem:[%s5 + $0xb0] sm:$0xff]
  %v449 = vld [vmem:[%s5 + $0xb8] sm:$0xff]
  %v450 = vld [vmem:[%s5 + $0xc0] sm:$0xff]
  %v451 = vld [vmem:[%s5 + $0xc8] sm:$0xff]
  %v452 = vld [vmem:[%s5 + $0xd0] sm:$0xff]
  %v453 = vld [vmem:[%s5 + $0xd8] sm:$0xff]
  %v454 = vld [vmem:[%s5 + $0xe0] sm:$0xff]
  %v455 = vld [vmem:[%s5 + $0xe8] sm:$0xff]
  %v456 = vld [vmem:[%s5 + $0xf0] sm:$0xff]
  %v457 = vld [vmem:[%s5 + $0xf8] sm:$0xff]
  %v458 = vld [vmem:[%s6] sm:$0x3]
  %v460 = vlaneseq
  %v461 = vshrl.u32 %v460, 7
  %v462 = vsub.s32 0, %v461
  %v463 = vrot.slane %v458, %v462
  %v464 = vlaneseq
  %v465 = vshrl.u32 %v464, 7
  %v466 = vsub.s32 1, %v465
  %v467 = vrot.slane %v458, %v466
  %v502 = vunpack.c.l.b16 %v426
  %v503 = vunpack.c.h.b16 %v426
  %v504 = vunpack.c.l.b16 %v427
  %v505 = vunpack.c.h.b16 %v427
  %v506 = vunpack.c.l.b16 %v428
  %v507 = vunpack.c.h.b16 %v428
  %v508 = vunpack.c.l.b16 %v429
  %v509 = vunpack.c.h.b16 %v429
  %v510 = vunpack.c.l.b16 %v430
  %v511 = vunpack.c.h.b16 %v430
  %v512 = vunpack.c.l.b16 %v431
  %v513 = vunpack.c.h.b16 %v431
  %v514 = vunpack.c.l.b16 %v432
  %v515 = vunpack.c.h.b16 %v432
  %v516 = vunpack.c.l.b16 %v433
  %v517 = vunpack.c.h.b16 %v433
  %v518 = vunpack.c.l.b16 %v434
  %v519 = vunpack.c.h.b16 %v434
  %v520 = vunpack.c.l.b16 %v435
  %v521 = vunpack.c.h.b16 %v435
  %v522 = vunpack.c.l.b16 %v436
  %v523 = vunpack.c.h.b16 %v436
  %v524 = vunpack.c.l.b16 %v437
  %v525 = vunpack.c.h.b16 %v437
  %v526 = vunpack.c.l.b16 %v438
  %v527 = vunpack.c.h.b16 %v438
  %v528 = vunpack.c.l.b16 %v439
  %v529 = vunpack.c.h.b16 %v439
  %v530 = vunpack.c.l.b16 %v440
  %v531 = vunpack.c.h.b16 %v440
  %v532 = vunpack.c.l.b16 %v441
  %v533 = vunpack.c.h.b16 %v441
  %v534 = vunpack.c.l.b16 %v442
  %v535 = vunpack.c.h.b16 %v442
  %v536 = vunpack.c.l.b16 %v443
  %v537 = vunpack.c.h.b16 %v443
  %v538 = vunpack.c.l.b16 %v444
  %v539 = vunpack.c.h.b16 %v444
  %v540 = vunpack.c.l.b16 %v445
  %v541 = vunpack.c.h.b16 %v445
  %v542 = vunpack.c.l.b16 %v446
  %v543 = vunpack.c.h.b16 %v446
  %v544 = vunpack.c.l.b16 %v447
  %v545 = vunpack.c.h.b16 %v447
  %v546 = vunpack.c.l.b16 %v448
  %v547 = vunpack.c.h.b16 %v448
  %v548 = vunpack.c.l.b16 %v449
  %v549 = vunpack.c.h.b16 %v449
  %v550 = vunpack.c.l.b16 %v450
  %v551 = vunpack.c.h.b16 %v450
  %v552 = vunpack.c.l.b16 %v451
  %v553 = vunpack.c.h.b16 %v451
  %v554 = vunpack.c.l.b16 %v452
  %v555 = vunpack.c.h.b16 %v452
  %v556 = vunpack.c.l.b16 %v453
  %v557 = vunpack.c.h.b16 %v453
  %v558 = vunpack.c.l.b16 %v454
  %v559 = vunpack.c.h.b16 %v454
  %v560 = vunpack.c.l.b16 %v455
  %v561 = vunpack.c.h.b16 %v455
  %v562 = vunpack.c.l.b16 %v456
  %v563 = vunpack.c.h.b16 %v456
  %v564 = vunpack.c.l.b16 %v457
  %v565 = vunpack.c.h.b16 %v457
  %v566 = vpack.c.b16 %v504, %v502
  %v567 = vpack.c.b16 %v505, %v503
  %v568 = vpack.c.b16 %v508, %v506
  %v569 = vpack.c.b16 %v509, %v507
  %v570 = vpack.c.b16 %v512, %v510
  %v571 = vpack.c.b16 %v513, %v511
  %v572 = vpack.c.b16 %v516, %v514
  %v573 = vpack.c.b16 %v517, %v515
  %v574 = vpack.c.b16 %v520, %v518
  %v575 = vpack.c.b16 %v521, %v519
  %v576 = vpack.c.b16 %v524, %v522
  %v577 = vpack.c.b16 %v525, %v523
  %v578 = vpack.c.b16 %v528, %v526
  %v579 = vpack.c.b16 %v529, %v527
  %v580 = vpack.c.b16 %v532, %v530
  %v581 = vpack.c.b16 %v533, %v531
  %v582 = vpack.c.b16 %v536, %v534
  %v583 = vpack.c.b16 %v537, %v535
  %v584 = vpack.c.b16 %v540, %v538
  %v585 = vpack.c.b16 %v541, %v539
  %v586 = vpack.c.b16 %v544, %v542
  %v587 = vpack.c.b16 %v545, %v543
  %v588 = vpack.c.b16 %v548, %v546
  %v589 = vpack.c.b16 %v549, %v547
  %v590 = vpack.c.b16 %v552, %v550
  %v591 = vpack.c.b16 %v553, %v551
  %v592 = vpack.c.b16 %v556, %v554
  %v593 = vpack.c.b16 %v557, %v555
  %v594 = vpack.c.b16 %v560, %v558
  %v595 = vpack.c.b16 %v561, %v559
  %v596 = vpack.c.b16 %v564, %v562
  %v597 = vpack.c.b16 %v565, %v563
  %630 = vmatprep.subr.bf16.mxu0 %v567
  %631 = vmatpush1.bf16.msra.mxu0 %v566
  %632 = vmatprep.subr.bf16.mxu0 %v569
  %633 = vmatpush1.bf16.msra.mxu0 %v568
  %634 = vmatprep.subr.bf16.mxu0 %v571
  %635 = vmatpush1.bf16.msra.mxu0 %v570
  %636 = vmatprep.subr.bf16.mxu0 %v573
  %637 = vmatpush1.bf16.msra.mxu0 %v572
  %638 = vmatprep.subr.bf16.mxu0 %v575
  %639 = vmatpush1.bf16.msra.mxu0 %v574
  %640 = vmatprep.subr.bf16.mxu0 %v577
  %641 = vmatpush1.bf16.msra.mxu0 %v576
  %642 = vmatprep.subr.bf16.mxu0 %v579
  %643 = vmatpush1.bf16.msra.mxu0 %v578
  %644 = vmatprep.subr.bf16.mxu0 %v581
  %645 = vmatpush1.bf16.msra.mxu0 %v580
  %646 = vmatprep.subr.bf16.mxu0 %v583
  %647 = vmatpush1.bf16.msra.mxu0 %v582
  %648 = vmatprep.subr.bf16.mxu0 %v585
  %649 = vmatpush1.bf16.msra.mxu0 %v584
  %650 = vmatprep.subr.bf16.mxu0 %v587
  %651 = vmatpush1.bf16.msra.mxu0 %v586
  %652 = vmatprep.subr.bf16.mxu0 %v589
  %653 = vmatpush1.bf16.msra.mxu0 %v588
  %654 = vmatprep.subr.bf16.mxu0 %v591
  %655 = vmatpush1.bf16.msra.mxu0 %v590
  %656 = vmatprep.subr.bf16.mxu0 %v593
  %657 = vmatpush1.bf16.msra.mxu0 %v592
  %658 = vmatprep.subr.bf16.mxu0 %v595
  %659 = vmatpush1.bf16.msra.mxu0 %v594
  %660 = vmatprep.subr.bf16.mxu0 %v597
  %661 = vmatpush1.bf16.msra.mxu0 %v596
  %662 = vmatprep.mubr.bf16.mxu0 %v425
  %663 = vmatmul.mubr.bf16.gmra.mrb[0].mxu0 %v424
  %v664 = vpop.f32.mrb[0].mxu0
  %v665 = vadd.f32 %v463, %v664
  %v666 = vpop.f32.mrb[0].mxu0
  %v667 = vadd.f32 %v467, %v666
  %v668 = vpop.f32.mrb[0].mxu0
  %v669 = vpop.f32.mrb[0].mxu0
  %670 = vdwg.mxu0
  %v671 = vpack.c.bf16 %v665, %v665
  %v672 = vpack.c.bf16 %v667, %v667
  %v675 = vunpack.c.l.b16 %v671
  %v676 = vunpack.c.l.b16 %v672
  %v677 = vpack.c.b16 %v676, %v675
  %679 = vst [vmem:[%s7] sm:$0xff] %v677
  // Predicated region
  $region30: #{patch_discriminator_with_sed.10} parent=0 // pred_check
    _
  $region31: #{patch_discriminator_with_sed.10} parent=0 // pred_check_branch
    %681 = sbr.rel (0) target = $region33
  $region32: #{patch_discriminator_with_sed.10} parent=0 // pred_region
    _
  $region33: #{patch_discriminator_with_sed.10} parent=0 // pred_fallthru
    _
  // Predicated region
  $region34: #{patch_discriminator_with_sed.10} parent=0 // pred_check
    _
  $region35: #{patch_discriminator_with_sed.10} parent=0 // pred_check_branch
    %683 = sbr.rel (0) target = $region37
  $region36: #{patch_discriminator_with_sed.10} parent=0 // pred_region
    _
  $region37: #{patch_discriminator_with_sed.10} parent=0 // pred_fallthru
    _

// kernel: patch_discriminator_with_sed.11
$region0: #{patch_discriminator_with_sed.11}
  #allocation0 [shape = 'u32[]', space=smem, size = 0x4, offset = 0x4, fixed_abs, tag = 'smem constant byte address 0x4 - core index']
  #allocation1 [shape = 'u32[144,128]{1,0:T(1,128)}', space=vmem, size = 0x12000, scoped, tag = 'internal scratch']
  %s0 = inlined_call_operand.vmem [shape: bf16[2,19,256], index: 0, kind: input, shape index: {}]
  %s1 = inlined_call_operand.vmem [shape: bf16[16,256,128], index: 1, kind: input, shape index: {}]
  %s2 = inlined_call_operand.vmem [shape: f32[1,128], index: 2, kind: input, shape index: {}]
  %s3 = inlined_call_operand.vmem [shape: f32[1,128], index: 3, kind: input, shape index: {}]
  %s4 = inlined_call_operand.vmem [shape: f32[2,4,128], index: 4, kind: output, shape index: {}]
  %s5 = sld [smem:[#allocation0]]
  $region49: #{patch_discriminator_with_sed.11} parent=0
    _
  %s7 = ssub.s32 1, %s5
  %s8 = scalar_select 0, %s7, %s5
  loop: start=0, step=1, limit=4
  $region2: #{patch_discriminator_with_sed.11} parent=0 // loop_pre_header
    _
  $region3: #{patch_discriminator_with_sed.11} parent=0 // loop_header
    %s10 = sphi 0, %s14
    %p11 = scmp.ge.s32.totalorder %s10, 4
    %s17 = sphi 0, %s29
    %s18 = sphi 0, %s25
    %s19 = sphi 0, %s17
    %s20 = sphi 0, %s18
    %s21 = sphi 0, %s19
    %s22 = sphi 0, %s20
    %s32 = sphi 0, %s34
    %s35 = sphi 0, %s32
    %s36 = sphi 0, %s35
    %s52 = sphi 0, %s36
    %s58 = sphi 0, %s60
    %s61 = sphi 0, %s58
    %s62 = sphi 0, %s61
    %s78 = sphi 0, %s62
    %s84 = sphi 0, %s86
    %s87 = sphi 0, %s84
    %s88 = sphi 0, %s87
    %s104 = sphi 0, %s88
    %s110 = sphi 0, %s112
    %s113 = sphi 0, %s110
    %s114 = sphi 0, %s113
    %s130 = sphi 0, %s114
    %s138 = sphi 0, %s140
    %s141 = sphi 0, %s138
    %s142 = sphi 0, %s141
    %s158 = sphi 0, %s142
  $region4: #{patch_discriminator_with_sed.11} parent=0 // loop_header_branch
    %13 = sbr.rel (%p11) target = $region8
  $region5: #{patch_discriminator_with_sed.11} parent=0 // loop_body
    %s15 = ssub.s32 %s10, 1
    %s16 = ssub.s32 %s10, 2
    %s23 = sadd.s32 1, %s18
    %p24 = scmp.ge.s32.totalorder %s23, 1
    %s25 = scalar_select %p24, 0, %s23
    %s26 = sadd.s32 1, %s17
    %s27 = scalar_select %p24, %s26, %s17
    %p28 = scmp.ge.s32.totalorder %s27, 2
    %s29 = scalar_select %p28, 0, %s27
    %s30 = ssub.s32 %s17, %s29
    %p31 = scmp.eq.s32.totalorder %s30, 0
    %s33 = sadd.s32 %s32, 1
    %s34 = scalar_select %p31, %s32, %s33
    %p37 = pneg %p31
    %p38 = scmp.eq.s32.totalorder %s10, 1
    %p39 = por %p37, %p38
    %p40 = scmp.ne.s32.totalorder %s32, %s35
    %p41 = scmp.eq.s32.totalorder %s10, 0
    %p42 = por %p40, %p41
    %p43 = scmp.ne.s32.totalorder %s32, %s35
    %p44 = scmp.eq.s32.totalorder %s15, 1
    %p45 = por %p43, %p44
    %p46 = scmp.ne.s32.totalorder %s35, %s36
    %p47 = scmp.eq.s32.totalorder %s15, 0
    %p48 = por %p46, %p47
    %p49 = scmp.ne.s32.totalorder %s35, %s36
    %p50 = scmp.eq.s32.totalorder %s16, 1
    %p51 = por %p49, %p50
    %p53 = scmp.ne.s32.totalorder %s36, %s52
    %p54 = scmp.eq.s32.totalorder %s16, 0
    %p55 = por %p53, %p54
    %s56 = ssub.s32 %s18, %s25
    %p57 = scmp.eq.s32.totalorder %s56, 0
    %s59 = sadd.s32 %s58, 1
    %s60 = scalar_select %p57, %s58, %s59
    %p63 = pneg %p57
    %p64 = scmp.eq.s32.totalorder %s10, 1
    %p65 = por %p63, %p64
    %p66 = scmp.ne.s32.totalorder %s58, %s61
    %p67 = scmp.eq.s32.totalorder %s10, 0
    %p68 = por %p66, %p67
    %p69 = scmp.ne.s32.totalorder %s58, %s61
    %p70 = scmp.eq.s32.totalorder %s15, 1
    %p71 = por %p69, %p70
    %p72 = scmp.ne.s32.totalorder %s61, %s62
    %p73 = scmp.eq.s32.totalorder %s15, 0
    %p74 = por %p72, %p73
    %p75 = scmp.ne.s32.totalorder %s61, %s62
    %p76 = scmp.eq.s32.totalorder %s16, 1
    %p77 = por %p75, %p76
    %p79 = scmp.ne.s32.totalorder %s62, %s78
    %p80 = scmp.eq.s32.totalorder %s16, 0
    %p81 = por %p79, %p80
    %s82 = ssub.s32 %s18, %s25
    %p83 = scmp.eq.s32.totalorder %s82, 0
    %s85 = sadd.s32 %s84, 1
    %s86 = scalar_select %p83, %s84, %s85
    %p89 = pneg %p83
    %p90 = scmp.eq.s32.totalorder %s10, 1
    %p91 = por %p89, %p90
    %p92 = scmp.ne.s32.totalorder %s84, %s87
    %p93 = scmp.eq.s32.totalorder %s10, 0
    %p94 = por %p92, %p93
    %p95 = scmp.ne.s32.totalorder %s84, %s87
    %p96 = scmp.eq.s32.totalorder %s15, 1
    %p97 = por %p95, %p96
    %p98 = scmp.ne.s32.totalorder %s87, %s88
    %p99 = scmp.eq.s32.totalorder %s15, 0
    %p100 = por %p98, %p99
    %p101 = scmp.ne.s32.totalorder %s87, %s88
    %p102 = scmp.eq.s32.totalorder %s16, 1
    %p103 = por %p101, %p102
    %p105 = scmp.ne.s32.totalorder %s88, %s104
    %p106 = scmp.eq.s32.totalorder %s16, 0
    %p107 = por %p105, %p106
    %s108 = ssub.s32 %s18, %s25
    %p109 = scmp.eq.s32.totalorder %s108, 0
    %s111 = sadd.s32 %s110, 1
    %s112 = scalar_select %p109, %s110, %s111
    %p115 = pneg %p109
    %p116 = scmp.eq.s32.totalorder %s10, 1
    %p117 = por %p115, %p116
    %p118 = scmp.ne.s32.totalorder %s110, %s113
    %p119 = scmp.eq.s32.totalorder %s10, 0
    %p120 = por %p118, %p119
    %p121 = scmp.ne.s32.totalorder %s110, %s113
    %p122 = scmp.eq.s32.totalorder %s15, 1
    %p123 = por %p121, %p122
    %p124 = scmp.ne.s32.totalorder %s113, %s114
    %p125 = scmp.eq.s32.totalorder %s15, 0
    %p126 = por %p124, %p125
    %p127 = scmp.ne.s32.totalorder %s113, %s114
    %p128 = scmp.eq.s32.totalorder %s16, 1
    %p129 = por %p127, %p128
    %p131 = scmp.ne.s32.totalorder %s114, %s130
    %p132 = scmp.eq.s32.totalorder %s16, 0
    %p133 = por %p131, %p132
    %s134 = ssub.s32 %s17, %s29
    %s135 = ssub.s32 %s18, %s25
    %s136 = sor.u32 %s134, %s135
    %p137 = scmp.eq.s32.totalorder %s136, 0
    %s139 = sadd.s32 %s138, 1
    %s140 = scalar_select %p137, %s138, %s139
    %p143 = pneg %p137
    %p144 = scmp.eq.s32.totalorder %s10, 1
    %p145 = por %p143, %p144
    %p146 = scmp.ne.s32.totalorder %s138, %s141
    %p147 = scmp.eq.s32.totalorder %s10, 0
    %p148 = por %p146, %p147
    %p149 = scmp.ne.s32.totalorder %s138, %s141
    %p150 = scmp.eq.s32.totalorder %s15, 1
    %p151 = por %p149, %p150
    %p152 = scmp.ne.s32.totalorder %s141, %s142
    %p153 = scmp.eq.s32.totalorder %s15, 0
    %p154 = por %p152, %p153
    %p155 = scmp.ne.s32.totalorder %s141, %s142
    %p156 = scmp.eq.s32.totalorder %s16, 1
    %p157 = por %p155, %p156
    %p159 = scmp.ne.s32.totalorder %s142, %s158
    %p160 = scmp.eq.s32.totalorder %s16, 0
    %p161 = por %p159, %p160
    %p162 = scmp.le.s32.totalorder 1, %s10
    %p163 = scmp.lt.s32.totalorder %s10, 3
    %p164 = pnand %p162, %p163
    %p165 = pneg %p164
    // Predicated region
    $region9: #{patch_discriminator_with_sed.11} parent=5 // pred_check
      _
    $region10: #{patch_discriminator_with_sed.11} parent=5 // pred_check_branch
      %167 = sbr.rel (%p164) target = $region12
    $region11: #{patch_discriminator_with_sed.11} parent=5 // pred_region
      %s168 = ssub.s32 %s10, 1
      // Predicated region
      $region13: #{patch_discriminator_with_sed.11} parent=11 // pred_check
        %p169 = pneg %p74
      $region14: #{patch_discriminator_with_sed.11} parent=11 // pred_check_branch
        %171 = sbr.rel (%p169) target = $region16
      $region15: #{patch_discriminator_with_sed.11} parent=11 // pred_region
        %p172 = scmp.lt.s32.totalorder %s20, 0
        %s173 = scalar_select %p172, %s20, 0
        %s174 = smul.addr %s173, 4
        %s175 = scalar_lea.vmem %s1, %s174
      $region16: #{patch_discriminator_with_sed.11} parent=11 // pred_fallthru
        _
      // Predicated region
      $region17: #{patch_discriminator_with_sed.11} parent=11 // pred_check
        %p176 = pneg %p100
      $region18: #{patch_discriminator_with_sed.11} parent=11 // pred_check_branch
        %178 = sbr.rel (%p176) target = $region20
      $region19: #{patch_discriminator_with_sed.11} parent=11 // pred_region
        %p179 = scmp.lt.s32.totalorder %s20, 0
        %s180 = scalar_select %p179, %s20, 0
        %s181 = scalar_lea.vmem %s2, %s180
      $region20: #{patch_discriminator_with_sed.11} parent=11 // pred_fallthru
        _
      // Predicated region
      $region21: #{patch_discriminator_with_sed.11} parent=11 // pred_check
        %p182 = pneg %p126
      $region22: #{patch_discriminator_with_sed.11} parent=11 // pred_check_branch
        %184 = sbr.rel (%p182) target = $region24
      $region23: #{patch_discriminator_with_sed.11} parent=11 // pred_region
        %p185 = scmp.lt.s32.totalorder %s20, 0
        %s186 = scalar_select %p185, %s20, 0
        %s187 = scalar_lea.vmem %s3, %s186
      $region24: #{patch_discriminator_with_sed.11} parent=11 // pred_fallthru
        _
    $region12: #{patch_discriminator_with_sed.11} parent=5 // pred_fallthru
      _
    %p188 = scmp.lt.s32.totalorder %s10, 2
    // Predicated region
    $region25: #{patch_discriminator_with_sed.11} parent=5 // pred_check
      %p189 = pneg %p188
    $region26: #{patch_discriminator_with_sed.11} parent=5 // pred_check_branch
      %191 = sbr.rel (%p189) target = $region28
    $region27: #{patch_discriminator_with_sed.11} parent=5 // pred_region
      // Predicated region
      $region29: #{patch_discriminator_with_sed.11} parent=27 // pred_check
        %p192 = pneg %p42
      $region30: #{patch_discriminator_with_sed.11} parent=27 // pred_check_branch
        %194 = sbr.rel (%p192) target = $region32
      $region31: #{patch_discriminator_with_sed.11} parent=27 // pred_region
        %p195 = scmp.lt.s32.totalorder %s17, 1
        %s196 = scalar_select %p195, %s17, 1
        %s197 = smul.addr %s196, 6
        %s198 = smul.addr %s197, 4
        %s199 = scalar_lea.vmem %s0, %s198
      $region32: #{patch_discriminator_with_sed.11} parent=27 // pred_fallthru
        _
    $region28: #{patch_discriminator_with_sed.11} parent=5 // pred_fallthru
      _
    %p200 = scmp.le.s32.totalorder 1, %s10
    %p201 = scmp.lt.s32.totalorder %s10, 3
    %p202 = pnand %p200, %p201
    %p203 = pneg %p202
    // Predicated region
    $region33: #{patch_discriminator_with_sed.11} parent=5 // pred_check
      _
    $region34: #{patch_discriminator_with_sed.11} parent=5 // pred_check_branch
      %205 = sbr.rel (%p202) target = $region36
    $region35: #{patch_discriminator_with_sed.11} parent=5 // pred_region
      %s206 = ssub.s32 %s10, 1
      %p207 = scmp.lt.s32.totalorder %s19, 1
      %s208 = scalar_select %p207, %s19, 1
      %s209 = smul.addr %s208, 6
      %s210 = smul.addr %s209, 4
      %s211 = scalar_lea.vmem %s0, %s210
      %p212 = pneg %p48
      %p213 = pneg %p45
      %p214 = scmp.lt.s32.totalorder %s20, 0
      %s215 = scalar_select %p214, %s20, 0
      %s216 = smul.addr %s215, 4
      %s217 = scalar_lea.vmem %s1, %s216
      %p218 = pneg %p74
      %p219 = pneg %p71
      %p220 = scmp.lt.s32.totalorder %s20, 0
      %s221 = scalar_select %p220, %s20, 0
      %s222 = scalar_lea.vmem %s2, %s221
      %p223 = pneg %p100
      %p224 = pneg %p97
      %p225 = scmp.lt.s32.totalorder %s20, 0
      %s226 = scalar_select %p225, %s20, 0
      %s227 = scalar_lea.vmem %s3, %s226
      %p228 = pneg %p126
      %p229 = pneg %p123
      %p230 = pneg %p154
      %p231 = pneg %p151
      %p232 = scmp.lt.s32.totalorder %s19, 1
      %s233 = scalar_select %p232, %s19, 1
      %p234 = scmp.lt.s32.totalorder %s20, 0
      %s235 = scalar_select %p234, %s20, 0
      %s236 = sadd.s32 %s235, %s233
      %s237 = smul.addr %s236, 4
      %s238 = scalar_lea.vmem %s4, %s237
      %p239 = scmp.lt.s32.totalorder %s19, 1
      %s240 = scalar_select %p239, %s19, 1
      %s241 = smul.addr %s240, 6
      %s242 = smul.addr %s241, 4
      %s243 = scalar_lea.vmem %s0, %s242
      %p244 = scmp.lt.s32.totalorder %s20, 0
      %s245 = scalar_select %p244, %s20, 0
      %s246 = smul.addr %s245, 4
      %s247 = scalar_lea.vmem %s1, %s246
      %p248 = scmp.lt.s32.totalorder %s20, 0
      %s249 = scalar_select %p248, %s20, 0
      %s250 = scalar_lea.vmem %s2, %s249
      %p251 = scmp.lt.s32.totalorder %s20, 0
      %s252 = scalar_select %p251, %s20, 0
      %s253 = scalar_lea.vmem %s3, %s252
      %p254 = scmp.lt.s32.totalorder %s19, 1
      %s255 = scalar_select %p254, %s19, 1
      %p256 = scmp.lt.s32.totalorder %s20, 0
      %s257 = scalar_select %p256, %s20, 0
      %s258 = sadd.s32 %s257, %s255
      %s259 = smul.addr %s258, 4
      %s260 = scalar_lea.vmem %s4, %s259
      %v262 = vld [vmem:[%s243] sm:$0x33]
      %v263 = vld [vmem:[%s247] sm:$0xf]
      %v264 = vld [vmem:[%s247 + $0x4] sm:$0xf]
      %v265 = vld [vmem:[%s247 + $0x8] sm:$0xf]
      %v266 = vld [vmem:[%s247 + $0xc] sm:$0xf]
      %v267 = vld [vmem:[%s247 + $0x10] sm:$0xf]
      %v268 = vld [vmem:[%s247 + $0x14] sm:$0xf]
      %v269 = vld [vmem:[%s247 + $0x18] sm:$0xf]
      %v270 = vld [vmem:[%s247 + $0x1c] sm:$0xf]
      %v271 = vld [vmem:[%s247 + $0x20] sm:$0xf]
      %v272 = vld [vmem:[%s247 + $0x24] sm:$0xf]
      %v273 = vld [vmem:[%s247 + $0x28] sm:$0xf]
      %v274 = vld [vmem:[%s247 + $0x2c] sm:$0xf]
      %v275 = vld [vmem:[%s247 + $0x30] sm:$0xf]
      %v276 = vld [vmem:[%s247 + $0x34] sm:$0xf]
      %v277 = vld [vmem:[%s247 + $0x38] sm:$0xf]
      %v278 = vld [vmem:[%s247 + $0x3c] sm:$0xf]
      %v279 = vld [vmem:[%s247 + $0x40] sm:$0xf]
      %v280 = vld [vmem:[%s247 + $0x44] sm:$0xf]
      %v281 = vld [vmem:[%s247 + $0x48] sm:$0xf]
      %v282 = vld [vmem:[%s247 + $0x4c] sm:$0xf]
      %v283 = vld [vmem:[%s247 + $0x50] sm:$0xf]
      %v284 = vld [vmem:[%s247 + $0x54] sm:$0xf]
      %v285 = vld [vmem:[%s247 + $0x58] sm:$0xf]
      %v286 = vld [vmem:[%s247 + $0x5c] sm:$0xf]
      %v287 = vld [vmem:[%s247 + $0x60] sm:$0xf]
      %v288 = vld [vmem:[%s247 + $0x64] sm:$0xf]
      %v289 = vld [vmem:[%s247 + $0x68] sm:$0xf]
      %v290 = vld [vmem:[%s247 + $0x6c] sm:$0xf]
      %v291 = vld [vmem:[%s247 + $0x70] sm:$0xf]
      %v292 = vld [vmem:[%s247 + $0x74] sm:$0xf]
      %v293 = vld [vmem:[%s247 + $0x78] sm:$0xf]
      %v294 = vld [vmem:[%s247 + $0x7c] sm:$0xf]
      %v295 = vld [vmem:[%s243] sm:$0x77]
      %s296 = scalar_lea.vmem %s247, 128
      %v297 = vld [vmem:[%s296] sm:$0xf]
      %v298 = vld [vmem:[%s296 + $0x4] sm:$0xf]
      %v299 = vld [vmem:[%s296 + $0x8] sm:$0xf]
      %v300 = vld [vmem:[%s296 + $0xc] sm:$0xf]
      %v301 = vld [vmem:[%s296 + $0x10] sm:$0xf]
      %v302 = vld [vmem:[%s296 + $0x14] sm:$0xf]
      %v303 = vld [vmem:[%s296 + $0x18] sm:$0xf]
      %v304 = vld [vmem:[%s296 + $0x1c] sm:$0xf]
      %v305 = vld [vmem:[%s296 + $0x20] sm:$0xf]
      %v306 = vld [vmem:[%s296 + $0x24] sm:$0xf]
      %v307 = vld [vmem:[%s296 + $0x28] sm:$0xf]
      %v308 = vld [vmem:[%s296 + $0x2c] sm:$0xf]
      %v309 = vld [vmem:[%s296 + $0x30] sm:$0xf]
      %v310 = vld [vmem:[%s296 + $0x34] sm:$0xf]
      %v311 = vld [vmem:[%s296 + $0x38] sm:$0xf]
      %v312 = vld [vmem:[%s296 + $0x3c] sm:$0xf]
      %v313 = vld [vmem:[%s296 + $0x40] sm:$0xf]
      %v314 = vld [vmem:[%s296 + $0x44] sm:$0xf]
      %v315 = vld [vmem:[%s296 + $0x48] sm:$0xf]
      %v316 = vld [vmem:[%s296 + $0x4c] sm:$0xf]
      %v317 = vld [vmem:[%s296 + $0x50] sm:$0xf]
      %v318 = vld [vmem:[%s296 + $0x54] sm:$0xf]
      %v319 = vld [vmem:[%s296 + $0x58] sm:$0xf]
      %v320 = vld [vmem:[%s296 + $0x5c] sm:$0xf]
      %v321 = vld [vmem:[%s296 + $0x60] sm:$0xf]
      %v322 = vld [vmem:[%s296 + $0x64] sm:$0xf]
      %v323 = vld [vmem:[%s296 + $0x68] sm:$0xf]
      %v324 = vld [vmem:[%s296 + $0x6c] sm:$0xf]
      %v325 = vld [vmem:[%s296 + $0x70] sm:$0xf]
      %v326 = vld [vmem:[%s296 + $0x74] sm:$0xf]
      %v327 = vld [vmem:[%s296 + $0x78] sm:$0xf]
      %v328 = vld [vmem:[%s296 + $0x7c] sm:$0xf]
      %v330 = vunpack.c.l.b16 %v295
      %v331 = vunpack.c.h.b16 %v295
      %v332 = vpack.c.b16 %v330, %v330
      %v333 = vpack.c.b16 %v331, %v331
      %v335 = vshrl.u32 %v332, 16
      %v337 = vshll.u32 %v332, 16
      %v339 = vrot.slane %v337, 1
      %v340 = vor.u32 %v335, %v339
      %v342 = vshrl.u32 %v333, 16
      %v344 = vshll.u32 %v333, 16
      %v346 = vrot.slane %v344, 1
      %v347 = vor.u32 %v342, %v346
      %v382 = vunpack.c.l.b16 %v297
      %v383 = vunpack.c.l.b16 %v298
      %v384 = vunpack.c.l.b16 %v299
      %v385 = vunpack.c.l.b16 %v300
      %v386 = vunpack.c.l.b16 %v301
      %v387 = vunpack.c.l.b16 %v302
      %v388 = vunpack.c.l.b16 %v303
      %v389 = vunpack.c.l.b16 %v304
      %v390 = vunpack.c.l.b16 %v305
      %v391 = vunpack.c.l.b16 %v306
      %v392 = vunpack.c.l.b16 %v307
      %v393 = vunpack.c.l.b16 %v308
      %v394 = vunpack.c.l.b16 %v309
      %v395 = vunpack.c.l.b16 %v310
      %v396 = vunpack.c.l.b16 %v311
      %v397 = vunpack.c.l.b16 %v312
      %v398 = vunpack.c.l.b16 %v313
      %v399 = vunpack.c.l.b16 %v314
      %v400 = vunpack.c.l.b16 %v315
      %v401 = vunpack.c.l.b16 %v316
      %v402 = vunpack.c.l.b16 %v317
      %v403 = vunpack.c.l.b16 %v318
      %v404 = vunpack.c.l.b16 %v319
      %v405 = vunpack.c.l.b16 %v320
      %v406 = vunpack.c.l.b16 %v321
      %v407 = vunpack.c.l.b16 %v322
      %v408 = vunpack.c.l.b16 %v323
      %v409 = vunpack.c.l.b16 %v324
      %v410 = vunpack.c.l.b16 %v325
      %v411 = vunpack.c.l.b16 %v326
      %v412 = vunpack.c.l.b16 %v327
      %v413 = vunpack.c.l.b16 %v328
      %v414 = vpack.c.b16 %v383, %v382
      %v415 = vpack.c.b16 %v385, %v384
      %v416 = vpack.c.b16 %v387, %v386
      %v417 = vpack.c.b16 %v389, %v388
      %v418 = vpack.c.b16 %v391, %v390
      %v419 = vpack.c.b16 %v393, %v392
      %v420 = vpack.c.b16 %v395, %v394
      %v421 = vpack.c.b16 %v397, %v396
      %v422 = vpack.c.b16 %v399, %v398
      %v423 = vpack.c.b16 %v401, %v400
      %v424 = vpack.c.b16 %v403, %v402
      %v425 = vpack.c.b16 %v405, %v404
      %v426 = vpack.c.b16 %v407, %v406
      %v427 = vpack.c.b16 %v409, %v408
      %v428 = vpack.c.b16 %v411, %v410
      %v429 = vpack.c.b16 %v413, %v412
      %446 = vmatprep.subr.bf16.mxu0 0
      %447 = vmatpush1.bf16.msra.mxu0 %v414
      %448 = vmatprep.subr.bf16.mxu0 0
      %449 = vmatpush1.bf16.msra.mxu0 %v415
      %450 = vmatprep.subr.bf16.mxu0 0
      %451 = vmatpush1.bf16.msra.mxu0 %v416
      %452 = vmatprep.subr.bf16.mxu0 0
      %453 = vmatpush1.bf16.msra.mxu0 %v417
      %454 = vmatprep.subr.bf16.mxu0 0
      %455 = vmatpush1.bf16.msra.mxu0 %v418
      %456 = vmatprep.subr.bf16.mxu0 0
      %457 = vmatpush1.bf16.msra.mxu0 %v419
      %458 = vmatprep.subr.bf16.mxu0 0
      %459 = vmatpush1.bf16.msra.mxu0 %v420
      %460 = vmatprep.subr.bf16.mxu0 0
      %461 = vmatpush1.bf16.msra.mxu0 %v421
      %462 = vmatprep.subr.bf16.mxu0 0
      %463 = vmatpush1.bf16.msra.mxu0 %v422
      %464 = vmatprep.subr.bf16.mxu0 0
      %465 = vmatpush1.bf16.msra.mxu0 %v423
      %466 = vmatprep.subr.bf16.mxu0 0
      %467 = vmatpush1.bf16.msra.mxu0 %v424
      %468 = vmatprep.subr.bf16.mxu0 0
      %469 = vmatpush1.bf16.msra.mxu0 %v425
      %470 = vmatprep.subr.bf16.mxu0 0
      %471 = vmatpush1.bf16.msra.mxu0 %v426
      %472 = vmatprep.subr.bf16.mxu0 0
      %473 = vmatpush1.bf16.msra.mxu0 %v427
      %474 = vmatprep.subr.bf16.mxu0 0
      %475 = vmatpush1.bf16.msra.mxu0 %v428
      %476 = vmatprep.subr.bf16.mxu0 0
      %477 = vmatpush1.bf16.msra.mxu0 %v429
      %478 = vmatprep.mubr.bf16.mxu0 %v347
      %479 = vmatmul.mubr.bf16.gmra.mrb[0].mxu0 %v340
      %v480 = vpop.f32.mrb[0].mxu0
      %v481 = vadd.f32 0.0, %v480
      %v482 = vpop.f32.mrb[0].mxu0
      %v483 = vpop.f32.mrb[0].mxu0
      %v484 = vpop.f32.mrb[0].mxu0
      %485 = vdwg.mxu0
      %v487 = vunpack.c.l.b16 %v262
      %v488 = vunpack.c.h.b16 %v262
      %v489 = vpack.c.b16 %v487, %v487
      %v490 = vpack.c.b16 %v488, %v488
      %v525 = vunpack.c.l.b16 %v263
      %v526 = vunpack.c.l.b16 %v264
      %v527 = vunpack.c.l.b16 %v265
      %v528 = vunpack.c.l.b16 %v266
      %v529 = vunpack.c.l.b16 %v267
      %v530 = vunpack.c.l.b16 %v268
      %v531 = vunpack.c.l.b16 %v269
      %v532 = vunpack.c.l.b16 %v270
      %v533 = vunpack.c.l.b16 %v271
      %v534 = vunpack.c.l.b16 %v272
      %v535 = vunpack.c.l.b16 %v273
      %v536 = vunpack.c.l.b16 %v274
      %v537 = vunpack.c.l.b16 %v275
      %v538 = vunpack.c.l.b16 %v276
      %v539 = vunpack.c.l.b16 %v277
      %v540 = vunpack.c.l.b16 %v278
      %v541 = vunpack.c.l.b16 %v279
      %v542 = vunpack.c.l.b16 %v280
      %v543 = vunpack.c.l.b16 %v281
      %v544 = vunpack.c.l.b16 %v282
      %v545 = vunpack.c.l.b16 %v283
      %v546 = vunpack.c.l.b16 %v284
      %v547 = vunpack.c.l.b16 %v285
      %v548 = vunpack.c.l.b16 %v286
      %v549 = vunpack.c.l.b16 %v287
      %v550 = vunpack.c.l.b16 %v288
      %v551 = vunpack.c.l.b16 %v289
      %v552 = vunpack.c.l.b16 %v290
      %v553 = vunpack.c.l.b16 %v291
      %v554 = vunpack.c.l.b16 %v292
      %v555 = vunpack.c.l.b16 %v293
      %v556 = vunpack.c.l.b16 %v294
      %v557 = vpack.c.b16 %v526, %v525
      %v558 = vpack.c.b16 %v528, %v527
      %v559 = vpack.c.b16 %v530, %v529
      %v560 = vpack.c.b16 %v532, %v531
      %v561 = vpack.c.b16 %v534, %v533
      %v562 = vpack.c.b16 %v536, %v535
      %v563 = vpack.c.b16 %v538, %v537
      %v564 = vpack.c.b16 %v540, %v539
      %v565 = vpack.c.b16 %v542, %v541
      %v566 = vpack.c.b16 %v544, %v543
      %v567 = vpack.c.b16 %v546, %v545
      %v568 = vpack.c.b16 %v548, %v547
      %v569 = vpack.c.b16 %v550, %v549
      %v570 = vpack.c.b16 %v552, %v551
      %v571 = vpack.c.b16 %v554, %v553
      %v572 = vpack.c.b16 %v556, %v555
      %589 = vmatprep.subr.bf16.mxu0 0
      %590 = vmatpush1.bf16.msra.mxu0 %v557
      %591 = vmatprep.subr.bf16.mxu0 0
      %592 = vmatpush1.bf16.msra.mxu0 %v558
      %593 = vmatprep.subr.bf16.mxu0 0
      %594 = vmatpush1.bf16.msra.mxu0 %v559
      %595 = vmatprep.subr.bf16.mxu0 0
      %596 = vmatpush1.bf16.msra.mxu0 %v560
      %597 = vmatprep.subr.bf16.mxu0 0
      %598 = vmatpush1.bf16.msra.mxu0 %v561
      %599 = vmatprep.subr.bf16.mxu0 0
      %600 = vmatpush1.bf16.msra.mxu0 %v562
      %601 = vmatprep.subr.bf16.mxu0 0
      %602 = vmatpush1.bf16.msra.mxu0 %v563
      %603 = vmatprep.subr.bf16.mxu0 0
      %604 = vmatpush1.bf16.msra.mxu0 %v564
      %605 = vmatprep.subr.bf16.mxu0 0
      %606 = vmatpush1.bf16.msra.mxu0 %v565
      %607 = vmatprep.subr.bf16.mxu0 0
      %608 = vmatpush1.bf16.msra.mxu0 %v566
      %609 = vmatprep.subr.bf16.mxu0 0
      %610 = vmatpush1.bf16.msra.mxu0 %v567
      %611 = vmatprep.subr.bf16.mxu0 0
      %612 = vmatpush1.bf16.msra.mxu0 %v568
      %613 = vmatprep.subr.bf16.mxu0 0
      %614 = vmatpush1.bf16.msra.mxu0 %v569
      %615 = vmatprep.subr.bf16.mxu0 0
      %616 = vmatpush1.bf16.msra.mxu0 %v570
      %617 = vmatprep.subr.bf16.mxu0 0
      %618 = vmatpush1.bf16.msra.mxu0 %v571
      %619 = vmatprep.subr.bf16.mxu0 0
      %620 = vmatpush1.bf16.msra.mxu0 %v572
      %621 = vmatprep.mubr.bf16.mxu0 %v490
      %622 = vmatmul.mubr.bf16.gmra.mrb[0].mxu0 %v489
      %v623 = vpop.f32.mrb[0].mxu0
      %v624 = vadd.f32 %v481, %v623
      %v625 = vpop.f32.mrb[0].mxu0
      %v626 = vpop.f32.mrb[0].mxu0
      %v627 = vpop.f32.mrb[0].mxu0
      %628 = vdwg.mxu0
      %v629 = vld [vmem:[%s243] sm:$0x66]
      %s630 = scalar_lea.vmem %s247, 256
      %v631 = vld [vmem:[%s630] sm:$0xf]
      %v632 = vld [vmem:[%s630 + $0x4] sm:$0xf]
      %v633 = vld [vmem:[%s630 + $0x8] sm:$0xf]
      %v634 = vld [vmem:[%s630 + $0xc] sm:$0xf]
      %v635 = vld [vmem:[%s630 + $0x10] sm:$0xf]
      %v636 = vld [vmem:[%s630 + $0x14] sm:$0xf]
      %v637 = vld [vmem:[%s630 + $0x18] sm:$0xf]
      %v638 = vld [vmem:[%s630 + $0x1c] sm:$0xf]
      %v639 = vld [vmem:[%s630 + $0x20] sm:$0xf]
      %v640 = vld [vmem:[%s630 + $0x24] sm:$0xf]
      %v641 = vld [vmem:[%s630 + $0x28] sm:$0xf]
      %v642 = vld [vmem:[%s630 + $0x2c] sm:$0xf]
      %v643 = vld [vmem:[%s630 + $0x30] sm:$0xf]
      %v644 = vld [vmem:[%s630 + $0x34] sm:$0xf]
      %v645 = vld [vmem:[%s630 + $0x38] sm:$0xf]
      %v646 = vld [vmem:[%s630 + $0x3c] sm:$0xf]
      %v647 = vld [vmem:[%s630 + $0x40] sm:$0xf]
      %v648 = vld [vmem:[%s630 + $0x44] sm:$0xf]
      %v649 = vld [vmem:[%s630 + $0x48] sm:$0xf]
      %v650 = vld [vmem:[%s630 + $0x4c] sm:$0xf]
      %v651 = vld [vmem:[%s630 + $0x50] sm:$0xf]
      %v652 = vld [vmem:[%s630 + $0x54] sm:$0xf]
      %v653 = vld [vmem:[%s630 + $0x58] sm:$0xf]
      %v654 = vld [vmem:[%s630 + $0x5c] sm:$0xf]
      %v655 = vld [vmem:[%s630 + $0x60] sm:$0xf]
      %v656 = vld [vmem:[%s630 + $0x64] sm:$0xf]
      %v657 = vld [vmem:[%s630 + $0x68] sm:$0xf]
      %v658 = vld [vmem:[%s630 + $0x6c] sm:$0xf]
      %v659 = vld [vmem:[%s630 + $0x70] sm:$0xf]
      %v660 = vld [vmem:[%s630 + $0x74] sm:$0xf]
      %v661 = vld [vmem:[%s630 + $0x78] sm:$0xf]
      %v662 = vld [vmem:[%s630 + $0x7c] sm:$0xf]
      %v664 = vunpack.c.l.b16 %v629
      %v665 = vunpack.c.h.b16 %v629
      %v666 = vpack.c.b16 %v664, %v664
      %v667 = vpack.c.b16 %v665, %v665
      %v668 = vrot.slane %v666, 1
      %v669 = vrot.slane %v667, 1
      %v704 = vunpack.c.l.b16 %v631
      %v705 = vunpack.c.l.b16 %v632
      %v706 = vunpack.c.l.b16 %v633
      %v707 = vunpack.c.l.b16 %v634
      %v708 = vunpack.c.l.b16 %v635
      %v709 = vunpack.c.l.b16 %v636
      %v710 = vunpack.c.l.b16 %v637
      %v711 = vunpack.c.l.b16 %v638
      %v712 = vunpack.c.l.b16 %v639
      %v713 = vunpack.c.l.b16 %v640
      %v714 = vunpack.c.l.b16 %v641
      %v715 = vunpack.c.l.b16 %v642
      %v716 = vunpack.c.l.b16 %v643
      %v717 = vunpack.c.l.b16 %v644
      %v718 = vunpack.c.l.b16 %v645
      %v719 = vunpack.c.l.b16 %v646
      %v720 = vunpack.c.l.b16 %v647
      %v721 = vunpack.c.l.b16 %v648
      %v722 = vunpack.c.l.b16 %v649
      %v723 = vunpack.c.l.b16 %v650
      %v724 = vunpack.c.l.b16 %v651
      %v725 = vunpack.c.l.b16 %v652
      %v726 = vunpack.c.l.b16 %v653
      %v727 = vunpack.c.l.b16 %v654
      %v728 = vunpack.c.l.b16 %v655
      %v729 = vunpack.c.l.b16 %v656
      %v730 = vunpack.c.l.b16 %v657
      %v731 = vunpack.c.l.b16 %v658
      %v732 = vunpack.c.l.b16 %v659
      %v733 = vunpack.c.l.b16 %v660
      %v734 = vunpack.c.l.b16 %v661
      %v735 = vunpack.c.l.b16 %v662
      %v736 = vpack.c.b16 %v705, %v704
      %v737 = vpack.c.b16 %v707, %v706
      %v738 = vpack.c.b16 %v709, %v708
      %v739 = vpack.c.b16 %v711, %v710
      %v740 = vpack.c.b16 %v713, %v712
      %v741 = vpack.c.b16 %v715, %v714
      %v742 = vpack.c.b16 %v717, %v716
      %v743 = vpack.c.b16 %v719, %v718
      %v744 = vpack.c.b16 %v721, %v720
      %v745 = vpack.c.b16 %v723, %v722
      %v746 = vpack.c.b16 %v725, %v724
      %v747 = vpack.c.b16 %v727, %v726
      %v748 = vpack.c.b16 %v729, %v728
      %v749 = vpack.c.b16 %v731, %v730
      %v750 = vpack.c.b16 %v733, %v732
      %v751 = vpack.c.b16 %v735, %v734
      %768 = vmatprep.subr.bf16.mxu0 0
      %769 = vmatpush1.bf16.msra.mxu0 %v736
      %770 = vmatprep.subr.bf16.mxu0 0
      %771 = vmatpush1.bf16.msra.mxu0 %v737
      %772 = vmatprep.subr.bf16.mxu0 0
      %773 = vmatpush1.bf16.msra.mxu0 %v738
      %774 = vmatprep.subr.bf16.mxu0 0
      %775 = vmatpush1.bf16.msra.mxu0 %v739
      %776 = vmatprep.subr.bf16.mxu0 0
      %777 = vmatpush1.bf16.msra.mxu0 %v740
      %778 = vmatprep.subr.bf16.mxu0 0
      %779 = vmatpush1.bf16.msra.mxu0 %v741
      %780 = vmatprep.subr.bf16.mxu0 0
      %781 = vmatpush1.bf16.msra.mxu0 %v742
      %782 = vmatprep.subr.bf16.mxu0 0
      %783 = vmatpush1.bf16.msra.mxu0 %v743
      %784 = vmatprep.subr.bf16.mxu0 0
      %785 = vmatpush1.bf16.msra.mxu0 %v744
      %786 = vmatprep.subr.bf16.mxu0 0
      %787 = vmatpush1.bf16.msra.mxu0 %v745
      %788 = vmatprep.subr.bf16.mxu0 0
      %789 = vmatpush1.bf16.msra.mxu0 %v746
      %790 = vmatprep.subr.bf16.mxu0 0
      %791 = vmatpush1.bf16.msra.mxu0 %v747
      %792 = vmatprep.subr.bf16.mxu0 0
      %793 = vmatpush1.bf16.msra.mxu0 %v748
      %794 = vmatprep.subr.bf16.mxu0 0
      %795 = vmatpush1.bf16.msra.mxu0 %v749
      %796 = vmatprep.subr.bf16.mxu0 0
      %797 = vmatpush1.bf16.msra.mxu0 %v750
      %798 = vmatprep.subr.bf16.mxu0 0
      %799 = vmatpush1.bf16.msra.mxu0 %v751
      %800 = vmatprep.mubr.bf16.mxu0 %v669
      %801 = vmatmul.mubr.bf16.gmra.mrb[0].mxu0 %v668
      %v802 = vpop.f32.mrb[0].mxu0
      %v803 = vadd.f32 0.0, %v802
      %v804 = vpop.f32.mrb[0].mxu0
      %v805 = vpop.f32.mrb[0].mxu0
      %v806 = vpop.f32.mrb[0].mxu0
      %807 = vdwg.mxu0
      %v808 = vadd.f32 %v624, %v803
      %v809 = vld [vmem:[%s243] sm:$0xee]
      %s810 = scalar_lea.vmem %s247, 384
      %v811 = vld [vmem:[%s810] sm:$0xf]
      %v812 = vld [vmem:[%s810 + $0x4] sm:$0xf]
      %v813 = vld [vmem:[%s810 + $0x8] sm:$0xf]
      %v814 = vld [vmem:[%s810 + $0xc] sm:$0xf]
      %v815 = vld [vmem:[%s810 + $0x10] sm:$0xf]
      %v816 = vld [vmem:[%s810 + $0x14] sm:$0xf]
      %v817 = vld [vmem:[%s810 + $0x18] sm:$0xf]
      %v818 = vld [vmem:[%s810 + $0x1c] sm:$0xf]
      %v819 = vld [vmem:[%s810 + $0x20] sm:$0xf]
      %v820 = vld [vmem:[%s810 + $0x24] sm:$0xf]
      %v821 = vld [vmem:[%s810 + $0x28] sm:$0xf]
      %v822 = vld [vmem:[%s810 + $0x2c] sm:$0xf]
      %v823 = vld [vmem:[%s810 + $0x30] sm:$0xf]
      %v824 = vld [vmem:[%s810 + $0x34] sm:$0xf]
      %v825 = vld [vmem:[%s810 + $0x38] sm:$0xf]
      %v826 = vld [vmem:[%s810 + $0x3c] sm:$0xf]
      %v827 = vld [vmem:[%s810 + $0x40] sm:$0xf]
      %v828 = vld [vmem:[%s810 + $0x44] sm:$0xf]
      %v829 = vld [vmem:[%s810 + $0x48] sm:$0xf]
      %v830 = vld [vmem:[%s810 + $0x4c] sm:$0xf]
      %v831 = vld [vmem:[%s810 + $0x50] sm:$0xf]
      %v832 = vld [vmem:[%s810 + $0x54] sm:$0xf]
      %v833 = vld [vmem:[%s810 + $0x58] sm:$0xf]
      %v834 = vld [vmem:[%s810 + $0x5c] sm:$0xf]
      %v835 = vld [vmem:[%s810 + $0x60] sm:$0xf]
      %v836 = vld [vmem:[%s810 + $0x64] sm:$0xf]
      %v837 = vld [vmem:[%s810 + $0x68] sm:$0xf]
      %v838 = vld [vmem:[%s810 + $0x6c] sm:$0xf]
      %v839 = vld [vmem:[%s810 + $0x70] sm:$0xf]
      %v840 = vld [vmem:[%s810 + $0x74] sm:$0xf]
      %v841 = vld [vmem:[%s810 + $0x78] sm:$0xf]
      %v842 = vld [vmem:[%s810 + $0x7c] sm:$0xf]
      %v844 = vunpack.c.l.b16 %v809
      %v845 = vunpack.c.h.b16 %v809
      %v846 = vpack.c.b16 %v844, %v844
      %v847 = vpack.c.b16 %v845, %v845
      %v849 = vshrl.u32 %v846, 16
      %v851 = vrot.slane %v849, 1
      %v852 = vshll.u32 %v846, 16
      %v854 = vrot.slane %v852, 2
      %v855 = vor.u32 %v851, %v854
      %v857 = vshrl.u32 %v847, 16
      %v859 = vrot.slane %v857, 1
      %v860 = vshll.u32 %v847, 16
      %v862 = vrot.slane %v860, 2
      %v863 = vor.u32 %v859, %v862
      %v898 = vunpack.c.l.b16 %v811
      %v899 = vunpack.c.l.b16 %v812
      %v900 = vunpack.c.l.b16 %v813
      %v901 = vunpack.c.l.b16 %v814
      %v902 = vunpack.c.l.b16 %v815
      %v903 = vunpack.c.l.b16 %v816
      %v904 = vunpack.c.l.b16 %v817
      %v905 = vunpack.c.l.b16 %v818
      %v906 = vunpack.c.l.b16 %v819
      %v907 = vunpack.c.l.b16 %v820
      %v908 = vunpack.c.l.b16 %v821
      %v909 = vunpack.c.l.b16 %v822
      %v910 = vunpack.c.l.b16 %v823
      %v911 = vunpack.c.l.b16 %v824
      %v912 = vunpack.c.l.b16 %v825
      %v913 = vunpack.c.l.b16 %v826
      %v914 = vunpack.c.l.b16 %v827
      %v915 = vunpack.c.l.b16 %v828
      %v916 = vunpack.c.l.b16 %v829
      %v917 = vunpack.c.l.b16 %v830
      %v918 = vunpack.c.l.b16 %v831
      %v919 = vunpack.c.l.b16 %v832
      %v920 = vunpack.c.l.b16 %v833
      %v921 = vunpack.c.l.b16 %v834
      %v922 = vunpack.c.l.b16 %v835
      %v923 = vunpack.c.l.b16 %v836
      %v924 = vunpack.c.l.b16 %v837
      %v925 = vunpack.c.l.b16 %v838
      %v926 = vunpack.c.l.b16 %v839
      %v927 = vunpack.c.l.b16 %v840
      %v928 = vunpack.c.l.b16 %v841
      %v929 = vunpack.c.l.b16 %v842
      %v930 = vpack.c.b16 %v899, %v898
      %v931 = vpack.c.b16 %v901, %v900
      %v932 = vpack.c.b16 %v903, %v902
      %v933 = vpack.c.b16 %v905, %v904
      %v934 = vpack.c.b16 %v907, %v906
      %v935 = vpack.c.b16 %v909, %v908
      %v936 = vpack.c.b16 %v911, %v910
      %v937 = vpack.c.b16 %v913, %v912
      %v938 = vpack.c.b16 %v915, %v914
      %v939 = vpack.c.b16 %v917, %v916
      %v940 = vpack.c.b16 %v919, %v918
      %v941 = vpack.c.b16 %v921, %v920
      %v942 = vpack.c.b16 %v923, %v922
      %v943 = vpack.c.b16 %v925, %v924
      %v944 = vpack.c.b16 %v927, %v926
      %v945 = vpack.c.b16 %v929, %v928
      %962 = vmatprep.subr.bf16.mxu0 0
      %963 = vmatpush1.bf16.msra.mxu0 %v930
      %964 = vmatprep.subr.bf16.mxu0 0
      %965 = vmatpush1.bf16.msra.mxu0 %v931
      %966 = vmatprep.subr.bf16.mxu0 0
      %967 = vmatpush1.bf16.msra.mxu0 %v932
      %968 = vmatprep.subr.bf16.mxu0 0
      %969 = vmatpush1.bf16.msra.mxu0 %v933
      %970 = vmatprep.subr.bf16.mxu0 0
      %971 = vmatpush1.bf16.msra.mxu0 %v934
      %972 = vmatprep.subr.bf16.mxu0 0
      %973 = vmatpush1.bf16.msra.mxu0 %v935
      %974 = vmatprep.subr.bf16.mxu0 0
      %975 = vmatpush1.bf16.msra.mxu0 %v936
      %976 = vmatprep.subr.bf16.mxu0 0
      %977 = vmatpush1.bf16.msra.mxu0 %v937
      %978 = vmatprep.subr.bf16.mxu0 0
      %979 = vmatpush1.bf16.msra.mxu0 %v938
      %980 = vmatprep.subr.bf16.mxu0 0
      %981 = vmatpush1.bf16.msra.mxu0 %v939
      %982 = vmatprep.subr.bf16.mxu0 0
      %983 = vmatpush1.bf16.msra.mxu0 %v940
      %984 = vmatprep.subr.bf16.mxu0 0
      %985 = vmatpush1.bf16.msra.mxu0 %v941
      %986 = vmatprep.subr.bf16.mxu0 0
      %987 = vmatpush1.bf16.msra.mxu0 %v942
      %988 = vmatprep.subr.bf16.mxu0 0
      %989 = vmatpush1.bf16.msra.mxu0 %v943
      %990 = vmatprep.subr.bf16.mxu0 0
      %991 = vmatpush1.bf16.msra.mxu0 %v944
      %992 = vmatprep.subr.bf16.mxu0 0
      %993 = vmatpush1.bf16.msra.mxu0 %v945
      %994 = vmatprep.mubr.bf16.mxu0 %v863
      %995 = vmatmul.mubr.bf16.gmra.mrb[0].mxu0 %v855
      %v996 = vpop.f32.mrb[0].mxu0
      %v997 = vadd.f32 0.0, %v996
      %v998 = vpop.f32.mrb[0].mxu0
      %v999 = vpop.f32.mrb[0].mxu0
      %v1000 = vpop.f32.mrb[0].mxu0
      %1001 = vdwg.mxu0
      %v1002 = vadd.f32 %v808, %v997
      %v1003 = vld [vmem:[%s243] sm:$0xcc]
      %s1004 = scalar_lea.vmem %s247, 512
      %v1005 = vld [vmem:[%s1004] sm:$0xf]
      %v1006 = vld [vmem:[%s1004 + $0x4] sm:$0xf]
      %v1007 = vld [vmem:[%s1004 + $0x8] sm:$0xf]
      %v1008 = vld [vmem:[%s1004 + $0xc] sm:$0xf]
      %v1009 = vld [vmem:[%s1004 + $0x10] sm:$0xf]
      %v1010 = vld [vmem:[%s1004 + $0x14] sm:$0xf]
      %v1011 = vld [vmem:[%s1004 + $0x18] sm:$0xf]
      %v1012 = vld [vmem:[%s1004 + $0x1c] sm:$0xf]
      %v1013 = vld [vmem:[%s1004 + $0x20] sm:$0xf]
      %v1014 = vld [vmem:[%s1004 + $0x24] sm:$0xf]
      %v1015 = vld [vmem:[%s1004 + $0x28] sm:$0xf]
      %v1016 = vld [vmem:[%s1004 + $0x2c] sm:$0xf]
      %v1017 = vld [vmem:[%s1004 + $0x30] sm:$0xf]
      %v1018 = vld [vmem:[%s1004 + $0x34] sm:$0xf]
      %v1019 = vld [vmem:[%s1004 + $0x38] sm:$0xf]
      %v1020 = vld [vmem:[%s1004 + $0x3c] sm:$0xf]
      %v1021 = vld [vmem:[%s1004 + $0x40] sm:$0xf]
      %v1022 = vld [vmem:[%s1004 + $0x44] sm:$0xf]
      %v1023 = vld [vmem:[%s1004 + $0x48] sm:$0xf]
      %v1024 = vld [vmem:[%s1004 + $0x4c] sm:$0xf]
      %v1025 = vld [vmem:[%s1004 + $0x50] sm:$0xf]
      %v1026 = vld [vmem:[%s1004 + $0x54] sm:$0xf]
      %v1027 = vld [vmem:[%s1004 + $0x58] sm:$0xf]
      %v1028 = vld [vmem:[%s1004 + $0x5c] sm:$0xf]
      %v1029 = vld [vmem:[%s1004 + $0x60] sm:$0xf]
      %v1030 = vld [vmem:[%s1004 + $0x64] sm:$0xf]
      %v1031 = vld [vmem:[%s1004 + $0x68] sm:$0xf]
      %v1032 = vld [vmem:[%s1004 + $0x6c] sm:$0xf]
      %v1033 = vld [vmem:[%s1004 + $0x70] sm:$0xf]
      %v1034 = vld [vmem:[%s1004 + $0x74] sm:$0xf]
      %v1035 = vld [vmem:[%s1004 + $0x78] sm:$0xf]
      %v1036 = vld [vmem:[%s1004 + $0x7c] sm:$0xf]
      %v1038 = vunpack.c.l.b16 %v1003
      %v1039 = vunpack.c.h.b16 %v1003
      %v1040 = vpack.c.b16 %v1038, %v1038
      %v1041 = vpack.c.b16 %v1039, %v1039
      %v1042 = vrot.slane %v1040, 2
      %v1043 = vrot.slane %v1041, 2
      %v1078 = vunpack.c.l.b16 %v1005
      %v1079 = vunpack.c.l.b16 %v1006
      %v1080 = vunpack.c.l.b16 %v1007
      %v1081 = vunpack.c.l.b16 %v1008
      %v1082 = vunpack.c.l.b16 %v1009
      %v1083 = vunpack.c.l.b16 %v1010
      %v1084 = vunpack.c.l.b16 %v1011
      %v1085 = vunpack.c.l.b16 %v1012
      %v1086 = vunpack.c.l.b16 %v1013
      %v1087 = vunpack.c.l.b16 %v1014
      %v1088 = vunpack.c.l.b16 %v1015
      %v1089 = vunpack.c.l.b16 %v1016
      %v1090 = vunpack.c.l.b16 %v1017
      %v1091 = vunpack.c.l.b16 %v1018
      %v1092 = vunpack.c.l.b16 %v1019
      %v1093 = vunpack.c.l.b16 %v1020
      %v1094 = vunpack.c.l.b16 %v1021
      %v1095 = vunpack.c.l.b16 %v1022
      %v1096 = vunpack.c.l.b16 %v1023
      %v1097 = vunpack.c.l.b16 %v1024
      %v1098 = vunpack.c.l.b16 %v1025
      %v1099 = vunpack.c.l.b16 %v1026
      %v1100 = vunpack.c.l.b16 %v1027
      %v1101 = vunpack.c.l.b16 %v1028
      %v1102 = vunpack.c.l.b16 %v1029
      %v1103 = vunpack.c.l.b16 %v1030
      %v1104 = vunpack.c.l.b16 %v1031
      %v1105 = vunpack.c.l.b16 %v1032
      %v1106 = vunpack.c.l.b16 %v1033
      %v1107 = vunpack.c.l.b16 %v1034
      %v1108 = vunpack.c.l.b16 %v1035
      %v1109 = vunpack.c.l.b16 %v1036
      %v1110 = vpack.c.b16 %v1079, %v1078
      %v1111 = vpack.c.b16 %v1081, %v1080
      %v1112 = vpack.c.b16 %v1083, %v1082
      %v1113 = vpack.c.b16 %v1085, %v1084
      %v1114 = vpack.c.b16 %v1087, %v1086
      %v1115 = vpack.c.b16 %v1089, %v1088
      %v1116 = vpack.c.b16 %v1091, %v1090
      %v1117 = vpack.c.b16 %v1093, %v1092
      %v1118 = vpack.c.b16 %v1095, %v1094
      %v1119 = vpack.c.b16 %v1097, %v1096
      %v1120 = vpack.c.b16 %v1099, %v1098
      %v1121 = vpack.c.b16 %v1101, %v1100
      %v1122 = vpack.c.b16 %v1103, %v1102
      %v1123 = vpack.c.b16 %v1105, %v1104
      %v1124 = vpack.c.b16 %v1107, %v1106
      %v1125 = vpack.c.b16 %v1109, %v1108
      %1142 = vmatprep.subr.bf16.mxu0 0
      %1143 = vmatpush1.bf16.msra.mxu0 %v1110
      %1144 = vmatprep.subr.bf16.mxu0 0
      %1145 = vmatpush1.bf16.msra.mxu0 %v1111
      %1146 = vmatprep.subr.bf16.mxu0 0
      %1147 = vmatpush1.bf16.msra.mxu0 %v1112
      %1148 = vmatprep.subr.bf16.mxu0 0
      %1149 = vmatpush1.bf16.msra.mxu0 %v1113
      %1150 = vmatprep.subr.bf16.mxu0 0
      %1151 = vmatpush1.bf16.msra.mxu0 %v1114
      %1152 = vmatprep.subr.bf16.mxu0 0
      %1153 = vmatpush1.bf16.msra.mxu0 %v1115
      %1154 = vmatprep.subr.bf16.mxu0 0
      %1155 = vmatpush1.bf16.msra.mxu0 %v1116
      %1156 = vmatprep.subr.bf16.mxu0 0
      %1157 = vmatpush1.bf16.msra.mxu0 %v1117
      %1158 = vmatprep.subr.bf16.mxu0 0
      %1159 = vmatpush1.bf16.msra.mxu0 %v1118
      %1160 = vmatprep.subr.bf16.mxu0 0
      %1161 = vmatpush1.bf16.msra.mxu0 %v1119
      %1162 = vmatprep.subr.bf16.mxu0 0
      %1163 = vmatpush1.bf16.msra.mxu0 %v1120
      %1164 = vmatprep.subr.bf16.mxu0 0
      %1165 = vmatpush1.bf16.msra.mxu0 %v1121
      %1166 = vmatprep.subr.bf16.mxu0 0
      %1167 = vmatpush1.bf16.msra.mxu0 %v1122
      %1168 = vmatprep.subr.bf16.mxu0 0
      %1169 = vmatpush1.bf16.msra.mxu0 %v1123
      %1170 = vmatprep.subr.bf16.mxu0 0
      %1171 = vmatpush1.bf16.msra.mxu0 %v1124
      %1172 = vmatprep.subr.bf16.mxu0 0
      %1173 = vmatpush1.bf16.msra.mxu0 %v1125
      %1174 = vmatprep.mubr.bf16.mxu0 %v1043
      %1175 = vmatmul.mubr.bf16.gmra.mrb[0].mxu0 %v1042
      %v1176 = vpop.f32.mrb[0].mxu0
      %v1177 = vadd.f32 0.0, %v1176
      %v1178 = vpop.f32.mrb[0].mxu0
      %v1179 = vpop.f32.mrb[0].mxu0
      %v1180 = vpop.f32.mrb[0].mxu0
      %1181 = vdwg.mxu0
      %v1182 = vadd.f32 %v1002, %v1177
      %v1183 = vld [vmem:[%s243] sm:$0xcc]
      %v1184 = vld [vmem:[%s243 + $0x8] sm:$0x11]
      %s1185 = scalar_lea.vmem %s247, 640
      %v1186 = vld [vmem:[%s1185] sm:$0xf]
      %v1187 = vld [vmem:[%s1185 + $0x4] sm:$0xf]
      %v1188 = vld [vmem:[%s1185 + $0x8] sm:$0xf]
      %v1189 = vld [vmem:[%s1185 + $0xc] sm:$0xf]
      %v1190 = vld [vmem:[%s1185 + $0x10] sm:$0xf]
      %v1191 = vld [vmem:[%s1185 + $0x14] sm:$0xf]
      %v1192 = vld [vmem:[%s1185 + $0x18] sm:$0xf]
      %v1193 = vld [vmem:[%s1185 + $0x1c] sm:$0xf]
      %v1194 = vld [vmem:[%s1185 + $0x20] sm:$0xf]
      %v1195 = vld [vmem:[%s1185 + $0x24] sm:$0xf]
      %v1196 = vld [vmem:[%s1185 + $0x28] sm:$0xf]
      %v1197 = vld [vmem:[%s1185 + $0x2c] sm:$0xf]
      %v1198 = vld [vmem:[%s1185 + $0x30] sm:$0xf]
      %v1199 = vld [vmem:[%s1185 + $0x34] sm:$0xf]
      %v1200 = vld [vmem:[%s1185 + $0x38] sm:$0xf]
      %v1201 = vld [vmem:[%s1185 + $0x3c] sm:$0xf]
      %v1202 = vld [vmem:[%s1185 + $0x40] sm:$0xf]
      %v1203 = vld [vmem:[%s1185 + $0x44] sm:$0xf]
      %v1204 = vld [vmem:[%s1185 + $0x48] sm:$0xf]
      %v1205 = vld [vmem:[%s1185 + $0x4c] sm:$0xf]
      %v1206 = vld [vmem:[%s1185 + $0x50] sm:$0xf]
      %v1207 = vld [vmem:[%s1185 + $0x54] sm:$0xf]
      %v1208 = vld [vmem:[%s1185 + $0x58] sm:$0xf]
      %v1209 = vld [vmem:[%s1185 + $0x5c] sm:$0xf]
      %v1210 = vld [vmem:[%s1185 + $0x60] sm:$0xf]
      %v1211 = vld [vmem:[%s1185 + $0x64] sm:$0xf]
      %v1212 = vld [vmem:[%s1185 + $0x68] sm:$0xf]
      %v1213 = vld [vmem:[%s1185 + $0x6c] sm:$0xf]
      %v1214 = vld [vmem:[%s1185 + $0x70] sm:$0xf]
      %v1215 = vld [vmem:[%s1185 + $0x74] sm:$0xf]
      %v1216 = vld [vmem:[%s1185 + $0x78] sm:$0xf]
      %v1217 = vld [vmem:[%s1185 + $0x7c] sm:$0xf]
      %v1220 = vunpack.c.l.b16 %v1183
      %v1221 = vunpack.c.h.b16 %v1183
      %v1222 = vunpack.c.l.b16 %v1184
      %v1223 = vunpack.c.h.b16 %v1184
      %v1224 = vpack.c.b16 %v1222, %v1220
      %v1225 = vpack.c.b16 %v1223, %v1221
      %v1227 = vshrl.u32 %v1224, 16
      %v1229 = vrot.slane %v1227, 2
      %v1230 = vshll.u32 %v1224, 16
      %v1232 = vrot.slane %v1230, 3
      %v1233 = vor.u32 %v1229, %v1232
      %v1235 = vshrl.u32 %v1225, 16
      %v1237 = vrot.slane %v1235, 2
      %v1238 = vshll.u32 %v1225, 16
      %v1240 = vrot.slane %v1238, 3
      %v1241 = vor.u32 %v1237, %v1240
      %v1276 = vunpack.c.l.b16 %v1186
      %v1277 = vunpack.c.l.b16 %v1187
      %v1278 = vunpack.c.l.b16 %v1188
      %v1279 = vunpack.c.l.b16 %v1189
      %v1280 = vunpack.c.l.b16 %v1190
      %v1281 = vunpack.c.l.b16 %v1191
      %v1282 = vunpack.c.l.b16 %v1192
      %v1283 = vunpack.c.l.b16 %v1193
      %v1284 = vunpack.c.l.b16 %v1194
      %v1285 = vunpack.c.l.b16 %v1195
      %v1286 = vunpack.c.l.b16 %v1196
      %v1287 = vunpack.c.l.b16 %v1197
      %v1288 = vunpack.c.l.b16 %v1198
      %v1289 = vunpack.c.l.b16 %v1199
      %v1290 = vunpack.c.l.b16 %v1200
      %v1291 = vunpack.c.l.b16 %v1201
      %v1292 = vunpack.c.l.b16 %v1202
      %v1293 = vunpack.c.l.b16 %v1203
      %v1294 = vunpack.c.l.b16 %v1204
      %v1295 = vunpack.c.l.b16 %v1205
      %v1296 = vunpack.c.l.b16 %v1206
      %v1297 = vunpack.c.l.b16 %v1207
      %v1298 = vunpack.c.l.b16 %v1208
      %v1299 = vunpack.c.l.b16 %v1209
      %v1300 = vunpack.c.l.b16 %v1210
      %v1301 = vunpack.c.l.b16 %v1211
      %v1302 = vunpack.c.l.b16 %v1212
      %v1303 = vunpack.c.l.b16 %v1213
      %v1304 = vunpack.c.l.b16 %v1214
      %v1305 = vunpack.c.l.b16 %v1215
      %v1306 = vunpack.c.l.b16 %v1216
      %v1307 = vunpack.c.l.b16 %v1217
      %v1308 = vpack.c.b16 %v1277, %v1276
      %v1309 = vpack.c.b16 %v1279, %v1278
      %v1310 = vpack.c.b16 %v1281, %v1280
      %v1311 = vpack.c.b16 %v1283, %v1282
      %v1312 = vpack.c.b16 %v1285, %v1284
      %v1313 = vpack.c.b16 %v1287, %v1286
      %v1314 = vpack.c.b16 %v1289, %v1288
      %v1315 = vpack.c.b16 %v1291, %v1290
      %v1316 = vpack.c.b16 %v1293, %v1292
      %v1317 = vpack.c.b16 %v1295, %v1294
      %v1318 = vpack.c.b16 %v1297, %v1296
      %v1319 = vpack.c.b16 %v1299, %v1298
      %v1320 = vpack.c.b16 %v1301, %v1300
      %v1321 = vpack.c.b16 %v1303, %v1302
      %v1322 = vpack.c.b16 %v1305, %v1304
      %v1323 = vpack.c.b16 %v1307, %v1306
      %1340 = vmatprep.subr.bf16.mxu0 0
      %1341 = vmatpush1.bf16.msra.mxu0 %v1308
      %1342 = vmatprep.subr.bf16.mxu0 0
      %1343 = vmatpush1.bf16.msra.mxu0 %v1309
      %1344 = vmatprep.subr.bf16.mxu0 0
      %1345 = vmatpush1.bf16.msra.mxu0 %v1310
      %1346 = vmatprep.subr.bf16.mxu0 0
      %1347 = vmatpush1.bf16.msra.mxu0 %v1311
      %1348 = vmatprep.subr.bf16.mxu0 0
      %1349 = vmatpush1.bf16.msra.mxu0 %v1312
      %1350 = vmatprep.subr.bf16.mxu0 0
      %1351 = vmatpush1.bf16.msra.mxu0 %v1313
      %1352 = vmatprep.subr.bf16.mxu0 0
      %1353 = vmatpush1.bf16.msra.mxu0 %v1314
      %1354 = vmatprep.subr.bf16.mxu0 0
      %1355 = vmatpush1.bf16.msra.mxu0 %v1315
      %1356 = vmatprep.subr.bf16.mxu0 0
      %1357 = vmatpush1.bf16.msra.mxu0 %v1316
      %1358 = vmatprep.subr.bf16.mxu0 0
      %1359 = vmatpush1.bf16.msra.mxu0 %v1317
      %1360 = vmatprep.subr.bf16.mxu0 0
      %1361 = vmatpush1.bf16.msra.mxu0 %v1318
      %1362 = vmatprep.subr.bf16.mxu0 0
      %1363 = vmatpush1.bf16.msra.mxu0 %v1319
      %1364 = vmatprep.subr.bf16.mxu0 0
      %1365 = vmatpush1.bf16.msra.mxu0 %v1320
      %1366 = vmatprep.subr.bf16.mxu0 0
      %1367 = vmatpush1.bf16.msra.mxu0 %v1321
      %1368 = vmatprep.subr.bf16.mxu0 0
      %1369 = vmatpush1.bf16.msra.mxu0 %v1322
      %1370 = vmatprep.subr.bf16.mxu0 0
      %1371 = vmatpush1.bf16.msra.mxu0 %v1323
      %1372 = vmatprep.mubr.bf16.mxu0 %v1241
      %1373 = vmatmul.mubr.bf16.gmra.mrb[0].mxu0 %v1233
      %v1374 = vpop.f32.mrb[0].mxu0
      %v1375 = vadd.f32 0.0, %v1374
      %v1376 = vpop.f32.mrb[0].mxu0
      %v1377 = vpop.f32.mrb[0].mxu0
      %v1378 = vpop.f32.mrb[0].mxu0
      %1379 = vdwg.mxu0
      %v1380 = vadd.f32 %v1182, %v1375
      %v1381 = vld [vmem:[%s243] sm:$0x88]
      %s1382 = scalar_lea.vmem %s247, 768
      %v1383 = vld [vmem:[%s1382] sm:$0xf]
      %v1384 = vld [vmem:[%s1382 + $0x4] sm:$0xf]
      %v1385 = vld [vmem:[%s1382 + $0x8] sm:$0xf]
      %v1386 = vld [vmem:[%s1382 + $0xc] sm:$0xf]
      %v1387 = vld [vmem:[%s1382 + $0x10] sm:$0xf]
      %v1388 = vld [vmem:[%s1382 + $0x14] sm:$0xf]
      %v1389 = vld [vmem:[%s1382 + $0x18] sm:$0xf]
      %v1390 = vld [vmem:[%s1382 + $0x1c] sm:$0xf]
      %v1391 = vld [vmem:[%s1382 + $0x20] sm:$0xf]
      %v1392 = vld [vmem:[%s1382 + $0x24] sm:$0xf]
      %v1393 = vld [vmem:[%s1382 + $0x28] sm:$0xf]
      %v1394 = vld [vmem:[%s1382 + $0x2c] sm:$0xf]
      %v1395 = vld [vmem:[%s1382 + $0x30] sm:$0xf]
      %v1396 = vld [vmem:[%s1382 + $0x34] sm:$0xf]
      %v1397 = vld [vmem:[%s1382 + $0x38] sm:$0xf]
      %v1398 = vld [vmem:[%s1382 + $0x3c] sm:$0xf]
      %v1399 = vld [vmem:[%s1382 + $0x40] sm:$0xf]
      %v1400 = vld [vmem:[%s1382 + $0x44] sm:$0xf]
      %v1401 = vld [vmem:[%s1382 + $0x48] sm:$0xf]
      %v1402 = vld [vmem:[%s1382 + $0x4c] sm:$0xf]
      %v1403 = vld [vmem:[%s1382 + $0x50] sm:$0xf]
      %v1404 = vld [vmem:[%s1382 + $0x54] sm:$0xf]
      %v1405 = vld [vmem:[%s1382 + $0x58] sm:$0xf]
      %v1406 = vld [vmem:[%s1382 + $0x5c] sm:$0xf]
      %v1407 = vld [vmem:[%s1382 + $0x60] sm:$0xf]
      %v1408 = vld [vmem:[%s1382 + $0x64] sm:$0xf]
      %v1409 = vld [vmem:[%s1382 + $0x68] sm:$0xf]
      %v1410 = vld [vmem:[%s1382 + $0x6c] sm:$0xf]
      %v1411 = vld [vmem:[%s1382 + $0x70] sm:$0xf]
      %v1412 = vld [vmem:[%s1382 + $0x74] sm:$0xf]
      %v1413 = vld [vmem:[%s1382 + $0x78] sm:$0xf]
      %v1414 = vld [vmem:[%s1382 + $0x7c] sm:$0xf]
      %v1416 = vunpack.c.l.b16 %v1381
      %v1417 = vunpack.c.h.b16 %v1381
      %v1418 = vpack.c.b16 %v1222, %v1416
      %v1419 = vpack.c.b16 %v1223, %v1417
      %v1420 = vrot.slane %v1418, 3
      %v1421 = vrot.slane %v1419, 3
      %v1456 = vunpack.c.l.b16 %v1383
      %v1457 = vunpack.c.l.b16 %v1384
      %v1458 = vunpack.c.l.b16 %v1385
      %v1459 = vunpack.c.l.b16 %v1386
      %v1460 = vunpack.c.l.b16 %v1387
      %v1461 = vunpack.c.l.b16 %v1388
      %v1462 = vunpack.c.l.b16 %v1389
      %v1463 = vunpack.c.l.b16 %v1390
      %v1464 = vunpack.c.l.b16 %v1391
      %v1465 = vunpack.c.l.b16 %v1392
      %v1466 = vunpack.c.l.b16 %v1393
      %v1467 = vunpack.c.l.b16 %v1394
      %v1468 = vunpack.c.l.b16 %v1395
      %v1469 = vunpack.c.l.b16 %v1396
      %v1470 = vunpack.c.l.b16 %v1397
      %v1471 = vunpack.c.l.b16 %v1398
      %v1472 = vunpack.c.l.b16 %v1399
      %v1473 = vunpack.c.l.b16 %v1400
      %v1474 = vunpack.c.l.b16 %v1401
      %v1475 = vunpack.c.l.b16 %v1402
      %v1476 = vunpack.c.l.b16 %v1403
      %v1477 = vunpack.c.l.b16 %v1404
      %v1478 = vunpack.c.l.b16 %v1405
      %v1479 = vunpack.c.l.b16 %v1406
      %v1480 = vunpack.c.l.b16 %v1407
      %v1481 = vunpack.c.l.b16 %v1408
      %v1482 = vunpack.c.l.b16 %v1409
      %v1483 = vunpack.c.l.b16 %v1410
      %v1484 = vunpack.c.l.b16 %v1411
      %v1485 = vunpack.c.l.b16 %v1412
      %v1486 = vunpack.c.l.b16 %v1413
      %v1487 = vunpack.c.l.b16 %v1414
      %v1488 = vpack.c.b16 %v1457, %v1456
      %v1489 = vpack.c.b16 %v1459, %v1458
      %v1490 = vpack.c.b16 %v1461, %v1460
      %v1491 = vpack.c.b16 %v1463, %v1462
      %v1492 = vpack.c.b16 %v1465, %v1464
      %v1493 = vpack.c.b16 %v1467, %v1466
      %v1494 = vpack.c.b16 %v1469, %v1468
      %v1495 = vpack.c.b16 %v1471, %v1470
      %v1496 = vpack.c.b16 %v1473, %v1472
      %v1497 = vpack.c.b16 %v1475, %v1474
      %v1498 = vpack.c.b16 %v1477, %v1476
      %v1499 = vpack.c.b16 %v1479, %v1478
      %v1500 = vpack.c.b16 %v1481, %v1480
      %v1501 = vpack.c.b16 %v1483, %v1482
      %v1502 = vpack.c.b16 %v1485, %v1484
      %v1503 = vpack.c.b16 %v1487, %v1486
      %1520 = vmatprep.subr.bf16.mxu0 0
      %1521 = vmatpush1.bf16.msra.mxu0 %v1488
      %1522 = vmatprep.subr.bf16.mxu0 0
      %1523 = vmatpush1.bf16.msra.mxu0 %v1489
      %1524 = vmatprep.subr.bf16.mxu0 0
      %1525 = vmatpush1.bf16.msra.mxu0 %v1490
      %1526 = vmatprep.subr.bf16.mxu0 0
      %1527 = vmatpush1.bf16.msra.mxu0 %v1491
      %1528 = vmatprep.subr.bf16.mxu0 0
      %1529 = vmatpush1.bf16.msra.mxu0 %v1492
      %1530 = vmatprep.subr.bf16.mxu0 0
      %1531 = vmatpush1.bf16.msra.mxu0 %v1493
      %1532 = vmatprep.subr.bf16.mxu0 0
      %1533 = vmatpush1.bf16.msra.mxu0 %v1494
      %1534 = vmatprep.subr.bf16.mxu0 0
      %1535 = vmatpush1.bf16.msra.mxu0 %v1495
      %1536 = vmatprep.subr.bf16.mxu0 0
      %1537 = vmatpush1.bf16.msra.mxu0 %v1496
      %1538 = vmatprep.subr.bf16.mxu0 0
      %1539 = vmatpush1.bf16.msra.mxu0 %v1497
      %1540 = vmatprep.subr.bf16.mxu0 0
      %1541 = vmatpush1.bf16.msra.mxu0 %v1498
      %1542 = vmatprep.subr.bf16.mxu0 0
      %1543 = vmatpush1.bf16.msra.mxu0 %v1499
      %1544 = vmatprep.subr.bf16.mxu0 0
      %1545 = vmatpush1.bf16.msra.mxu0 %v1500
      %1546 = vmatprep.subr.bf16.mxu0 0
      %1547 = vmatpush1.bf16.msra.mxu0 %v1501
      %1548 = vmatprep.subr.bf16.mxu0 0
      %1549 = vmatpush1.bf16.msra.mxu0 %v1502
      %1550 = vmatprep.subr.bf16.mxu0 0
      %1551 = vmatpush1.bf16.msra.mxu0 %v1503
      %1552 = vmatprep.mubr.bf16.mxu0 %v1421
      %1553 = vmatmul.mubr.bf16.gmra.mrb[0].mxu0 %v1420
      %v1554 = vpop.f32.mrb[0].mxu0
      %v1555 = vadd.f32 0.0, %v1554
      %v1556 = vpop.f32.mrb[0].mxu0
      %v1557 = vpop.f32.mrb[0].mxu0
      %v1558 = vpop.f32.mrb[0].mxu0
      %1559 = vdwg.mxu0
      %v1560 = vadd.f32 %v1380, %v1555
      %v1561 = vld [vmem:[%s243 + $0x8] sm:$0x33]
      %s1562 = scalar_lea.vmem %s247, 896
      %v1563 = vld [vmem:[%s1562] sm:$0xf]
      %v1564 = vld [vmem:[%s1562 + $0x4] sm:$0xf]
      %v1565 = vld [vmem:[%s1562 + $0x8] sm:$0xf]
      %v1566 = vld [vmem:[%s1562 + $0xc] sm:$0xf]
      %v1567 = vld [vmem:[%s1562 + $0x10] sm:$0xf]
      %v1568 = vld [vmem:[%s1562 + $0x14] sm:$0xf]
      %v1569 = vld [vmem:[%s1562 + $0x18] sm:$0xf]
      %v1570 = vld [vmem:[%s1562 + $0x1c] sm:$0xf]
      %v1571 = vld [vmem:[%s1562 + $0x20] sm:$0xf]
      %v1572 = vld [vmem:[%s1562 + $0x24] sm:$0xf]
      %v1573 = vld [vmem:[%s1562 + $0x28] sm:$0xf]
      %v1574 = vld [vmem:[%s1562 + $0x2c] sm:$0xf]
      %v1575 = vld [vmem:[%s1562 + $0x30] sm:$0xf]
      %v1576 = vld [vmem:[%s1562 + $0x34] sm:$0xf]
      %v1577 = vld [vmem:[%s1562 + $0x38] sm:$0xf]
      %v1578 = vld [vmem:[%s1562 + $0x3c] sm:$0xf]
      %v1579 = vld [vmem:[%s1562 + $0x40] sm:$0xf]
      %v1580 = vld [vmem:[%s1562 + $0x44] sm:$0xf]
      %v1581 = vld [vmem:[%s1562 + $0x48] sm:$0xf]
      %v1582 = vld [vmem:[%s1562 + $0x4c] sm:$0xf]
      %v1583 = vld [vmem:[%s1562 + $0x50] sm:$0xf]
      %v1584 = vld [vmem:[%s1562 + $0x54] sm:$0xf]
      %v1585 = vld [vmem:[%s1562 + $0x58] sm:$0xf]
      %v1586 = vld [vmem:[%s1562 + $0x5c] sm:$0xf]
      %v1587 = vld [vmem:[%s1562 + $0x60] sm:$0xf]
      %v1588 = vld [vmem:[%s1562 + $0x64] sm:$0xf]
      %v1589 = vld [vmem:[%s1562 + $0x68] sm:$0xf]
      %v1590 = vld [vmem:[%s1562 + $0x6c] sm:$0xf]
      %v1591 = vld [vmem:[%s1562 + $0x70] sm:$0xf]
      %v1592 = vld [vmem:[%s1562 + $0x74] sm:$0xf]
      %v1593 = vld [vmem:[%s1562 + $0x78] sm:$0xf]
      %v1594 = vld [vmem:[%s1562 + $0x7c] sm:$0xf]
      %v1596 = vunpack.c.l.b16 %v1561
      %v1597 = vunpack.c.h.b16 %v1561
      %v1598 = vpack.c.b16 %v1596, %v1416
      %v1599 = vpack.c.b16 %v1597, %v1417
      %v1601 = vshrl.u32 %v1598, 16
      %v1603 = vrot.slane %v1601, 3
      %v1604 = vshll.u32 %v1598, 16
      %v1606 = vrot.slane %v1604, 4
      %v1607 = vor.u32 %v1603, %v1606
      %v1609 = vshrl.u32 %v1599, 16
      %v1611 = vrot.slane %v1609, 3
      %v1612 = vshll.u32 %v1599, 16
      %v1614 = vrot.slane %v1612, 4
      %v1615 = vor.u32 %v1611, %v1614
      %v1650 = vunpack.c.l.b16 %v1563
      %v1651 = vunpack.c.l.b16 %v1564
      %v1652 = vunpack.c.l.b16 %v1565
      %v1653 = vunpack.c.l.b16 %v1566
      %v1654 = vunpack.c.l.b16 %v1567
      %v1655 = vunpack.c.l.b16 %v1568
      %v1656 = vunpack.c.l.b16 %v1569
      %v1657 = vunpack.c.l.b16 %v1570
      %v1658 = vunpack.c.l.b16 %v1571
      %v1659 = vunpack.c.l.b16 %v1572
      %v1660 = vunpack.c.l.b16 %v1573
      %v1661 = vunpack.c.l.b16 %v1574
      %v1662 = vunpack.c.l.b16 %v1575
      %v1663 = vunpack.c.l.b16 %v1576
      %v1664 = vunpack.c.l.b16 %v1577
      %v1665 = vunpack.c.l.b16 %v1578
      %v1666 = vunpack.c.l.b16 %v1579
      %v1667 = vunpack.c.l.b16 %v1580
      %v1668 = vunpack.c.l.b16 %v1581
      %v1669 = vunpack.c.l.b16 %v1582
      %v1670 = vunpack.c.l.b16 %v1583
      %v1671 = vunpack.c.l.b16 %v1584
      %v1672 = vunpack.c.l.b16 %v1585
      %v1673 = vunpack.c.l.b16 %v1586
      %v1674 = vunpack.c.l.b16 %v1587
      %v1675 = vunpack.c.l.b16 %v1588
      %v1676 = vunpack.c.l.b16 %v1589
      %v1677 = vunpack.c.l.b16 %v1590
      %v1678 = vunpack.c.l.b16 %v1591
      %v1679 = vunpack.c.l.b16 %v1592
      %v1680 = vunpack.c.l.b16 %v1593
      %v1681 = vunpack.c.l.b16 %v1594
      %v1682 = vpack.c.b16 %v1651, %v1650
      %v1683 = vpack.c.b16 %v1653, %v1652
      %v1684 = vpack.c.b16 %v1655, %v1654
      %v1685 = vpack.c.b16 %v1657, %v1656
      %v1686 = vpack.c.b16 %v1659, %v1658
      %v1687 = vpack.c.b16 %v1661, %v1660
      %v1688 = vpack.c.b16 %v1663, %v1662
      %v1689 = vpack.c.b16 %v1665, %v1664
      %v1690 = vpack.c.b16 %v1667, %v1666
      %v1691 = vpack.c.b16 %v1669, %v1668
      %v1692 = vpack.c.b16 %v1671, %v1670
      %v1693 = vpack.c.b16 %v1673, %v1672
      %v1694 = vpack.c.b16 %v1675, %v1674
      %v1695 = vpack.c.b16 %v1677, %v1676
      %v1696 = vpack.c.b16 %v1679, %v1678
      %v1697 = vpack.c.b16 %v1681, %v1680
      %1714 = vmatprep.subr.bf16.mxu0 0
      %1715 = vmatpush1.bf16.msra.mxu0 %v1682
      %1716 = vmatprep.subr.bf16.mxu0 0
      %1717 = vmatpush1.bf16.msra.mxu0 %v1683
      %1718 = vmatprep.subr.bf16.mxu0 0
      %1719 = vmatpush1.bf16.msra.mxu0 %v1684
      %1720 = vmatprep.subr.bf16.mxu0 0
      %1721 = vmatpush1.bf16.msra.mxu0 %v1685
      %1722 = vmatprep.subr.bf16.mxu0 0
      %1723 = vmatpush1.bf16.msra.mxu0 %v1686
      %1724 = vmatprep.subr.bf16.mxu0 0
      %1725 = vmatpush1.bf16.msra.mxu0 %v1687
      %1726 = vmatprep.subr.bf16.mxu0 0
      %1727 = vmatpush1.bf16.msra.mxu0 %v1688
      %1728 = vmatprep.subr.bf16.mxu0 0
      %1729 = vmatpush1.bf16.msra.mxu0 %v1689
      %1730 = vmatprep.subr.bf16.mxu0 0
      %1731 = vmatpush1.bf16.msra.mxu0 %v1690
      %1732 = vmatprep.subr.bf16.mxu0 0
      %1733 = vmatpush1.bf16.msra.mxu0 %v1691
      %1734 = vmatprep.subr.bf16.mxu0 0
      %1735 = vmatpush1.bf16.msra.mxu0 %v1692
      %1736 = vmatprep.subr.bf16.mxu0 0
      %1737 = vmatpush1.bf16.msra.mxu0 %v1693
      %1738 = vmatprep.subr.bf16.mxu0 0
      %1739 = vmatpush1.bf16.msra.mxu0 %v1694
      %1740 = vmatprep.subr.bf16.mxu0 0
      %1741 = vmatpush1.bf16.msra.mxu0 %v1695
      %1742 = vmatprep.subr.bf16.mxu0 0
      %1743 = vmatpush1.bf16.msra.mxu0 %v1696
      %1744 = vmatprep.subr.bf16.mxu0 0
      %1745 = vmatpush1.bf16.msra.mxu0 %v1697
      %1746 = vmatprep.mubr.bf16.mxu0 %v1615
      %1747 = vmatmul.mubr.bf16.gmra.mrb[0].mxu0 %v1607
      %v1748 = vpop.f32.mrb[0].mxu0
      %v1749 = vadd.f32 0.0, %v1748
      %v1750 = vpop.f32.mrb[0].mxu0
      %v1751 = vpop.f32.mrb[0].mxu0
      %v1752 = vpop.f32.mrb[0].mxu0
      %1753 = vdwg.mxu0
      %v1754 = vadd.f32 %v1560, %v1749
      %s1755 = scalar_lea.vmem %s247, 1024
      %v1756 = vld [vmem:[%s1755] sm:$0xf]
      %v1757 = vld [vmem:[%s1755 + $0x4] sm:$0xf]
      %v1758 = vld [vmem:[%s1755 + $0x8] sm:$0xf]
      %v1759 = vld [vmem:[%s1755 + $0xc] sm:$0xf]
      %v1760 = vld [vmem:[%s1755 + $0x10] sm:$0xf]
      %v1761 = vld [vmem:[%s1755 + $0x14] sm:$0xf]
      %v1762 = vld [vmem:[%s1755 + $0x18] sm:$0xf]
      %v1763 = vld [vmem:[%s1755 + $0x1c] sm:$0xf]
      %v1764 = vld [vmem:[%s1755 + $0x20] sm:$0xf]
      %v1765 = vld [vmem:[%s1755 + $0x24] sm:$0xf]
      %v1766 = vld [vmem:[%s1755 + $0x28] sm:$0xf]
      %v1767 = vld [vmem:[%s1755 + $0x2c] sm:$0xf]
      %v1768 = vld [vmem:[%s1755 + $0x30] sm:$0xf]
      %v1769 = vld [vmem:[%s1755 + $0x34] sm:$0xf]
      %v1770 = vld [vmem:[%s1755 + $0x38] sm:$0xf]
      %v1771 = vld [vmem:[%s1755 + $0x3c] sm:$0xf]
      %v1772 = vld [vmem:[%s1755 + $0x40] sm:$0xf]
      %v1773 = vld [vmem:[%s1755 + $0x44] sm:$0xf]
      %v1774 = vld [vmem:[%s1755 + $0x48] sm:$0xf]
      %v1775 = vld [vmem:[%s1755 + $0x4c] sm:$0xf]
      %v1776 = vld [vmem:[%s1755 + $0x50] sm:$0xf]
      %v1777 = vld [vmem:[%s1755 + $0x54] sm:$0xf]
      %v1778 = vld [vmem:[%s1755 + $0x58] sm:$0xf]
      %v1779 = vld [vmem:[%s1755 + $0x5c] sm:$0xf]
      %v1780 = vld [vmem:[%s1755 + $0x60] sm:$0xf]
      %v1781 = vld [vmem:[%s1755 + $0x64] sm:$0xf]
      %v1782 = vld [vmem:[%s1755 + $0x68] sm:$0xf]
      %v1783 = vld [vmem:[%s1755 + $0x6c] sm:$0xf]
      %v1784 = vld [vmem:[%s1755 + $0x70] sm:$0xf]
      %v1785 = vld [vmem:[%s1755 + $0x74] sm:$0xf]
      %v1786 = vld [vmem:[%s1755 + $0x78] sm:$0xf]
      %v1787 = vld [vmem:[%s1755 + $0x7c] sm:$0xf]
      %v1788 = vpack.c.b16 %v1596, %v1596
      %v1789 = vpack.c.b16 %v1597, %v1597
      %v1824 = vunpack.c.l.b16 %v1756
      %v1825 = vunpack.c.l.b16 %v1757
      %v1826 = vunpack.c.l.b16 %v1758
      %v1827 = vunpack.c.l.b16 %v1759
      %v1828 = vunpack.c.l.b16 %v1760
      %v1829 = vunpack.c.l.b16 %v1761
      %v1830 = vunpack.c.l.b16 %v1762
      %v1831 = vunpack.c.l.b16 %v1763
      %v1832 = vunpack.c.l.b16 %v1764
      %v1833 = vunpack.c.l.b16 %v1765
      %v1834 = vunpack.c.l.b16 %v1766
      %v1835 = vunpack.c.l.b16 %v1767
      %v1836 = vunpack.c.l.b16 %v1768
      %v1837 = vunpack.c.l.b16 %v1769
      %v1838 = vunpack.c.l.b16 %v1770
      %v1839 = vunpack.c.l.b16 %v1771
      %v1840 = vunpack.c.l.b16 %v1772
      %v1841 = vunpack.c.l.b16 %v1773
      %v1842 = vunpack.c.l.b16 %v1774
      %v1843 = vunpack.c.l.b16 %v1775
      %v1844 = vunpack.c.l.b16 %v1776
      %v1845 = vunpack.c.l.b16 %v1777
      %v1846 = vunpack.c.l.b16 %v1778
      %v1847 = vunpack.c.l.b16 %v1779
      %v1848 = vunpack.c.l.b16 %v1780
      %v1849 = vunpack.c.l.b16 %v1781
      %v1850 = vunpack.c.l.b16 %v1782
      %v1851 = vunpack.c.l.b16 %v1783
      %v1852 = vunpack.c.l.b16 %v1784
      %v1853 = vunpack.c.l.b16 %v1785
      %v1854 = vunpack.c.l.b16 %v1786
      %v1855 = vunpack.c.l.b16 %v1787
      %v1856 = vpack.c.b16 %v1825, %v1824
      %v1857 = vpack.c.b16 %v1827, %v1826
      %v1858 = vpack.c.b16 %v1829, %v1828
      %v1859 = vpack.c.b16 %v1831, %v1830
      %v1860 = vpack.c.b16 %v1833, %v1832
      %v1861 = vpack.c.b16 %v1835, %v1834
      %v1862 = vpack.c.b16 %v1837, %v1836
      %v1863 = vpack.c.b16 %v1839, %v1838
      %v1864 = vpack.c.b16 %v1841, %v1840
      %v1865 = vpack.c.b16 %v1843, %v1842
      %v1866 = vpack.c.b16 %v1845, %v1844
      %v1867 = vpack.c.b16 %v1847, %v1846
      %v1868 = vpack.c.b16 %v1849, %v1848
      %v1869 = vpack.c.b16 %v1851, %v1850
      %v1870 = vpack.c.b16 %v1853, %v1852
      %v1871 = vpack.c.b16 %v1855, %v1854
      %1888 = vmatprep.subr.bf16.mxu0 0
      %1889 = vmatpush1.bf16.msra.mxu0 %v1856
      %1890 = vmatprep.subr.bf16.mxu0 0
      %1891 = vmatpush1.bf16.msra.mxu0 %v1857
      %1892 = vmatprep.subr.bf16.mxu0 0
      %1893 = vmatpush1.bf16.msra.mxu0 %v1858
      %1894 = vmatprep.subr.bf16.mxu0 0
      %1895 = vmatpush1.bf16.msra.mxu0 %v1859
      %1896 = vmatprep.subr.bf16.mxu0 0
      %1897 = vmatpush1.bf16.msra.mxu0 %v1860
      %1898 = vmatprep.subr.bf16.mxu0 0
      %1899 = vmatpush1.bf16.msra.mxu0 %v1861
      %1900 = vmatprep.subr.bf16.mxu0 0
      %1901 = vmatpush1.bf16.msra.mxu0 %v1862
      %1902 = vmatprep.subr.bf16.mxu0 0
      %1903 = vmatpush1.bf16.msra.mxu0 %v1863
      %1904 = vmatprep.subr.bf16.mxu0 0
      %1905 = vmatpush1.bf16.msra.mxu0 %v1864
      %1906 = vmatprep.subr.bf16.mxu0 0
      %1907 = vmatpush1.bf16.msra.mxu0 %v1865
      %1908 = vmatprep.subr.bf16.mxu0 0
      %1909 = vmatpush1.bf16.msra.mxu0 %v1866
      %1910 = vmatprep.subr.bf16.mxu0 0
      %1911 = vmatpush1.bf16.msra.mxu0 %v1867
      %1912 = vmatprep.subr.bf16.mxu0 0
      %1913 = vmatpush1.bf16.msra.mxu0 %v1868
      %1914 = vmatprep.subr.bf16.mxu0 0
      %1915 = vmatpush1.bf16.msra.mxu0 %v1869
      %1916 = vmatprep.subr.bf16.mxu0 0
      %1917 = vmatpush1.bf16.msra.mxu0 %v1870
      %1918 = vmatprep.subr.bf16.mxu0 0
      %1919 = vmatpush1.bf16.msra.mxu0 %v1871
      %1920 = vmatprep.mubr.bf16.mxu0 %v1789
      %1921 = vmatmul.mubr.bf16.gmra.mrb[0].mxu0 %v1788
      %v1922 = vpop.f32.mrb[0].mxu0
      %v1923 = vadd.f32 0.0, %v1922
      %v1924 = vpop.f32.mrb[0].mxu0
      %v1925 = vpop.f32.mrb[0].mxu0
      %v1926 = vpop.f32.mrb[0].mxu0
      %1927 = vdwg.mxu0
      %v1928 = vadd.f32 %v1754, %v1923
      %v1929 = vld [vmem:[%s243 + $0x8] sm:$0x77]
      %s1930 = scalar_lea.vmem %s247, 1152
      %v1931 = vld [vmem:[%s1930] sm:$0xf]
      %v1932 = vld [vmem:[%s1930 + $0x4] sm:$0xf]
      %v1933 = vld [vmem:[%s1930 + $0x8] sm:$0xf]
      %v1934 = vld [vmem:[%s1930 + $0xc] sm:$0xf]
      %v1935 = vld [vmem:[%s1930 + $0x10] sm:$0xf]
      %v1936 = vld [vmem:[%s1930 + $0x14] sm:$0xf]
      %v1937 = vld [vmem:[%s1930 + $0x18] sm:$0xf]
      %v1938 = vld [vmem:[%s1930 + $0x1c] sm:$0xf]
      %v1939 = vld [vmem:[%s1930 + $0x20] sm:$0xf]
      %v1940 = vld [vmem:[%s1930 + $0x24] sm:$0xf]
      %v1941 = vld [vmem:[%s1930 + $0x28] sm:$0xf]
      %v1942 = vld [vmem:[%s1930 + $0x2c] sm:$0xf]
      %v1943 = vld [vmem:[%s1930 + $0x30] sm:$0xf]
      %v1944 = vld [vmem:[%s1930 + $0x34] sm:$0xf]
      %v1945 = vld [vmem:[%s1930 + $0x38] sm:$0xf]
      %v1946 = vld [vmem:[%s1930 + $0x3c] sm:$0xf]
      %v1947 = vld [vmem:[%s1930 + $0x40] sm:$0xf]
      %v1948 = vld [vmem:[%s1930 + $0x44] sm:$0xf]
      %v1949 = vld [vmem:[%s1930 + $0x48] sm:$0xf]
      %v1950 = vld [vmem:[%s1930 + $0x4c] sm:$0xf]
      %v1951 = vld [vmem:[%s1930 + $0x50] sm:$0xf]
      %v1952 = vld [vmem:[%s1930 + $0x54] sm:$0xf]
      %v1953 = vld [vmem:[%s1930 + $0x58] sm:$0xf]
      %v1954 = vld [vmem:[%s1930 + $0x5c] sm:$0xf]
      %v1955 = vld [vmem:[%s1930 + $0x60] sm:$0xf]
      %v1956 = vld [vmem:[%s1930 + $0x64] sm:$0xf]
      %v1957 = vld [vmem:[%s1930 + $0x68] sm:$0xf]
      %v1958 = vld [vmem:[%s1930 + $0x6c] sm:$0xf]
      %v1959 = vld [vmem:[%s1930 + $0x70] sm:$0xf]
      %v1960 = vld [vmem:[%s1930 + $0x74] sm:$0xf]
      %v1961 = vld [vmem:[%s1930 + $0x78] sm:$0xf]
      %v1962 = vld [vmem:[%s1930 + $0x7c] sm:$0xf]
      %v1964 = vunpack.c.l.b16 %v1929
      %v1965 = vunpack.c.h.b16 %v1929
      %v1966 = vpack.c.b16 %v1964, %v1964
      %v1967 = vpack.c.b16 %v1965, %v1965
      %v1969 = vshrl.u32 %v1966, 16
      %v1971 = vshll.u32 %v1966, 16
      %v1973 = vrot.slane %v1971, 1
      %v1974 = vor.u32 %v1969, %v1973
      %v1976 = vshrl.u32 %v1967, 16
      %v1978 = vshll.u32 %v1967, 16
      %v1980 = vrot.slane %v1978, 1
      %v1981 = vor.u32 %v1976, %v1980
      %v2016 = vunpack.c.l.b16 %v1931
      %v2017 = vunpack.c.l.b16 %v1932
      %v2018 = vunpack.c.l.b16 %v1933
      %v2019 = vunpack.c.l.b16 %v1934
      %v2020 = vunpack.c.l.b16 %v1935
      %v2021 = vunpack.c.l.b16 %v1936
      %v2022 = vunpack.c.l.b16 %v1937
      %v2023 = vunpack.c.l.b16 %v1938
      %v2024 = vunpack.c.l.b16 %v1939
      %v2025 = vunpack.c.l.b16 %v1940
      %v2026 = vunpack.c.l.b16 %v1941
      %v2027 = vunpack.c.l.b16 %v1942
      %v2028 = vunpack.c.l.b16 %v1943
      %v2029 = vunpack.c.l.b16 %v1944
      %v2030 = vunpack.c.l.b16 %v1945
      %v2031 = vunpack.c.l.b16 %v1946
      %v2032 = vunpack.c.l.b16 %v1947
      %v2033 = vunpack.c.l.b16 %v1948
      %v2034 = vunpack.c.l.b16 %v1949
      %v2035 = vunpack.c.l.b16 %v1950
      %v2036 = vunpack.c.l.b16 %v1951
      %v2037 = vunpack.c.l.b16 %v1952
      %v2038 = vunpack.c.l.b16 %v1953
      %v2039 = vunpack.c.l.b16 %v1954
      %v2040 = vunpack.c.l.b16 %v1955
      %v2041 = vunpack.c.l.b16 %v1956
      %v2042 = vunpack.c.l.b16 %v1957
      %v2043 = vunpack.c.l.b16 %v1958
      %v2044 = vunpack.c.l.b16 %v1959
      %v2045 = vunpack.c.l.b16 %v1960
      %v2046 = vunpack.c.l.b16 %v1961
      %v2047 = vunpack.c.l.b16 %v1962
      %v2048 = vpack.c.b16 %v2017, %v2016
      %v2049 = vpack.c.b16 %v2019, %v2018
      %v2050 = vpack.c.b16 %v2021, %v2020
      %v2051 = vpack.c.b16 %v2023, %v2022
      %v2052 = vpack.c.b16 %v2025, %v2024
      %v2053 = vpack.c.b16 %v2027, %v2026
      %v2054 = vpack.c.b16 %v2029, %v2028
      %v2055 = vpack.c.b16 %v2031, %v2030
      %v2056 = vpack.c.b16 %v2033, %v2032
      %v2057 = vpack.c.b16 %v2035, %v2034
      %v2058 = vpack.c.b16 %v2037, %v2036
      %v2059 = vpack.c.b16 %v2039, %v2038
      %v2060 = vpack.c.b16 %v2041, %v2040
      %v2061 = vpack.c.b16 %v2043, %v2042
      %v2062 = vpack.c.b16 %v2045, %v2044
      %v2063 = vpack.c.b16 %v2047, %v2046
      %2080 = vmatprep.subr.bf16.mxu0 0
      %2081 = vmatpush1.bf16.msra.mxu0 %v2048
      %2082 = vmatprep.subr.bf16.mxu0 0
      %2083 = vmatpush1.bf16.msra.mxu0 %v2049
      %2084 = vmatprep.subr.bf16.mxu0 0
      %2085 = vmatpush1.bf16.msra.mxu0 %v2050
      %2086 = vmatprep.subr.bf16.mxu0 0
      %2087 = vmatpush1.bf16.msra.mxu0 %v2051
      %2088 = vmatprep.subr.bf16.mxu0 0
      %2089 = vmatpush1.bf16.msra.mxu0 %v2052
      %2090 = vmatprep.subr.bf16.mxu0 0
      %2091 = vmatpush1.bf16.msra.mxu0 %v2053
      %2092 = vmatprep.subr.bf16.mxu0 0
      %2093 = vmatpush1.bf16.msra.mxu0 %v2054
      %2094 = vmatprep.subr.bf16.mxu0 0
      %2095 = vmatpush1.bf16.msra.mxu0 %v2055
      %2096 = vmatprep.subr.bf16.mxu0 0
      %2097 = vmatpush1.bf16.msra.mxu0 %v2056
      %2098 = vmatprep.subr.bf16.mxu0 0
      %2099 = vmatpush1.bf16.msra.mxu0 %v2057
      %2100 = vmatprep.subr.bf16.mxu0 0
      %2101 = vmatpush1.bf16.msra.mxu0 %v2058
      %2102 = vmatprep.subr.bf16.mxu0 0
      %2103 = vmatpush1.bf16.msra.mxu0 %v2059
      %2104 = vmatprep.subr.bf16.mxu0 0
      %2105 = vmatpush1.bf16.msra.mxu0 %v2060
      %2106 = vmatprep.subr.bf16.mxu0 0
      %2107 = vmatpush1.bf16.msra.mxu0 %v2061
      %2108 = vmatprep.subr.bf16.mxu0 0
      %2109 = vmatpush1.bf16.msra.mxu0 %v2062
      %2110 = vmatprep.subr.bf16.mxu0 0
      %2111 = vmatpush1.bf16.msra.mxu0 %v2063
      %2112 = vmatprep.mubr.bf16.mxu0 %v1981
      %2113 = vmatmul.mubr.bf16.gmra.mrb[0].mxu0 %v1974
      %v2114 = vpop.f32.mrb[0].mxu0
      %v2115 = vadd.f32 0.0, %v2114
      %v2116 = vpop.f32.mrb[0].mxu0
      %v2117 = vpop.f32.mrb[0].mxu0
      %v2118 = vpop.f32.mrb[0].mxu0
      %2119 = vdwg.mxu0
      %v2120 = vadd.f32 %v1928, %v2115
      %v2121 = vld [vmem:[%s243 + $0x8] sm:$0x66]
      %s2122 = scalar_lea.vmem %s247, 1280
      %v2123 = vld [vmem:[%s2122] sm:$0xf]
      %v2124 = vld [vmem:[%s2122 + $0x4] sm:$0xf]
      %v2125 = vld [vmem:[%s2122 + $0x8] sm:$0xf]
      %v2126 = vld [vmem:[%s2122 + $0xc] sm:$0xf]
      %v2127 = vld [vmem:[%s2122 + $0x10] sm:$0xf]
      %v2128 = vld [vmem:[%s2122 + $0x14] sm:$0xf]
      %v2129 = vld [vmem:[%s2122 + $0x18] sm:$0xf]
      %v2130 = vld [vmem:[%s2122 + $0x1c] sm:$0xf]
      %v2131 = vld [vmem:[%s2122 + $0x20] sm:$0xf]
      %v2132 = vld [vmem:[%s2122 + $0x24] sm:$0xf]
      %v2133 = vld [vmem:[%s2122 + $0x28] sm:$0xf]
      %v2134 = vld [vmem:[%s2122 + $0x2c] sm:$0xf]
      %v2135 = vld [vmem:[%s2122 + $0x30] sm:$0xf]
      %v2136 = vld [vmem:[%s2122 + $0x34] sm:$0xf]
      %v2137 = vld [vmem:[%s2122 + $0x38] sm:$0xf]
      %v2138 = vld [vmem:[%s2122 + $0x3c] sm:$0xf]
      %v2139 = vld [vmem:[%s2122 + $0x40] sm:$0xf]
      %v2140 = vld [vmem:[%s2122 + $0x44] sm:$0xf]
      %v2141 = vld [vmem:[%s2122 + $0x48] sm:$0xf]
      %v2142 = vld [vmem:[%s2122 + $0x4c] sm:$0xf]
      %v2143 = vld [vmem:[%s2122 + $0x50] sm:$0xf]
      %v2144 = vld [vmem:[%s2122 + $0x54] sm:$0xf]
      %v2145 = vld [vmem:[%s2122 + $0x58] sm:$0xf]
      %v2146 = vld [vmem:[%s2122 + $0x5c] sm:$0xf]
      %v2147 = vld [vmem:[%s2122 + $0x60] sm:$0xf]
      %v2148 = vld [vmem:[%s2122 + $0x64] sm:$0xf]
      %v2149 = vld [vmem:[%s2122 + $0x68] sm:$0xf]
      %v2150 = vld [vmem:[%s2122 + $0x6c] sm:$0xf]
      %v2151 = vld [vmem:[%s2122 + $0x70] sm:$0xf]
      %v2152 = vld [vmem:[%s2122 + $0x74] sm:$0xf]
      %v2153 = vld [vmem:[%s2122 + $0x78] sm:$0xf]
      %v2154 = vld [vmem:[%s2122 + $0x7c] sm:$0xf]
      %v2156 = vunpack.c.l.b16 %v2121
      %v2157 = vunpack.c.h.b16 %v2121
      %v2158 = vpack.c.b16 %v2156, %v2156
      %v2159 = vpack.c.b16 %v2157, %v2157
      %v2160 = vrot.slane %v2158, 1
      %v2161 = vrot.slane %v2159, 1
      %v2196 = vunpack.c.l.b16 %v2123
      %v2197 = vunpack.c.l.b16 %v2124
      %v2198 = vunpack.c.l.b16 %v2125
      %v2199 = vunpack.c.l.b16 %v2126
      %v2200 = vunpack.c.l.b16 %v2127
      %v2201 = vunpack.c.l.b16 %v2128
      %v2202 = vunpack.c.l.b16 %v2129
      %v2203 = vunpack.c.l.b16 %v2130
      %v2204 = vunpack.c.l.b16 %v2131
      %v2205 = vunpack.c.l.b16 %v2132
      %v2206 = vunpack.c.l.b16 %v2133
      %v2207 = vunpack.c.l.b16 %v2134
      %v2208 = vunpack.c.l.b16 %v2135
      %v2209 = vunpack.c.l.b16 %v2136
      %v2210 = vunpack.c.l.b16 %v2137
      %v2211 = vunpack.c.l.b16 %v2138
      %v2212 = vunpack.c.l.b16 %v2139
      %v2213 = vunpack.c.l.b16 %v2140
      %v2214 = vunpack.c.l.b16 %v2141
      %v2215 = vunpack.c.l.b16 %v2142
      %v2216 = vunpack.c.l.b16 %v2143
      %v2217 = vunpack.c.l.b16 %v2144
      %v2218 = vunpack.c.l.b16 %v2145
      %v2219 = vunpack.c.l.b16 %v2146
      %v2220 = vunpack.c.l.b16 %v2147
      %v2221 = vunpack.c.l.b16 %v2148
      %v2222 = vunpack.c.l.b16 %v2149
      %v2223 = vunpack.c.l.b16 %v2150
      %v2224 = vunpack.c.l.b16 %v2151
      %v2225 = vunpack.c.l.b16 %v2152
      %v2226 = vunpack.c.l.b16 %v2153
      %v2227 = vunpack.c.l.b16 %v2154
      %v2228 = vpack.c.b16 %v2197, %v2196
      %v2229 = vpack.c.b16 %v2199, %v2198
      %v2230 = vpack.c.b16 %v2201, %v2200
      %v2231 = vpack.c.b16 %v2203, %v2202
      %v2232 = vpack.c.b16 %v2205, %v2204
      %v2233 = vpack.c.b16 %v2207, %v2206
      %v2234 = vpack.c.b16 %v2209, %v2208
      %v2235 = vpack.c.b16 %v2211, %v2210
      %v2236 = vpack.c.b16 %v2213, %v2212
      %v2237 = vpack.c.b16 %v2215, %v2214
      %v2238 = vpack.c.b16 %v2217, %v2216
      %v2239 = vpack.c.b16 %v2219, %v2218
      %v2240 = vpack.c.b16 %v2221, %v2220
      %v2241 = vpack.c.b16 %v2223, %v2222
      %v2242 = vpack.c.b16 %v2225, %v2224
      %v2243 = vpack.c.b16 %v2227, %v2226
      %2260 = vmatprep.subr.bf16.mxu0 0
      %2261 = vmatpush1.bf16.msra.mxu0 %v2228
      %2262 = vmatprep.subr.bf16.mxu0 0
      %2263 = vmatpush1.bf16.msra.mxu0 %v2229
      %2264 = vmatprep.subr.bf16.mxu0 0
      %2265 = vmatpush1.bf16.msra.mxu0 %v2230
      %2266 = vmatprep.subr.bf16.mxu0 0
      %2267 = vmatpush1.bf16.msra.mxu0 %v2231
      %2268 = vmatprep.subr.bf16.mxu0 0
      %2269 = vmatpush1.bf16.msra.mxu0 %v2232
      %2270 = vmatprep.subr.bf16.mxu0 0
      %2271 = vmatpush1.bf16.msra.mxu0 %v2233
      %2272 = vmatprep.subr.bf16.mxu0 0
      %2273 = vmatpush1.bf16.msra.mxu0 %v2234
      %2274 = vmatprep.subr.bf16.mxu0 0
      %2275 = vmatpush1.bf16.msra.mxu0 %v2235
      %2276 = vmatprep.subr.bf16.mxu0 0
      %2277 = vmatpush1.bf16.msra.mxu0 %v2236
      %2278 = vmatprep.subr.bf16.mxu0 0
      %2279 = vmatpush1.bf16.msra.mxu0 %v2237
      %2280 = vmatprep.subr.bf16.mxu0 0
      %2281 = vmatpush1.bf16.msra.mxu0 %v2238
      %2282 = vmatprep.subr.bf16.mxu0 0
      %2283 = vmatpush1.bf16.msra.mxu0 %v2239
      %2284 = vmatprep.subr.bf16.mxu0 0
      %2285 = vmatpush1.bf16.msra.mxu0 %v2240
      %2286 = vmatprep.subr.bf16.mxu0 0
      %2287 = vmatpush1.bf16.msra.mxu0 %v2241
      %2288 = vmatprep.subr.bf16.mxu0 0
      %2289 = vmatpush1.bf16.msra.mxu0 %v2242
      %2290 = vmatprep.subr.bf16.mxu0 0
      %2291 = vmatpush1.bf16.msra.mxu0 %v2243
      %2292 = vmatprep.mubr.bf16.mxu0 %v2161
      %2293 = vmatmul.mubr.bf16.gmra.mrb[0].mxu0 %v2160
      %v2294 = vpop.f32.mrb[0].mxu0
      %v2295 = vadd.f32 0.0, %v2294
      %v2296 = vpop.f32.mrb[0].mxu0
      %v2297 = vpop.f32.mrb[0].mxu0
      %v2298 = vpop.f32.mrb[0].mxu0
      %2299 = vdwg.mxu0
      %v2300 = vadd.f32 %v2120, %v2295
      %v2301 = vld [vmem:[%s243 + $0x8] sm:$0xee]
      %s2302 = scalar_lea.vmem %s247, 1408
      %v2303 = vld [vmem:[%s2302] sm:$0xf]
      %v2304 = vld [vmem:[%s2302 + $0x4] sm:$0xf]
      %v2305 = vld [vmem:[%s2302 + $0x8] sm:$0xf]
      %v2306 = vld [vmem:[%s2302 + $0xc] sm:$0xf]
      %v2307 = vld [vmem:[%s2302 + $0x10] sm:$0xf]
      %v2308 = vld [vmem:[%s2302 + $0x14] sm:$0xf]
      %v2309 = vld [vmem:[%s2302 + $0x18] sm:$0xf]
      %v2310 = vld [vmem:[%s2302 + $0x1c] sm:$0xf]
      %v2311 = vld [vmem:[%s2302 + $0x20] sm:$0xf]
      %v2312 = vld [vmem:[%s2302 + $0x24] sm:$0xf]
      %v2313 = vld [vmem:[%s2302 + $0x28] sm:$0xf]
      %v2314 = vld [vmem:[%s2302 + $0x2c] sm:$0xf]
      %v2315 = vld [vmem:[%s2302 + $0x30] sm:$0xf]
      %v2316 = vld [vmem:[%s2302 + $0x34] sm:$0xf]
      %v2317 = vld [vmem:[%s2302 + $0x38] sm:$0xf]
      %v2318 = vld [vmem:[%s2302 + $0x3c] sm:$0xf]
      %v2319 = vld [vmem:[%s2302 + $0x40] sm:$0xf]
      %v2320 = vld [vmem:[%s2302 + $0x44] sm:$0xf]
      %v2321 = vld [vmem:[%s2302 + $0x48] sm:$0xf]
      %v2322 = vld [vmem:[%s2302 + $0x4c] sm:$0xf]
      %v2323 = vld [vmem:[%s2302 + $0x50] sm:$0xf]
      %v2324 = vld [vmem:[%s2302 + $0x54] sm:$0xf]
      %v2325 = vld [vmem:[%s2302 + $0x58] sm:$0xf]
      %v2326 = vld [vmem:[%s2302 + $0x5c] sm:$0xf]
      %v2327 = vld [vmem:[%s2302 + $0x60] sm:$0xf]
      %v2328 = vld [vmem:[%s2302 + $0x64] sm:$0xf]
      %v2329 = vld [vmem:[%s2302 + $0x68] sm:$0xf]
      %v2330 = vld [vmem:[%s2302 + $0x6c] sm:$0xf]
      %v2331 = vld [vmem:[%s2302 + $0x70] sm:$0xf]
      %v2332 = vld [vmem:[%s2302 + $0x74] sm:$0xf]
      %v2333 = vld [vmem:[%s2302 + $0x78] sm:$0xf]
      %v2334 = vld [vmem:[%s2302 + $0x7c] sm:$0xf]
      %v2336 = vunpack.c.l.b16 %v2301
      %v2337 = vunpack.c.h.b16 %v2301
      %v2338 = vpack.c.b16 %v2336, %v2336
      %v2339 = vpack.c.b16 %v2337, %v2337
      %v2341 = vshrl.u32 %v2338, 16
      %v2343 = vrot.slane %v2341, 1
      %v2344 = vshll.u32 %v2338, 16
      %v2346 = vrot.slane %v2344, 2
      %v2347 = vor.u32 %v2343, %v2346
      %v2349 = vshrl.u32 %v2339, 16
      %v2351 = vrot.slane %v2349, 1
      %v2352 = vshll.u32 %v2339, 16
      %v2354 = vrot.slane %v2352, 2
      %v2355 = vor.u32 %v2351, %v2354
      %v2390 = vunpack.c.l.b16 %v2303
      %v2391 = vunpack.c.l.b16 %v2304
      %v2392 = vunpack.c.l.b16 %v2305
      %v2393 = vunpack.c.l.b16 %v2306
      %v2394 = vunpack.c.l.b16 %v2307
      %v2395 = vunpack.c.l.b16 %v2308
      %v2396 = vunpack.c.l.b16 %v2309
      %v2397 = vunpack.c.l.b16 %v2310
      %v2398 = vunpack.c.l.b16 %v2311
      %v2399 = vunpack.c.l.b16 %v2312
      %v2400 = vunpack.c.l.b16 %v2313
      %v2401 = vunpack.c.l.b16 %v2314
      %v2402 = vunpack.c.l.b16 %v2315
      %v2403 = vunpack.c.l.b16 %v2316
      %v2404 = vunpack.c.l.b16 %v2317
      %v2405 = vunpack.c.l.b16 %v2318
      %v2406 = vunpack.c.l.b16 %v2319
      %v2407 = vunpack.c.l.b16 %v2320
      %v2408 = vunpack.c.l.b16 %v2321
      %v2409 = vunpack.c.l.b16 %v2322
      %v2410 = vunpack.c.l.b16 %v2323
      %v2411 = vunpack.c.l.b16 %v2324
      %v2412 = vunpack.c.l.b16 %v2325
      %v2413 = vunpack.c.l.b16 %v2326
      %v2414 = vunpack.c.l.b16 %v2327
      %v2415 = vunpack.c.l.b16 %v2328
      %v2416 = vunpack.c.l.b16 %v2329
      %v2417 = vunpack.c.l.b16 %v2330
      %v2418 = vunpack.c.l.b16 %v2331
      %v2419 = vunpack.c.l.b16 %v2332
      %v2420 = vunpack.c.l.b16 %v2333
      %v2421 = vunpack.c.l.b16 %v2334
      %v2422 = vpack.c.b16 %v2391, %v2390
      %v2423 = vpack.c.b16 %v2393, %v2392
      %v2424 = vpack.c.b16 %v2395, %v2394
      %v2425 = vpack.c.b16 %v2397, %v2396
      %v2426 = vpack.c.b16 %v2399, %v2398
      %v2427 = vpack.c.b16 %v2401, %v2400
      %v2428 = vpack.c.b16 %v2403, %v2402
      %v2429 = vpack.c.b16 %v2405, %v2404
      %v2430 = vpack.c.b16 %v2407, %v2406
      %v2431 = vpack.c.b16 %v2409, %v2408
      %v2432 = vpack.c.b16 %v2411, %v2410
      %v2433 = vpack.c.b16 %v2413, %v2412
      %v2434 = vpack.c.b16 %v2415, %v2414
      %v2435 = vpack.c.b16 %v2417, %v2416
      %v2436 = vpack.c.b16 %v2419, %v2418
      %v2437 = vpack.c.b16 %v2421, %v2420
      %2454 = vmatprep.subr.bf16.mxu0 0
      %2455 = vmatpush1.bf16.msra.mxu0 %v2422
      %2456 = vmatprep.subr.bf16.mxu0 0
      %2457 = vmatpush1.bf16.msra.mxu0 %v2423
      %2458 = vmatprep.subr.bf16.mxu0 0
      %2459 = vmatpush1.bf16.msra.mxu0 %v2424
      %2460 = vmatprep.subr.bf16.mxu0 0
      %2461 = vmatpush1.bf16.msra.mxu0 %v2425
      %2462 = vmatprep.subr.bf16.mxu0 0
      %2463 = vmatpush1.bf16.msra.mxu0 %v2426
      %2464 = vmatprep.subr.bf16.mxu0 0
      %2465 = vmatpush1.bf16.msra.mxu0 %v2427
      %2466 = vmatprep.subr.bf16.mxu0 0
      %2467 = vmatpush1.bf16.msra.mxu0 %v2428
      %2468 = vmatprep.subr.bf16.mxu0 0
      %2469 = vmatpush1.bf16.msra.mxu0 %v2429
      %2470 = vmatprep.subr.bf16.mxu0 0
      %2471 = vmatpush1.bf16.msra.mxu0 %v2430
      %2472 = vmatprep.subr.bf16.mxu0 0
      %2473 = vmatpush1.bf16.msra.mxu0 %v2431
      %2474 = vmatprep.subr.bf16.mxu0 0
      %2475 = vmatpush1.bf16.msra.mxu0 %v2432
      %2476 = vmatprep.subr.bf16.mxu0 0
      %2477 = vmatpush1.bf16.msra.mxu0 %v2433
      %2478 = vmatprep.subr.bf16.mxu0 0
      %2479 = vmatpush1.bf16.msra.mxu0 %v2434
      %2480 = vmatprep.subr.bf16.mxu0 0
      %2481 = vmatpush1.bf16.msra.mxu0 %v2435
      %2482 = vmatprep.subr.bf16.mxu0 0
      %2483 = vmatpush1.bf16.msra.mxu0 %v2436
      %2484 = vmatprep.subr.bf16.mxu0 0
      %2485 = vmatpush1.bf16.msra.mxu0 %v2437
      %2486 = vmatprep.mubr.bf16.mxu0 %v2355
      %2487 = vmatmul.mubr.bf16.gmra.mrb[0].mxu0 %v2347
      %v2488 = vpop.f32.mrb[0].mxu0
      %v2489 = vadd.f32 0.0, %v2488
      %v2490 = vpop.f32.mrb[0].mxu0
      %v2491 = vpop.f32.mrb[0].mxu0
      %v2492 = vpop.f32.mrb[0].mxu0
      %2493 = vdwg.mxu0
      %v2494 = vadd.f32 %v2300, %v2489
      %v2495 = vld [vmem:[%s243 + $0x8] sm:$0xcc]
      %s2496 = scalar_lea.vmem %s247, 1536
      %v2497 = vld [vmem:[%s2496] sm:$0xf]
      %v2498 = vld [vmem:[%s2496 + $0x4] sm:$0xf]
      %v2499 = vld [vmem:[%s2496 + $0x8] sm:$0xf]
      %v2500 = vld [vmem:[%s2496 + $0xc] sm:$0xf]
      %v2501 = vld [vmem:[%s2496 + $0x10] sm:$0xf]
      %v2502 = vld [vmem:[%s2496 + $0x14] sm:$0xf]
      %v2503 = vld [vmem:[%s2496 + $0x18] sm:$0xf]
      %v2504 = vld [vmem:[%s2496 + $0x1c] sm:$0xf]
      %v2505 = vld [vmem:[%s2496 + $0x20] sm:$0xf]
      %v2506 = vld [vmem:[%s2496 + $0x24] sm:$0xf]
      %v2507 = vld [vmem:[%s2496 + $0x28] sm:$0xf]
      %v2508 = vld [vmem:[%s2496 + $0x2c] sm:$0xf]
      %v2509 = vld [vmem:[%s2496 + $0x30] sm:$0xf]
      %v2510 = vld [vmem:[%s2496 + $0x34] sm:$0xf]
      %v2511 = vld [vmem:[%s2496 + $0x38] sm:$0xf]
      %v2512 = vld [vmem:[%s2496 + $0x3c] sm:$0xf]
      %v2513 = vld [vmem:[%s2496 + $0x40] sm:$0xf]
      %v2514 = vld [vmem:[%s2496 + $0x44] sm:$0xf]
      %v2515 = vld [vmem:[%s2496 + $0x48] sm:$0xf]
      %v2516 = vld [vmem:[%s2496 + $0x4c] sm:$0xf]
      %v2517 = vld [vmem:[%s2496 + $0x50] sm:$0xf]
      %v2518 = vld [vmem:[%s2496 + $0x54] sm:$0xf]
      %v2519 = vld [vmem:[%s2496 + $0x58] sm:$0xf]
      %v2520 = vld [vmem:[%s2496 + $0x5c] sm:$0xf]
      %v2521 = vld [vmem:[%s2496 + $0x60] sm:$0xf]
      %v2522 = vld [vmem:[%s2496 + $0x64] sm:$0xf]
      %v2523 = vld [vmem:[%s2496 + $0x68] sm:$0xf]
      %v2524 = vld [vmem:[%s2496 + $0x6c] sm:$0xf]
      %v2525 = vld [vmem:[%s2496 + $0x70] sm:$0xf]
      %v2526 = vld [vmem:[%s2496 + $0x74] sm:$0xf]
      %v2527 = vld [vmem:[%s2496 + $0x78] sm:$0xf]
      %v2528 = vld [vmem:[%s2496 + $0x7c] sm:$0xf]
      %v2530 = vunpack.c.l.b16 %v2495
      %v2531 = vunpack.c.h.b16 %v2495
      %v2532 = vpack.c.b16 %v2530, %v2530
      %v2533 = vpack.c.b16 %v2531, %v2531
      %v2534 = vrot.slane %v2532, 2
      %v2535 = vrot.slane %v2533, 2
      %v2570 = vunpack.c.l.b16 %v2497
      %v2571 = vunpack.c.l.b16 %v2498
      %v2572 = vunpack.c.l.b16 %v2499
      %v2573 = vunpack.c.l.b16 %v2500
      %v2574 = vunpack.c.l.b16 %v2501
      %v2575 = vunpack.c.l.b16 %v2502
      %v2576 = vunpack.c.l.b16 %v2503
      %v2577 = vunpack.c.l.b16 %v2504
      %v2578 = vunpack.c.l.b16 %v2505
      %v2579 = vunpack.c.l.b16 %v2506
      %v2580 = vunpack.c.l.b16 %v2507
      %v2581 = vunpack.c.l.b16 %v2508
      %v2582 = vunpack.c.l.b16 %v2509
      %v2583 = vunpack.c.l.b16 %v2510
      %v2584 = vunpack.c.l.b16 %v2511
      %v2585 = vunpack.c.l.b16 %v2512
      %v2586 = vunpack.c.l.b16 %v2513
      %v2587 = vunpack.c.l.b16 %v2514
      %v2588 = vunpack.c.l.b16 %v2515
      %v2589 = vunpack.c.l.b16 %v2516
      %v2590 = vunpack.c.l.b16 %v2517
      %v2591 = vunpack.c.l.b16 %v2518
      %v2592 = vunpack.c.l.b16 %v2519
      %v2593 = vunpack.c.l.b16 %v2520
      %v2594 = vunpack.c.l.b16 %v2521
      %v2595 = vunpack.c.l.b16 %v2522
      %v2596 = vunpack.c.l.b16 %v2523
      %v2597 = vunpack.c.l.b16 %v2524
      %v2598 = vunpack.c.l.b16 %v2525
      %v2599 = vunpack.c.l.b16 %v2526
      %v2600 = vunpack.c.l.b16 %v2527
      %v2601 = vunpack.c.l.b16 %v2528
      %v2602 = vpack.c.b16 %v2571, %v2570
      %v2603 = vpack.c.b16 %v2573, %v2572
      %v2604 = vpack.c.b16 %v2575, %v2574
      %v2605 = vpack.c.b16 %v2577, %v2576
      %v2606 = vpack.c.b16 %v2579, %v2578
      %v2607 = vpack.c.b16 %v2581, %v2580
      %v2608 = vpack.c.b16 %v2583, %v2582
      %v2609 = vpack.c.b16 %v2585, %v2584
      %v2610 = vpack.c.b16 %v2587, %v2586
      %v2611 = vpack.c.b16 %v2589, %v2588
      %v2612 = vpack.c.b16 %v2591, %v2590
      %v2613 = vpack.c.b16 %v2593, %v2592
      %v2614 = vpack.c.b16 %v2595, %v2594
      %v2615 = vpack.c.b16 %v2597, %v2596
      %v2616 = vpack.c.b16 %v2599, %v2598
      %v2617 = vpack.c.b16 %v2601, %v2600
      %2634 = vmatprep.subr.bf16.mxu0 0
      %2635 = vmatpush1.bf16.msra.mxu0 %v2602
      %2636 = vmatprep.subr.bf16.mxu0 0
      %2637 = vmatpush1.bf16.msra.mxu0 %v2603
      %2638 = vmatprep.subr.bf16.mxu0 0
      %2639 = vmatpush1.bf16.msra.mxu0 %v2604
      %2640 = vmatprep.subr.bf16.mxu0 0
      %2641 = vmatpush1.bf16.msra.mxu0 %v2605
      %2642 = vmatprep.subr.bf16.mxu0 0
      %2643 = vmatpush1.bf16.msra.mxu0 %v2606
      %2644 = vmatprep.subr.bf16.mxu0 0
      %2645 = vmatpush1.bf16.msra.mxu0 %v2607
      %2646 = vmatprep.subr.bf16.mxu0 0
      %2647 = vmatpush1.bf16.msra.mxu0 %v2608
      %2648 = vmatprep.subr.bf16.mxu0 0
      %2649 = vmatpush1.bf16.msra.mxu0 %v2609
      %2650 = vmatprep.subr.bf16.mxu0 0
      %2651 = vmatpush1.bf16.msra.mxu0 %v2610
      %2652 = vmatprep.subr.bf16.mxu0 0
      %2653 = vmatpush1.bf16.msra.mxu0 %v2611
      %2654 = vmatprep.subr.bf16.mxu0 0
      %2655 = vmatpush1.bf16.msra.mxu0 %v2612
      %2656 = vmatprep.subr.bf16.mxu0 0
      %2657 = vmatpush1.bf16.msra.mxu0 %v2613
      %2658 = vmatprep.subr.bf16.mxu0 0
      %2659 = vmatpush1.bf16.msra.mxu0 %v2614
      %2660 = vmatprep.subr.bf16.mxu0 0
      %2661 = vmatpush1.bf16.msra.mxu0 %v2615
      %2662 = vmatprep.subr.bf16.mxu0 0
      %2663 = vmatpush1.bf16.msra.mxu0 %v2616
      %2664 = vmatprep.subr.bf16.mxu0 0
      %2665 = vmatpush1.bf16.msra.mxu0 %v2617
      %2666 = vmatprep.mubr.bf16.mxu0 %v2535
      %2667 = vmatmul.mubr.bf16.gmra.mrb[0].mxu0 %v2534
      %v2668 = vpop.f32.mrb[0].mxu0
      %v2669 = vadd.f32 0.0, %v2668
      %v2670 = vpop.f32.mrb[0].mxu0
      %v2671 = vpop.f32.mrb[0].mxu0
      %v2672 = vpop.f32.mrb[0].mxu0
      %2673 = vdwg.mxu0
      %v2674 = vadd.f32 %v2494, %v2669
      %v2675 = vld [vmem:[%s243 + $0x8] sm:$0xcc]
      %v2676 = vld [vmem:[%s243 + $0x10] sm:$0x11]
      %s2677 = scalar_lea.vmem %s247, 1664
      %v2678 = vld [vmem:[%s2677] sm:$0xf]
      %v2679 = vld [vmem:[%s2677 + $0x4] sm:$0xf]
      %v2680 = vld [vmem:[%s2677 + $0x8] sm:$0xf]
      %v2681 = vld [vmem:[%s2677 + $0xc] sm:$0xf]
      %v2682 = vld [vmem:[%s2677 + $0x10] sm:$0xf]
      %v2683 = vld [vmem:[%s2677 + $0x14] sm:$0xf]
      %v2684 = vld [vmem:[%s2677 + $0x18] sm:$0xf]
      %v2685 = vld [vmem:[%s2677 + $0x1c] sm:$0xf]
      %v2686 = vld [vmem:[%s2677 + $0x20] sm:$0xf]
      %v2687 = vld [vmem:[%s2677 + $0x24] sm:$0xf]
      %v2688 = vld [vmem:[%s2677 + $0x28] sm:$0xf]
      %v2689 = vld [vmem:[%s2677 + $0x2c] sm:$0xf]
      %v2690 = vld [vmem:[%s2677 + $0x30] sm:$0xf]
      %v2691 = vld [vmem:[%s2677 + $0x34] sm:$0xf]
      %v2692 = vld [vmem:[%s2677 + $0x38] sm:$0xf]
      %v2693 = vld [vmem:[%s2677 + $0x3c] sm:$0xf]
      %v2694 = vld [vmem:[%s2677 + $0x40] sm:$0xf]
      %v2695 = vld [vmem:[%s2677 + $0x44] sm:$0xf]
      %v2696 = vld [vmem:[%s2677 + $0x48] sm:$0xf]
      %v2697 = vld [vmem:[%s2677 + $0x4c] sm:$0xf]
      %v2698 = vld [vmem:[%s2677 + $0x50] sm:$0xf]
      %v2699 = vld [vmem:[%s2677 + $0x54] sm:$0xf]
      %v2700 = vld [vmem:[%s2677 + $0x58] sm:$0xf]
      %v2701 = vld [vmem:[%s2677 + $0x5c] sm:$0xf]
      %v2702 = vld [vmem:[%s2677 + $0x60] sm:$0xf]
      %v2703 = vld [vmem:[%s2677 + $0x64] sm:$0xf]
      %v2704 = vld [vmem:[%s2677 + $0x68] sm:$0xf]
      %v2705 = vld [vmem:[%s2677 + $0x6c] sm:$0xf]
      %v2706 = vld [vmem:[%s2677 + $0x70] sm:$0xf]
      %v2707 = vld [vmem:[%s2677 + $0x74] sm:$0xf]
      %v2708 = vld [vmem:[%s2677 + $0x78] sm:$0xf]
      %v2709 = vld [vmem:[%s2677 + $0x7c] sm:$0xf]
      %v2712 = vunpack.c.l.b16 %v2675
      %v2713 = vunpack.c.h.b16 %v2675
      %v2714 = vunpack.c.l.b16 %v2676
      %v2715 = vunpack.c.h.b16 %v2676
      %v2716 = vpack.c.b16 %v2714, %v2712
      %v2717 = vpack.c.b16 %v2715, %v2713
      %v2719 = vshrl.u32 %v2716, 16
      %v2721 = vrot.slane %v2719, 2
      %v2722 = vshll.u32 %v2716, 16
      %v2724 = vrot.slane %v2722, 3
      %v2725 = vor.u32 %v2721, %v2724
      %v2727 = vshrl.u32 %v2717, 16
      %v2729 = vrot.slane %v2727, 2
      %v2730 = vshll.u32 %v2717, 16
      %v2732 = vrot.slane %v2730, 3
      %v2733 = vor.u32 %v2729, %v2732
      %v2768 = vunpack.c.l.b16 %v2678
      %v2769 = vunpack.c.l.b16 %v2679
      %v2770 = vunpack.c.l.b16 %v2680
      %v2771 = vunpack.c.l.b16 %v2681
      %v2772 = vunpack.c.l.b16 %v2682
      %v2773 = vunpack.c.l.b16 %v2683
      %v2774 = vunpack.c.l.b16 %v2684
      %v2775 = vunpack.c.l.b16 %v2685
      %v2776 = vunpack.c.l.b16 %v2686
      %v2777 = vunpack.c.l.b16 %v2687
      %v2778 = vunpack.c.l.b16 %v2688
      %v2779 = vunpack.c.l.b16 %v2689
      %v2780 = vunpack.c.l.b16 %v2690
      %v2781 = vunpack.c.l.b16 %v2691
      %v2782 = vunpack.c.l.b16 %v2692
      %v2783 = vunpack.c.l.b16 %v2693
      %v2784 = vunpack.c.l.b16 %v2694
      %v2785 = vunpack.c.l.b16 %v2695
      %v2786 = vunpack.c.l.b16 %v2696
      %v2787 = vunpack.c.l.b16 %v2697
      %v2788 = vunpack.c.l.b16 %v2698
      %v2789 = vunpack.c.l.b16 %v2699
      %v2790 = vunpack.c.l.b16 %v2700
      %v2791 = vunpack.c.l.b16 %v2701
      %v2792 = vunpack.c.l.b16 %v2702
      %v2793 = vunpack.c.l.b16 %v2703
      %v2794 = vunpack.c.l.b16 %v2704
      %v2795 = vunpack.c.l.b16 %v2705
      %v2796 = vunpack.c.l.b16 %v2706
      %v2797 = vunpack.c.l.b16 %v2707
      %v2798 = vunpack.c.l.b16 %v2708
      %v2799 = vunpack.c.l.b16 %v2709
      %v2800 = vpack.c.b16 %v2769, %v2768
      %v2801 = vpack.c.b16 %v2771, %v2770
      %v2802 = vpack.c.b16 %v2773, %v2772
      %v2803 = vpack.c.b16 %v2775, %v2774
      %v2804 = vpack.c.b16 %v2777, %v2776
      %v2805 = vpack.c.b16 %v2779, %v2778
      %v2806 = vpack.c.b16 %v2781, %v2780
      %v2807 = vpack.c.b16 %v2783, %v2782
      %v2808 = vpack.c.b16 %v2785, %v2784
      %v2809 = vpack.c.b16 %v2787, %v2786
      %v2810 = vpack.c.b16 %v2789, %v2788
      %v2811 = vpack.c.b16 %v2791, %v2790
      %v2812 = vpack.c.b16 %v2793, %v2792
      %v2813 = vpack.c.b16 %v2795, %v2794
      %v2814 = vpack.c.b16 %v2797, %v2796
      %v2815 = vpack.c.b16 %v2799, %v2798
      %2832 = vmatprep.subr.bf16.mxu0 0
      %2833 = vmatpush1.bf16.msra.mxu0 %v2800
      %2834 = vmatprep.subr.bf16.mxu0 0
      %2835 = vmatpush1.bf16.msra.mxu0 %v2801
      %2836 = vmatprep.subr.bf16.mxu0 0
      %2837 = vmatpush1.bf16.msra.mxu0 %v2802
      %2838 = vmatprep.subr.bf16.mxu0 0
      %2839 = vmatpush1.bf16.msra.mxu0 %v2803
      %2840 = vmatprep.subr.bf16.mxu0 0
      %2841 = vmatpush1.bf16.msra.mxu0 %v2804
      %2842 = vmatprep.subr.bf16.mxu0 0
      %2843 = vmatpush1.bf16.msra.mxu0 %v2805
      %2844 = vmatprep.subr.bf16.mxu0 0
      %2845 = vmatpush1.bf16.msra.mxu0 %v2806
      %2846 = vmatprep.subr.bf16.mxu0 0
      %2847 = vmatpush1.bf16.msra.mxu0 %v2807
      %2848 = vmatprep.subr.bf16.mxu0 0
      %2849 = vmatpush1.bf16.msra.mxu0 %v2808
      %2850 = vmatprep.subr.bf16.mxu0 0
      %2851 = vmatpush1.bf16.msra.mxu0 %v2809
      %2852 = vmatprep.subr.bf16.mxu0 0
      %2853 = vmatpush1.bf16.msra.mxu0 %v2810
      %2854 = vmatprep.subr.bf16.mxu0 0
      %2855 = vmatpush1.bf16.msra.mxu0 %v2811
      %2856 = vmatprep.subr.bf16.mxu0 0
      %2857 = vmatpush1.bf16.msra.mxu0 %v2812
      %2858 = vmatprep.subr.bf16.mxu0 0
      %2859 = vmatpush1.bf16.msra.mxu0 %v2813
      %2860 = vmatprep.subr.bf16.mxu0 0
      %2861 = vmatpush1.bf16.msra.mxu0 %v2814
      %2862 = vmatprep.subr.bf16.mxu0 0
      %2863 = vmatpush1.bf16.msra.mxu0 %v2815
      %2864 = vmatprep.mubr.bf16.mxu0 %v2733
      %2865 = vmatmul.mubr.bf16.gmra.mrb[0].mxu0 %v2725
      %v2866 = vpop.f32.mrb[0].mxu0
      %v2867 = vadd.f32 0.0, %v2866
      %v2868 = vpop.f32.mrb[0].mxu0
      %v2869 = vpop.f32.mrb[0].mxu0
      %v2870 = vpop.f32.mrb[0].mxu0
      %2871 = vdwg.mxu0
      %v2872 = vadd.f32 %v2674, %v2867
      %v2873 = vld [vmem:[%s243 + $0x8] sm:$0x88]
      %s2874 = scalar_lea.vmem %s247, 1792
      %v2875 = vld [vmem:[%s2874] sm:$0xf]
      %v2876 = vld [vmem:[%s2874 + $0x4] sm:$0xf]
      %v2877 = vld [vmem:[%s2874 + $0x8] sm:$0xf]
      %v2878 = vld [vmem:[%s2874 + $0xc] sm:$0xf]
      %v2879 = vld [vmem:[%s2874 + $0x10] sm:$0xf]
      %v2880 = vld [vmem:[%s2874 + $0x14] sm:$0xf]
      %v2881 = vld [vmem:[%s2874 + $0x18] sm:$0xf]
      %v2882 = vld [vmem:[%s2874 + $0x1c] sm:$0xf]
      %v2883 = vld [vmem:[%s2874 + $0x20] sm:$0xf]
      %v2884 = vld [vmem:[%s2874 + $0x24] sm:$0xf]
      %v2885 = vld [vmem:[%s2874 + $0x28] sm:$0xf]
      %v2886 = vld [vmem:[%s2874 + $0x2c] sm:$0xf]
      %v2887 = vld [vmem:[%s2874 + $0x30] sm:$0xf]
      %v2888 = vld [vmem:[%s2874 + $0x34] sm:$0xf]
      %v2889 = vld [vmem:[%s2874 + $0x38] sm:$0xf]
      %v2890 = vld [vmem:[%s2874 + $0x3c] sm:$0xf]
      %v2891 = vld [vmem:[%s2874 + $0x40] sm:$0xf]
      %v2892 = vld [vmem:[%s2874 + $0x44] sm:$0xf]
      %v2893 = vld [vmem:[%s2874 + $0x48] sm:$0xf]
      %v2894 = vld [vmem:[%s2874 + $0x4c] sm:$0xf]
      %v2895 = vld [vmem:[%s2874 + $0x50] sm:$0xf]
      %v2896 = vld [vmem:[%s2874 + $0x54] sm:$0xf]
      %v2897 = vld [vmem:[%s2874 + $0x58] sm:$0xf]
      %v2898 = vld [vmem:[%s2874 + $0x5c] sm:$0xf]
      %v2899 = vld [vmem:[%s2874 + $0x60] sm:$0xf]
      %v2900 = vld [vmem:[%s2874 + $0x64] sm:$0xf]
      %v2901 = vld [vmem:[%s2874 + $0x68] sm:$0xf]
      %v2902 = vld [vmem:[%s2874 + $0x6c] sm:$0xf]
      %v2903 = vld [vmem:[%s2874 + $0x70] sm:$0xf]
      %v2904 = vld [vmem:[%s2874 + $0x74] sm:$0xf]
      %v2905 = vld [vmem:[%s2874 + $0x78] sm:$0xf]
      %v2906 = vld [vmem:[%s2874 + $0x7c] sm:$0xf]
      %v2908 = vunpack.c.l.b16 %v2873
      %v2909 = vunpack.c.h.b16 %v2873
      %v2910 = vpack.c.b16 %v2714, %v2908
      %v2911 = vpack.c.b16 %v2715, %v2909
      %v2912 = vrot.slane %v2910, 3
      %v2913 = vrot.slane %v2911, 3
      %v2948 = vunpack.c.l.b16 %v2875
      %v2949 = vunpack.c.l.b16 %v2876
      %v2950 = vunpack.c.l.b16 %v2877
      %v2951 = vunpack.c.l.b16 %v2878
      %v2952 = vunpack.c.l.b16 %v2879
      %v2953 = vunpack.c.l.b16 %v2880
      %v2954 = vunpack.c.l.b16 %v2881
      %v2955 = vunpack.c.l.b16 %v2882
      %v2956 = vunpack.c.l.b16 %v2883
      %v2957 = vunpack.c.l.b16 %v2884
      %v2958 = vunpack.c.l.b16 %v2885
      %v2959 = vunpack.c.l.b16 %v2886
      %v2960 = vunpack.c.l.b16 %v2887
      %v2961 = vunpack.c.l.b16 %v2888
      %v2962 = vunpack.c.l.b16 %v2889
      %v2963 = vunpack.c.l.b16 %v2890
      %v2964 = vunpack.c.l.b16 %v2891
      %v2965 = vunpack.c.l.b16 %v2892
      %v2966 = vunpack.c.l.b16 %v2893
      %v2967 = vunpack.c.l.b16 %v2894
      %v2968 = vunpack.c.l.b16 %v2895
      %v2969 = vunpack.c.l.b16 %v2896
      %v2970 = vunpack.c.l.b16 %v2897
      %v2971 = vunpack.c.l.b16 %v2898
      %v2972 = vunpack.c.l.b16 %v2899
      %v2973 = vunpack.c.l.b16 %v2900
      %v2974 = vunpack.c.l.b16 %v2901
      %v2975 = vunpack.c.l.b16 %v2902
      %v2976 = vunpack.c.l.b16 %v2903
      %v2977 = vunpack.c.l.b16 %v2904
      %v2978 = vunpack.c.l.b16 %v2905
      %v2979 = vunpack.c.l.b16 %v2906
      %v2980 = vpack.c.b16 %v2949, %v2948
      %v2981 = vpack.c.b16 %v2951, %v2950
      %v2982 = vpack.c.b16 %v2953, %v2952
      %v2983 = vpack.c.b16 %v2955, %v2954
      %v2984 = vpack.c.b16 %v2957, %v2956
      %v2985 = vpack.c.b16 %v2959, %v2958
      %v2986 = vpack.c.b16 %v2961, %v2960
      %v2987 = vpack.c.b16 %v2963, %v2962
      %v2988 = vpack.c.b16 %v2965, %v2964
      %v2989 = vpack.c.b16 %v2967, %v2966
      %v2990 = vpack.c.b16 %v2969, %v2968
      %v2991 = vpack.c.b16 %v2971, %v2970
      %v2992 = vpack.c.b16 %v2973, %v2972
      %v2993 = vpack.c.b16 %v2975, %v2974
      %v2994 = vpack.c.b16 %v2977, %v2976
      %v2995 = vpack.c.b16 %v2979, %v2978
      %3012 = vmatprep.subr.bf16.mxu0 0
      %3013 = vmatpush1.bf16.msra.mxu0 %v2980
      %3014 = vmatprep.subr.bf16.mxu0 0
      %3015 = vmatpush1.bf16.msra.mxu0 %v2981
      %3016 = vmatprep.subr.bf16.mxu0 0
      %3017 = vmatpush1.bf16.msra.mxu0 %v2982
      %3018 = vmatprep.subr.bf16.mxu0 0
      %3019 = vmatpush1.bf16.msra.mxu0 %v2983
      %3020 = vmatprep.subr.bf16.mxu0 0
      %3021 = vmatpush1.bf16.msra.mxu0 %v2984
      %3022 = vmatprep.subr.bf16.mxu0 0
      %3023 = vmatpush1.bf16.msra.mxu0 %v2985
      %3024 = vmatprep.subr.bf16.mxu0 0
      %3025 = vmatpush1.bf16.msra.mxu0 %v2986
      %3026 = vmatprep.subr.bf16.mxu0 0
      %3027 = vmatpush1.bf16.msra.mxu0 %v2987
      %3028 = vmatprep.subr.bf16.mxu0 0
      %3029 = vmatpush1.bf16.msra.mxu0 %v2988
      %3030 = vmatprep.subr.bf16.mxu0 0
      %3031 = vmatpush1.bf16.msra.mxu0 %v2989
      %3032 = vmatprep.subr.bf16.mxu0 0
      %3033 = vmatpush1.bf16.msra.mxu0 %v2990
      %3034 = vmatprep.subr.bf16.mxu0 0
      %3035 = vmatpush1.bf16.msra.mxu0 %v2991
      %3036 = vmatprep.subr.bf16.mxu0 0
      %3037 = vmatpush1.bf16.msra.mxu0 %v2992
      %3038 = vmatprep.subr.bf16.mxu0 0
      %3039 = vmatpush1.bf16.msra.mxu0 %v2993
      %3040 = vmatprep.subr.bf16.mxu0 0
      %3041 = vmatpush1.bf16.msra.mxu0 %v2994
      %3042 = vmatprep.subr.bf16.mxu0 0
      %3043 = vmatpush1.bf16.msra.mxu0 %v2995
      %3044 = vmatprep.mubr.bf16.mxu0 %v2913
      %3045 = vmatmul.mubr.bf16.gmra.mrb[0].mxu0 %v2912
      %v3046 = vpop.f32.mrb[0].mxu0
      %v3047 = vadd.f32 0.0, %v3046
      %v3048 = vpop.f32.mrb[0].mxu0
      %v3049 = vpop.f32.mrb[0].mxu0
      %v3050 = vpop.f32.mrb[0].mxu0
      %3051 = vdwg.mxu0
      %v3052 = vadd.f32 %v2872, %v3047
      %v3053 = vld [vmem:[%s243 + $0x10] sm:$0x33]
      %s3054 = scalar_lea.vmem %s247, 1920
      %v3055 = vld [vmem:[%s3054] sm:$0xf]
      %v3056 = vld [vmem:[%s3054 + $0x4] sm:$0xf]
      %v3057 = vld [vmem:[%s3054 + $0x8] sm:$0xf]
      %v3058 = vld [vmem:[%s3054 + $0xc] sm:$0xf]
      %v3059 = vld [vmem:[%s3054 + $0x10] sm:$0xf]
      %v3060 = vld [vmem:[%s3054 + $0x14] sm:$0xf]
      %v3061 = vld [vmem:[%s3054 + $0x18] sm:$0xf]
      %v3062 = vld [vmem:[%s3054 + $0x1c] sm:$0xf]
      %v3063 = vld [vmem:[%s3054 + $0x20] sm:$0xf]
      %v3064 = vld [vmem:[%s3054 + $0x24] sm:$0xf]
      %v3065 = vld [vmem:[%s3054 + $0x28] sm:$0xf]
      %v3066 = vld [vmem:[%s3054 + $0x2c] sm:$0xf]
      %v3067 = vld [vmem:[%s3054 + $0x30] sm:$0xf]
      %v3068 = vld [vmem:[%s3054 + $0x34] sm:$0xf]
      %v3069 = vld [vmem:[%s3054 + $0x38] sm:$0xf]
      %v3070 = vld [vmem:[%s3054 + $0x3c] sm:$0xf]
      %v3071 = vld [vmem:[%s3054 + $0x40] sm:$0xf]
      %v3072 = vld [vmem:[%s3054 + $0x44] sm:$0xf]
      %v3073 = vld [vmem:[%s3054 + $0x48] sm:$0xf]
      %v3074 = vld [vmem:[%s3054 + $0x4c] sm:$0xf]
      %v3075 = vld [vmem:[%s3054 + $0x50] sm:$0xf]
      %v3076 = vld [vmem:[%s3054 + $0x54] sm:$0xf]
      %v3077 = vld [vmem:[%s3054 + $0x58] sm:$0xf]
      %v3078 = vld [vmem:[%s3054 + $0x5c] sm:$0xf]
      %v3079 = vld [vmem:[%s3054 + $0x60] sm:$0xf]
      %v3080 = vld [vmem:[%s3054 + $0x64] sm:$0xf]
      %v3081 = vld [vmem:[%s3054 + $0x68] sm:$0xf]
      %v3082 = vld [vmem:[%s3054 + $0x6c] sm:$0xf]
      %v3083 = vld [vmem:[%s3054 + $0x70] sm:$0xf]
      %v3084 = vld [vmem:[%s3054 + $0x74] sm:$0xf]
      %v3085 = vld [vmem:[%s3054 + $0x78] sm:$0xf]
      %v3086 = vld [vmem:[%s3054 + $0x7c] sm:$0xf]
      %v3088 = vunpack.c.l.b16 %v3053
      %v3089 = vunpack.c.h.b16 %v3053
      %v3090 = vpack.c.b16 %v3088, %v2908
      %v3091 = vpack.c.b16 %v3089, %v2909
      %v3093 = vshrl.u32 %v3090, 16
      %v3095 = vrot.slane %v3093, 3
      %v3096 = vshll.u32 %v3090, 16
      %v3098 = vrot.slane %v3096, 4
      %v3099 = vor.u32 %v3095, %v3098
      %v3101 = vshrl.u32 %v3091, 16
      %v3103 = vrot.slane %v3101, 3
      %v3104 = vshll.u32 %v3091, 16
      %v3106 = vrot.slane %v3104, 4
      %v3107 = vor.u32 %v3103, %v3106
      %v3142 = vunpack.c.l.b16 %v3055
      %v3143 = vunpack.c.l.b16 %v3056
      %v3144 = vunpack.c.l.b16 %v3057
      %v3145 = vunpack.c.l.b16 %v3058
      %v3146 = vunpack.c.l.b16 %v3059
      %v3147 = vunpack.c.l.b16 %v3060
      %v3148 = vunpack.c.l.b16 %v3061
      %v3149 = vunpack.c.l.b16 %v3062
      %v3150 = vunpack.c.l.b16 %v3063
      %v3151 = vunpack.c.l.b16 %v3064
      %v3152 = vunpack.c.l.b16 %v3065
      %v3153 = vunpack.c.l.b16 %v3066
      %v3154 = vunpack.c.l.b16 %v3067
      %v3155 = vunpack.c.l.b16 %v3068
      %v3156 = vunpack.c.l.b16 %v3069
      %v3157 = vunpack.c.l.b16 %v3070
      %v3158 = vunpack.c.l.b16 %v3071
      %v3159 = vunpack.c.l.b16 %v3072
      %v3160 = vunpack.c.l.b16 %v3073
      %v3161 = vunpack.c.l.b16 %v3074
      %v3162 = vunpack.c.l.b16 %v3075
      %v3163 = vunpack.c.l.b16 %v3076
      %v3164 = vunpack.c.l.b16 %v3077
      %v3165 = vunpack.c.l.b16 %v3078
      %v3166 = vunpack.c.l.b16 %v3079
      %v3167 = vunpack.c.l.b16 %v3080
      %v3168 = vunpack.c.l.b16 %v3081
      %v3169 = vunpack.c.l.b16 %v3082
      %v3170 = vunpack.c.l.b16 %v3083
      %v3171 = vunpack.c.l.b16 %v3084
      %v3172 = vunpack.c.l.b16 %v3085
      %v3173 = vunpack.c.l.b16 %v3086
      %v3174 = vpack.c.b16 %v3143, %v3142
      %v3175 = vpack.c.b16 %v3145, %v3144
      %v3176 = vpack.c.b16 %v3147, %v3146
      %v3177 = vpack.c.b16 %v3149, %v3148
      %v3178 = vpack.c.b16 %v3151, %v3150
      %v3179 = vpack.c.b16 %v3153, %v3152
      %v3180 = vpack.c.b16 %v3155, %v3154
      %v3181 = vpack.c.b16 %v3157, %v3156
      %v3182 = vpack.c.b16 %v3159, %v3158
      %v3183 = vpack.c.b16 %v3161, %v3160
      %v3184 = vpack.c.b16 %v3163, %v3162
      %v3185 = vpack.c.b16 %v3165, %v3164
      %v3186 = vpack.c.b16 %v3167, %v3166
      %v3187 = vpack.c.b16 %v3169, %v3168
      %v3188 = vpack.c.b16 %v3171, %v3170
      %v3189 = vpack.c.b16 %v3173, %v3172
      %3206 = vmatprep.subr.bf16.mxu0 0
      %3207 = vmatpush1.bf16.msra.mxu0 %v3174
      %3208 = vmatprep.subr.bf16.mxu0 0
      %3209 = vmatpush1.bf16.msra.mxu0 %v3175
      %3210 = vmatprep.subr.bf16.mxu0 0
      %3211 = vmatpush1.bf16.msra.mxu0 %v3176
      %3212 = vmatprep.subr.bf16.mxu0 0
      %3213 = vmatpush1.bf16.msra.mxu0 %v3177
      %3214 = vmatprep.subr.bf16.mxu0 0
      %3215 = vmatpush1.bf16.msra.mxu0 %v3178
      %3216 = vmatprep.subr.bf16.mxu0 0
      %3217 = vmatpush1.bf16.msra.mxu0 %v3179
      %3218 = vmatprep.subr.bf16.mxu0 0
      %3219 = vmatpush1.bf16.msra.mxu0 %v3180
      %3220 = vmatprep.subr.bf16.mxu0 0
      %3221 = vmatpush1.bf16.msra.mxu0 %v3181
      %3222 = vmatprep.subr.bf16.mxu0 0
      %3223 = vmatpush1.bf16.msra.mxu0 %v3182
      %3224 = vmatprep.subr.bf16.mxu0 0
      %3225 = vmatpush1.bf16.msra.mxu0 %v3183
      %3226 = vmatprep.subr.bf16.mxu0 0
      %3227 = vmatpush1.bf16.msra.mxu0 %v3184
      %3228 = vmatprep.subr.bf16.mxu0 0
      %3229 = vmatpush1.bf16.msra.mxu0 %v3185
      %3230 = vmatprep.subr.bf16.mxu0 0
      %3231 = vmatpush1.bf16.msra.mxu0 %v3186
      %3232 = vmatprep.subr.bf16.mxu0 0
      %3233 = vmatpush1.bf16.msra.mxu0 %v3187
      %3234 = vmatprep.subr.bf16.mxu0 0
      %3235 = vmatpush1.bf16.msra.mxu0 %v3188
      %3236 = vmatprep.subr.bf16.mxu0 0
      %3237 = vmatpush1.bf16.msra.mxu0 %v3189
      %3238 = vmatprep.mubr.bf16.mxu0 %v3107
      %3239 = vmatmul.mubr.bf16.gmra.mrb[0].mxu0 %v3099
      %v3240 = vpop.f32.mrb[0].mxu0
      %v3241 = vadd.f32 0.0, %v3240
      %v3242 = vpop.f32.mrb[0].mxu0
      %v3243 = vpop.f32.mrb[0].mxu0
      %v3244 = vpop.f32.mrb[0].mxu0
      %3245 = vdwg.mxu0
      %v3246 = vadd.f32 %v3052, %v3241
      %v3247 = vld [vmem:[%s250] sm:$0x1]
      %v3249 = vlaneseq
      %v3250 = vshrl.u32 %v3249, 7
      %v3251 = vsub.s32 0, %v3250
      %v3252 = vrot.slane %v3247, %v3251
      %v3254 = vmul.f32 %v3246, %v3252
      %v3255 = vld [vmem:[%s253] sm:$0x1]
      %v3257 = vlaneseq
      %v3258 = vshrl.u32 %v3257, 7
      %v3259 = vsub.s32 0, %v3258
      %v3260 = vrot.slane %v3255, %v3259
      %v3262 = vadd.f32 %v3254, %v3260
      %3263 = vst [vmem:[%s260] sm:$0xf] %v3262
      %p3264 = scmp.lt.s32.totalorder %s19, 1
      %s3265 = scalar_select %p3264, %s19, 1
      %p3266 = scmp.lt.s32.totalorder %s20, 0
      %s3267 = scalar_select %p3266, %s20, 0
      %s3268 = sadd.s32 %s3267, %s3265
      %s3269 = smul.addr %s3268, 4
      %s3270 = scalar_lea.vmem %s4, %s3269
      // Predicated region
      $region37: #{patch_discriminator_with_sed.11} parent=35 // pred_check
        %p3271 = pneg %p151
      $region38: #{patch_discriminator_with_sed.11} parent=35 // pred_check_branch
        %3273 = sbr.rel (%p3271) target = $region40
      $region39: #{patch_discriminator_with_sed.11} parent=35 // pred_region
        _
      $region40: #{patch_discriminator_with_sed.11} parent=35 // pred_fallthru
        _
    $region36: #{patch_discriminator_with_sed.11} parent=5 // pred_fallthru
      _
    %p3274 = scmp.le.s32.totalorder 2, %s10
    // Predicated region
    $region41: #{patch_discriminator_with_sed.11} parent=5 // pred_check
      %p3275 = pneg %p3274
    $region42: #{patch_discriminator_with_sed.11} parent=5 // pred_check_branch
      %3277 = sbr.rel (%p3275) target = $region44
    $region43: #{patch_discriminator_with_sed.11} parent=5 // pred_region
      %s3278 = ssub.s32 %s10, 2
      // Predicated region
      $region45: #{patch_discriminator_with_sed.11} parent=43 // pred_check
        %p3279 = pneg %p157
      $region46: #{patch_discriminator_with_sed.11} parent=43 // pred_check_branch
        %3281 = sbr.rel (%p3279) target = $region48
      $region47: #{patch_discriminator_with_sed.11} parent=43 // pred_region
        %p3282 = scmp.lt.s32.totalorder %s21, 1
        %s3283 = scalar_select %p3282, %s21, 1
        %p3284 = scmp.lt.s32.totalorder %s22, 0
        %s3285 = scalar_select %p3284, %s22, 0
        %s3286 = sadd.s32 %s3285, %s3283
        %s3287 = smul.addr %s3286, 4
        %s3288 = scalar_lea.vmem %s4, %s3287
      $region48: #{patch_discriminator_with_sed.11} parent=43 // pred_fallthru
        _
    $region44: #{patch_discriminator_with_sed.11} parent=5 // pred_fallthru
      _
  $region6: #{patch_discriminator_with_sed.11} parent=0 // loop_footer
    %s14 = sadd.s32 1, %s10
  $region7: #{patch_discriminator_with_sed.11} parent=0 // loop_footer_branch
    %9 = sbr.rel target = $region3
  $region8: #{patch_discriminator_with_sed.11} parent=0 // loop_exit
    _

</llo_original>
